<compile_context>
chip_gen: v5e
topology: v5e:2x2
jax: 0.10.0
libtpu: 0.0.40
codegen_flags: <defaults>
</compile_context>

<pallas_src>
import functools

import jax
import jax.numpy as jnp
from jax.experimental import pallas as pl
from jax.experimental.pallas import tpu as pltpu


# ---------------------------------------------------------------------------
# Fused Pallas kernel: stem conv + 2 body convs + global-avg-pool + linear head
# ---------------------------------------------------------------------------
def _mtl_clf_fused_kernel(x_ref, m_ref, w1_ref, b1_ref, w2_ref, b2_ref,
                          w3_ref, b3_ref, wh_ref, bh_ref, out_ref,
                          *, width, hw):
    """One image per grid step.

    x_ref  : (1, HW, Cin)      bf16  flattened NHWC image
    m_ref  : (9, HW, 1)        f32   per-tap validity masks (zero padding)
    wK_ref : (9, CinK, CoutK)  bf16  conv taps, BN scale folded in
    bK_ref : (1, CoutK)        f32   folded BN bias
    wh_ref : (C3, NCpad)       f32   head weight (classes padded to 128 lanes)
    bh_ref : (1, NCpad)        f32   head bias
    out_ref: (1, 1, NCpad)     f32   logits for this image
    """

    def conv3x3_bn_relu(feat, w_ref, b_ref):
        # feat: (HW, Cin) f32.  Implicit im2col: 9 shifted bf16 matmuls
        # accumulated in f32, then folded-BN bias + ReLU.
        cout = w_ref.shape[2]
        acc = jnp.zeros((hw, cout), jnp.float32)
        for t in range(9):
            dh, dw = t // 3, t % 3
            s = (dh - 1) * width + (dw - 1)          # flat spatial shift
            if s == 0:
                xs = feat                            # center tap: no shift/mask
            else:
                # xs[p] = feat[p + s]; boundary wraparound zeroed by the mask.
                xs = pltpu.roll(feat, (-s) % hw, axis=0) * m_ref[t]
            acc = acc + jnp.dot(xs.astype(jnp.bfloat16), w_ref[t],
                                preferred_element_type=jnp.float32)
        return jnp.maximum(acc + b_ref[...], 0.0)

    x = x_ref[0].astype(jnp.float32)                 # (HW, Cin)
    f = conv3x3_bn_relu(x, w1_ref, b1_ref)           # ClfStem
    f = conv3x3_bn_relu(f, w2_ref, b2_ref)           # backbone.body block 1
    f = conv3x3_bn_relu(f, w3_ref, b3_ref)           # backbone.body block 2

    # Classifier head fused into the epilogue: global avg pool + Linear.
    pooled = jnp.sum(f, axis=0, keepdims=True) * (1.0 / hw)        # (1, C3)
    logits = jnp.dot(pooled, wh_ref[...],
                     preferred_element_type=jnp.float32) + bh_ref[...]
    out_ref[0] = logits


# ---------------------------------------------------------------------------
# pallas_call wrapper
# ---------------------------------------------------------------------------
def _fused_clf_forward(x_flat, masks, fp, *, width):
    n, hw, cin = x_flat.shape
    ncp = fp["head_w"].shape[1]
    kernel = functools.partial(_mtl_clf_fused_kernel, width=width, hw=hw)

    def resident(a):
        # Full-array block with a constant index map: fetched once, stays
        # resident in VMEM across all grid steps (weights / biases / masks).
        nd = a.ndim
        return pl.BlockSpec(a.shape, lambda i, _nd=nd: (0,) * _nd)

    out = pl.pallas_call(
        kernel,
        out_shape=jax.ShapeDtypeStruct((n, 1, ncp), jnp.float32),
        grid_spec=pltpu.PrefetchScalarGridSpec(
            num_scalar_prefetch=0,
            grid=(n,),                                  # one image per step
            in_specs=[
                pl.BlockSpec((1, hw, cin), lambda i: (i, 0, 0)),
                resident(masks),
                resident(fp["w1"]), resident(fp["b1"]),
                resident(fp["w2"]), resident(fp["b2"]),
                resident(fp["w3"]), resident(fp["b3"]),
                resident(fp["head_w"]), resident(fp["head_b"]),
            ],
            out_specs=pl.BlockSpec((1, 1, ncp), lambda i: (i, 0, 0)),
        ),
        compiler_params=pltpu.CompilerParams(
            dimension_semantics=("parallel",)),         # v7x: 2 TCs split batch
    )(x_flat, masks, fp["w1"], fp["b1"], fp["w2"], fp["b2"],
      fp["w3"], fp["b3"], fp["head_w"], fp["head_b"])
    return out.reshape(n, ncp)


def _tap_masks(h, w):
    """(9, H*W, 1) f32 masks: tap (dh, dw) reads x[h+dh-1, w+dw-1]; 0 if OOB."""
    hh = jnp.arange(h, dtype=jnp.int32)[:, None]
    ww = jnp.arange(w, dtype=jnp.int32)[None, :]
    taps = []
    for dh in range(3):
        for dw in range(3):
            valid = ((hh + dh - 1 >= 0) & (hh + dh - 1 < h) &
                     (ww + dw - 1 >= 0) & (ww + dw - 1 < w))
            taps.append(valid.reshape(h * w).astype(jnp.float32))
    return jnp.stack(taps, axis=0)[:, :, None]


# ---------------------------------------------------------------------------
# Parameters: PyTorch-convention init + eval-mode BN folding
# ---------------------------------------------------------------------------
def init_raw_params(key, cin=3, stem_c=16, body_c=32, num_classes=10):
    """PyTorch-convention params (init_weights: kaiming conv/linear, unit BN)."""
    ks = jax.random.split(key, 4)

    def conv_w(k, cout, cin_):
        std = (2.0 / (cin_ * 9)) ** 0.5                 # kaiming_normal_, relu
        return jax.random.normal(k, (cout, cin_, 3, 3), jnp.float32) * std

    def bn(c):
        return {"gamma": jnp.ones((c,), jnp.float32),
                "beta": jnp.zeros((c,), jnp.float32),
                "mean": jnp.zeros((c,), jnp.float32),
                "var": jnp.ones((c,), jnp.float32)}

    bound = (6.0 / body_c) ** 0.5                       # kaiming_uniform_, relu
    return {
        "stem_w": conv_w(ks[0], stem_c, cin),    "stem_bn": bn(stem_c),
        "b1_w":   conv_w(ks[1], body_c, stem_c), "b1_bn":   bn(body_c),
        "b2_w":   conv_w(ks[2], body_c, body_c), "b2_bn":   bn(body_c),
        "head_w": jax.random.uniform(ks[3], (num_classes, body_c),
                                     jnp.float32, -bound, bound),
        "head_b": jnp.zeros((num_classes,), jnp.float32),
    }


def fold_params(raw, eps=1e-5, lane=128):
    """Fold eval BN into conv weights/bias, cast conv weights to bf16, and pad
    the head to a lane-dense (multiple-of-128) class dimension."""
    def fold_conv(w, bn):
        scale = bn["gamma"] / jnp.sqrt(bn["var"] + eps)            # (Cout,)
        bias = bn["beta"] - bn["mean"] * scale                     # (Cout,)
        cout, cin_ = w.shape[0], w.shape[1]
        taps = jnp.transpose(w, (2, 3, 1, 0)).reshape(9, cin_, cout)
        taps = taps * scale[None, None, :]                         # BN scale fold
        return taps.astype(jnp.bfloat16), bias[None, :].astype(jnp.float32)

    w1, b1 = fold_conv(raw["stem_w"], raw["stem_bn"])
    w2, b2 = fold_conv(raw["b1_w"], raw["b1_bn"])
    w3, b3 = fold_conv(raw["b2_w"], raw["b2_bn"])
    nc, c3 = raw["head_w"].shape
    ncp = ((nc + lane - 1) // lane) * lane
    head_w = jnp.zeros((c3, ncp), jnp.float32).at[:, :nc].set(raw["head_w"].T)
    head_b = jnp.zeros((1, ncp), jnp.float32).at[0, :nc].set(raw["head_b"])
    return {"w1": w1, "b1": b1, "w2": w2, "b2": b2, "w3": w3, "b3": b3,
            "head_w": head_w, "head_b": head_b}


# ---------------------------------------------------------------------------
# Public forward (eval / _forward_val, 'clf' task)
# ---------------------------------------------------------------------------
@functools.partial(jax.jit, static_argnames=("num_classes",))
def mtl_nogate_forward_val(x_nchw, fparams, *, num_classes):
    """Eval forward for the 'clf' branch: stem -> backbone.body -> head."""
    n, c, h, w = x_nchw.shape
    x = jnp.transpose(x_nchw, (0, 2, 3, 1)).reshape(n, h * w, c)
    x = x.astype(jnp.bfloat16)          # bf16 over HBM; f32 accumulation in-kernel
    masks = _tap_masks(h, w)
    logits = _fused_clf_forward(x, masks, fparams, width=w)
    return {"outputs": logits[:, :num_classes]}
    # TODO(synk): det/seg branches (RPN/ROI detection heads, segmentation
    # decoder with bilinear upsample to input_shape) are task-plugin modules
    # not defined in the reference source; only the clf path is implemented.


# ---------------------------------------------------------------------------
# Plain-JAX reference (same folded params & dtype choices) for self-check
# ---------------------------------------------------------------------------
def reference_forward(x_nchw, fp, num_classes):
    x = jnp.transpose(x_nchw, (0, 2, 3, 1))

    def conv_block(feat, taps, bias):
        cin_, cout = taps.shape[1], taps.shape[2]
        w = taps.reshape(3, 3, cin_, cout)                         # HWIO
        y = jax.lax.conv_general_dilated(
            feat.astype(jnp.bfloat16), w, window_strides=(1, 1), padding="SAME",
            dimension_numbers=("NHWC", "HWIO", "NHWC"),
            preferred_element_type=jnp.float32)
        return jnp.maximum(y + bias.reshape(1, 1, 1, -1), 0.0)

    f = conv_block(x, fp["w1"], fp["b1"])
    f = conv_block(f, fp["w2"], fp["b2"])
    f = conv_block(f, fp["w3"], fp["b3"])
    pooled = jnp.mean(f, axis=(1, 2))                              # (N, C3) f32
    logits = pooled @ fp["head_w"] + fp["head_b"]
    return logits[:, :num_classes]


if __name__ == "__main__":
    key = jax.random.PRNGKey(0)
    k_img, k_par = jax.random.split(key)

    # Small shapes consistent with the module: RGB images, NCHW.
    N, C, H, W = 2, 3, 16, 16
    NUM_CLASSES = 10
    images = jax.random.normal(k_img, (N, C, H, W), jnp.float32)

    raw = init_raw_params(k_par, cin=C, stem_c=16, body_c=32,
                          num_classes=NUM_CLASSES)
    fparams = fold_params(raw)

    out = mtl_nogate_forward_val(images, fparams, num_classes=NUM_CLASSES)
    logits = jax.block_until_ready(out["outputs"])

    ref = reference_forward(images, fparams, NUM_CLASSES)
    assert logits.shape == (N, NUM_CLASSES)
    assert bool(jnp.all(jnp.isfinite(logits)))
    err = float(jnp.max(jnp.abs(logits - jnp.asarray(ref))))
    assert err < 5e-2, f"mismatch vs plain-JAX reference: {err}"
    print("KERNEL_OK")
</pallas_src>

<mosaic_0001>
module attributes {stable_mosaic.version = 11 : i64} {
  func.func @_mtl_clf_fused_kernel(%arg0: i32, %arg1: memref<1x256x3xbf16, #tpu.memory_space<vmem>>, %arg2: memref<9x256x1xf32, #tpu.memory_space<vmem>>, %arg3: memref<9x3x16xbf16, #tpu.memory_space<vmem>>, %arg4: memref<1x16xf32, #tpu.memory_space<vmem>>, %arg5: memref<9x16x32xbf16, #tpu.memory_space<vmem>>, %arg6: memref<1x32xf32, #tpu.memory_space<vmem>>, %arg7: memref<9x32x32xbf16, #tpu.memory_space<vmem>>, %arg8: memref<1x32xf32, #tpu.memory_space<vmem>>, %arg9: memref<32x128xf32, #tpu.memory_space<vmem>>, %arg10: memref<1x128xf32, #tpu.memory_space<vmem>>, %arg11: memref<1x1x128xf32, #tpu.memory_space<vmem>>) attributes {dimension_semantics = [#tpu.dimension_semantics<parallel>], iteration_bounds = array<i64: 2>, scalar_prefetch = 0 : i64, scratch_operands = 0 : i64, tpu.core_type = #tpu.core_type<tc>, window_params = [{transform_indices = @transform_0, window_bounds = array<i64: 1, 256, 3>}, {pipeline_mode = #tpu.pipeline_mode<synchronous>, transform_indices = @transform_1, window_bounds = array<i64: 9, 256, 1>}, {pipeline_mode = #tpu.pipeline_mode<synchronous>, transform_indices = @transform_2, window_bounds = array<i64: 9, 3, 16>}, {pipeline_mode = #tpu.pipeline_mode<synchronous>, transform_indices = @transform_3, window_bounds = array<i64: 1, 16>}, {pipeline_mode = #tpu.pipeline_mode<synchronous>, transform_indices = @transform_4, window_bounds = array<i64: 9, 16, 32>}, {pipeline_mode = #tpu.pipeline_mode<synchronous>, transform_indices = @transform_5, window_bounds = array<i64: 1, 32>}, {pipeline_mode = #tpu.pipeline_mode<synchronous>, transform_indices = @transform_6, window_bounds = array<i64: 9, 32, 32>}, {pipeline_mode = #tpu.pipeline_mode<synchronous>, transform_indices = @transform_7, window_bounds = array<i64: 1, 32>}, {pipeline_mode = #tpu.pipeline_mode<synchronous>, transform_indices = @transform_8, window_bounds = array<i64: 32, 128>}, {pipeline_mode = #tpu.pipeline_mode<synchronous>, transform_indices = @transform_9, window_bounds = array<i64: 1, 128>}, {transform_indices = @transform_10, window_bounds = array<i64: 1, 1, 128>}]} {
    %c0 = arith.constant 0 : index
    %c0_0 = arith.constant 0 : index
    %c0_1 = arith.constant 0 : index
    %0 = vector.load %arg1[%c0, %c0_0, %c0_1] : memref<1x256x3xbf16, #tpu.memory_space<vmem>>, vector<1x256x3xbf16>
    %1 = vector.shape_cast %0 : vector<1x256x3xbf16> to vector<256x3xbf16>
    %2 = arith.extf %1 : vector<256x3xbf16> to vector<256x3xf32>
    %cst = arith.constant 0.000000e+00 : f32
    %3 = vector.broadcast %cst : f32 to vector<256x16xf32>
    %c17_i32 = arith.constant 17 : i32
    %4 = tpu.dynamic_rotate %2 by %c17_i32 dim 0 : vector<256x3xf32>, i32 -> vector<256x3xf32>
    %c0_2 = arith.constant 0 : index
    %c0_3 = arith.constant 0 : index
    %c0_4 = arith.constant 0 : index
    %5 = vector.load %arg2[%c0_2, %c0_3, %c0_4] : memref<9x256x1xf32, #tpu.memory_space<vmem>>, vector<1x256x1xf32>
    %6 = vector.shape_cast %5 : vector<1x256x1xf32> to vector<256x1xf32>
    %7 = vector.broadcast %6 : vector<256x1xf32> to vector<256x3xf32>
    %8 = arith.mulf %4, %7 : vector<256x3xf32>
    %9 = arith.truncf %8 : vector<256x3xf32> to vector<256x3xbf16>
    %c0_5 = arith.constant 0 : index
    %c0_6 = arith.constant 0 : index
    %c0_7 = arith.constant 0 : index
    %10 = vector.load %arg3[%c0_5, %c0_6, %c0_7] : memref<9x3x16xbf16, #tpu.memory_space<vmem>>, vector<1x3x16xbf16>
    %11 = vector.shape_cast %10 : vector<1x3x16xbf16> to vector<3x16xbf16>
    %cst_8 = arith.constant dense<0.000000e+00> : vector<256x16xf32>
    %12 = tpu.matmul %9, %11, %cst_8 {dimension_numbers = #tpu.dot_dimension_numbers<[1], [0], [0], [1], [0, 0, 1, 1], [], []>} : vector<256x3xbf16>, vector<3x16xbf16>, vector<256x16xf32> -> vector<256x16xf32>
    %13 = arith.addf %3, %12 : vector<256x16xf32>
    %c16_i32 = arith.constant 16 : i32
    %14 = tpu.dynamic_rotate %2 by %c16_i32 dim 0 : vector<256x3xf32>, i32 -> vector<256x3xf32>
    %c1 = arith.constant 1 : index
    %c0_9 = arith.constant 0 : index
    %c0_10 = arith.constant 0 : index
    %15 = vector.load %arg2[%c1, %c0_9, %c0_10] : memref<9x256x1xf32, #tpu.memory_space<vmem>>, vector<1x256x1xf32>
    %16 = vector.shape_cast %15 : vector<1x256x1xf32> to vector<256x1xf32>
    %17 = vector.broadcast %16 : vector<256x1xf32> to vector<256x3xf32>
    %18 = arith.mulf %14, %17 : vector<256x3xf32>
    %19 = arith.truncf %18 : vector<256x3xf32> to vector<256x3xbf16>
    %c1_11 = arith.constant 1 : index
    %c0_12 = arith.constant 0 : index
    %c0_13 = arith.constant 0 : index
    %20 = vector.load %arg3[%c1_11, %c0_12, %c0_13] : memref<9x3x16xbf16, #tpu.memory_space<vmem>>, vector<1x3x16xbf16>
    %21 = vector.shape_cast %20 : vector<1x3x16xbf16> to vector<3x16xbf16>
    %cst_14 = arith.constant dense<0.000000e+00> : vector<256x16xf32>
    %22 = tpu.matmul %19, %21, %cst_14 {dimension_numbers = #tpu.dot_dimension_numbers<[1], [0], [0], [1], [0, 0, 1, 1], [], []>} : vector<256x3xbf16>, vector<3x16xbf16>, vector<256x16xf32> -> vector<256x16xf32>
    %23 = arith.addf %13, %22 : vector<256x16xf32>
    %c15_i32 = arith.constant 15 : i32
    %24 = tpu.dynamic_rotate %2 by %c15_i32 dim 0 : vector<256x3xf32>, i32 -> vector<256x3xf32>
    %c2 = arith.constant 2 : index
    %c0_15 = arith.constant 0 : index
    %c0_16 = arith.constant 0 : index
    %25 = vector.load %arg2[%c2, %c0_15, %c0_16] : memref<9x256x1xf32, #tpu.memory_space<vmem>>, vector<1x256x1xf32>
    %26 = vector.shape_cast %25 : vector<1x256x1xf32> to vector<256x1xf32>
    %27 = vector.broadcast %26 : vector<256x1xf32> to vector<256x3xf32>
    %28 = arith.mulf %24, %27 : vector<256x3xf32>
    %29 = arith.truncf %28 : vector<256x3xf32> to vector<256x3xbf16>
    %c2_17 = arith.constant 2 : index
    %c0_18 = arith.constant 0 : index
    %c0_19 = arith.constant 0 : index
    %30 = vector.load %arg3[%c2_17, %c0_18, %c0_19] : memref<9x3x16xbf16, #tpu.memory_space<vmem>>, vector<1x3x16xbf16>
    %31 = vector.shape_cast %30 : vector<1x3x16xbf16> to vector<3x16xbf16>
    %cst_20 = arith.constant dense<0.000000e+00> : vector<256x16xf32>
    %32 = tpu.matmul %29, %31, %cst_20 {dimension_numbers = #tpu.dot_dimension_numbers<[1], [0], [0], [1], [0, 0, 1, 1], [], []>} : vector<256x3xbf16>, vector<3x16xbf16>, vector<256x16xf32> -> vector<256x16xf32>
    %33 = arith.addf %23, %32 : vector<256x16xf32>
    %c1_i32 = arith.constant 1 : i32
    %34 = tpu.dynamic_rotate %2 by %c1_i32 dim 0 : vector<256x3xf32>, i32 -> vector<256x3xf32>
    %c3 = arith.constant 3 : index
    %c0_21 = arith.constant 0 : index
    %c0_22 = arith.constant 0 : index
    %35 = vector.load %arg2[%c3, %c0_21, %c0_22] : memref<9x256x1xf32, #tpu.memory_space<vmem>>, vector<1x256x1xf32>
    %36 = vector.shape_cast %35 : vector<1x256x1xf32> to vector<256x1xf32>
    %37 = vector.broadcast %36 : vector<256x1xf32> to vector<256x3xf32>
    %38 = arith.mulf %34, %37 : vector<256x3xf32>
    %39 = arith.truncf %38 : vector<256x3xf32> to vector<256x3xbf16>
    %c3_23 = arith.constant 3 : index
    %c0_24 = arith.constant 0 : index
    %c0_25 = arith.constant 0 : index
    %40 = vector.load %arg3[%c3_23, %c0_24, %c0_25] : memref<9x3x16xbf16, #tpu.memory_space<vmem>>, vector<1x3x16xbf16>
    %41 = vector.shape_cast %40 : vector<1x3x16xbf16> to vector<3x16xbf16>
    %cst_26 = arith.constant dense<0.000000e+00> : vector<256x16xf32>
    %42 = tpu.matmul %39, %41, %cst_26 {dimension_numbers = #tpu.dot_dimension_numbers<[1], [0], [0], [1], [0, 0, 1, 1], [], []>} : vector<256x3xbf16>, vector<3x16xbf16>, vector<256x16xf32> -> vector<256x16xf32>
    %43 = arith.addf %33, %42 : vector<256x16xf32>
    %44 = arith.truncf %2 : vector<256x3xf32> to vector<256x3xbf16>
    %c4 = arith.constant 4 : index
    %c0_27 = arith.constant 0 : index
    %c0_28 = arith.constant 0 : index
    %45 = vector.load %arg3[%c4, %c0_27, %c0_28] : memref<9x3x16xbf16, #tpu.memory_space<vmem>>, vector<1x3x16xbf16>
    %46 = vector.shape_cast %45 : vector<1x3x16xbf16> to vector<3x16xbf16>
    %cst_29 = arith.constant dense<0.000000e+00> : vector<256x16xf32>
    %47 = tpu.matmul %44, %46, %cst_29 {dimension_numbers = #tpu.dot_dimension_numbers<[1], [0], [0], [1], [0, 0, 1, 1], [], []>} : vector<256x3xbf16>, vector<3x16xbf16>, vector<256x16xf32> -> vector<256x16xf32>
    %48 = arith.addf %43, %47 : vector<256x16xf32>
    %c255_i32 = arith.constant 255 : i32
    %49 = tpu.dynamic_rotate %2 by %c255_i32 dim 0 : vector<256x3xf32>, i32 -> vector<256x3xf32>
    %c5 = arith.constant 5 : index
    %c0_30 = arith.constant 0 : index
    %c0_31 = arith.constant 0 : index
    %50 = vector.load %arg2[%c5, %c0_30, %c0_31] : memref<9x256x1xf32, #tpu.memory_space<vmem>>, vector<1x256x1xf32>
    %51 = vector.shape_cast %50 : vector<1x256x1xf32> to vector<256x1xf32>
    %52 = vector.broadcast %51 : vector<256x1xf32> to vector<256x3xf32>
    %53 = arith.mulf %49, %52 : vector<256x3xf32>
    %54 = arith.truncf %53 : vector<256x3xf32> to vector<256x3xbf16>
    %c5_32 = arith.constant 5 : index
    %c0_33 = arith.constant 0 : index
    %c0_34 = arith.constant 0 : index
    %55 = vector.load %arg3[%c5_32, %c0_33, %c0_34] : memref<9x3x16xbf16, #tpu.memory_space<vmem>>, vector<1x3x16xbf16>
    %56 = vector.shape_cast %55 : vector<1x3x16xbf16> to vector<3x16xbf16>
    %cst_35 = arith.constant dense<0.000000e+00> : vector<256x16xf32>
    %57 = tpu.matmul %54, %56, %cst_35 {dimension_numbers = #tpu.dot_dimension_numbers<[1], [0], [0], [1], [0, 0, 1, 1], [], []>} : vector<256x3xbf16>, vector<3x16xbf16>, vector<256x16xf32> -> vector<256x16xf32>
    %58 = arith.addf %48, %57 : vector<256x16xf32>
    %c241_i32 = arith.constant 241 : i32
    %59 = tpu.dynamic_rotate %2 by %c241_i32 dim 0 : vector<256x3xf32>, i32 -> vector<256x3xf32>
    %c6 = arith.constant 6 : index
    %c0_36 = arith.constant 0 : index
    %c0_37 = arith.constant 0 : index
    %60 = vector.load %arg2[%c6, %c0_36, %c0_37] : memref<9x256x1xf32, #tpu.memory_space<vmem>>, vector<1x256x1xf32>
    %61 = vector.shape_cast %60 : vector<1x256x1xf32> to vector<256x1xf32>
    %62 = vector.broadcast %61 : vector<256x1xf32> to vector<256x3xf32>
    %63 = arith.mulf %59, %62 : vector<256x3xf32>
    %64 = arith.truncf %63 : vector<256x3xf32> to vector<256x3xbf16>
    %c6_38 = arith.constant 6 : index
    %c0_39 = arith.constant 0 : index
    %c0_40 = arith.constant 0 : index
    %65 = vector.load %arg3[%c6_38, %c0_39, %c0_40] : memref<9x3x16xbf16, #tpu.memory_space<vmem>>, vector<1x3x16xbf16>
    %66 = vector.shape_cast %65 : vector<1x3x16xbf16> to vector<3x16xbf16>
    %cst_41 = arith.constant dense<0.000000e+00> : vector<256x16xf32>
    %67 = tpu.matmul %64, %66, %cst_41 {dimension_numbers = #tpu.dot_dimension_numbers<[1], [0], [0], [1], [0, 0, 1, 1], [], []>} : vector<256x3xbf16>, vector<3x16xbf16>, vector<256x16xf32> -> vector<256x16xf32>
    %68 = arith.addf %58, %67 : vector<256x16xf32>
    %c240_i32 = arith.constant 240 : i32
    %69 = tpu.dynamic_rotate %2 by %c240_i32 dim 0 : vector<256x3xf32>, i32 -> vector<256x3xf32>
    %c7 = arith.constant 7 : index
    %c0_42 = arith.constant 0 : index
    %c0_43 = arith.constant 0 : index
    %70 = vector.load %arg2[%c7, %c0_42, %c0_43] : memref<9x256x1xf32, #tpu.memory_space<vmem>>, vector<1x256x1xf32>
    %71 = vector.shape_cast %70 : vector<1x256x1xf32> to vector<256x1xf32>
    %72 = vector.broadcast %71 : vector<256x1xf32> to vector<256x3xf32>
    %73 = arith.mulf %69, %72 : vector<256x3xf32>
    %74 = arith.truncf %73 : vector<256x3xf32> to vector<256x3xbf16>
    %c7_44 = arith.constant 7 : index
    %c0_45 = arith.constant 0 : index
    %c0_46 = arith.constant 0 : index
    %75 = vector.load %arg3[%c7_44, %c0_45, %c0_46] : memref<9x3x16xbf16, #tpu.memory_space<vmem>>, vector<1x3x16xbf16>
    %76 = vector.shape_cast %75 : vector<1x3x16xbf16> to vector<3x16xbf16>
    %cst_47 = arith.constant dense<0.000000e+00> : vector<256x16xf32>
    %77 = tpu.matmul %74, %76, %cst_47 {dimension_numbers = #tpu.dot_dimension_numbers<[1], [0], [0], [1], [0, 0, 1, 1], [], []>} : vector<256x3xbf16>, vector<3x16xbf16>, vector<256x16xf32> -> vector<256x16xf32>
    %78 = arith.addf %68, %77 : vector<256x16xf32>
    %c239_i32 = arith.constant 239 : i32
    %79 = tpu.dynamic_rotate %2 by %c239_i32 dim 0 : vector<256x3xf32>, i32 -> vector<256x3xf32>
    %c8 = arith.constant 8 : index
    %c0_48 = arith.constant 0 : index
    %c0_49 = arith.constant 0 : index
    %80 = vector.load %arg2[%c8, %c0_48, %c0_49] : memref<9x256x1xf32, #tpu.memory_space<vmem>>, vector<1x256x1xf32>
    %81 = vector.shape_cast %80 : vector<1x256x1xf32> to vector<256x1xf32>
    %82 = vector.broadcast %81 : vector<256x1xf32> to vector<256x3xf32>
    %83 = arith.mulf %79, %82 : vector<256x3xf32>
    %84 = arith.truncf %83 : vector<256x3xf32> to vector<256x3xbf16>
    %c8_50 = arith.constant 8 : index
    %c0_51 = arith.constant 0 : index
    %c0_52 = arith.constant 0 : index
    %85 = vector.load %arg3[%c8_50, %c0_51, %c0_52] : memref<9x3x16xbf16, #tpu.memory_space<vmem>>, vector<1x3x16xbf16>
    %86 = vector.shape_cast %85 : vector<1x3x16xbf16> to vector<3x16xbf16>
    %cst_53 = arith.constant dense<0.000000e+00> : vector<256x16xf32>
    %87 = tpu.matmul %84, %86, %cst_53 {dimension_numbers = #tpu.dot_dimension_numbers<[1], [0], [0], [1], [0, 0, 1, 1], [], []>} : vector<256x3xbf16>, vector<3x16xbf16>, vector<256x16xf32> -> vector<256x16xf32>
    %88 = arith.addf %78, %87 : vector<256x16xf32>
    %c0_54 = arith.constant 0 : index
    %c0_55 = arith.constant 0 : index
    %89 = vector.load %arg4[%c0_54, %c0_55] : memref<1x16xf32, #tpu.memory_space<vmem>>, vector<1x16xf32>
    %90 = vector.broadcast %89 : vector<1x16xf32> to vector<256x16xf32>
    %91 = arith.addf %88, %90 : vector<256x16xf32>
    %cst_56 = arith.constant 0.000000e+00 : f32
    %92 = vector.broadcast %cst_56 : f32 to vector<256x16xf32>
    %93 = arith.maximumf %91, %92 : vector<256x16xf32>
    %cst_57 = arith.constant 0.000000e+00 : f32
    %94 = vector.broadcast %cst_57 : f32 to vector<256x32xf32>
    %c17_i32_58 = arith.constant 17 : i32
    %95 = tpu.dynamic_rotate %93 by %c17_i32_58 dim 0 : vector<256x16xf32>, i32 -> vector<256x16xf32>
    %c0_59 = arith.constant 0 : index
    %c0_60 = arith.constant 0 : index
    %c0_61 = arith.constant 0 : index
    %96 = vector.load %arg2[%c0_59, %c0_60, %c0_61] : memref<9x256x1xf32, #tpu.memory_space<vmem>>, vector<1x256x1xf32>
    %97 = vector.shape_cast %96 : vector<1x256x1xf32> to vector<256x1xf32>
    %98 = vector.broadcast %97 : vector<256x1xf32> to vector<256x16xf32>
    %99 = arith.mulf %95, %98 : vector<256x16xf32>
    %100 = arith.truncf %99 : vector<256x16xf32> to vector<256x16xbf16>
    %c0_62 = arith.constant 0 : index
    %c0_63 = arith.constant 0 : index
    %c0_64 = arith.constant 0 : index
    %101 = vector.load %arg5[%c0_62, %c0_63, %c0_64] : memref<9x16x32xbf16, #tpu.memory_space<vmem>>, vector<1x16x32xbf16>
    %102 = vector.shape_cast %101 : vector<1x16x32xbf16> to vector<16x32xbf16>
    %cst_65 = arith.constant dense<0.000000e+00> : vector<256x32xf32>
    %103 = tpu.matmul %100, %102, %cst_65 {dimension_numbers = #tpu.dot_dimension_numbers<[1], [0], [0], [1], [0, 0, 1, 1], [], []>} : vector<256x16xbf16>, vector<16x32xbf16>, vector<256x32xf32> -> vector<256x32xf32>
    %104 = arith.addf %94, %103 : vector<256x32xf32>
    %c16_i32_66 = arith.constant 16 : i32
    %105 = tpu.dynamic_rotate %93 by %c16_i32_66 dim 0 : vector<256x16xf32>, i32 -> vector<256x16xf32>
    %c1_67 = arith.constant 1 : index
    %c0_68 = arith.constant 0 : index
    %c0_69 = arith.constant 0 : index
    %106 = vector.load %arg2[%c1_67, %c0_68, %c0_69] : memref<9x256x1xf32, #tpu.memory_space<vmem>>, vector<1x256x1xf32>
    %107 = vector.shape_cast %106 : vector<1x256x1xf32> to vector<256x1xf32>
    %108 = vector.broadcast %107 : vector<256x1xf32> to vector<256x16xf32>
    %109 = arith.mulf %105, %108 : vector<256x16xf32>
    %110 = arith.truncf %109 : vector<256x16xf32> to vector<256x16xbf16>
    %c1_70 = arith.constant 1 : index
    %c0_71 = arith.constant 0 : index
    %c0_72 = arith.constant 0 : index
    %111 = vector.load %arg5[%c1_70, %c0_71, %c0_72] : memref<9x16x32xbf16, #tpu.memory_space<vmem>>, vector<1x16x32xbf16>
    %112 = vector.shape_cast %111 : vector<1x16x32xbf16> to vector<16x32xbf16>
    %cst_73 = arith.constant dense<0.000000e+00> : vector<256x32xf32>
    %113 = tpu.matmul %110, %112, %cst_73 {dimension_numbers = #tpu.dot_dimension_numbers<[1], [0], [0], [1], [0, 0, 1, 1], [], []>} : vector<256x16xbf16>, vector<16x32xbf16>, vector<256x32xf32> -> vector<256x32xf32>
    %114 = arith.addf %104, %113 : vector<256x32xf32>
    %c15_i32_74 = arith.constant 15 : i32
    %115 = tpu.dynamic_rotate %93 by %c15_i32_74 dim 0 : vector<256x16xf32>, i32 -> vector<256x16xf32>
    %c2_75 = arith.constant 2 : index
    %c0_76 = arith.constant 0 : index
    %c0_77 = arith.constant 0 : index
    %116 = vector.load %arg2[%c2_75, %c0_76, %c0_77] : memref<9x256x1xf32, #tpu.memory_space<vmem>>, vector<1x256x1xf32>
    %117 = vector.shape_cast %116 : vector<1x256x1xf32> to vector<256x1xf32>
    %118 = vector.broadcast %117 : vector<256x1xf32> to vector<256x16xf32>
    %119 = arith.mulf %115, %118 : vector<256x16xf32>
    %120 = arith.truncf %119 : vector<256x16xf32> to vector<256x16xbf16>
    %c2_78 = arith.constant 2 : index
    %c0_79 = arith.constant 0 : index
    %c0_80 = arith.constant 0 : index
    %121 = vector.load %arg5[%c2_78, %c0_79, %c0_80] : memref<9x16x32xbf16, #tpu.memory_space<vmem>>, vector<1x16x32xbf16>
    %122 = vector.shape_cast %121 : vector<1x16x32xbf16> to vector<16x32xbf16>
    %cst_81 = arith.constant dense<0.000000e+00> : vector<256x32xf32>
    %123 = tpu.matmul %120, %122, %cst_81 {dimension_numbers = #tpu.dot_dimension_numbers<[1], [0], [0], [1], [0, 0, 1, 1], [], []>} : vector<256x16xbf16>, vector<16x32xbf16>, vector<256x32xf32> -> vector<256x32xf32>
    %124 = arith.addf %114, %123 : vector<256x32xf32>
    %c1_i32_82 = arith.constant 1 : i32
    %125 = tpu.dynamic_rotate %93 by %c1_i32_82 dim 0 : vector<256x16xf32>, i32 -> vector<256x16xf32>
    %c3_83 = arith.constant 3 : index
    %c0_84 = arith.constant 0 : index
    %c0_85 = arith.constant 0 : index
    %126 = vector.load %arg2[%c3_83, %c0_84, %c0_85] : memref<9x256x1xf32, #tpu.memory_space<vmem>>, vector<1x256x1xf32>
    %127 = vector.shape_cast %126 : vector<1x256x1xf32> to vector<256x1xf32>
    %128 = vector.broadcast %127 : vector<256x1xf32> to vector<256x16xf32>
    %129 = arith.mulf %125, %128 : vector<256x16xf32>
    %130 = arith.truncf %129 : vector<256x16xf32> to vector<256x16xbf16>
    %c3_86 = arith.constant 3 : index
    %c0_87 = arith.constant 0 : index
    %c0_88 = arith.constant 0 : index
    %131 = vector.load %arg5[%c3_86, %c0_87, %c0_88] : memref<9x16x32xbf16, #tpu.memory_space<vmem>>, vector<1x16x32xbf16>
    %132 = vector.shape_cast %131 : vector<1x16x32xbf16> to vector<16x32xbf16>
    %cst_89 = arith.constant dense<0.000000e+00> : vector<256x32xf32>
    %133 = tpu.matmul %130, %132, %cst_89 {dimension_numbers = #tpu.dot_dimension_numbers<[1], [0], [0], [1], [0, 0, 1, 1], [], []>} : vector<256x16xbf16>, vector<16x32xbf16>, vector<256x32xf32> -> vector<256x32xf32>
    %134 = arith.addf %124, %133 : vector<256x32xf32>
    %135 = arith.truncf %93 : vector<256x16xf32> to vector<256x16xbf16>
    %c4_90 = arith.constant 4 : index
    %c0_91 = arith.constant 0 : index
    %c0_92 = arith.constant 0 : index
    %136 = vector.load %arg5[%c4_90, %c0_91, %c0_92] : memref<9x16x32xbf16, #tpu.memory_space<vmem>>, vector<1x16x32xbf16>
    %137 = vector.shape_cast %136 : vector<1x16x32xbf16> to vector<16x32xbf16>
    %cst_93 = arith.constant dense<0.000000e+00> : vector<256x32xf32>
    %138 = tpu.matmul %135, %137, %cst_93 {dimension_numbers = #tpu.dot_dimension_numbers<[1], [0], [0], [1], [0, 0, 1, 1], [], []>} : vector<256x16xbf16>, vector<16x32xbf16>, vector<256x32xf32> -> vector<256x32xf32>
    %139 = arith.addf %134, %138 : vector<256x32xf32>
    %c255_i32_94 = arith.constant 255 : i32
    %140 = tpu.dynamic_rotate %93 by %c255_i32_94 dim 0 : vector<256x16xf32>, i32 -> vector<256x16xf32>
    %c5_95 = arith.constant 5 : index
    %c0_96 = arith.constant 0 : index
    %c0_97 = arith.constant 0 : index
    %141 = vector.load %arg2[%c5_95, %c0_96, %c0_97] : memref<9x256x1xf32, #tpu.memory_space<vmem>>, vector<1x256x1xf32>
    %142 = vector.shape_cast %141 : vector<1x256x1xf32> to vector<256x1xf32>
    %143 = vector.broadcast %142 : vector<256x1xf32> to vector<256x16xf32>
    %144 = arith.mulf %140, %143 : vector<256x16xf32>
    %145 = arith.truncf %144 : vector<256x16xf32> to vector<256x16xbf16>
    %c5_98 = arith.constant 5 : index
    %c0_99 = arith.constant 0 : index
    %c0_100 = arith.constant 0 : index
    %146 = vector.load %arg5[%c5_98, %c0_99, %c0_100] : memref<9x16x32xbf16, #tpu.memory_space<vmem>>, vector<1x16x32xbf16>
    %147 = vector.shape_cast %146 : vector<1x16x32xbf16> to vector<16x32xbf16>
    %cst_101 = arith.constant dense<0.000000e+00> : vector<256x32xf32>
    %148 = tpu.matmul %145, %147, %cst_101 {dimension_numbers = #tpu.dot_dimension_numbers<[1], [0], [0], [1], [0, 0, 1, 1], [], []>} : vector<256x16xbf16>, vector<16x32xbf16>, vector<256x32xf32> -> vector<256x32xf32>
    %149 = arith.addf %139, %148 : vector<256x32xf32>
    %c241_i32_102 = arith.constant 241 : i32
    %150 = tpu.dynamic_rotate %93 by %c241_i32_102 dim 0 : vector<256x16xf32>, i32 -> vector<256x16xf32>
    %c6_103 = arith.constant 6 : index
    %c0_104 = arith.constant 0 : index
    %c0_105 = arith.constant 0 : index
    %151 = vector.load %arg2[%c6_103, %c0_104, %c0_105] : memref<9x256x1xf32, #tpu.memory_space<vmem>>, vector<1x256x1xf32>
    %152 = vector.shape_cast %151 : vector<1x256x1xf32> to vector<256x1xf32>
    %153 = vector.broadcast %152 : vector<256x1xf32> to vector<256x16xf32>
    %154 = arith.mulf %150, %153 : vector<256x16xf32>
    %155 = arith.truncf %154 : vector<256x16xf32> to vector<256x16xbf16>
    %c6_106 = arith.constant 6 : index
    %c0_107 = arith.constant 0 : index
    %c0_108 = arith.constant 0 : index
    %156 = vector.load %arg5[%c6_106, %c0_107, %c0_108] : memref<9x16x32xbf16, #tpu.memory_space<vmem>>, vector<1x16x32xbf16>
    %157 = vector.shape_cast %156 : vector<1x16x32xbf16> to vector<16x32xbf16>
    %cst_109 = arith.constant dense<0.000000e+00> : vector<256x32xf32>
    %158 = tpu.matmul %155, %157, %cst_109 {dimension_numbers = #tpu.dot_dimension_numbers<[1], [0], [0], [1], [0, 0, 1, 1], [], []>} : vector<256x16xbf16>, vector<16x32xbf16>, vector<256x32xf32> -> vector<256x32xf32>
    %159 = arith.addf %149, %158 : vector<256x32xf32>
    %c240_i32_110 = arith.constant 240 : i32
    %160 = tpu.dynamic_rotate %93 by %c240_i32_110 dim 0 : vector<256x16xf32>, i32 -> vector<256x16xf32>
    %c7_111 = arith.constant 7 : index
    %c0_112 = arith.constant 0 : index
    %c0_113 = arith.constant 0 : index
    %161 = vector.load %arg2[%c7_111, %c0_112, %c0_113] : memref<9x256x1xf32, #tpu.memory_space<vmem>>, vector<1x256x1xf32>
    %162 = vector.shape_cast %161 : vector<1x256x1xf32> to vector<256x1xf32>
    %163 = vector.broadcast %162 : vector<256x1xf32> to vector<256x16xf32>
    %164 = arith.mulf %160, %163 : vector<256x16xf32>
    %165 = arith.truncf %164 : vector<256x16xf32> to vector<256x16xbf16>
    %c7_114 = arith.constant 7 : index
    %c0_115 = arith.constant 0 : index
    %c0_116 = arith.constant 0 : index
    %166 = vector.load %arg5[%c7_114, %c0_115, %c0_116] : memref<9x16x32xbf16, #tpu.memory_space<vmem>>, vector<1x16x32xbf16>
    %167 = vector.shape_cast %166 : vector<1x16x32xbf16> to vector<16x32xbf16>
    %cst_117 = arith.constant dense<0.000000e+00> : vector<256x32xf32>
    %168 = tpu.matmul %165, %167, %cst_117 {dimension_numbers = #tpu.dot_dimension_numbers<[1], [0], [0], [1], [0, 0, 1, 1], [], []>} : vector<256x16xbf16>, vector<16x32xbf16>, vector<256x32xf32> -> vector<256x32xf32>
    %169 = arith.addf %159, %168 : vector<256x32xf32>
    %c239_i32_118 = arith.constant 239 : i32
    %170 = tpu.dynamic_rotate %93 by %c239_i32_118 dim 0 : vector<256x16xf32>, i32 -> vector<256x16xf32>
    %c8_119 = arith.constant 8 : index
    %c0_120 = arith.constant 0 : index
    %c0_121 = arith.constant 0 : index
    %171 = vector.load %arg2[%c8_119, %c0_120, %c0_121] : memref<9x256x1xf32, #tpu.memory_space<vmem>>, vector<1x256x1xf32>
    %172 = vector.shape_cast %171 : vector<1x256x1xf32> to vector<256x1xf32>
    %173 = vector.broadcast %172 : vector<256x1xf32> to vector<256x16xf32>
    %174 = arith.mulf %170, %173 : vector<256x16xf32>
    %175 = arith.truncf %174 : vector<256x16xf32> to vector<256x16xbf16>
    %c8_122 = arith.constant 8 : index
    %c0_123 = arith.constant 0 : index
    %c0_124 = arith.constant 0 : index
    %176 = vector.load %arg5[%c8_122, %c0_123, %c0_124] : memref<9x16x32xbf16, #tpu.memory_space<vmem>>, vector<1x16x32xbf16>
    %177 = vector.shape_cast %176 : vector<1x16x32xbf16> to vector<16x32xbf16>
    %cst_125 = arith.constant dense<0.000000e+00> : vector<256x32xf32>
    %178 = tpu.matmul %175, %177, %cst_125 {dimension_numbers = #tpu.dot_dimension_numbers<[1], [0], [0], [1], [0, 0, 1, 1], [], []>} : vector<256x16xbf16>, vector<16x32xbf16>, vector<256x32xf32> -> vector<256x32xf32>
    %179 = arith.addf %169, %178 : vector<256x32xf32>
    %c0_126 = arith.constant 0 : index
    %c0_127 = arith.constant 0 : index
    %180 = vector.load %arg6[%c0_126, %c0_127] : memref<1x32xf32, #tpu.memory_space<vmem>>, vector<1x32xf32>
    %181 = vector.broadcast %180 : vector<1x32xf32> to vector<256x32xf32>
    %182 = arith.addf %179, %181 : vector<256x32xf32>
    %cst_128 = arith.constant 0.000000e+00 : f32
    %183 = vector.broadcast %cst_128 : f32 to vector<256x32xf32>
    %184 = arith.maximumf %182, %183 : vector<256x32xf32>
    %cst_129 = arith.constant 0.000000e+00 : f32
    %185 = vector.broadcast %cst_129 : f32 to vector<256x32xf32>
    %c17_i32_130 = arith.constant 17 : i32
    %186 = tpu.dynamic_rotate %184 by %c17_i32_130 dim 0 : vector<256x32xf32>, i32 -> vector<256x32xf32>
    %c0_131 = arith.constant 0 : index
    %c0_132 = arith.constant 0 : index
    %c0_133 = arith.constant 0 : index
    %187 = vector.load %arg2[%c0_131, %c0_132, %c0_133] : memref<9x256x1xf32, #tpu.memory_space<vmem>>, vector<1x256x1xf32>
    %188 = vector.shape_cast %187 : vector<1x256x1xf32> to vector<256x1xf32>
    %189 = vector.broadcast %188 : vector<256x1xf32> to vector<256x32xf32>
    %190 = arith.mulf %186, %189 : vector<256x32xf32>
    %191 = arith.truncf %190 : vector<256x32xf32> to vector<256x32xbf16>
    %c0_134 = arith.constant 0 : index
    %c0_135 = arith.constant 0 : index
    %c0_136 = arith.constant 0 : index
    %192 = vector.load %arg7[%c0_134, %c0_135, %c0_136] : memref<9x32x32xbf16, #tpu.memory_space<vmem>>, vector<1x32x32xbf16>
    %193 = vector.shape_cast %192 : vector<1x32x32xbf16> to vector<32x32xbf16>
    %cst_137 = arith.constant dense<0.000000e+00> : vector<256x32xf32>
    %194 = tpu.matmul %191, %193, %cst_137 {dimension_numbers = #tpu.dot_dimension_numbers<[1], [0], [0], [1], [0, 0, 1, 1], [], []>} : vector<256x32xbf16>, vector<32x32xbf16>, vector<256x32xf32> -> vector<256x32xf32>
    %195 = arith.addf %185, %194 : vector<256x32xf32>
    %c16_i32_138 = arith.constant 16 : i32
    %196 = tpu.dynamic_rotate %184 by %c16_i32_138 dim 0 : vector<256x32xf32>, i32 -> vector<256x32xf32>
    %c1_139 = arith.constant 1 : index
    %c0_140 = arith.constant 0 : index
    %c0_141 = arith.constant 0 : index
    %197 = vector.load %arg2[%c1_139, %c0_140, %c0_141] : memref<9x256x1xf32, #tpu.memory_space<vmem>>, vector<1x256x1xf32>
    %198 = vector.shape_cast %197 : vector<1x256x1xf32> to vector<256x1xf32>
    %199 = vector.broadcast %198 : vector<256x1xf32> to vector<256x32xf32>
    %200 = arith.mulf %196, %199 : vector<256x32xf32>
    %201 = arith.truncf %200 : vector<256x32xf32> to vector<256x32xbf16>
    %c1_142 = arith.constant 1 : index
    %c0_143 = arith.constant 0 : index
    %c0_144 = arith.constant 0 : index
    %202 = vector.load %arg7[%c1_142, %c0_143, %c0_144] : memref<9x32x32xbf16, #tpu.memory_space<vmem>>, vector<1x32x32xbf16>
    %203 = vector.shape_cast %202 : vector<1x32x32xbf16> to vector<32x32xbf16>
    %cst_145 = arith.constant dense<0.000000e+00> : vector<256x32xf32>
    %204 = tpu.matmul %201, %203, %cst_145 {dimension_numbers = #tpu.dot_dimension_numbers<[1], [0], [0], [1], [0, 0, 1, 1], [], []>} : vector<256x32xbf16>, vector<32x32xbf16>, vector<256x32xf32> -> vector<256x32xf32>
    %205 = arith.addf %195, %204 : vector<256x32xf32>
    %c15_i32_146 = arith.constant 15 : i32
    %206 = tpu.dynamic_rotate %184 by %c15_i32_146 dim 0 : vector<256x32xf32>, i32 -> vector<256x32xf32>
    %c2_147 = arith.constant 2 : index
    %c0_148 = arith.constant 0 : index
    %c0_149 = arith.constant 0 : index
    %207 = vector.load %arg2[%c2_147, %c0_148, %c0_149] : memref<9x256x1xf32, #tpu.memory_space<vmem>>, vector<1x256x1xf32>
    %208 = vector.shape_cast %207 : vector<1x256x1xf32> to vector<256x1xf32>
    %209 = vector.broadcast %208 : vector<256x1xf32> to vector<256x32xf32>
    %210 = arith.mulf %206, %209 : vector<256x32xf32>
    %211 = arith.truncf %210 : vector<256x32xf32> to vector<256x32xbf16>
    %c2_150 = arith.constant 2 : index
    %c0_151 = arith.constant 0 : index
    %c0_152 = arith.constant 0 : index
    %212 = vector.load %arg7[%c2_150, %c0_151, %c0_152] : memref<9x32x32xbf16, #tpu.memory_space<vmem>>, vector<1x32x32xbf16>
    %213 = vector.shape_cast %212 : vector<1x32x32xbf16> to vector<32x32xbf16>
    %cst_153 = arith.constant dense<0.000000e+00> : vector<256x32xf32>
    %214 = tpu.matmul %211, %213, %cst_153 {dimension_numbers = #tpu.dot_dimension_numbers<[1], [0], [0], [1], [0, 0, 1, 1], [], []>} : vector<256x32xbf16>, vector<32x32xbf16>, vector<256x32xf32> -> vector<256x32xf32>
    %215 = arith.addf %205, %214 : vector<256x32xf32>
    %c1_i32_154 = arith.constant 1 : i32
    %216 = tpu.dynamic_rotate %184 by %c1_i32_154 dim 0 : vector<256x32xf32>, i32 -> vector<256x32xf32>
    %c3_155 = arith.constant 3 : index
    %c0_156 = arith.constant 0 : index
    %c0_157 = arith.constant 0 : index
    %217 = vector.load %arg2[%c3_155, %c0_156, %c0_157] : memref<9x256x1xf32, #tpu.memory_space<vmem>>, vector<1x256x1xf32>
    %218 = vector.shape_cast %217 : vector<1x256x1xf32> to vector<256x1xf32>
    %219 = vector.broadcast %218 : vector<256x1xf32> to vector<256x32xf32>
    %220 = arith.mulf %216, %219 : vector<256x32xf32>
    %221 = arith.truncf %220 : vector<256x32xf32> to vector<256x32xbf16>
    %c3_158 = arith.constant 3 : index
    %c0_159 = arith.constant 0 : index
    %c0_160 = arith.constant 0 : index
    %222 = vector.load %arg7[%c3_158, %c0_159, %c0_160] : memref<9x32x32xbf16, #tpu.memory_space<vmem>>, vector<1x32x32xbf16>
    %223 = vector.shape_cast %222 : vector<1x32x32xbf16> to vector<32x32xbf16>
    %cst_161 = arith.constant dense<0.000000e+00> : vector<256x32xf32>
    %224 = tpu.matmul %221, %223, %cst_161 {dimension_numbers = #tpu.dot_dimension_numbers<[1], [0], [0], [1], [0, 0, 1, 1], [], []>} : vector<256x32xbf16>, vector<32x32xbf16>, vector<256x32xf32> -> vector<256x32xf32>
    %225 = arith.addf %215, %224 : vector<256x32xf32>
    %226 = arith.truncf %184 : vector<256x32xf32> to vector<256x32xbf16>
    %c4_162 = arith.constant 4 : index
    %c0_163 = arith.constant 0 : index
    %c0_164 = arith.constant 0 : index
    %227 = vector.load %arg7[%c4_162, %c0_163, %c0_164] : memref<9x32x32xbf16, #tpu.memory_space<vmem>>, vector<1x32x32xbf16>
    %228 = vector.shape_cast %227 : vector<1x32x32xbf16> to vector<32x32xbf16>
    %cst_165 = arith.constant dense<0.000000e+00> : vector<256x32xf32>
    %229 = tpu.matmul %226, %228, %cst_165 {dimension_numbers = #tpu.dot_dimension_numbers<[1], [0], [0], [1], [0, 0, 1, 1], [], []>} : vector<256x32xbf16>, vector<32x32xbf16>, vector<256x32xf32> -> vector<256x32xf32>
    %230 = arith.addf %225, %229 : vector<256x32xf32>
    %c255_i32_166 = arith.constant 255 : i32
    %231 = tpu.dynamic_rotate %184 by %c255_i32_166 dim 0 : vector<256x32xf32>, i32 -> vector<256x32xf32>
    %c5_167 = arith.constant 5 : index
    %c0_168 = arith.constant 0 : index
    %c0_169 = arith.constant 0 : index
    %232 = vector.load %arg2[%c5_167, %c0_168, %c0_169] : memref<9x256x1xf32, #tpu.memory_space<vmem>>, vector<1x256x1xf32>
    %233 = vector.shape_cast %232 : vector<1x256x1xf32> to vector<256x1xf32>
    %234 = vector.broadcast %233 : vector<256x1xf32> to vector<256x32xf32>
    %235 = arith.mulf %231, %234 : vector<256x32xf32>
    %236 = arith.truncf %235 : vector<256x32xf32> to vector<256x32xbf16>
    %c5_170 = arith.constant 5 : index
    %c0_171 = arith.constant 0 : index
    %c0_172 = arith.constant 0 : index
    %237 = vector.load %arg7[%c5_170, %c0_171, %c0_172] : memref<9x32x32xbf16, #tpu.memory_space<vmem>>, vector<1x32x32xbf16>
    %238 = vector.shape_cast %237 : vector<1x32x32xbf16> to vector<32x32xbf16>
    %cst_173 = arith.constant dense<0.000000e+00> : vector<256x32xf32>
    %239 = tpu.matmul %236, %238, %cst_173 {dimension_numbers = #tpu.dot_dimension_numbers<[1], [0], [0], [1], [0, 0, 1, 1], [], []>} : vector<256x32xbf16>, vector<32x32xbf16>, vector<256x32xf32> -> vector<256x32xf32>
    %240 = arith.addf %230, %239 : vector<256x32xf32>
    %c241_i32_174 = arith.constant 241 : i32
    %241 = tpu.dynamic_rotate %184 by %c241_i32_174 dim 0 : vector<256x32xf32>, i32 -> vector<256x32xf32>
    %c6_175 = arith.constant 6 : index
    %c0_176 = arith.constant 0 : index
    %c0_177 = arith.constant 0 : index
    %242 = vector.load %arg2[%c6_175, %c0_176, %c0_177] : memref<9x256x1xf32, #tpu.memory_space<vmem>>, vector<1x256x1xf32>
    %243 = vector.shape_cast %242 : vector<1x256x1xf32> to vector<256x1xf32>
    %244 = vector.broadcast %243 : vector<256x1xf32> to vector<256x32xf32>
    %245 = arith.mulf %241, %244 : vector<256x32xf32>
    %246 = arith.truncf %245 : vector<256x32xf32> to vector<256x32xbf16>
    %c6_178 = arith.constant 6 : index
    %c0_179 = arith.constant 0 : index
    %c0_180 = arith.constant 0 : index
    %247 = vector.load %arg7[%c6_178, %c0_179, %c0_180] : memref<9x32x32xbf16, #tpu.memory_space<vmem>>, vector<1x32x32xbf16>
    %248 = vector.shape_cast %247 : vector<1x32x32xbf16> to vector<32x32xbf16>
    %cst_181 = arith.constant dense<0.000000e+00> : vector<256x32xf32>
    %249 = tpu.matmul %246, %248, %cst_181 {dimension_numbers = #tpu.dot_dimension_numbers<[1], [0], [0], [1], [0, 0, 1, 1], [], []>} : vector<256x32xbf16>, vector<32x32xbf16>, vector<256x32xf32> -> vector<256x32xf32>
    %250 = arith.addf %240, %249 : vector<256x32xf32>
    %c240_i32_182 = arith.constant 240 : i32
    %251 = tpu.dynamic_rotate %184 by %c240_i32_182 dim 0 : vector<256x32xf32>, i32 -> vector<256x32xf32>
    %c7_183 = arith.constant 7 : index
    %c0_184 = arith.constant 0 : index
    %c0_185 = arith.constant 0 : index
    %252 = vector.load %arg2[%c7_183, %c0_184, %c0_185] : memref<9x256x1xf32, #tpu.memory_space<vmem>>, vector<1x256x1xf32>
    %253 = vector.shape_cast %252 : vector<1x256x1xf32> to vector<256x1xf32>
    %254 = vector.broadcast %253 : vector<256x1xf32> to vector<256x32xf32>
    %255 = arith.mulf %251, %254 : vector<256x32xf32>
    %256 = arith.truncf %255 : vector<256x32xf32> to vector<256x32xbf16>
    %c7_186 = arith.constant 7 : index
    %c0_187 = arith.constant 0 : index
    %c0_188 = arith.constant 0 : index
    %257 = vector.load %arg7[%c7_186, %c0_187, %c0_188] : memref<9x32x32xbf16, #tpu.memory_space<vmem>>, vector<1x32x32xbf16>
    %258 = vector.shape_cast %257 : vector<1x32x32xbf16> to vector<32x32xbf16>
    %cst_189 = arith.constant dense<0.000000e+00> : vector<256x32xf32>
    %259 = tpu.matmul %256, %258, %cst_189 {dimension_numbers = #tpu.dot_dimension_numbers<[1], [0], [0], [1], [0, 0, 1, 1], [], []>} : vector<256x32xbf16>, vector<32x32xbf16>, vector<256x32xf32> -> vector<256x32xf32>
    %260 = arith.addf %250, %259 : vector<256x32xf32>
    %c239_i32_190 = arith.constant 239 : i32
    %261 = tpu.dynamic_rotate %184 by %c239_i32_190 dim 0 : vector<256x32xf32>, i32 -> vector<256x32xf32>
    %c8_191 = arith.constant 8 : index
    %c0_192 = arith.constant 0 : index
    %c0_193 = arith.constant 0 : index
    %262 = vector.load %arg2[%c8_191, %c0_192, %c0_193] : memref<9x256x1xf32, #tpu.memory_space<vmem>>, vector<1x256x1xf32>
    %263 = vector.shape_cast %262 : vector<1x256x1xf32> to vector<256x1xf32>
    %264 = vector.broadcast %263 : vector<256x1xf32> to vector<256x32xf32>
    %265 = arith.mulf %261, %264 : vector<256x32xf32>
    %266 = arith.truncf %265 : vector<256x32xf32> to vector<256x32xbf16>
    %c8_194 = arith.constant 8 : index
    %c0_195 = arith.constant 0 : index
    %c0_196 = arith.constant 0 : index
    %267 = vector.load %arg7[%c8_194, %c0_195, %c0_196] : memref<9x32x32xbf16, #tpu.memory_space<vmem>>, vector<1x32x32xbf16>
    %268 = vector.shape_cast %267 : vector<1x32x32xbf16> to vector<32x32xbf16>
    %cst_197 = arith.constant dense<0.000000e+00> : vector<256x32xf32>
    %269 = tpu.matmul %266, %268, %cst_197 {dimension_numbers = #tpu.dot_dimension_numbers<[1], [0], [0], [1], [0, 0, 1, 1], [], []>} : vector<256x32xbf16>, vector<32x32xbf16>, vector<256x32xf32> -> vector<256x32xf32>
    %270 = arith.addf %260, %269 : vector<256x32xf32>
    %c0_198 = arith.constant 0 : index
    %c0_199 = arith.constant 0 : index
    %271 = vector.load %arg8[%c0_198, %c0_199] : memref<1x32xf32, #tpu.memory_space<vmem>>, vector<1x32xf32>
    %272 = vector.broadcast %271 : vector<1x32xf32> to vector<256x32xf32>
    %273 = arith.addf %270, %272 : vector<256x32xf32>
    %cst_200 = arith.constant 0.000000e+00 : f32
    %274 = vector.broadcast %cst_200 : f32 to vector<256x32xf32>
    %275 = arith.maximumf %273, %274 : vector<256x32xf32>
    %cst_201 = arith.constant dense<0.000000e+00> : vector<32xf32>
    %276 = vector.multi_reduction <add>, %275, %cst_201 [0] : vector<256x32xf32> to vector<32xf32>
    %277 = vector.shape_cast %276 : vector<32xf32> to vector<1x32xf32>
    %cst_202 = arith.constant 3.906250e-03 : f32
    %278 = vector.broadcast %cst_202 : f32 to vector<1x32xf32>
    %279 = arith.mulf %277, %278 : vector<1x32xf32>
    %c0_203 = arith.constant 0 : index
    %c0_204 = arith.constant 0 : index
    %280 = vector.load %arg9[%c0_203, %c0_204] : memref<32x128xf32, #tpu.memory_space<vmem>>, vector<32x128xf32>
    %cst_205 = arith.constant dense<0.000000e+00> : vector<1x128xf32>
    %281 = tpu.matmul %279, %280, %cst_205 {dimension_numbers = #tpu.dot_dimension_numbers<[1], [0], [0], [1], [0, 0, 1, 1], [], []>} : vector<1x32xf32>, vector<32x128xf32>, vector<1x128xf32> -> vector<1x128xf32>
    %c0_206 = arith.constant 0 : index
    %c0_207 = arith.constant 0 : index
    %282 = vector.load %arg10[%c0_206, %c0_207] : memref<1x128xf32, #tpu.memory_space<vmem>>, vector<1x128xf32>
    %283 = arith.addf %281, %282 : vector<1x128xf32>
    %c0_208 = arith.constant 0 : index
    %c0_209 = arith.constant 0 : index
    %c0_210 = arith.constant 0 : index
    %284 = vector.load %arg11[%c0_208, %c0_209, %c0_210] : memref<1x1x128xf32, #tpu.memory_space<vmem>>, vector<1x1x128xf32>
    %285 = vector.shape_cast %284 : vector<1x1x128xf32> to vector<1x128xf32>
    %286 = vector.shape_cast %283 : vector<1x128xf32> to vector<1x1x128xf32>
    tpu.vector_store %arg11[%c0_208, %c0_209, %c0_210], %286 {strides = array<i32>} : memref<1x1x128xf32, #tpu.memory_space<vmem>>, vector<1x1x128xf32>,
    return
  }
  func.func @transform_0(%arg0: i32) -> (i32, i32, i32) {
    %c0_i32 = arith.constant 0 : i32
    %c0_i32_0 = arith.constant 0 : i32
    %c0_i32_1 = arith.constant 0 : i32
    return %arg0, %c0_i32, %c0_i32_0 : i32, i32, i32
  }
  func.func @transform_1(%arg0: i32) -> (i32, i32, i32) {
    %c0_i32 = arith.constant 0 : i32
    %c0_i32_0 = arith.constant 0 : i32
    %c0_i32_1 = arith.constant 0 : i32
    %c0_i32_2 = arith.constant 0 : i32
    return %c0_i32, %c0_i32_0, %c0_i32_1 : i32, i32, i32
  }
  func.func @transform_2(%arg0: i32) -> (i32, i32, i32) {
    %c0_i32 = arith.constant 0 : i32
    %c0_i32_0 = arith.constant 0 : i32
    %c0_i32_1 = arith.constant 0 : i32
    %c0_i32_2 = arith.constant 0 : i32
    return %c0_i32, %c0_i32_0, %c0_i32_1 : i32, i32, i32
  }
  func.func @transform_3(%arg0: i32) -> (i32, i32) {
    %c0_i32 = arith.constant 0 : i32
    %c0_i32_0 = arith.constant 0 : i32
    %c0_i32_1 = arith.constant 0 : i32
    return %c0_i32, %c0_i32_0 : i32, i32
  }
  func.func @transform_4(%arg0: i32) -> (i32, i32, i32) {
    %c0_i32 = arith.constant 0 : i32
    %c0_i32_0 = arith.constant 0 : i32
    %c0_i32_1 = arith.constant 0 : i32
    %c0_i32_2 = arith.constant 0 : i32
    return %c0_i32, %c0_i32_0, %c0_i32_1 : i32, i32, i32
  }
  func.func @transform_5(%arg0: i32) -> (i32, i32) {
    %c0_i32 = arith.constant 0 : i32
    %c0_i32_0 = arith.constant 0 : i32
    %c0_i32_1 = arith.constant 0 : i32
    return %c0_i32, %c0_i32_0 : i32, i32
  }
  func.func @transform_6(%arg0: i32) -> (i32, i32, i32) {
    %c0_i32 = arith.constant 0 : i32
    %c0_i32_0 = arith.constant 0 : i32
    %c0_i32_1 = arith.constant 0 : i32
    %c0_i32_2 = arith.constant 0 : i32
    return %c0_i32, %c0_i32_0, %c0_i32_1 : i32, i32, i32
  }
  func.func @transform_7(%arg0: i32) -> (i32, i32) {
    %c0_i32 = arith.constant 0 : i32
    %c0_i32_0 = arith.constant 0 : i32
    %c0_i32_1 = arith.constant 0 : i32
    return %c0_i32, %c0_i32_0 : i32, i32
  }
  func.func @transform_8(%arg0: i32) -> (i32, i32) {
    %c0_i32 = arith.constant 0 : i32
    %c0_i32_0 = arith.constant 0 : i32
    %c0_i32_1 = arith.constant 0 : i32
    return %c0_i32, %c0_i32_0 : i32, i32
  }
  func.func @transform_9(%arg0: i32) -> (i32, i32) {
    %c0_i32 = arith.constant 0 : i32
    %c0_i32_0 = arith.constant 0 : i32
    %c0_i32_1 = arith.constant 0 : i32
    return %c0_i32, %c0_i32_0 : i32, i32
  }
  func.func @transform_10(%arg0: i32) -> (i32, i32, i32) {
    %c0_i32 = arith.constant 0 : i32
    %c0_i32_0 = arith.constant 0 : i32
    %c0_i32_1 = arith.constant 0 : i32
    return %arg0, %c0_i32, %c0_i32_0 : i32, i32, i32
  }
}

</mosaic_0001>

<llo_original>
// kernel: mtl_nogate_forward_val.1
$region0: #{mtl_nogate_forward_val.1}
  #allocation0 [shape = 'u32[]', space=smem, size = 0x4, offset = 0x4, fixed_abs, tag = 'smem constant byte address 0x4 - core index']
  #allocation1 [shape = 'u32[72,128]{1,0:T(1,128)}', space=vmem, size = 0x9000, scoped, tag = 'internal scratch']
  %s0 = inlined_call_operand.vmem [shape: bf16[2,256,3], index: 0, kind: input, shape index: {}]
  %s1 = inlined_call_operand.vmem [shape: f32[9,256,1], index: 1, kind: input, shape index: {}]
  %s2 = inlined_call_operand.vmem [shape: bf16[9,3,16], index: 2, kind: input, shape index: {}]
  %s3 = inlined_call_operand.vmem [shape: f32[1,16], index: 3, kind: input, shape index: {}]
  %s4 = inlined_call_operand.vmem [shape: bf16[9,16,32], index: 4, kind: input, shape index: {}]
  %s5 = inlined_call_operand.vmem [shape: f32[1,32], index: 5, kind: input, shape index: {}]
  %s6 = inlined_call_operand.vmem [shape: bf16[9,32,32], index: 6, kind: input, shape index: {}]
  %s7 = inlined_call_operand.vmem [shape: f32[1,32], index: 7, kind: input, shape index: {}]
  %s8 = inlined_call_operand.vmem [shape: f32[32,128], index: 8, kind: input, shape index: {}]
  %s9 = inlined_call_operand.vmem [shape: f32[1,128], index: 9, kind: input, shape index: {}]
  %s10 = inlined_call_operand.hbm [shape: f32[2,1,128], index: 10, kind: output, shape index: {}]
  %s11 = sld [smem:[#allocation0]]
  $region73: #{mtl_nogate_forward_val.1} parent=0
    _
  %s13 = ssub.s32 1, %s11
  %s14 = scalar_select 0, %s13, %s11
  $region1: #{mtl_nogate_forward_val.1} parent=0
    #allocation2 [shape = 'u8[1024]{0}', space=vmem, size = 0x400, scoped, tag = 'output window, operand 0']
    #allocation3 [shape = 's32[2]{0}', space=sflag, size = 0x8, scoped, tag = 'scoped memory for mtl_nogate_forward_val.1']
    %15 = vsyncpa [#allocation3], 0
    %s16 = scalar_lea.sflag [#allocation3], 1
    %17 = vsyncpa %s16, 0
    loop: start=0, step=1, limit=4
    $region2: #{mtl_nogate_forward_val.1} parent=1 // loop_pre_header
      _
    $region3: #{mtl_nogate_forward_val.1} parent=1 // loop_header
      %s19 = sphi 0, %s23
      %p20 = scmp.ge.s32.totalorder %s19, 4
      %s29 = sphi 0, %s31
      %s32 = sphi 0, %s29
      %s33 = sphi 0, %s32
      %s49 = sphi 0, %s33
      %s53 = sphi 0, %s53
      %s55 = sphi 0, %s53
      %s56 = sphi 0, %s55
      %s70 = sphi 0, %s56
      %s74 = sphi 0, %s74
      %s76 = sphi 0, %s74
      %s77 = sphi 0, %s76
      %s91 = sphi 0, %s77
      %s95 = sphi 0, %s95
      %s97 = sphi 0, %s95
      %s98 = sphi 0, %s97
      %s112 = sphi 0, %s98
      %s116 = sphi 0, %s116
      %s118 = sphi 0, %s116
      %s119 = sphi 0, %s118
      %s133 = sphi 0, %s119
      %s137 = sphi 0, %s137
      %s139 = sphi 0, %s137
      %s140 = sphi 0, %s139
      %s154 = sphi 0, %s140
      %s158 = sphi 0, %s158
      %s160 = sphi 0, %s158
      %s161 = sphi 0, %s160
      %s175 = sphi 0, %s161
      %s179 = sphi 0, %s179
      %s181 = sphi 0, %s179
      %s182 = sphi 0, %s181
      %s196 = sphi 0, %s182
      %s200 = sphi 0, %s200
      %s202 = sphi 0, %s200
      %s203 = sphi 0, %s202
      %s217 = sphi 0, %s203
      %s221 = sphi 0, %s221
      %s223 = sphi 0, %s221
      %s224 = sphi 0, %s223
      %s238 = sphi 0, %s224
      %s244 = sphi 0, %s246
      %s247 = sphi 0, %s244
      %s248 = sphi 0, %s247
      %s264 = sphi 0, %s248
    $region4: #{mtl_nogate_forward_val.1} parent=1 // loop_header_branch
      %22 = sbr.rel (%p20) target = $region8
    $region5: #{mtl_nogate_forward_val.1} parent=1 // loop_body
      %s24 = ssub.s32 %s19, 1
      %s25 = ssub.s32 %s19, 2
      %s26 = sadd.s32 %s19, 1
      %s27 = ssub.s32 %s19, %s26
      %p28 = scmp.eq.s32.totalorder %s27, 0
      %s30 = sadd.s32 %s29, 1
      %s31 = scalar_select %p28, %s29, %s30
      %p34 = pneg %p28
      %p35 = scmp.eq.s32.totalorder %s19, 1
      %p36 = por %p34, %p35
      %p37 = scmp.ne.s32.totalorder %s29, %s32
      %p38 = scmp.eq.s32.totalorder %s19, 0
      %p39 = por %p37, %p38
      %p40 = scmp.ne.s32.totalorder %s29, %s32
      %p41 = scmp.eq.s32.totalorder %s24, 1
      %p42 = por %p40, %p41
      %p43 = scmp.ne.s32.totalorder %s32, %s33
      %p44 = scmp.eq.s32.totalorder %s24, 0
      %p45 = por %p43, %p44
      %p46 = scmp.ne.s32.totalorder %s32, %s33
      %p47 = scmp.eq.s32.totalorder %s25, 1
      %p48 = por %p46, %p47
      %p50 = scmp.ne.s32.totalorder %s33, %s49
      %p51 = scmp.eq.s32.totalorder %s25, 0
      %p52 = por %p50, %p51
      %s54 = sadd.s32 %s53, 1
      %p57 = scmp.eq.s32.totalorder %s19, 1
      %p58 = scmp.ne.s32.totalorder %s53, %s55
      %p59 = scmp.eq.s32.totalorder %s19, 0
      %p60 = por %p58, %p59
      %p61 = scmp.ne.s32.totalorder %s53, %s55
      %p62 = scmp.eq.s32.totalorder %s24, 1
      %p63 = por %p61, %p62
      %p64 = scmp.ne.s32.totalorder %s55, %s56
      %p65 = scmp.eq.s32.totalorder %s24, 0
      %p66 = por %p64, %p65
      %p67 = scmp.ne.s32.totalorder %s55, %s56
      %p68 = scmp.eq.s32.totalorder %s25, 1
      %p69 = por %p67, %p68
      %p71 = scmp.ne.s32.totalorder %s56, %s70
      %p72 = scmp.eq.s32.totalorder %s25, 0
      %p73 = por %p71, %p72
      %s75 = sadd.s32 %s74, 1
      %p78 = scmp.eq.s32.totalorder %s19, 1
      %p79 = scmp.ne.s32.totalorder %s74, %s76
      %p80 = scmp.eq.s32.totalorder %s19, 0
      %p81 = por %p79, %p80
      %p82 = scmp.ne.s32.totalorder %s74, %s76
      %p83 = scmp.eq.s32.totalorder %s24, 1
      %p84 = por %p82, %p83
      %p85 = scmp.ne.s32.totalorder %s76, %s77
      %p86 = scmp.eq.s32.totalorder %s24, 0
      %p87 = por %p85, %p86
      %p88 = scmp.ne.s32.totalorder %s76, %s77
      %p89 = scmp.eq.s32.totalorder %s25, 1
      %p90 = por %p88, %p89
      %p92 = scmp.ne.s32.totalorder %s77, %s91
      %p93 = scmp.eq.s32.totalorder %s25, 0
      %p94 = por %p92, %p93
      %s96 = sadd.s32 %s95, 1
      %p99 = scmp.eq.s32.totalorder %s19, 1
      %p100 = scmp.ne.s32.totalorder %s95, %s97
      %p101 = scmp.eq.s32.totalorder %s19, 0
      %p102 = por %p100, %p101
      %p103 = scmp.ne.s32.totalorder %s95, %s97
      %p104 = scmp.eq.s32.totalorder %s24, 1
      %p105 = por %p103, %p104
      %p106 = scmp.ne.s32.totalorder %s97, %s98
      %p107 = scmp.eq.s32.totalorder %s24, 0
      %p108 = por %p106, %p107
      %p109 = scmp.ne.s32.totalorder %s97, %s98
      %p110 = scmp.eq.s32.totalorder %s25, 1
      %p111 = por %p109, %p110
      %p113 = scmp.ne.s32.totalorder %s98, %s112
      %p114 = scmp.eq.s32.totalorder %s25, 0
      %p115 = por %p113, %p114
      %s117 = sadd.s32 %s116, 1
      %p120 = scmp.eq.s32.totalorder %s19, 1
      %p121 = scmp.ne.s32.totalorder %s116, %s118
      %p122 = scmp.eq.s32.totalorder %s19, 0
      %p123 = por %p121, %p122
      %p124 = scmp.ne.s32.totalorder %s116, %s118
      %p125 = scmp.eq.s32.totalorder %s24, 1
      %p126 = por %p124, %p125
      %p127 = scmp.ne.s32.totalorder %s118, %s119
      %p128 = scmp.eq.s32.totalorder %s24, 0
      %p129 = por %p127, %p128
      %p130 = scmp.ne.s32.totalorder %s118, %s119
      %p131 = scmp.eq.s32.totalorder %s25, 1
      %p132 = por %p130, %p131
      %p134 = scmp.ne.s32.totalorder %s119, %s133
      %p135 = scmp.eq.s32.totalorder %s25, 0
      %p136 = por %p134, %p135
      %s138 = sadd.s32 %s137, 1
      %p141 = scmp.eq.s32.totalorder %s19, 1
      %p142 = scmp.ne.s32.totalorder %s137, %s139
      %p143 = scmp.eq.s32.totalorder %s19, 0
      %p144 = por %p142, %p143
      %p145 = scmp.ne.s32.totalorder %s137, %s139
      %p146 = scmp.eq.s32.totalorder %s24, 1
      %p147 = por %p145, %p146
      %p148 = scmp.ne.s32.totalorder %s139, %s140
      %p149 = scmp.eq.s32.totalorder %s24, 0
      %p150 = por %p148, %p149
      %p151 = scmp.ne.s32.totalorder %s139, %s140
      %p152 = scmp.eq.s32.totalorder %s25, 1
      %p153 = por %p151, %p152
      %p155 = scmp.ne.s32.totalorder %s140, %s154
      %p156 = scmp.eq.s32.totalorder %s25, 0
      %p157 = por %p155, %p156
      %s159 = sadd.s32 %s158, 1
      %p162 = scmp.eq.s32.totalorder %s19, 1
      %p163 = scmp.ne.s32.totalorder %s158, %s160
      %p164 = scmp.eq.s32.totalorder %s19, 0
      %p165 = por %p163, %p164
      %p166 = scmp.ne.s32.totalorder %s158, %s160
      %p167 = scmp.eq.s32.totalorder %s24, 1
      %p168 = por %p166, %p167
      %p169 = scmp.ne.s32.totalorder %s160, %s161
      %p170 = scmp.eq.s32.totalorder %s24, 0
      %p171 = por %p169, %p170
      %p172 = scmp.ne.s32.totalorder %s160, %s161
      %p173 = scmp.eq.s32.totalorder %s25, 1
      %p174 = por %p172, %p173
      %p176 = scmp.ne.s32.totalorder %s161, %s175
      %p177 = scmp.eq.s32.totalorder %s25, 0
      %p178 = por %p176, %p177
      %s180 = sadd.s32 %s179, 1
      %p183 = scmp.eq.s32.totalorder %s19, 1
      %p184 = scmp.ne.s32.totalorder %s179, %s181
      %p185 = scmp.eq.s32.totalorder %s19, 0
      %p186 = por %p184, %p185
      %p187 = scmp.ne.s32.totalorder %s179, %s181
      %p188 = scmp.eq.s32.totalorder %s24, 1
      %p189 = por %p187, %p188
      %p190 = scmp.ne.s32.totalorder %s181, %s182
      %p191 = scmp.eq.s32.totalorder %s24, 0
      %p192 = por %p190, %p191
      %p193 = scmp.ne.s32.totalorder %s181, %s182
      %p194 = scmp.eq.s32.totalorder %s25, 1
      %p195 = por %p193, %p194
      %p197 = scmp.ne.s32.totalorder %s182, %s196
      %p198 = scmp.eq.s32.totalorder %s25, 0
      %p199 = por %p197, %p198
      %s201 = sadd.s32 %s200, 1
      %p204 = scmp.eq.s32.totalorder %s19, 1
      %p205 = scmp.ne.s32.totalorder %s200, %s202
      %p206 = scmp.eq.s32.totalorder %s19, 0
      %p207 = por %p205, %p206
      %p208 = scmp.ne.s32.totalorder %s200, %s202
      %p209 = scmp.eq.s32.totalorder %s24, 1
      %p210 = por %p208, %p209
      %p211 = scmp.ne.s32.totalorder %s202, %s203
      %p212 = scmp.eq.s32.totalorder %s24, 0
      %p213 = por %p211, %p212
      %p214 = scmp.ne.s32.totalorder %s202, %s203
      %p215 = scmp.eq.s32.totalorder %s25, 1
      %p216 = por %p214, %p215
      %p218 = scmp.ne.s32.totalorder %s203, %s217
      %p219 = scmp.eq.s32.totalorder %s25, 0
      %p220 = por %p218, %p219
      %s222 = sadd.s32 %s221, 1
      %p225 = scmp.eq.s32.totalorder %s19, 1
      %p226 = scmp.ne.s32.totalorder %s221, %s223
      %p227 = scmp.eq.s32.totalorder %s19, 0
      %p228 = por %p226, %p227
      %p229 = scmp.ne.s32.totalorder %s221, %s223
      %p230 = scmp.eq.s32.totalorder %s24, 1
      %p231 = por %p229, %p230
      %p232 = scmp.ne.s32.totalorder %s223, %s224
      %p233 = scmp.eq.s32.totalorder %s24, 0
      %p234 = por %p232, %p233
      %p235 = scmp.ne.s32.totalorder %s223, %s224
      %p236 = scmp.eq.s32.totalorder %s25, 1
      %p237 = por %p235, %p236
      %p239 = scmp.ne.s32.totalorder %s224, %s238
      %p240 = scmp.eq.s32.totalorder %s25, 0
      %p241 = por %p239, %p240
      %s242 = ssub.s32 %s19, %s26
      %p243 = scmp.eq.s32.totalorder %s242, 0
      %s245 = sadd.s32 %s244, 1
      %s246 = scalar_select %p243, %s244, %s245
      %p249 = pneg %p243
      %p250 = scmp.eq.s32.totalorder %s19, 1
      %p251 = por %p249, %p250
      %p252 = scmp.ne.s32.totalorder %s244, %s247
      %p253 = scmp.eq.s32.totalorder %s19, 0
      %p254 = por %p252, %p253
      %p255 = scmp.ne.s32.totalorder %s244, %s247
      %p256 = scmp.eq.s32.totalorder %s24, 1
      %p257 = por %p255, %p256
      %p258 = scmp.ne.s32.totalorder %s247, %s248
      %p259 = scmp.eq.s32.totalorder %s24, 0
      %p260 = por %p258, %p259
      %p261 = scmp.ne.s32.totalorder %s247, %s248
      %p262 = scmp.eq.s32.totalorder %s25, 1
      %p263 = por %p261, %p262
      %p265 = scmp.ne.s32.totalorder %s248, %s264
      %p266 = scmp.eq.s32.totalorder %s25, 0
      %p267 = por %p265, %p266
      %p268 = scmp.le.s32.totalorder 1, %s19
      %p269 = scmp.lt.s32.totalorder %s19, 3
      %p270 = pnand %p268, %p269
      %p271 = pneg %p270
      // Predicated region
      $region9: #{mtl_nogate_forward_val.1} parent=5 // pred_check
        _
      $region10: #{mtl_nogate_forward_val.1} parent=5 // pred_check_branch
        %273 = sbr.rel (%p270) target = $region12
      $region11: #{mtl_nogate_forward_val.1} parent=5 // pred_region
        %s274 = ssub.s32 %s19, 1
        // Predicated region
        $region13: #{mtl_nogate_forward_val.1} parent=11 // pred_check
          %p275 = pneg %p66
        $region14: #{mtl_nogate_forward_val.1} parent=11 // pred_check_branch
          %277 = sbr.rel (%p275) target = $region16
        $region15: #{mtl_nogate_forward_val.1} parent=11 // pred_region
          _
        $region16: #{mtl_nogate_forward_val.1} parent=11 // pred_fallthru
          _
        // Predicated region
        $region17: #{mtl_nogate_forward_val.1} parent=11 // pred_check
          %p278 = pneg %p87
        $region18: #{mtl_nogate_forward_val.1} parent=11 // pred_check_branch
          %280 = sbr.rel (%p278) target = $region20
        $region19: #{mtl_nogate_forward_val.1} parent=11 // pred_region
          _
        $region20: #{mtl_nogate_forward_val.1} parent=11 // pred_fallthru
          _
        // Predicated region
        $region21: #{mtl_nogate_forward_val.1} parent=11 // pred_check
          %p281 = pneg %p108
        $region22: #{mtl_nogate_forward_val.1} parent=11 // pred_check_branch
          %283 = sbr.rel (%p281) target = $region24
        $region23: #{mtl_nogate_forward_val.1} parent=11 // pred_region
          _
        $region24: #{mtl_nogate_forward_val.1} parent=11 // pred_fallthru
          _
        // Predicated region
        $region25: #{mtl_nogate_forward_val.1} parent=11 // pred_check
          %p284 = pneg %p129
        $region26: #{mtl_nogate_forward_val.1} parent=11 // pred_check_branch
          %286 = sbr.rel (%p284) target = $region28
        $region27: #{mtl_nogate_forward_val.1} parent=11 // pred_region
          _
        $region28: #{mtl_nogate_forward_val.1} parent=11 // pred_fallthru
          _
        // Predicated region
        $region29: #{mtl_nogate_forward_val.1} parent=11 // pred_check
          %p287 = pneg %p150
        $region30: #{mtl_nogate_forward_val.1} parent=11 // pred_check_branch
          %289 = sbr.rel (%p287) target = $region32
        $region31: #{mtl_nogate_forward_val.1} parent=11 // pred_region
          _
        $region32: #{mtl_nogate_forward_val.1} parent=11 // pred_fallthru
          _
        // Predicated region
        $region33: #{mtl_nogate_forward_val.1} parent=11 // pred_check
          %p290 = pneg %p171
        $region34: #{mtl_nogate_forward_val.1} parent=11 // pred_check_branch
          %292 = sbr.rel (%p290) target = $region36
        $region35: #{mtl_nogate_forward_val.1} parent=11 // pred_region
          _
        $region36: #{mtl_nogate_forward_val.1} parent=11 // pred_fallthru
          _
        // Predicated region
        $region37: #{mtl_nogate_forward_val.1} parent=11 // pred_check
          %p293 = pneg %p192
        $region38: #{mtl_nogate_forward_val.1} parent=11 // pred_check_branch
          %295 = sbr.rel (%p293) target = $region40
        $region39: #{mtl_nogate_forward_val.1} parent=11 // pred_region
          _
        $region40: #{mtl_nogate_forward_val.1} parent=11 // pred_fallthru
          _
        // Predicated region
        $region41: #{mtl_nogate_forward_val.1} parent=11 // pred_check
          %p296 = pneg %p213
        $region42: #{mtl_nogate_forward_val.1} parent=11 // pred_check_branch
          %298 = sbr.rel (%p296) target = $region44
        $region43: #{mtl_nogate_forward_val.1} parent=11 // pred_region
          _
        $region44: #{mtl_nogate_forward_val.1} parent=11 // pred_fallthru
          _
        // Predicated region
        $region45: #{mtl_nogate_forward_val.1} parent=11 // pred_check
          %p299 = pneg %p234
        $region46: #{mtl_nogate_forward_val.1} parent=11 // pred_check_branch
          %301 = sbr.rel (%p299) target = $region48
        $region47: #{mtl_nogate_forward_val.1} parent=11 // pred_region
          _
        $region48: #{mtl_nogate_forward_val.1} parent=11 // pred_fallthru
          _
      $region12: #{mtl_nogate_forward_val.1} parent=5 // pred_fallthru
        _
      %p302 = scmp.lt.s32.totalorder %s19, 2
      // Predicated region
      $region49: #{mtl_nogate_forward_val.1} parent=5 // pred_check
        %p303 = pneg %p302
      $region50: #{mtl_nogate_forward_val.1} parent=5 // pred_check_branch
        %305 = sbr.rel (%p303) target = $region52
      $region51: #{mtl_nogate_forward_val.1} parent=5 // pred_region
        // Predicated region
        $region53: #{mtl_nogate_forward_val.1} parent=51 // pred_check
          %p306 = pneg %p39
        $region54: #{mtl_nogate_forward_val.1} parent=51 // pred_check_branch
          %308 = sbr.rel (%p306) target = $region56
        $region55: #{mtl_nogate_forward_val.1} parent=51 // pred_region
          %p309 = scmp.lt.s32.totalorder %s19, 1
          %s310 = scalar_select %p309, %s19, 1
          %s311 = smul.addr %s310, 32
          %s312 = smul.addr %s311, 4
          %s313 = scalar_lea.vmem %s0, %s312
        $region56: #{mtl_nogate_forward_val.1} parent=51 // pred_fallthru
          _
      $region52: #{mtl_nogate_forward_val.1} parent=5 // pred_fallthru
        _
      %p314 = scmp.le.s32.totalorder 1, %s19
      %p315 = scmp.lt.s32.totalorder %s19, 3
      %p316 = pnand %p314, %p315
      %p317 = pneg %p316
      // Predicated region
      $region57: #{mtl_nogate_forward_val.1} parent=5 // pred_check
        _
      $region58: #{mtl_nogate_forward_val.1} parent=5 // pred_check_branch
        %319 = sbr.rel (%p316) target = $region60
      $region59: #{mtl_nogate_forward_val.1} parent=5 // pred_region
        %s320 = ssub.s32 %s19, 1
        %p321 = scmp.lt.s32.totalorder %s24, 1
        %s322 = scalar_select %p321, %s24, 1
        %s323 = smul.addr %s322, 32
        %s324 = smul.addr %s323, 4
        %s325 = scalar_lea.vmem %s0, %s324
        %p326 = pneg %p45
        %p327 = pneg %p42
        %p328 = pneg %p66
        %p329 = pneg %p63
        %p330 = pneg %p87
        %p331 = pneg %p84
        %p332 = pneg %p108
        %p333 = pneg %p105
        %p334 = pneg %p129
        %p335 = pneg %p126
        %p336 = pneg %p150
        %p337 = pneg %p147
        %p338 = pneg %p171
        %p339 = pneg %p168
        %p340 = pneg %p192
        %p341 = pneg %p189
        %p342 = pneg %p213
        %p343 = pneg %p210
        %p344 = pneg %p234
        %p345 = pneg %p231
        %p346 = pneg %p260
        %p347 = pneg %p257
        %s348 = sand.u32 %s247, 1
        %s349 = scalar_lea.sflag [#allocation3], %s348
        %s350 = sand.u32 %s247, 1
        %s351 = scalar_lea.vmem [#allocation2], %s350
        %p352 = scmp.lt.s32.totalorder %s24, 1
        %s353 = scalar_select %p352, %s24, 1
        %s354 = smul.addr %s353, 32
        %s355 = smul.addr %s354, 4
        %s356 = scalar_lea.vmem %s0, %s355
        %v358 = vld [vmem:[%s356] sm:$0xf]
        %v359 = vld [vmem:[%s356 + $0x4] sm:$0xf]
        %v360 = vld [vmem:[%s356 + $0x8] sm:$0xf]
        %v361 = vld [vmem:[%s356 + $0xc] sm:$0xf]
        %v362 = vld [vmem:[%s356 + $0x10] sm:$0xf]
        %v363 = vld [vmem:[%s356 + $0x14] sm:$0xf]
        %v364 = vld [vmem:[%s356 + $0x18] sm:$0xf]
        %v365 = vld [vmem:[%s356 + $0x1c] sm:$0xf]
        %v366 = vld [vmem:[%s356 + $0x20] sm:$0xf]
        %v367 = vld [vmem:[%s356 + $0x24] sm:$0xf]
        %v368 = vld [vmem:[%s356 + $0x28] sm:$0xf]
        %v369 = vld [vmem:[%s356 + $0x2c] sm:$0xf]
        %v370 = vld [vmem:[%s356 + $0x30] sm:$0xf]
        %v371 = vld [vmem:[%s356 + $0x34] sm:$0xf]
        %v372 = vld [vmem:[%s356 + $0x38] sm:$0xf]
        %v373 = vld [vmem:[%s356 + $0x3c] sm:$0xf]
        %v374 = vld [vmem:[%s356 + $0x40] sm:$0xf]
        %v375 = vld [vmem:[%s356 + $0x44] sm:$0xf]
        %v376 = vld [vmem:[%s356 + $0x48] sm:$0xf]
        %v377 = vld [vmem:[%s356 + $0x4c] sm:$0xf]
        %v378 = vld [vmem:[%s356 + $0x50] sm:$0xf]
        %v379 = vld [vmem:[%s356 + $0x54] sm:$0xf]
        %v380 = vld [vmem:[%s356 + $0x58] sm:$0xf]
        %v381 = vld [vmem:[%s356 + $0x5c] sm:$0xf]
        %v382 = vld [vmem:[%s356 + $0x60] sm:$0xf]
        %v383 = vld [vmem:[%s356 + $0x64] sm:$0xf]
        %v384 = vld [vmem:[%s356 + $0x68] sm:$0xf]
        %v385 = vld [vmem:[%s356 + $0x6c] sm:$0xf]
        %v386 = vld [vmem:[%s356 + $0x70] sm:$0xf]
        %v387 = vld [vmem:[%s356 + $0x74] sm:$0xf]
        %v388 = vld [vmem:[%s356 + $0x78] sm:$0xf]
        %v389 = vld [vmem:[%s356 + $0x7c] sm:$0xf]
        %v390 = vunpack.c.l.bf16 %v358
        %v391 = vunpack.c.l.bf16 %v359
        %v392 = vunpack.c.l.bf16 %v360
        %v393 = vunpack.c.l.bf16 %v361
        %v394 = vunpack.c.l.bf16 %v362
        %v395 = vunpack.c.l.bf16 %v363
        %v396 = vunpack.c.l.bf16 %v364
        %v397 = vunpack.c.l.bf16 %v365
        %v398 = vunpack.c.l.bf16 %v366
        %v399 = vunpack.c.l.bf16 %v367
        %v400 = vunpack.c.l.bf16 %v368
        %v401 = vunpack.c.l.bf16 %v369
        %v402 = vunpack.c.l.bf16 %v370
        %v403 = vunpack.c.l.bf16 %v371
        %v404 = vunpack.c.l.bf16 %v372
        %v405 = vunpack.c.l.bf16 %v373
        %v406 = vunpack.c.l.bf16 %v374
        %v407 = vunpack.c.l.bf16 %v375
        %v408 = vunpack.c.l.bf16 %v376
        %v409 = vunpack.c.l.bf16 %v377
        %v410 = vunpack.c.l.bf16 %v378
        %v411 = vunpack.c.l.bf16 %v379
        %v412 = vunpack.c.l.bf16 %v380
        %v413 = vunpack.c.l.bf16 %v381
        %v414 = vunpack.c.l.bf16 %v382
        %v415 = vunpack.c.l.bf16 %v383
        %v416 = vunpack.c.l.bf16 %v384
        %v417 = vunpack.c.l.bf16 %v385
        %v418 = vunpack.c.l.bf16 %v386
        %v419 = vunpack.c.l.bf16 %v387
        %v420 = vunpack.c.l.bf16 %v388
        %v421 = vunpack.c.l.bf16 %v389
        %v422 = vrot.slane %v390, 7
        %v423 = vrot.slane %v391, 7
        %v424 = vrot.slane %v392, 7
        %v425 = vrot.slane %v393, 7
        %v426 = vrot.slane %v394, 7
        %v427 = vrot.slane %v395, 7
        %v428 = vrot.slane %v396, 7
        %v429 = vrot.slane %v397, 7
        %v430 = vrot.slane %v398, 7
        %v431 = vrot.slane %v399, 7
        %v432 = vrot.slane %v400, 7
        %v433 = vrot.slane %v401, 7
        %v434 = vrot.slane %v402, 7
        %v435 = vrot.slane %v403, 7
        %v436 = vrot.slane %v404, 7
        %v437 = vrot.slane %v405, 7
        %v438 = vrot.slane %v406, 7
        %v439 = vrot.slane %v407, 7
        %v440 = vrot.slane %v408, 7
        %v441 = vrot.slane %v409, 7
        %v442 = vrot.slane %v410, 7
        %v443 = vrot.slane %v411, 7
        %v444 = vrot.slane %v412, 7
        %v445 = vrot.slane %v413, 7
        %v446 = vrot.slane %v414, 7
        %v447 = vrot.slane %v415, 7
        %v448 = vrot.slane %v416, 7
        %v449 = vrot.slane %v417, 7
        %v450 = vrot.slane %v418, 7
        %v451 = vrot.slane %v419, 7
        %v452 = vrot.slane %v420, 7
        %v453 = vrot.slane %v421, 7
        %v454 = vlaneseq
        %v455 = vshrl.u32 %v454, 7
        %vm456 = vcmp.lt.s32.totalorder %v455, 1
        %v457 = vsel %vm456, %v452, %v453
        %v458 = vsel %vm456, %v451, %v452
        %v459 = vsel %vm456, %v450, %v451
        %v460 = vsel %vm456, %v449, %v450
        %v461 = vsel %vm456, %v448, %v449
        %v462 = vsel %vm456, %v447, %v448
        %v463 = vsel %vm456, %v446, %v447
        %v464 = vsel %vm456, %v445, %v446
        %v465 = vsel %vm456, %v444, %v445
        %v466 = vsel %vm456, %v443, %v444
        %v467 = vsel %vm456, %v442, %v443
        %v468 = vsel %vm456, %v441, %v442
        %v469 = vsel %vm456, %v440, %v441
        %v470 = vsel %vm456, %v439, %v440
        %v471 = vsel %vm456, %v438, %v439
        %v472 = vsel %vm456, %v437, %v438
        %v473 = vsel %vm456, %v436, %v437
        %v474 = vsel %vm456, %v435, %v436
        %v475 = vsel %vm456, %v434, %v435
        %v476 = vsel %vm456, %v433, %v434
        %v477 = vsel %vm456, %v432, %v433
        %v478 = vsel %vm456, %v431, %v432
        %v479 = vsel %vm456, %v430, %v431
        %v480 = vsel %vm456, %v429, %v430
        %v481 = vsel %vm456, %v428, %v429
        %v482 = vsel %vm456, %v427, %v428
        %v483 = vsel %vm456, %v426, %v427
        %v484 = vsel %vm456, %v425, %v426
        %v485 = vsel %vm456, %v424, %v425
        %v486 = vsel %vm456, %v423, %v424
        %v487 = vsel %vm456, %v422, %v423
        %v488 = vsel %vm456, %v453, %v422
        %v489 = vld [vmem:[%s1] sm:$0xff]
        %v490 = vld [vmem:[%s1 + $0x8] sm:$0xff]
        %v491 = vld [vmem:[%s1 + $0x10] sm:$0xff]
        %v492 = vld [vmem:[%s1 + $0x18] sm:$0xff]
        %v493 = vld [vmem:[%s1 + $0x20] sm:$0xff]
        %v494 = vld [vmem:[%s1 + $0x28] sm:$0xff]
        %v495 = vld [vmem:[%s1 + $0x30] sm:$0xff]
        %v496 = vld [vmem:[%s1 + $0x38] sm:$0xff]
        %v497 = vld [vmem:[%s1 + $0x40] sm:$0xff]
        %v498 = vld [vmem:[%s1 + $0x48] sm:$0xff]
        %v499 = vld [vmem:[%s1 + $0x50] sm:$0xff]
        %v500 = vld [vmem:[%s1 + $0x58] sm:$0xff]
        %v501 = vld [vmem:[%s1 + $0x60] sm:$0xff]
        %v502 = vld [vmem:[%s1 + $0x68] sm:$0xff]
        %v503 = vld [vmem:[%s1 + $0x70] sm:$0xff]
        %v504 = vld [vmem:[%s1 + $0x78] sm:$0xff]
        %v505 = vld [vmem:[%s1 + $0x80] sm:$0xff]
        %v506 = vld [vmem:[%s1 + $0x88] sm:$0xff]
        %v507 = vld [vmem:[%s1 + $0x90] sm:$0xff]
        %v508 = vld [vmem:[%s1 + $0x98] sm:$0xff]
        %v509 = vld [vmem:[%s1 + $0xa0] sm:$0xff]
        %v510 = vld [vmem:[%s1 + $0xa8] sm:$0xff]
        %v511 = vld [vmem:[%s1 + $0xb0] sm:$0xff]
        %v512 = vld [vmem:[%s1 + $0xb8] sm:$0xff]
        %v513 = vld [vmem:[%s1 + $0xc0] sm:$0xff]
        %v514 = vld [vmem:[%s1 + $0xc8] sm:$0xff]
        %v515 = vld [vmem:[%s1 + $0xd0] sm:$0xff]
        %v516 = vld [vmem:[%s1 + $0xd8] sm:$0xff]
        %v517 = vld [vmem:[%s1 + $0xe0] sm:$0xff]
        %v518 = vld [vmem:[%s1 + $0xe8] sm:$0xff]
        %v519 = vld [vmem:[%s1 + $0xf0] sm:$0xff]
        %v520 = vld [vmem:[%s1 + $0xf8] sm:$0xff]
        %522 = vset.pattern.permute.xlu0 0
        %523 = vperm.xlu0 %522, %v489
        %v524 = vpop.permute.xlu0 %523
        %527 = vset.pattern.permute.xlu0 0
        %528 = vperm.xlu0 %527, %v490
        %v529 = vpop.permute.xlu0 %528
        %532 = vset.pattern.permute.xlu0 0
        %533 = vperm.xlu0 %532, %v491
        %v534 = vpop.permute.xlu0 %533
        %537 = vset.pattern.permute.xlu0 0
        %538 = vperm.xlu0 %537, %v492
        %v539 = vpop.permute.xlu0 %538
        %542 = vset.pattern.permute.xlu0 0
        %543 = vperm.xlu0 %542, %v493
        %v544 = vpop.permute.xlu0 %543
        %547 = vset.pattern.permute.xlu0 0
        %548 = vperm.xlu0 %547, %v494
        %v549 = vpop.permute.xlu0 %548
        %552 = vset.pattern.permute.xlu0 0
        %553 = vperm.xlu0 %552, %v495
        %v554 = vpop.permute.xlu0 %553
        %557 = vset.pattern.permute.xlu0 0
        %558 = vperm.xlu0 %557, %v496
        %v559 = vpop.permute.xlu0 %558
        %562 = vset.pattern.permute.xlu0 0
        %563 = vperm.xlu0 %562, %v497
        %v564 = vpop.permute.xlu0 %563
        %567 = vset.pattern.permute.xlu0 0
        %568 = vperm.xlu0 %567, %v498
        %v569 = vpop.permute.xlu0 %568
        %572 = vset.pattern.permute.xlu0 0
        %573 = vperm.xlu0 %572, %v499
        %v574 = vpop.permute.xlu0 %573
        %577 = vset.pattern.permute.xlu0 0
        %578 = vperm.xlu0 %577, %v500
        %v579 = vpop.permute.xlu0 %578
        %582 = vset.pattern.permute.xlu0 0
        %583 = vperm.xlu0 %582, %v501
        %v584 = vpop.permute.xlu0 %583
        %587 = vset.pattern.permute.xlu0 0
        %588 = vperm.xlu0 %587, %v502
        %v589 = vpop.permute.xlu0 %588
        %592 = vset.pattern.permute.xlu0 0
        %593 = vperm.xlu0 %592, %v503
        %v594 = vpop.permute.xlu0 %593
        %597 = vset.pattern.permute.xlu0 0
        %598 = vperm.xlu0 %597, %v504
        %v599 = vpop.permute.xlu0 %598
        %602 = vset.pattern.permute.xlu0 0
        %603 = vperm.xlu0 %602, %v505
        %v604 = vpop.permute.xlu0 %603
        %607 = vset.pattern.permute.xlu0 0
        %608 = vperm.xlu0 %607, %v506
        %v609 = vpop.permute.xlu0 %608
        %612 = vset.pattern.permute.xlu0 0
        %613 = vperm.xlu0 %612, %v507
        %v614 = vpop.permute.xlu0 %613
        %617 = vset.pattern.permute.xlu0 0
        %618 = vperm.xlu0 %617, %v508
        %v619 = vpop.permute.xlu0 %618
        %622 = vset.pattern.permute.xlu0 0
        %623 = vperm.xlu0 %622, %v509
        %v624 = vpop.permute.xlu0 %623
        %627 = vset.pattern.permute.xlu0 0
        %628 = vperm.xlu0 %627, %v510
        %v629 = vpop.permute.xlu0 %628
        %632 = vset.pattern.permute.xlu0 0
        %633 = vperm.xlu0 %632, %v511
        %v634 = vpop.permute.xlu0 %633
        %637 = vset.pattern.permute.xlu0 0
        %638 = vperm.xlu0 %637, %v512
        %v639 = vpop.permute.xlu0 %638
        %642 = vset.pattern.permute.xlu0 0
        %643 = vperm.xlu0 %642, %v513
        %v644 = vpop.permute.xlu0 %643
        %647 = vset.pattern.permute.xlu0 0
        %648 = vperm.xlu0 %647, %v514
        %v649 = vpop.permute.xlu0 %648
        %652 = vset.pattern.permute.xlu0 0
        %653 = vperm.xlu0 %652, %v515
        %v654 = vpop.permute.xlu0 %653
        %657 = vset.pattern.permute.xlu0 0
        %658 = vperm.xlu0 %657, %v516
        %v659 = vpop.permute.xlu0 %658
        %662 = vset.pattern.permute.xlu0 0
        %663 = vperm.xlu0 %662, %v517
        %v664 = vpop.permute.xlu0 %663
        %667 = vset.pattern.permute.xlu0 0
        %668 = vperm.xlu0 %667, %v518
        %v669 = vpop.permute.xlu0 %668
        %672 = vset.pattern.permute.xlu0 0
        %673 = vperm.xlu0 %672, %v519
        %v674 = vpop.permute.xlu0 %673
        %677 = vset.pattern.permute.xlu0 0
        %678 = vperm.xlu0 %677, %v520
        %v679 = vpop.permute.xlu0 %678
        %v681 = vmul.f32 %v458, %v524
        %v682 = vmul.f32 %v457, %v529
        %v683 = vmul.f32 %v488, %v534
        %v684 = vmul.f32 %v487, %v539
        %v685 = vmul.f32 %v486, %v544
        %v686 = vmul.f32 %v485, %v549
        %v687 = vmul.f32 %v484, %v554
        %v688 = vmul.f32 %v483, %v559
        %v689 = vmul.f32 %v482, %v564
        %v690 = vmul.f32 %v481, %v569
        %v691 = vmul.f32 %v480, %v574
        %v692 = vmul.f32 %v479, %v579
        %v693 = vmul.f32 %v478, %v584
        %v694 = vmul.f32 %v477, %v589
        %v695 = vmul.f32 %v476, %v594
        %v696 = vmul.f32 %v475, %v599
        %v697 = vmul.f32 %v474, %v604
        %v698 = vmul.f32 %v473, %v609
        %v699 = vmul.f32 %v472, %v614
        %v700 = vmul.f32 %v471, %v619
        %v701 = vmul.f32 %v470, %v624
        %v702 = vmul.f32 %v469, %v629
        %v703 = vmul.f32 %v468, %v634
        %v704 = vmul.f32 %v467, %v639
        %v705 = vmul.f32 %v466, %v644
        %v706 = vmul.f32 %v465, %v649
        %v707 = vmul.f32 %v464, %v654
        %v708 = vmul.f32 %v463, %v659
        %v709 = vmul.f32 %v462, %v664
        %v710 = vmul.f32 %v461, %v669
        %v711 = vmul.f32 %v460, %v674
        %v712 = vmul.f32 %v459, %v679
        %v713 = vpack.c.bf16 %v682, %v681
        %v714 = vpack.c.bf16 %v684, %v683
        %v715 = vpack.c.bf16 %v686, %v685
        %v716 = vpack.c.bf16 %v688, %v687
        %v717 = vpack.c.bf16 %v690, %v689
        %v718 = vpack.c.bf16 %v692, %v691
        %v719 = vpack.c.bf16 %v694, %v693
        %v720 = vpack.c.bf16 %v696, %v695
        %v721 = vpack.c.bf16 %v698, %v697
        %v722 = vpack.c.bf16 %v700, %v699
        %v723 = vpack.c.bf16 %v702, %v701
        %v724 = vpack.c.bf16 %v704, %v703
        %v725 = vpack.c.bf16 %v706, %v705
        %v726 = vpack.c.bf16 %v708, %v707
        %v727 = vpack.c.bf16 %v710, %v709
        %v728 = vpack.c.bf16 %v712, %v711
        %v729 = vld [vmem:[%s2] sm:$0x3]
        %s730 = scalar_lea.vmem %s1, 256
        %v731 = vld [vmem:[%s730] sm:$0xff]
        %v732 = vld [vmem:[%s730 + $0x8] sm:$0xff]
        %v733 = vld [vmem:[%s730 + $0x10] sm:$0xff]
        %v734 = vld [vmem:[%s730 + $0x18] sm:$0xff]
        %v735 = vld [vmem:[%s730 + $0x20] sm:$0xff]
        %v736 = vld [vmem:[%s730 + $0x28] sm:$0xff]
        %v737 = vld [vmem:[%s730 + $0x30] sm:$0xff]
        %v738 = vld [vmem:[%s730 + $0x38] sm:$0xff]
        %v739 = vld [vmem:[%s730 + $0x40] sm:$0xff]
        %v740 = vld [vmem:[%s730 + $0x48] sm:$0xff]
        %v741 = vld [vmem:[%s730 + $0x50] sm:$0xff]
        %v742 = vld [vmem:[%s730 + $0x58] sm:$0xff]
        %v743 = vld [vmem:[%s730 + $0x60] sm:$0xff]
        %v744 = vld [vmem:[%s730 + $0x68] sm:$0xff]
        %v745 = vld [vmem:[%s730 + $0x70] sm:$0xff]
        %v746 = vld [vmem:[%s730 + $0x78] sm:$0xff]
        %v747 = vld [vmem:[%s730 + $0x80] sm:$0xff]
        %v748 = vld [vmem:[%s730 + $0x88] sm:$0xff]
        %v749 = vld [vmem:[%s730 + $0x90] sm:$0xff]
        %v750 = vld [vmem:[%s730 + $0x98] sm:$0xff]
        %v751 = vld [vmem:[%s730 + $0xa0] sm:$0xff]
        %v752 = vld [vmem:[%s730 + $0xa8] sm:$0xff]
        %v753 = vld [vmem:[%s730 + $0xb0] sm:$0xff]
        %v754 = vld [vmem:[%s730 + $0xb8] sm:$0xff]
        %v755 = vld [vmem:[%s730 + $0xc0] sm:$0xff]
        %v756 = vld [vmem:[%s730 + $0xc8] sm:$0xff]
        %v757 = vld [vmem:[%s730 + $0xd0] sm:$0xff]
        %v758 = vld [vmem:[%s730 + $0xd8] sm:$0xff]
        %v759 = vld [vmem:[%s730 + $0xe0] sm:$0xff]
        %v760 = vld [vmem:[%s730 + $0xe8] sm:$0xff]
        %v761 = vld [vmem:[%s730 + $0xf0] sm:$0xff]
        %v762 = vld [vmem:[%s730 + $0xf8] sm:$0xff]
        %764 = vset.pattern.permute.xlu0 0
        %765 = vperm.xlu0 %764, %v731
        %v766 = vpop.permute.xlu0 %765
        %769 = vset.pattern.permute.xlu0 0
        %770 = vperm.xlu0 %769, %v732
        %v771 = vpop.permute.xlu0 %770
        %774 = vset.pattern.permute.xlu0 0
        %775 = vperm.xlu0 %774, %v733
        %v776 = vpop.permute.xlu0 %775
        %779 = vset.pattern.permute.xlu0 0
        %780 = vperm.xlu0 %779, %v734
        %v781 = vpop.permute.xlu0 %780
        %784 = vset.pattern.permute.xlu0 0
        %785 = vperm.xlu0 %784, %v735
        %v786 = vpop.permute.xlu0 %785
        %789 = vset.pattern.permute.xlu0 0
        %790 = vperm.xlu0 %789, %v736
        %v791 = vpop.permute.xlu0 %790
        %794 = vset.pattern.permute.xlu0 0
        %795 = vperm.xlu0 %794, %v737
        %v796 = vpop.permute.xlu0 %795
        %799 = vset.pattern.permute.xlu0 0
        %800 = vperm.xlu0 %799, %v738
        %v801 = vpop.permute.xlu0 %800
        %804 = vset.pattern.permute.xlu0 0
        %805 = vperm.xlu0 %804, %v739
        %v806 = vpop.permute.xlu0 %805
        %809 = vset.pattern.permute.xlu0 0
        %810 = vperm.xlu0 %809, %v740
        %v811 = vpop.permute.xlu0 %810
        %814 = vset.pattern.permute.xlu0 0
        %815 = vperm.xlu0 %814, %v741
        %v816 = vpop.permute.xlu0 %815
        %819 = vset.pattern.permute.xlu0 0
        %820 = vperm.xlu0 %819, %v742
        %v821 = vpop.permute.xlu0 %820
        %824 = vset.pattern.permute.xlu0 0
        %825 = vperm.xlu0 %824, %v743
        %v826 = vpop.permute.xlu0 %825
        %829 = vset.pattern.permute.xlu0 0
        %830 = vperm.xlu0 %829, %v744
        %v831 = vpop.permute.xlu0 %830
        %834 = vset.pattern.permute.xlu0 0
        %835 = vperm.xlu0 %834, %v745
        %v836 = vpop.permute.xlu0 %835
        %839 = vset.pattern.permute.xlu0 0
        %840 = vperm.xlu0 %839, %v746
        %v841 = vpop.permute.xlu0 %840
        %844 = vset.pattern.permute.xlu0 0
        %845 = vperm.xlu0 %844, %v747
        %v846 = vpop.permute.xlu0 %845
        %849 = vset.pattern.permute.xlu0 0
        %850 = vperm.xlu0 %849, %v748
        %v851 = vpop.permute.xlu0 %850
        %854 = vset.pattern.permute.xlu0 0
        %855 = vperm.xlu0 %854, %v749
        %v856 = vpop.permute.xlu0 %855
        %859 = vset.pattern.permute.xlu0 0
        %860 = vperm.xlu0 %859, %v750
        %v861 = vpop.permute.xlu0 %860
        %864 = vset.pattern.permute.xlu0 0
        %865 = vperm.xlu0 %864, %v751
        %v866 = vpop.permute.xlu0 %865
        %869 = vset.pattern.permute.xlu0 0
        %870 = vperm.xlu0 %869, %v752
        %v871 = vpop.permute.xlu0 %870
        %874 = vset.pattern.permute.xlu0 0
        %875 = vperm.xlu0 %874, %v753
        %v876 = vpop.permute.xlu0 %875
        %879 = vset.pattern.permute.xlu0 0
        %880 = vperm.xlu0 %879, %v754
        %v881 = vpop.permute.xlu0 %880
        %884 = vset.pattern.permute.xlu0 0
        %885 = vperm.xlu0 %884, %v755
        %v886 = vpop.permute.xlu0 %885
        %889 = vset.pattern.permute.xlu0 0
        %890 = vperm.xlu0 %889, %v756
        %v891 = vpop.permute.xlu0 %890
        %894 = vset.pattern.permute.xlu0 0
        %895 = vperm.xlu0 %894, %v757
        %v896 = vpop.permute.xlu0 %895
        %899 = vset.pattern.permute.xlu0 0
        %900 = vperm.xlu0 %899, %v758
        %v901 = vpop.permute.xlu0 %900
        %904 = vset.pattern.permute.xlu0 0
        %905 = vperm.xlu0 %904, %v759
        %v906 = vpop.permute.xlu0 %905
        %909 = vset.pattern.permute.xlu0 0
        %910 = vperm.xlu0 %909, %v760
        %v911 = vpop.permute.xlu0 %910
        %914 = vset.pattern.permute.xlu0 0
        %915 = vperm.xlu0 %914, %v761
        %v916 = vpop.permute.xlu0 %915
        %919 = vset.pattern.permute.xlu0 0
        %920 = vperm.xlu0 %919, %v762
        %v921 = vpop.permute.xlu0 %920
        %v923 = vmul.f32 %v420, %v766
        %v924 = vmul.f32 %v421, %v771
        %v925 = vmul.f32 %v390, %v776
        %v926 = vmul.f32 %v391, %v781
        %v927 = vmul.f32 %v392, %v786
        %v928 = vmul.f32 %v393, %v791
        %v929 = vmul.f32 %v394, %v796
        %v930 = vmul.f32 %v395, %v801
        %v931 = vmul.f32 %v396, %v806
        %v932 = vmul.f32 %v397, %v811
        %v933 = vmul.f32 %v398, %v816
        %v934 = vmul.f32 %v399, %v821
        %v935 = vmul.f32 %v400, %v826
        %v936 = vmul.f32 %v401, %v831
        %v937 = vmul.f32 %v402, %v836
        %v938 = vmul.f32 %v403, %v841
        %v939 = vmul.f32 %v404, %v846
        %v940 = vmul.f32 %v405, %v851
        %v941 = vmul.f32 %v406, %v856
        %v942 = vmul.f32 %v407, %v861
        %v943 = vmul.f32 %v408, %v866
        %v944 = vmul.f32 %v409, %v871
        %v945 = vmul.f32 %v410, %v876
        %v946 = vmul.f32 %v411, %v881
        %v947 = vmul.f32 %v412, %v886
        %v948 = vmul.f32 %v413, %v891
        %v949 = vmul.f32 %v414, %v896
        %v950 = vmul.f32 %v415, %v901
        %v951 = vmul.f32 %v416, %v906
        %v952 = vmul.f32 %v417, %v911
        %v953 = vmul.f32 %v418, %v916
        %v954 = vmul.f32 %v419, %v921
        %v955 = vpack.c.bf16 %v924, %v923
        %v956 = vpack.c.bf16 %v926, %v925
        %v957 = vpack.c.bf16 %v928, %v927
        %v958 = vpack.c.bf16 %v930, %v929
        %v959 = vpack.c.bf16 %v932, %v931
        %v960 = vpack.c.bf16 %v934, %v933
        %v961 = vpack.c.bf16 %v936, %v935
        %v962 = vpack.c.bf16 %v938, %v937
        %v963 = vpack.c.bf16 %v940, %v939
        %v964 = vpack.c.bf16 %v942, %v941
        %v965 = vpack.c.bf16 %v944, %v943
        %v966 = vpack.c.bf16 %v946, %v945
        %v967 = vpack.c.bf16 %v948, %v947
        %v968 = vpack.c.bf16 %v950, %v949
        %v969 = vpack.c.bf16 %v952, %v951
        %v970 = vpack.c.bf16 %v954, %v953
        %s971 = scalar_lea.vmem %s2, 2
        %v972 = vld [vmem:[%s971] sm:$0x3]
        %vm973 = vcmask 23552
        %v975 = vsel %vm973, %v955, 0
        %v978 = vsel %vm973, %v956, 0
        %v981 = vsel %vm973, %v957, 0
        %v984 = vsel %vm973, %v958, 0
        %v987 = vsel %vm973, %v959, 0
        %v990 = vsel %vm973, %v960, 0
        %v993 = vsel %vm973, %v961, 0
        %v996 = vsel %vm973, %v962, 0
        %v999 = vsel %vm973, %v963, 0
        %v1002 = vsel %vm973, %v964, 0
        %v1005 = vsel %vm973, %v965, 0
        %v1008 = vsel %vm973, %v966, 0
        %v1011 = vsel %vm973, %v967, 0
        %v1014 = vsel %vm973, %v968, 0
        %v1017 = vsel %vm973, %v969, 0
        %v1020 = vsel %vm973, %v970, 0
        %vm1022 = vcmask 1040384
        %vm1023 = vcmask 1041408
        %v1024 = vsel %vm1022, 4294967295, 65535
        %v1025 = vsel %vm1023, %v1024, 0
        %v1027 = vand.u32 %v972, %v1025
        %1029 = vmatpush.bf16.msra.mxu0 0
        %1030 = vmatpush.bf16.msra.mxu0 0
        %1031 = vmatpush.bf16.msra.mxu0 0
        %1032 = vmatpush.bf16.msra.mxu0 0
        %1033 = vmatpush.bf16.msra.mxu0 0
        %1034 = vmatpush.bf16.msra.mxu0 0
        %1035 = vmatpush.bf16.msra.mxu0 0
        %1036 = vmatpush.bf16.msra.mxu0 %v1027
        %1037 = vmatmul.bf16.gmra.mxu0 %v975
        %v1038 = vpop.f32.mrf.mxu0
        %v1039 = vadd.f32 0.0, %v1038
        %v1040 = vpop.f32.mrf.mxu0
        %v1041 = vadd.f32 0.0, %v1040
        %1042 = vmatmul.bf16.gmra.mxu0 %v978
        %v1043 = vpop.f32.mrf.mxu0
        %v1044 = vadd.f32 0.0, %v1043
        %v1045 = vpop.f32.mrf.mxu0
        %v1046 = vadd.f32 0.0, %v1045
        %1047 = vmatmul.bf16.gmra.mxu0 %v981
        %v1048 = vpop.f32.mrf.mxu0
        %v1049 = vadd.f32 0.0, %v1048
        %v1050 = vpop.f32.mrf.mxu0
        %v1051 = vadd.f32 0.0, %v1050
        %1052 = vmatmul.bf16.gmra.mxu0 %v984
        %v1053 = vpop.f32.mrf.mxu0
        %v1054 = vadd.f32 0.0, %v1053
        %v1055 = vpop.f32.mrf.mxu0
        %v1056 = vadd.f32 0.0, %v1055
        %1057 = vmatmul.bf16.gmra.mxu0 %v987
        %v1058 = vpop.f32.mrf.mxu0
        %v1059 = vadd.f32 0.0, %v1058
        %v1060 = vpop.f32.mrf.mxu0
        %v1061 = vadd.f32 0.0, %v1060
        %1062 = vmatmul.bf16.gmra.mxu0 %v990
        %v1063 = vpop.f32.mrf.mxu0
        %v1064 = vadd.f32 0.0, %v1063
        %v1065 = vpop.f32.mrf.mxu0
        %v1066 = vadd.f32 0.0, %v1065
        %1067 = vmatmul.bf16.gmra.mxu0 %v993
        %v1068 = vpop.f32.mrf.mxu0
        %v1069 = vadd.f32 0.0, %v1068
        %v1070 = vpop.f32.mrf.mxu0
        %v1071 = vadd.f32 0.0, %v1070
        %1072 = vmatmul.bf16.gmra.mxu0 %v996
        %v1073 = vpop.f32.mrf.mxu0
        %v1074 = vadd.f32 0.0, %v1073
        %v1075 = vpop.f32.mrf.mxu0
        %v1076 = vadd.f32 0.0, %v1075
        %1077 = vmatmul.bf16.gmra.mxu0 %v999
        %v1078 = vpop.f32.mrf.mxu0
        %v1079 = vadd.f32 0.0, %v1078
        %v1080 = vpop.f32.mrf.mxu0
        %v1081 = vadd.f32 0.0, %v1080
        %1082 = vmatmul.bf16.gmra.mxu0 %v1002
        %v1083 = vpop.f32.mrf.mxu0
        %v1084 = vadd.f32 0.0, %v1083
        %v1085 = vpop.f32.mrf.mxu0
        %v1086 = vadd.f32 0.0, %v1085
        %1087 = vmatmul.bf16.gmra.mxu0 %v1005
        %v1088 = vpop.f32.mrf.mxu0
        %v1089 = vadd.f32 0.0, %v1088
        %v1090 = vpop.f32.mrf.mxu0
        %v1091 = vadd.f32 0.0, %v1090
        %1092 = vmatmul.bf16.gmra.mxu0 %v1008
        %v1093 = vpop.f32.mrf.mxu0
        %v1094 = vadd.f32 0.0, %v1093
        %v1095 = vpop.f32.mrf.mxu0
        %v1096 = vadd.f32 0.0, %v1095
        %1097 = vmatmul.bf16.gmra.mxu0 %v1011
        %v1098 = vpop.f32.mrf.mxu0
        %v1099 = vadd.f32 0.0, %v1098
        %v1100 = vpop.f32.mrf.mxu0
        %v1101 = vadd.f32 0.0, %v1100
        %1102 = vmatmul.bf16.gmra.mxu0 %v1014
        %v1103 = vpop.f32.mrf.mxu0
        %v1104 = vadd.f32 0.0, %v1103
        %v1105 = vpop.f32.mrf.mxu0
        %v1106 = vadd.f32 0.0, %v1105
        %1107 = vmatmul.bf16.gmra.mxu0 %v1017
        %v1108 = vpop.f32.mrf.mxu0
        %v1109 = vadd.f32 0.0, %v1108
        %v1110 = vpop.f32.mrf.mxu0
        %v1111 = vadd.f32 0.0, %v1110
        %1112 = vmatmul.bf16.gmra.mxu0 %v1020
        %v1113 = vpop.f32.mrf.mxu0
        %v1114 = vadd.f32 0.0, %v1113
        %v1115 = vpop.f32.mrf.mxu0
        %v1116 = vadd.f32 0.0, %v1115
        %1117 = vdwg.mxu0
        %v1119 = vsel %vm973, %v713, 0
        %v1122 = vsel %vm973, %v714, 0
        %v1125 = vsel %vm973, %v715, 0
        %v1128 = vsel %vm973, %v716, 0
        %v1131 = vsel %vm973, %v717, 0
        %v1134 = vsel %vm973, %v718, 0
        %v1137 = vsel %vm973, %v719, 0
        %v1140 = vsel %vm973, %v720, 0
        %v1143 = vsel %vm973, %v721, 0
        %v1146 = vsel %vm973, %v722, 0
        %v1149 = vsel %vm973, %v723, 0
        %v1152 = vsel %vm973, %v724, 0
        %v1155 = vsel %vm973, %v725, 0
        %v1158 = vsel %vm973, %v726, 0
        %v1161 = vsel %vm973, %v727, 0
        %v1164 = vsel %vm973, %v728, 0
        %v1167 = vand.u32 %v729, %v1025
        %1169 = vmatpush.bf16.msra.mxu0 0
        %1170 = vmatpush.bf16.msra.mxu0 0
        %1171 = vmatpush.bf16.msra.mxu0 0
        %1172 = vmatpush.bf16.msra.mxu0 0
        %1173 = vmatpush.bf16.msra.mxu0 0
        %1174 = vmatpush.bf16.msra.mxu0 0
        %1175 = vmatpush.bf16.msra.mxu0 0
        %1176 = vmatpush.bf16.msra.mxu0 %v1167
        %1177 = vmatmul.bf16.gmra.mxu0 %v1119
        %v1178 = vpop.f32.mrf.mxu0
        %v1179 = vadd.f32 %v1039, %v1178
        %v1180 = vpop.f32.mrf.mxu0
        %v1181 = vadd.f32 %v1041, %v1180
        %1182 = vmatmul.bf16.gmra.mxu0 %v1122
        %v1183 = vpop.f32.mrf.mxu0
        %v1184 = vadd.f32 %v1044, %v1183
        %v1185 = vpop.f32.mrf.mxu0
        %v1186 = vadd.f32 %v1046, %v1185
        %1187 = vmatmul.bf16.gmra.mxu0 %v1125
        %v1188 = vpop.f32.mrf.mxu0
        %v1189 = vadd.f32 %v1049, %v1188
        %v1190 = vpop.f32.mrf.mxu0
        %v1191 = vadd.f32 %v1051, %v1190
        %1192 = vmatmul.bf16.gmra.mxu0 %v1128
        %v1193 = vpop.f32.mrf.mxu0
        %v1194 = vadd.f32 %v1054, %v1193
        %v1195 = vpop.f32.mrf.mxu0
        %v1196 = vadd.f32 %v1056, %v1195
        %1197 = vmatmul.bf16.gmra.mxu0 %v1131
        %v1198 = vpop.f32.mrf.mxu0
        %v1199 = vadd.f32 %v1059, %v1198
        %v1200 = vpop.f32.mrf.mxu0
        %v1201 = vadd.f32 %v1061, %v1200
        %1202 = vmatmul.bf16.gmra.mxu0 %v1134
        %v1203 = vpop.f32.mrf.mxu0
        %v1204 = vadd.f32 %v1064, %v1203
        %v1205 = vpop.f32.mrf.mxu0
        %v1206 = vadd.f32 %v1066, %v1205
        %1207 = vmatmul.bf16.gmra.mxu0 %v1137
        %v1208 = vpop.f32.mrf.mxu0
        %v1209 = vadd.f32 %v1069, %v1208
        %v1210 = vpop.f32.mrf.mxu0
        %v1211 = vadd.f32 %v1071, %v1210
        %1212 = vmatmul.bf16.gmra.mxu0 %v1140
        %v1213 = vpop.f32.mrf.mxu0
        %v1214 = vadd.f32 %v1074, %v1213
        %v1215 = vpop.f32.mrf.mxu0
        %v1216 = vadd.f32 %v1076, %v1215
        %1217 = vmatmul.bf16.gmra.mxu0 %v1143
        %v1218 = vpop.f32.mrf.mxu0
        %v1219 = vadd.f32 %v1079, %v1218
        %v1220 = vpop.f32.mrf.mxu0
        %v1221 = vadd.f32 %v1081, %v1220
        %1222 = vmatmul.bf16.gmra.mxu0 %v1146
        %v1223 = vpop.f32.mrf.mxu0
        %v1224 = vadd.f32 %v1084, %v1223
        %v1225 = vpop.f32.mrf.mxu0
        %v1226 = vadd.f32 %v1086, %v1225
        %1227 = vmatmul.bf16.gmra.mxu0 %v1149
        %v1228 = vpop.f32.mrf.mxu0
        %v1229 = vadd.f32 %v1089, %v1228
        %v1230 = vpop.f32.mrf.mxu0
        %v1231 = vadd.f32 %v1091, %v1230
        %1232 = vmatmul.bf16.gmra.mxu0 %v1152
        %v1233 = vpop.f32.mrf.mxu0
        %v1234 = vadd.f32 %v1094, %v1233
        %v1235 = vpop.f32.mrf.mxu0
        %v1236 = vadd.f32 %v1096, %v1235
        %1237 = vmatmul.bf16.gmra.mxu0 %v1155
        %v1238 = vpop.f32.mrf.mxu0
        %v1239 = vadd.f32 %v1099, %v1238
        %v1240 = vpop.f32.mrf.mxu0
        %v1241 = vadd.f32 %v1101, %v1240
        %1242 = vmatmul.bf16.gmra.mxu0 %v1158
        %v1243 = vpop.f32.mrf.mxu0
        %v1244 = vadd.f32 %v1104, %v1243
        %v1245 = vpop.f32.mrf.mxu0
        %v1246 = vadd.f32 %v1106, %v1245
        %1247 = vmatmul.bf16.gmra.mxu0 %v1161
        %v1248 = vpop.f32.mrf.mxu0
        %v1249 = vadd.f32 %v1109, %v1248
        %v1250 = vpop.f32.mrf.mxu0
        %v1251 = vadd.f32 %v1111, %v1250
        %1252 = vmatmul.bf16.gmra.mxu0 %v1164
        %v1253 = vpop.f32.mrf.mxu0
        %v1254 = vadd.f32 %v1114, %v1253
        %v1255 = vpop.f32.mrf.mxu0
        %v1256 = vadd.f32 %v1116, %v1255
        %1257 = vdwg.mxu0
        %v1258 = vrot.slane %v390, 1
        %v1259 = vrot.slane %v391, 1
        %v1260 = vrot.slane %v392, 1
        %v1261 = vrot.slane %v393, 1
        %v1262 = vrot.slane %v394, 1
        %v1263 = vrot.slane %v395, 1
        %v1264 = vrot.slane %v396, 1
        %v1265 = vrot.slane %v397, 1
        %v1266 = vrot.slane %v398, 1
        %v1267 = vrot.slane %v399, 1
        %v1268 = vrot.slane %v400, 1
        %v1269 = vrot.slane %v401, 1
        %v1270 = vrot.slane %v402, 1
        %v1271 = vrot.slane %v403, 1
        %v1272 = vrot.slane %v404, 1
        %v1273 = vrot.slane %v405, 1
        %v1274 = vrot.slane %v406, 1
        %v1275 = vrot.slane %v407, 1
        %v1276 = vrot.slane %v408, 1
        %v1277 = vrot.slane %v409, 1
        %v1278 = vrot.slane %v410, 1
        %v1279 = vrot.slane %v411, 1
        %v1280 = vrot.slane %v412, 1
        %v1281 = vrot.slane %v413, 1
        %v1282 = vrot.slane %v414, 1
        %v1283 = vrot.slane %v415, 1
        %v1284 = vrot.slane %v416, 1
        %v1285 = vrot.slane %v417, 1
        %v1286 = vrot.slane %v418, 1
        %v1287 = vrot.slane %v419, 1
        %v1288 = vrot.slane %v420, 1
        %v1289 = vrot.slane %v421, 1
        %vm1290 = vcmp.lt.s32.totalorder %v455, 7
        %v1291 = vsel %vm1290, %v1288, %v1289
        %v1292 = vsel %vm1290, %v1287, %v1288
        %v1293 = vsel %vm1290, %v1286, %v1287
        %v1294 = vsel %vm1290, %v1285, %v1286
        %v1295 = vsel %vm1290, %v1284, %v1285
        %v1296 = vsel %vm1290, %v1283, %v1284
        %v1297 = vsel %vm1290, %v1282, %v1283
        %v1298 = vsel %vm1290, %v1281, %v1282
        %v1299 = vsel %vm1290, %v1280, %v1281
        %v1300 = vsel %vm1290, %v1279, %v1280
        %v1301 = vsel %vm1290, %v1278, %v1279
        %v1302 = vsel %vm1290, %v1277, %v1278
        %v1303 = vsel %vm1290, %v1276, %v1277
        %v1304 = vsel %vm1290, %v1275, %v1276
        %v1305 = vsel %vm1290, %v1274, %v1275
        %v1306 = vsel %vm1290, %v1273, %v1274
        %v1307 = vsel %vm1290, %v1272, %v1273
        %v1308 = vsel %vm1290, %v1271, %v1272
        %v1309 = vsel %vm1290, %v1270, %v1271
        %v1310 = vsel %vm1290, %v1269, %v1270
        %v1311 = vsel %vm1290, %v1268, %v1269
        %v1312 = vsel %vm1290, %v1267, %v1268
        %v1313 = vsel %vm1290, %v1266, %v1267
        %v1314 = vsel %vm1290, %v1265, %v1266
        %v1315 = vsel %vm1290, %v1264, %v1265
        %v1316 = vsel %vm1290, %v1263, %v1264
        %v1317 = vsel %vm1290, %v1262, %v1263
        %v1318 = vsel %vm1290, %v1261, %v1262
        %v1319 = vsel %vm1290, %v1260, %v1261
        %v1320 = vsel %vm1290, %v1259, %v1260
        %v1321 = vsel %vm1290, %v1258, %v1259
        %v1322 = vsel %vm1290, %v1289, %v1258
        %s1323 = scalar_lea.vmem %s1, 512
        %v1324 = vld [vmem:[%s1323] sm:$0xff]
        %v1325 = vld [vmem:[%s1323 + $0x8] sm:$0xff]
        %v1326 = vld [vmem:[%s1323 + $0x10] sm:$0xff]
        %v1327 = vld [vmem:[%s1323 + $0x18] sm:$0xff]
        %v1328 = vld [vmem:[%s1323 + $0x20] sm:$0xff]
        %v1329 = vld [vmem:[%s1323 + $0x28] sm:$0xff]
        %v1330 = vld [vmem:[%s1323 + $0x30] sm:$0xff]
        %v1331 = vld [vmem:[%s1323 + $0x38] sm:$0xff]
        %v1332 = vld [vmem:[%s1323 + $0x40] sm:$0xff]
        %v1333 = vld [vmem:[%s1323 + $0x48] sm:$0xff]
        %v1334 = vld [vmem:[%s1323 + $0x50] sm:$0xff]
        %v1335 = vld [vmem:[%s1323 + $0x58] sm:$0xff]
        %v1336 = vld [vmem:[%s1323 + $0x60] sm:$0xff]
        %v1337 = vld [vmem:[%s1323 + $0x68] sm:$0xff]
        %v1338 = vld [vmem:[%s1323 + $0x70] sm:$0xff]
        %v1339 = vld [vmem:[%s1323 + $0x78] sm:$0xff]
        %v1340 = vld [vmem:[%s1323 + $0x80] sm:$0xff]
        %v1341 = vld [vmem:[%s1323 + $0x88] sm:$0xff]
        %v1342 = vld [vmem:[%s1323 + $0x90] sm:$0xff]
        %v1343 = vld [vmem:[%s1323 + $0x98] sm:$0xff]
        %v1344 = vld [vmem:[%s1323 + $0xa0] sm:$0xff]
        %v1345 = vld [vmem:[%s1323 + $0xa8] sm:$0xff]
        %v1346 = vld [vmem:[%s1323 + $0xb0] sm:$0xff]
        %v1347 = vld [vmem:[%s1323 + $0xb8] sm:$0xff]
        %v1348 = vld [vmem:[%s1323 + $0xc0] sm:$0xff]
        %v1349 = vld [vmem:[%s1323 + $0xc8] sm:$0xff]
        %v1350 = vld [vmem:[%s1323 + $0xd0] sm:$0xff]
        %v1351 = vld [vmem:[%s1323 + $0xd8] sm:$0xff]
        %v1352 = vld [vmem:[%s1323 + $0xe0] sm:$0xff]
        %v1353 = vld [vmem:[%s1323 + $0xe8] sm:$0xff]
        %v1354 = vld [vmem:[%s1323 + $0xf0] sm:$0xff]
        %v1355 = vld [vmem:[%s1323 + $0xf8] sm:$0xff]
        %1357 = vset.pattern.permute.xlu0 0
        %1358 = vperm.xlu0 %1357, %v1324
        %v1359 = vpop.permute.xlu0 %1358
        %1362 = vset.pattern.permute.xlu0 0
        %1363 = vperm.xlu0 %1362, %v1325
        %v1364 = vpop.permute.xlu0 %1363
        %1367 = vset.pattern.permute.xlu0 0
        %1368 = vperm.xlu0 %1367, %v1326
        %v1369 = vpop.permute.xlu0 %1368
        %1372 = vset.pattern.permute.xlu0 0
        %1373 = vperm.xlu0 %1372, %v1327
        %v1374 = vpop.permute.xlu0 %1373
        %1377 = vset.pattern.permute.xlu0 0
        %1378 = vperm.xlu0 %1377, %v1328
        %v1379 = vpop.permute.xlu0 %1378
        %1382 = vset.pattern.permute.xlu0 0
        %1383 = vperm.xlu0 %1382, %v1329
        %v1384 = vpop.permute.xlu0 %1383
        %1387 = vset.pattern.permute.xlu0 0
        %1388 = vperm.xlu0 %1387, %v1330
        %v1389 = vpop.permute.xlu0 %1388
        %1392 = vset.pattern.permute.xlu0 0
        %1393 = vperm.xlu0 %1392, %v1331
        %v1394 = vpop.permute.xlu0 %1393
        %1397 = vset.pattern.permute.xlu0 0
        %1398 = vperm.xlu0 %1397, %v1332
        %v1399 = vpop.permute.xlu0 %1398
        %1402 = vset.pattern.permute.xlu0 0
        %1403 = vperm.xlu0 %1402, %v1333
        %v1404 = vpop.permute.xlu0 %1403
        %1407 = vset.pattern.permute.xlu0 0
        %1408 = vperm.xlu0 %1407, %v1334
        %v1409 = vpop.permute.xlu0 %1408
        %1412 = vset.pattern.permute.xlu0 0
        %1413 = vperm.xlu0 %1412, %v1335
        %v1414 = vpop.permute.xlu0 %1413
        %1417 = vset.pattern.permute.xlu0 0
        %1418 = vperm.xlu0 %1417, %v1336
        %v1419 = vpop.permute.xlu0 %1418
        %1422 = vset.pattern.permute.xlu0 0
        %1423 = vperm.xlu0 %1422, %v1337
        %v1424 = vpop.permute.xlu0 %1423
        %1427 = vset.pattern.permute.xlu0 0
        %1428 = vperm.xlu0 %1427, %v1338
        %v1429 = vpop.permute.xlu0 %1428
        %1432 = vset.pattern.permute.xlu0 0
        %1433 = vperm.xlu0 %1432, %v1339
        %v1434 = vpop.permute.xlu0 %1433
        %1437 = vset.pattern.permute.xlu0 0
        %1438 = vperm.xlu0 %1437, %v1340
        %v1439 = vpop.permute.xlu0 %1438
        %1442 = vset.pattern.permute.xlu0 0
        %1443 = vperm.xlu0 %1442, %v1341
        %v1444 = vpop.permute.xlu0 %1443
        %1447 = vset.pattern.permute.xlu0 0
        %1448 = vperm.xlu0 %1447, %v1342
        %v1449 = vpop.permute.xlu0 %1448
        %1452 = vset.pattern.permute.xlu0 0
        %1453 = vperm.xlu0 %1452, %v1343
        %v1454 = vpop.permute.xlu0 %1453
        %1457 = vset.pattern.permute.xlu0 0
        %1458 = vperm.xlu0 %1457, %v1344
        %v1459 = vpop.permute.xlu0 %1458
        %1462 = vset.pattern.permute.xlu0 0
        %1463 = vperm.xlu0 %1462, %v1345
        %v1464 = vpop.permute.xlu0 %1463
        %1467 = vset.pattern.permute.xlu0 0
        %1468 = vperm.xlu0 %1467, %v1346
        %v1469 = vpop.permute.xlu0 %1468
        %1472 = vset.pattern.permute.xlu0 0
        %1473 = vperm.xlu0 %1472, %v1347
        %v1474 = vpop.permute.xlu0 %1473
        %1477 = vset.pattern.permute.xlu0 0
        %1478 = vperm.xlu0 %1477, %v1348
        %v1479 = vpop.permute.xlu0 %1478
        %1482 = vset.pattern.permute.xlu0 0
        %1483 = vperm.xlu0 %1482, %v1349
        %v1484 = vpop.permute.xlu0 %1483
        %1487 = vset.pattern.permute.xlu0 0
        %1488 = vperm.xlu0 %1487, %v1350
        %v1489 = vpop.permute.xlu0 %1488
        %1492 = vset.pattern.permute.xlu0 0
        %1493 = vperm.xlu0 %1492, %v1351
        %v1494 = vpop.permute.xlu0 %1493
        %1497 = vset.pattern.permute.xlu0 0
        %1498 = vperm.xlu0 %1497, %v1352
        %v1499 = vpop.permute.xlu0 %1498
        %1502 = vset.pattern.permute.xlu0 0
        %1503 = vperm.xlu0 %1502, %v1353
        %v1504 = vpop.permute.xlu0 %1503
        %1507 = vset.pattern.permute.xlu0 0
        %1508 = vperm.xlu0 %1507, %v1354
        %v1509 = vpop.permute.xlu0 %1508
        %1512 = vset.pattern.permute.xlu0 0
        %1513 = vperm.xlu0 %1512, %v1355
        %v1514 = vpop.permute.xlu0 %1513
        %v1516 = vmul.f32 %v1291, %v1359
        %v1517 = vmul.f32 %v1322, %v1364
        %v1518 = vmul.f32 %v1321, %v1369
        %v1519 = vmul.f32 %v1320, %v1374
        %v1520 = vmul.f32 %v1319, %v1379
        %v1521 = vmul.f32 %v1318, %v1384
        %v1522 = vmul.f32 %v1317, %v1389
        %v1523 = vmul.f32 %v1316, %v1394
        %v1524 = vmul.f32 %v1315, %v1399
        %v1525 = vmul.f32 %v1314, %v1404
        %v1526 = vmul.f32 %v1313, %v1409
        %v1527 = vmul.f32 %v1312, %v1414
        %v1528 = vmul.f32 %v1311, %v1419
        %v1529 = vmul.f32 %v1310, %v1424
        %v1530 = vmul.f32 %v1309, %v1429
        %v1531 = vmul.f32 %v1308, %v1434
        %v1532 = vmul.f32 %v1307, %v1439
        %v1533 = vmul.f32 %v1306, %v1444
        %v1534 = vmul.f32 %v1305, %v1449
        %v1535 = vmul.f32 %v1304, %v1454
        %v1536 = vmul.f32 %v1303, %v1459
        %v1537 = vmul.f32 %v1302, %v1464
        %v1538 = vmul.f32 %v1301, %v1469
        %v1539 = vmul.f32 %v1300, %v1474
        %v1540 = vmul.f32 %v1299, %v1479
        %v1541 = vmul.f32 %v1298, %v1484
        %v1542 = vmul.f32 %v1297, %v1489
        %v1543 = vmul.f32 %v1296, %v1494
        %v1544 = vmul.f32 %v1295, %v1499
        %v1545 = vmul.f32 %v1294, %v1504
        %v1546 = vmul.f32 %v1293, %v1509
        %v1547 = vmul.f32 %v1292, %v1514
        %v1548 = vpack.c.bf16 %v1517, %v1516
        %v1549 = vpack.c.bf16 %v1519, %v1518
        %v1550 = vpack.c.bf16 %v1521, %v1520
        %v1551 = vpack.c.bf16 %v1523, %v1522
        %v1552 = vpack.c.bf16 %v1525, %v1524
        %v1553 = vpack.c.bf16 %v1527, %v1526
        %v1554 = vpack.c.bf16 %v1529, %v1528
        %v1555 = vpack.c.bf16 %v1531, %v1530
        %v1556 = vpack.c.bf16 %v1533, %v1532
        %v1557 = vpack.c.bf16 %v1535, %v1534
        %v1558 = vpack.c.bf16 %v1537, %v1536
        %v1559 = vpack.c.bf16 %v1539, %v1538
        %v1560 = vpack.c.bf16 %v1541, %v1540
        %v1561 = vpack.c.bf16 %v1543, %v1542
        %v1562 = vpack.c.bf16 %v1545, %v1544
        %v1563 = vpack.c.bf16 %v1547, %v1546
        %s1564 = scalar_lea.vmem %s2, 4
        %v1565 = vld [vmem:[%s1564] sm:$0x3]
        %v1567 = vsel %vm973, %v1548, 0
        %v1570 = vsel %vm973, %v1549, 0
        %v1573 = vsel %vm973, %v1550, 0
        %v1576 = vsel %vm973, %v1551, 0
        %v1579 = vsel %vm973, %v1552, 0
        %v1582 = vsel %vm973, %v1553, 0
        %v1585 = vsel %vm973, %v1554, 0
        %v1588 = vsel %vm973, %v1555, 0
        %v1591 = vsel %vm973, %v1556, 0
        %v1594 = vsel %vm973, %v1557, 0
        %v1597 = vsel %vm973, %v1558, 0
        %v1600 = vsel %vm973, %v1559, 0
        %v1603 = vsel %vm973, %v1560, 0
        %v1606 = vsel %vm973, %v1561, 0
        %v1609 = vsel %vm973, %v1562, 0
        %v1612 = vsel %vm973, %v1563, 0
        %v1615 = vand.u32 %v1565, %v1025
        %1617 = vmatpush.bf16.msra.mxu0 0
        %1618 = vmatpush.bf16.msra.mxu0 0
        %1619 = vmatpush.bf16.msra.mxu0 0
        %1620 = vmatpush.bf16.msra.mxu0 0
        %1621 = vmatpush.bf16.msra.mxu0 0
        %1622 = vmatpush.bf16.msra.mxu0 0
        %1623 = vmatpush.bf16.msra.mxu0 0
        %1624 = vmatpush.bf16.msra.mxu0 %v1615
        %1625 = vmatmul.bf16.gmra.mxu0 %v1567
        %v1626 = vpop.f32.mrf.mxu0
        %v1627 = vadd.f32 0.0, %v1626
        %v1628 = vpop.f32.mrf.mxu0
        %v1629 = vadd.f32 0.0, %v1628
        %1630 = vmatmul.bf16.gmra.mxu0 %v1570
        %v1631 = vpop.f32.mrf.mxu0
        %v1632 = vadd.f32 0.0, %v1631
        %v1633 = vpop.f32.mrf.mxu0
        %v1634 = vadd.f32 0.0, %v1633
        %1635 = vmatmul.bf16.gmra.mxu0 %v1573
        %v1636 = vpop.f32.mrf.mxu0
        %v1637 = vadd.f32 0.0, %v1636
        %v1638 = vpop.f32.mrf.mxu0
        %v1639 = vadd.f32 0.0, %v1638
        %1640 = vmatmul.bf16.gmra.mxu0 %v1576
        %v1641 = vpop.f32.mrf.mxu0
        %v1642 = vadd.f32 0.0, %v1641
        %v1643 = vpop.f32.mrf.mxu0
        %v1644 = vadd.f32 0.0, %v1643
        %1645 = vmatmul.bf16.gmra.mxu0 %v1579
        %v1646 = vpop.f32.mrf.mxu0
        %v1647 = vadd.f32 0.0, %v1646
        %v1648 = vpop.f32.mrf.mxu0
        %v1649 = vadd.f32 0.0, %v1648
        %1650 = vmatmul.bf16.gmra.mxu0 %v1582
        %v1651 = vpop.f32.mrf.mxu0
        %v1652 = vadd.f32 0.0, %v1651
        %v1653 = vpop.f32.mrf.mxu0
        %v1654 = vadd.f32 0.0, %v1653
        %1655 = vmatmul.bf16.gmra.mxu0 %v1585
        %v1656 = vpop.f32.mrf.mxu0
        %v1657 = vadd.f32 0.0, %v1656
        %v1658 = vpop.f32.mrf.mxu0
        %v1659 = vadd.f32 0.0, %v1658
        %1660 = vmatmul.bf16.gmra.mxu0 %v1588
        %v1661 = vpop.f32.mrf.mxu0
        %v1662 = vadd.f32 0.0, %v1661
        %v1663 = vpop.f32.mrf.mxu0
        %v1664 = vadd.f32 0.0, %v1663
        %1665 = vmatmul.bf16.gmra.mxu0 %v1591
        %v1666 = vpop.f32.mrf.mxu0
        %v1667 = vadd.f32 0.0, %v1666
        %v1668 = vpop.f32.mrf.mxu0
        %v1669 = vadd.f32 0.0, %v1668
        %1670 = vmatmul.bf16.gmra.mxu0 %v1594
        %v1671 = vpop.f32.mrf.mxu0
        %v1672 = vadd.f32 0.0, %v1671
        %v1673 = vpop.f32.mrf.mxu0
        %v1674 = vadd.f32 0.0, %v1673
        %1675 = vmatmul.bf16.gmra.mxu0 %v1597
        %v1676 = vpop.f32.mrf.mxu0
        %v1677 = vadd.f32 0.0, %v1676
        %v1678 = vpop.f32.mrf.mxu0
        %v1679 = vadd.f32 0.0, %v1678
        %1680 = vmatmul.bf16.gmra.mxu0 %v1600
        %v1681 = vpop.f32.mrf.mxu0
        %v1682 = vadd.f32 0.0, %v1681
        %v1683 = vpop.f32.mrf.mxu0
        %v1684 = vadd.f32 0.0, %v1683
        %1685 = vmatmul.bf16.gmra.mxu0 %v1603
        %v1686 = vpop.f32.mrf.mxu0
        %v1687 = vadd.f32 0.0, %v1686
        %v1688 = vpop.f32.mrf.mxu0
        %v1689 = vadd.f32 0.0, %v1688
        %1690 = vmatmul.bf16.gmra.mxu0 %v1606
        %v1691 = vpop.f32.mrf.mxu0
        %v1692 = vadd.f32 0.0, %v1691
        %v1693 = vpop.f32.mrf.mxu0
        %v1694 = vadd.f32 0.0, %v1693
        %1695 = vmatmul.bf16.gmra.mxu0 %v1609
        %v1696 = vpop.f32.mrf.mxu0
        %v1697 = vadd.f32 0.0, %v1696
        %v1698 = vpop.f32.mrf.mxu0
        %v1699 = vadd.f32 0.0, %v1698
        %1700 = vmatmul.bf16.gmra.mxu0 %v1612
        %v1701 = vpop.f32.mrf.mxu0
        %v1702 = vadd.f32 0.0, %v1701
        %v1703 = vpop.f32.mrf.mxu0
        %v1704 = vadd.f32 0.0, %v1703
        %1705 = vdwg.mxu0
        %v1706 = vadd.f32 %v1179, %v1627
        %v1707 = vadd.f32 %v1181, %v1629
        %v1708 = vadd.f32 %v1184, %v1632
        %v1709 = vadd.f32 %v1186, %v1634
        %v1710 = vadd.f32 %v1189, %v1637
        %v1711 = vadd.f32 %v1191, %v1639
        %v1712 = vadd.f32 %v1194, %v1642
        %v1713 = vadd.f32 %v1196, %v1644
        %v1714 = vadd.f32 %v1199, %v1647
        %v1715 = vadd.f32 %v1201, %v1649
        %v1716 = vadd.f32 %v1204, %v1652
        %v1717 = vadd.f32 %v1206, %v1654
        %v1718 = vadd.f32 %v1209, %v1657
        %v1719 = vadd.f32 %v1211, %v1659
        %v1720 = vadd.f32 %v1214, %v1662
        %v1721 = vadd.f32 %v1216, %v1664
        %v1722 = vadd.f32 %v1219, %v1667
        %v1723 = vadd.f32 %v1221, %v1669
        %v1724 = vadd.f32 %v1224, %v1672
        %v1725 = vadd.f32 %v1226, %v1674
        %v1726 = vadd.f32 %v1229, %v1677
        %v1727 = vadd.f32 %v1231, %v1679
        %v1728 = vadd.f32 %v1234, %v1682
        %v1729 = vadd.f32 %v1236, %v1684
        %v1730 = vadd.f32 %v1239, %v1687
        %v1731 = vadd.f32 %v1241, %v1689
        %v1732 = vadd.f32 %v1244, %v1692
        %v1733 = vadd.f32 %v1246, %v1694
        %v1734 = vadd.f32 %v1249, %v1697
        %v1735 = vadd.f32 %v1251, %v1699
        %v1736 = vadd.f32 %v1254, %v1702
        %v1737 = vadd.f32 %v1256, %v1704
        %s1738 = scalar_lea.vmem %s1, 768
        %v1739 = vld [vmem:[%s1738] sm:$0xff]
        %v1740 = vld [vmem:[%s1738 + $0x8] sm:$0xff]
        %v1741 = vld [vmem:[%s1738 + $0x10] sm:$0xff]
        %v1742 = vld [vmem:[%s1738 + $0x18] sm:$0xff]
        %v1743 = vld [vmem:[%s1738 + $0x20] sm:$0xff]
        %v1744 = vld [vmem:[%s1738 + $0x28] sm:$0xff]
        %v1745 = vld [vmem:[%s1738 + $0x30] sm:$0xff]
        %v1746 = vld [vmem:[%s1738 + $0x38] sm:$0xff]
        %v1747 = vld [vmem:[%s1738 + $0x40] sm:$0xff]
        %v1748 = vld [vmem:[%s1738 + $0x48] sm:$0xff]
        %v1749 = vld [vmem:[%s1738 + $0x50] sm:$0xff]
        %v1750 = vld [vmem:[%s1738 + $0x58] sm:$0xff]
        %v1751 = vld [vmem:[%s1738 + $0x60] sm:$0xff]
        %v1752 = vld [vmem:[%s1738 + $0x68] sm:$0xff]
        %v1753 = vld [vmem:[%s1738 + $0x70] sm:$0xff]
        %v1754 = vld [vmem:[%s1738 + $0x78] sm:$0xff]
        %v1755 = vld [vmem:[%s1738 + $0x80] sm:$0xff]
        %v1756 = vld [vmem:[%s1738 + $0x88] sm:$0xff]
        %v1757 = vld [vmem:[%s1738 + $0x90] sm:$0xff]
        %v1758 = vld [vmem:[%s1738 + $0x98] sm:$0xff]
        %v1759 = vld [vmem:[%s1738 + $0xa0] sm:$0xff]
        %v1760 = vld [vmem:[%s1738 + $0xa8] sm:$0xff]
        %v1761 = vld [vmem:[%s1738 + $0xb0] sm:$0xff]
        %v1762 = vld [vmem:[%s1738 + $0xb8] sm:$0xff]
        %v1763 = vld [vmem:[%s1738 + $0xc0] sm:$0xff]
        %v1764 = vld [vmem:[%s1738 + $0xc8] sm:$0xff]
        %v1765 = vld [vmem:[%s1738 + $0xd0] sm:$0xff]
        %v1766 = vld [vmem:[%s1738 + $0xd8] sm:$0xff]
        %v1767 = vld [vmem:[%s1738 + $0xe0] sm:$0xff]
        %v1768 = vld [vmem:[%s1738 + $0xe8] sm:$0xff]
        %v1769 = vld [vmem:[%s1738 + $0xf0] sm:$0xff]
        %v1770 = vld [vmem:[%s1738 + $0xf8] sm:$0xff]
        %1772 = vset.pattern.permute.xlu0 0
        %1773 = vperm.xlu0 %1772, %v1739
        %v1774 = vpop.permute.xlu0 %1773
        %1777 = vset.pattern.permute.xlu0 0
        %1778 = vperm.xlu0 %1777, %v1740
        %v1779 = vpop.permute.xlu0 %1778
        %1782 = vset.pattern.permute.xlu0 0
        %1783 = vperm.xlu0 %1782, %v1741
        %v1784 = vpop.permute.xlu0 %1783
        %1787 = vset.pattern.permute.xlu0 0
        %1788 = vperm.xlu0 %1787, %v1742
        %v1789 = vpop.permute.xlu0 %1788
        %1792 = vset.pattern.permute.xlu0 0
        %1793 = vperm.xlu0 %1792, %v1743
        %v1794 = vpop.permute.xlu0 %1793
        %1797 = vset.pattern.permute.xlu0 0
        %1798 = vperm.xlu0 %1797, %v1744
        %v1799 = vpop.permute.xlu0 %1798
        %1802 = vset.pattern.permute.xlu0 0
        %1803 = vperm.xlu0 %1802, %v1745
        %v1804 = vpop.permute.xlu0 %1803
        %1807 = vset.pattern.permute.xlu0 0
        %1808 = vperm.xlu0 %1807, %v1746
        %v1809 = vpop.permute.xlu0 %1808
        %1812 = vset.pattern.permute.xlu0 0
        %1813 = vperm.xlu0 %1812, %v1747
        %v1814 = vpop.permute.xlu0 %1813
        %1817 = vset.pattern.permute.xlu0 0
        %1818 = vperm.xlu0 %1817, %v1748
        %v1819 = vpop.permute.xlu0 %1818
        %1822 = vset.pattern.permute.xlu0 0
        %1823 = vperm.xlu0 %1822, %v1749
        %v1824 = vpop.permute.xlu0 %1823
        %1827 = vset.pattern.permute.xlu0 0
        %1828 = vperm.xlu0 %1827, %v1750
        %v1829 = vpop.permute.xlu0 %1828
        %1832 = vset.pattern.permute.xlu0 0
        %1833 = vperm.xlu0 %1832, %v1751
        %v1834 = vpop.permute.xlu0 %1833
        %1837 = vset.pattern.permute.xlu0 0
        %1838 = vperm.xlu0 %1837, %v1752
        %v1839 = vpop.permute.xlu0 %1838
        %1842 = vset.pattern.permute.xlu0 0
        %1843 = vperm.xlu0 %1842, %v1753
        %v1844 = vpop.permute.xlu0 %1843
        %1847 = vset.pattern.permute.xlu0 0
        %1848 = vperm.xlu0 %1847, %v1754
        %v1849 = vpop.permute.xlu0 %1848
        %1852 = vset.pattern.permute.xlu0 0
        %1853 = vperm.xlu0 %1852, %v1755
        %v1854 = vpop.permute.xlu0 %1853
        %1857 = vset.pattern.permute.xlu0 0
        %1858 = vperm.xlu0 %1857, %v1756
        %v1859 = vpop.permute.xlu0 %1858
        %1862 = vset.pattern.permute.xlu0 0
        %1863 = vperm.xlu0 %1862, %v1757
        %v1864 = vpop.permute.xlu0 %1863
        %1867 = vset.pattern.permute.xlu0 0
        %1868 = vperm.xlu0 %1867, %v1758
        %v1869 = vpop.permute.xlu0 %1868
        %1872 = vset.pattern.permute.xlu0 0
        %1873 = vperm.xlu0 %1872, %v1759
        %v1874 = vpop.permute.xlu0 %1873
        %1877 = vset.pattern.permute.xlu0 0
        %1878 = vperm.xlu0 %1877, %v1760
        %v1879 = vpop.permute.xlu0 %1878
        %1882 = vset.pattern.permute.xlu0 0
        %1883 = vperm.xlu0 %1882, %v1761
        %v1884 = vpop.permute.xlu0 %1883
        %1887 = vset.pattern.permute.xlu0 0
        %1888 = vperm.xlu0 %1887, %v1762
        %v1889 = vpop.permute.xlu0 %1888
        %1892 = vset.pattern.permute.xlu0 0
        %1893 = vperm.xlu0 %1892, %v1763
        %v1894 = vpop.permute.xlu0 %1893
        %1897 = vset.pattern.permute.xlu0 0
        %1898 = vperm.xlu0 %1897, %v1764
        %v1899 = vpop.permute.xlu0 %1898
        %1902 = vset.pattern.permute.xlu0 0
        %1903 = vperm.xlu0 %1902, %v1765
        %v1904 = vpop.permute.xlu0 %1903
        %1907 = vset.pattern.permute.xlu0 0
        %1908 = vperm.xlu0 %1907, %v1766
        %v1909 = vpop.permute.xlu0 %1908
        %1912 = vset.pattern.permute.xlu0 0
        %1913 = vperm.xlu0 %1912, %v1767
        %v1914 = vpop.permute.xlu0 %1913
        %1917 = vset.pattern.permute.xlu0 0
        %1918 = vperm.xlu0 %1917, %v1768
        %v1919 = vpop.permute.xlu0 %1918
        %1922 = vset.pattern.permute.xlu0 0
        %1923 = vperm.xlu0 %1922, %v1769
        %v1924 = vpop.permute.xlu0 %1923
        %1927 = vset.pattern.permute.xlu0 0
        %1928 = vperm.xlu0 %1927, %v1770
        %v1929 = vpop.permute.xlu0 %1928
        %v1931 = vmul.f32 %v488, %v1774
        %v1932 = vmul.f32 %v487, %v1779
        %v1933 = vmul.f32 %v486, %v1784
        %v1934 = vmul.f32 %v485, %v1789
        %v1935 = vmul.f32 %v484, %v1794
        %v1936 = vmul.f32 %v483, %v1799
        %v1937 = vmul.f32 %v482, %v1804
        %v1938 = vmul.f32 %v481, %v1809
        %v1939 = vmul.f32 %v480, %v1814
        %v1940 = vmul.f32 %v479, %v1819
        %v1941 = vmul.f32 %v478, %v1824
        %v1942 = vmul.f32 %v477, %v1829
        %v1943 = vmul.f32 %v476, %v1834
        %v1944 = vmul.f32 %v475, %v1839
        %v1945 = vmul.f32 %v474, %v1844
        %v1946 = vmul.f32 %v473, %v1849
        %v1947 = vmul.f32 %v472, %v1854
        %v1948 = vmul.f32 %v471, %v1859
        %v1949 = vmul.f32 %v470, %v1864
        %v1950 = vmul.f32 %v469, %v1869
        %v1951 = vmul.f32 %v468, %v1874
        %v1952 = vmul.f32 %v467, %v1879
        %v1953 = vmul.f32 %v466, %v1884
        %v1954 = vmul.f32 %v465, %v1889
        %v1955 = vmul.f32 %v464, %v1894
        %v1956 = vmul.f32 %v463, %v1899
        %v1957 = vmul.f32 %v462, %v1904
        %v1958 = vmul.f32 %v461, %v1909
        %v1959 = vmul.f32 %v460, %v1914
        %v1960 = vmul.f32 %v459, %v1919
        %v1961 = vmul.f32 %v458, %v1924
        %v1962 = vmul.f32 %v457, %v1929
        %v1963 = vpack.c.bf16 %v1932, %v1931
        %v1964 = vpack.c.bf16 %v1934, %v1933
        %v1965 = vpack.c.bf16 %v1936, %v1935
        %v1966 = vpack.c.bf16 %v1938, %v1937
        %v1967 = vpack.c.bf16 %v1940, %v1939
        %v1968 = vpack.c.bf16 %v1942, %v1941
        %v1969 = vpack.c.bf16 %v1944, %v1943
        %v1970 = vpack.c.bf16 %v1946, %v1945
        %v1971 = vpack.c.bf16 %v1948, %v1947
        %v1972 = vpack.c.bf16 %v1950, %v1949
        %v1973 = vpack.c.bf16 %v1952, %v1951
        %v1974 = vpack.c.bf16 %v1954, %v1953
        %v1975 = vpack.c.bf16 %v1956, %v1955
        %v1976 = vpack.c.bf16 %v1958, %v1957
        %v1977 = vpack.c.bf16 %v1960, %v1959
        %v1978 = vpack.c.bf16 %v1962, %v1961
        %s1979 = scalar_lea.vmem %s2, 6
        %v1980 = vld [vmem:[%s1979] sm:$0x3]
        %v1982 = vsel %vm973, %v1963, 0
        %v1985 = vsel %vm973, %v1964, 0
        %v1988 = vsel %vm973, %v1965, 0
        %v1991 = vsel %vm973, %v1966, 0
        %v1994 = vsel %vm973, %v1967, 0
        %v1997 = vsel %vm973, %v1968, 0
        %v2000 = vsel %vm973, %v1969, 0
        %v2003 = vsel %vm973, %v1970, 0
        %v2006 = vsel %vm973, %v1971, 0
        %v2009 = vsel %vm973, %v1972, 0
        %v2012 = vsel %vm973, %v1973, 0
        %v2015 = vsel %vm973, %v1974, 0
        %v2018 = vsel %vm973, %v1975, 0
        %v2021 = vsel %vm973, %v1976, 0
        %v2024 = vsel %vm973, %v1977, 0
        %v2027 = vsel %vm973, %v1978, 0
        %v2030 = vand.u32 %v1980, %v1025
        %2032 = vmatpush.bf16.msra.mxu0 0
        %2033 = vmatpush.bf16.msra.mxu0 0
        %2034 = vmatpush.bf16.msra.mxu0 0
        %2035 = vmatpush.bf16.msra.mxu0 0
        %2036 = vmatpush.bf16.msra.mxu0 0
        %2037 = vmatpush.bf16.msra.mxu0 0
        %2038 = vmatpush.bf16.msra.mxu0 0
        %2039 = vmatpush.bf16.msra.mxu0 %v2030
        %2040 = vmatmul.bf16.gmra.mxu0 %v1982
        %v2041 = vpop.f32.mrf.mxu0
        %v2042 = vadd.f32 0.0, %v2041
        %v2043 = vpop.f32.mrf.mxu0
        %v2044 = vadd.f32 0.0, %v2043
        %2045 = vmatmul.bf16.gmra.mxu0 %v1985
        %v2046 = vpop.f32.mrf.mxu0
        %v2047 = vadd.f32 0.0, %v2046
        %v2048 = vpop.f32.mrf.mxu0
        %v2049 = vadd.f32 0.0, %v2048
        %2050 = vmatmul.bf16.gmra.mxu0 %v1988
        %v2051 = vpop.f32.mrf.mxu0
        %v2052 = vadd.f32 0.0, %v2051
        %v2053 = vpop.f32.mrf.mxu0
        %v2054 = vadd.f32 0.0, %v2053
        %2055 = vmatmul.bf16.gmra.mxu0 %v1991
        %v2056 = vpop.f32.mrf.mxu0
        %v2057 = vadd.f32 0.0, %v2056
        %v2058 = vpop.f32.mrf.mxu0
        %v2059 = vadd.f32 0.0, %v2058
        %2060 = vmatmul.bf16.gmra.mxu0 %v1994
        %v2061 = vpop.f32.mrf.mxu0
        %v2062 = vadd.f32 0.0, %v2061
        %v2063 = vpop.f32.mrf.mxu0
        %v2064 = vadd.f32 0.0, %v2063
        %2065 = vmatmul.bf16.gmra.mxu0 %v1997
        %v2066 = vpop.f32.mrf.mxu0
        %v2067 = vadd.f32 0.0, %v2066
        %v2068 = vpop.f32.mrf.mxu0
        %v2069 = vadd.f32 0.0, %v2068
        %2070 = vmatmul.bf16.gmra.mxu0 %v2000
        %v2071 = vpop.f32.mrf.mxu0
        %v2072 = vadd.f32 0.0, %v2071
        %v2073 = vpop.f32.mrf.mxu0
        %v2074 = vadd.f32 0.0, %v2073
        %2075 = vmatmul.bf16.gmra.mxu0 %v2003
        %v2076 = vpop.f32.mrf.mxu0
        %v2077 = vadd.f32 0.0, %v2076
        %v2078 = vpop.f32.mrf.mxu0
        %v2079 = vadd.f32 0.0, %v2078
        %2080 = vmatmul.bf16.gmra.mxu0 %v2006
        %v2081 = vpop.f32.mrf.mxu0
        %v2082 = vadd.f32 0.0, %v2081
        %v2083 = vpop.f32.mrf.mxu0
        %v2084 = vadd.f32 0.0, %v2083
        %2085 = vmatmul.bf16.gmra.mxu0 %v2009
        %v2086 = vpop.f32.mrf.mxu0
        %v2087 = vadd.f32 0.0, %v2086
        %v2088 = vpop.f32.mrf.mxu0
        %v2089 = vadd.f32 0.0, %v2088
        %2090 = vmatmul.bf16.gmra.mxu0 %v2012
        %v2091 = vpop.f32.mrf.mxu0
        %v2092 = vadd.f32 0.0, %v2091
        %v2093 = vpop.f32.mrf.mxu0
        %v2094 = vadd.f32 0.0, %v2093
        %2095 = vmatmul.bf16.gmra.mxu0 %v2015
        %v2096 = vpop.f32.mrf.mxu0
        %v2097 = vadd.f32 0.0, %v2096
        %v2098 = vpop.f32.mrf.mxu0
        %v2099 = vadd.f32 0.0, %v2098
        %2100 = vmatmul.bf16.gmra.mxu0 %v2018
        %v2101 = vpop.f32.mrf.mxu0
        %v2102 = vadd.f32 0.0, %v2101
        %v2103 = vpop.f32.mrf.mxu0
        %v2104 = vadd.f32 0.0, %v2103
        %2105 = vmatmul.bf16.gmra.mxu0 %v2021
        %v2106 = vpop.f32.mrf.mxu0
        %v2107 = vadd.f32 0.0, %v2106
        %v2108 = vpop.f32.mrf.mxu0
        %v2109 = vadd.f32 0.0, %v2108
        %2110 = vmatmul.bf16.gmra.mxu0 %v2024
        %v2111 = vpop.f32.mrf.mxu0
        %v2112 = vadd.f32 0.0, %v2111
        %v2113 = vpop.f32.mrf.mxu0
        %v2114 = vadd.f32 0.0, %v2113
        %2115 = vmatmul.bf16.gmra.mxu0 %v2027
        %v2116 = vpop.f32.mrf.mxu0
        %v2117 = vadd.f32 0.0, %v2116
        %v2118 = vpop.f32.mrf.mxu0
        %v2119 = vadd.f32 0.0, %v2118
        %2120 = vdwg.mxu0
        %v2121 = vadd.f32 %v1706, %v2042
        %v2122 = vadd.f32 %v1707, %v2044
        %v2123 = vadd.f32 %v1708, %v2047
        %v2124 = vadd.f32 %v1709, %v2049
        %v2125 = vadd.f32 %v1710, %v2052
        %v2126 = vadd.f32 %v1711, %v2054
        %v2127 = vadd.f32 %v1712, %v2057
        %v2128 = vadd.f32 %v1713, %v2059
        %v2129 = vadd.f32 %v1714, %v2062
        %v2130 = vadd.f32 %v1715, %v2064
        %v2131 = vadd.f32 %v1716, %v2067
        %v2132 = vadd.f32 %v1717, %v2069
        %v2133 = vadd.f32 %v1718, %v2072
        %v2134 = vadd.f32 %v1719, %v2074
        %v2135 = vadd.f32 %v1720, %v2077
        %v2136 = vadd.f32 %v1721, %v2079
        %v2137 = vadd.f32 %v1722, %v2082
        %v2138 = vadd.f32 %v1723, %v2084
        %v2139 = vadd.f32 %v1724, %v2087
        %v2140 = vadd.f32 %v1725, %v2089
        %v2141 = vadd.f32 %v1726, %v2092
        %v2142 = vadd.f32 %v1727, %v2094
        %v2143 = vadd.f32 %v1728, %v2097
        %v2144 = vadd.f32 %v1729, %v2099
        %v2145 = vadd.f32 %v1730, %v2102
        %v2146 = vadd.f32 %v1731, %v2104
        %v2147 = vadd.f32 %v1732, %v2107
        %v2148 = vadd.f32 %v1733, %v2109
        %v2149 = vadd.f32 %v1734, %v2112
        %v2150 = vadd.f32 %v1735, %v2114
        %v2151 = vadd.f32 %v1736, %v2117
        %v2152 = vadd.f32 %v1737, %v2119
        %s2153 = scalar_lea.vmem %s2, 8
        %v2154 = vld [vmem:[%s2153] sm:$0x3]
        %v2187 = vunpack.c.l.b16 %v358
        %v2188 = vunpack.c.l.b16 %v359
        %v2189 = vunpack.c.l.b16 %v360
        %v2190 = vunpack.c.l.b16 %v361
        %v2191 = vunpack.c.l.b16 %v362
        %v2192 = vunpack.c.l.b16 %v363
        %v2193 = vunpack.c.l.b16 %v364
        %v2194 = vunpack.c.l.b16 %v365
        %v2195 = vunpack.c.l.b16 %v366
        %v2196 = vunpack.c.l.b16 %v367
        %v2197 = vunpack.c.l.b16 %v368
        %v2198 = vunpack.c.l.b16 %v369
        %v2199 = vunpack.c.l.b16 %v370
        %v2200 = vunpack.c.l.b16 %v371
        %v2201 = vunpack.c.l.b16 %v372
        %v2202 = vunpack.c.l.b16 %v373
        %v2203 = vunpack.c.l.b16 %v374
        %v2204 = vunpack.c.l.b16 %v375
        %v2205 = vunpack.c.l.b16 %v376
        %v2206 = vunpack.c.l.b16 %v377
        %v2207 = vunpack.c.l.b16 %v378
        %v2208 = vunpack.c.l.b16 %v379
        %v2209 = vunpack.c.l.b16 %v380
        %v2210 = vunpack.c.l.b16 %v381
        %v2211 = vunpack.c.l.b16 %v382
        %v2212 = vunpack.c.l.b16 %v383
        %v2213 = vunpack.c.l.b16 %v384
        %v2214 = vunpack.c.l.b16 %v385
        %v2215 = vunpack.c.l.b16 %v386
        %v2216 = vunpack.c.l.b16 %v387
        %v2217 = vunpack.c.l.b16 %v388
        %v2218 = vunpack.c.l.b16 %v389
        %v2219 = vpack.c.b16 %v2188, %v2187
        %v2220 = vpack.c.b16 %v2190, %v2189
        %v2221 = vpack.c.b16 %v2192, %v2191
        %v2222 = vpack.c.b16 %v2194, %v2193
        %v2223 = vpack.c.b16 %v2196, %v2195
        %v2224 = vpack.c.b16 %v2198, %v2197
        %v2225 = vpack.c.b16 %v2200, %v2199
        %v2226 = vpack.c.b16 %v2202, %v2201
        %v2227 = vpack.c.b16 %v2204, %v2203
        %v2228 = vpack.c.b16 %v2206, %v2205
        %v2229 = vpack.c.b16 %v2208, %v2207
        %v2230 = vpack.c.b16 %v2210, %v2209
        %v2231 = vpack.c.b16 %v2212, %v2211
        %v2232 = vpack.c.b16 %v2214, %v2213
        %v2233 = vpack.c.b16 %v2216, %v2215
        %v2234 = vpack.c.b16 %v2218, %v2217
        %v2236 = vsel %vm973, %v2219, 0
        %v2239 = vsel %vm973, %v2220, 0
        %v2242 = vsel %vm973, %v2221, 0
        %v2245 = vsel %vm973, %v2222, 0
        %v2248 = vsel %vm973, %v2223, 0
        %v2251 = vsel %vm973, %v2224, 0
        %v2254 = vsel %vm973, %v2225, 0
        %v2257 = vsel %vm973, %v2226, 0
        %v2260 = vsel %vm973, %v2227, 0
        %v2263 = vsel %vm973, %v2228, 0
        %v2266 = vsel %vm973, %v2229, 0
        %v2269 = vsel %vm973, %v2230, 0
        %v2272 = vsel %vm973, %v2231, 0
        %v2275 = vsel %vm973, %v2232, 0
        %v2278 = vsel %vm973, %v2233, 0
        %v2281 = vsel %vm973, %v2234, 0
        %v2284 = vand.u32 %v2154, %v1025
        %2286 = vmatpush.bf16.msra.mxu0 0
        %2287 = vmatpush.bf16.msra.mxu0 0
        %2288 = vmatpush.bf16.msra.mxu0 0
        %2289 = vmatpush.bf16.msra.mxu0 0
        %2290 = vmatpush.bf16.msra.mxu0 0
        %2291 = vmatpush.bf16.msra.mxu0 0
        %2292 = vmatpush.bf16.msra.mxu0 0
        %2293 = vmatpush.bf16.msra.mxu0 %v2284
        %2294 = vmatmul.bf16.gmra.mxu0 %v2236
        %v2295 = vpop.f32.mrf.mxu0
        %v2296 = vadd.f32 0.0, %v2295
        %v2297 = vpop.f32.mrf.mxu0
        %v2298 = vadd.f32 0.0, %v2297
        %2299 = vmatmul.bf16.gmra.mxu0 %v2239
        %v2300 = vpop.f32.mrf.mxu0
        %v2301 = vadd.f32 0.0, %v2300
        %v2302 = vpop.f32.mrf.mxu0
        %v2303 = vadd.f32 0.0, %v2302
        %2304 = vmatmul.bf16.gmra.mxu0 %v2242
        %v2305 = vpop.f32.mrf.mxu0
        %v2306 = vadd.f32 0.0, %v2305
        %v2307 = vpop.f32.mrf.mxu0
        %v2308 = vadd.f32 0.0, %v2307
        %2309 = vmatmul.bf16.gmra.mxu0 %v2245
        %v2310 = vpop.f32.mrf.mxu0
        %v2311 = vadd.f32 0.0, %v2310
        %v2312 = vpop.f32.mrf.mxu0
        %v2313 = vadd.f32 0.0, %v2312
        %2314 = vmatmul.bf16.gmra.mxu0 %v2248
        %v2315 = vpop.f32.mrf.mxu0
        %v2316 = vadd.f32 0.0, %v2315
        %v2317 = vpop.f32.mrf.mxu0
        %v2318 = vadd.f32 0.0, %v2317
        %2319 = vmatmul.bf16.gmra.mxu0 %v2251
        %v2320 = vpop.f32.mrf.mxu0
        %v2321 = vadd.f32 0.0, %v2320
        %v2322 = vpop.f32.mrf.mxu0
        %v2323 = vadd.f32 0.0, %v2322
        %2324 = vmatmul.bf16.gmra.mxu0 %v2254
        %v2325 = vpop.f32.mrf.mxu0
        %v2326 = vadd.f32 0.0, %v2325
        %v2327 = vpop.f32.mrf.mxu0
        %v2328 = vadd.f32 0.0, %v2327
        %2329 = vmatmul.bf16.gmra.mxu0 %v2257
        %v2330 = vpop.f32.mrf.mxu0
        %v2331 = vadd.f32 0.0, %v2330
        %v2332 = vpop.f32.mrf.mxu0
        %v2333 = vadd.f32 0.0, %v2332
        %2334 = vmatmul.bf16.gmra.mxu0 %v2260
        %v2335 = vpop.f32.mrf.mxu0
        %v2336 = vadd.f32 0.0, %v2335
        %v2337 = vpop.f32.mrf.mxu0
        %v2338 = vadd.f32 0.0, %v2337
        %2339 = vmatmul.bf16.gmra.mxu0 %v2263
        %v2340 = vpop.f32.mrf.mxu0
        %v2341 = vadd.f32 0.0, %v2340
        %v2342 = vpop.f32.mrf.mxu0
        %v2343 = vadd.f32 0.0, %v2342
        %2344 = vmatmul.bf16.gmra.mxu0 %v2266
        %v2345 = vpop.f32.mrf.mxu0
        %v2346 = vadd.f32 0.0, %v2345
        %v2347 = vpop.f32.mrf.mxu0
        %v2348 = vadd.f32 0.0, %v2347
        %2349 = vmatmul.bf16.gmra.mxu0 %v2269
        %v2350 = vpop.f32.mrf.mxu0
        %v2351 = vadd.f32 0.0, %v2350
        %v2352 = vpop.f32.mrf.mxu0
        %v2353 = vadd.f32 0.0, %v2352
        %2354 = vmatmul.bf16.gmra.mxu0 %v2272
        %v2355 = vpop.f32.mrf.mxu0
        %v2356 = vadd.f32 0.0, %v2355
        %v2357 = vpop.f32.mrf.mxu0
        %v2358 = vadd.f32 0.0, %v2357
        %2359 = vmatmul.bf16.gmra.mxu0 %v2275
        %v2360 = vpop.f32.mrf.mxu0
        %v2361 = vadd.f32 0.0, %v2360
        %v2362 = vpop.f32.mrf.mxu0
        %v2363 = vadd.f32 0.0, %v2362
        %2364 = vmatmul.bf16.gmra.mxu0 %v2278
        %v2365 = vpop.f32.mrf.mxu0
        %v2366 = vadd.f32 0.0, %v2365
        %v2367 = vpop.f32.mrf.mxu0
        %v2368 = vadd.f32 0.0, %v2367
        %2369 = vmatmul.bf16.gmra.mxu0 %v2281
        %v2370 = vpop.f32.mrf.mxu0
        %v2371 = vadd.f32 0.0, %v2370
        %v2372 = vpop.f32.mrf.mxu0
        %v2373 = vadd.f32 0.0, %v2372
        %2374 = vdwg.mxu0
        %v2375 = vadd.f32 %v2121, %v2296
        %v2376 = vadd.f32 %v2122, %v2298
        %v2377 = vadd.f32 %v2123, %v2301
        %v2378 = vadd.f32 %v2124, %v2303
        %v2379 = vadd.f32 %v2125, %v2306
        %v2380 = vadd.f32 %v2126, %v2308
        %v2381 = vadd.f32 %v2127, %v2311
        %v2382 = vadd.f32 %v2128, %v2313
        %v2383 = vadd.f32 %v2129, %v2316
        %v2384 = vadd.f32 %v2130, %v2318
        %v2385 = vadd.f32 %v2131, %v2321
        %v2386 = vadd.f32 %v2132, %v2323
        %v2387 = vadd.f32 %v2133, %v2326
        %v2388 = vadd.f32 %v2134, %v2328
        %v2389 = vadd.f32 %v2135, %v2331
        %v2390 = vadd.f32 %v2136, %v2333
        %v2391 = vadd.f32 %v2137, %v2336
        %v2392 = vadd.f32 %v2138, %v2338
        %v2393 = vadd.f32 %v2139, %v2341
        %v2394 = vadd.f32 %v2140, %v2343
        %v2395 = vadd.f32 %v2141, %v2346
        %v2396 = vadd.f32 %v2142, %v2348
        %v2397 = vadd.f32 %v2143, %v2351
        %v2398 = vadd.f32 %v2144, %v2353
        %v2399 = vadd.f32 %v2145, %v2356
        %v2400 = vadd.f32 %v2146, %v2358
        %v2401 = vadd.f32 %v2147, %v2361
        %v2402 = vadd.f32 %v2148, %v2363
        %v2403 = vadd.f32 %v2149, %v2366
        %v2404 = vadd.f32 %v2150, %v2368
        %v2405 = vadd.f32 %v2151, %v2371
        %v2406 = vadd.f32 %v2152, %v2373
        %s2407 = scalar_lea.vmem %s1, 1280
        %v2408 = vld [vmem:[%s2407] sm:$0xff]
        %v2409 = vld [vmem:[%s2407 + $0x8] sm:$0xff]
        %v2410 = vld [vmem:[%s2407 + $0x10] sm:$0xff]
        %v2411 = vld [vmem:[%s2407 + $0x18] sm:$0xff]
        %v2412 = vld [vmem:[%s2407 + $0x20] sm:$0xff]
        %v2413 = vld [vmem:[%s2407 + $0x28] sm:$0xff]
        %v2414 = vld [vmem:[%s2407 + $0x30] sm:$0xff]
        %v2415 = vld [vmem:[%s2407 + $0x38] sm:$0xff]
        %v2416 = vld [vmem:[%s2407 + $0x40] sm:$0xff]
        %v2417 = vld [vmem:[%s2407 + $0x48] sm:$0xff]
        %v2418 = vld [vmem:[%s2407 + $0x50] sm:$0xff]
        %v2419 = vld [vmem:[%s2407 + $0x58] sm:$0xff]
        %v2420 = vld [vmem:[%s2407 + $0x60] sm:$0xff]
        %v2421 = vld [vmem:[%s2407 + $0x68] sm:$0xff]
        %v2422 = vld [vmem:[%s2407 + $0x70] sm:$0xff]
        %v2423 = vld [vmem:[%s2407 + $0x78] sm:$0xff]
        %v2424 = vld [vmem:[%s2407 + $0x80] sm:$0xff]
        %v2425 = vld [vmem:[%s2407 + $0x88] sm:$0xff]
        %v2426 = vld [vmem:[%s2407 + $0x90] sm:$0xff]
        %v2427 = vld [vmem:[%s2407 + $0x98] sm:$0xff]
        %v2428 = vld [vmem:[%s2407 + $0xa0] sm:$0xff]
        %v2429 = vld [vmem:[%s2407 + $0xa8] sm:$0xff]
        %v2430 = vld [vmem:[%s2407 + $0xb0] sm:$0xff]
        %v2431 = vld [vmem:[%s2407 + $0xb8] sm:$0xff]
        %v2432 = vld [vmem:[%s2407 + $0xc0] sm:$0xff]
        %v2433 = vld [vmem:[%s2407 + $0xc8] sm:$0xff]
        %v2434 = vld [vmem:[%s2407 + $0xd0] sm:$0xff]
        %v2435 = vld [vmem:[%s2407 + $0xd8] sm:$0xff]
        %v2436 = vld [vmem:[%s2407 + $0xe0] sm:$0xff]
        %v2437 = vld [vmem:[%s2407 + $0xe8] sm:$0xff]
        %v2438 = vld [vmem:[%s2407 + $0xf0] sm:$0xff]
        %v2439 = vld [vmem:[%s2407 + $0xf8] sm:$0xff]
        %2441 = vset.pattern.permute.xlu0 0
        %2442 = vperm.xlu0 %2441, %v2408
        %v2443 = vpop.permute.xlu0 %2442
        %2446 = vset.pattern.permute.xlu0 0
        %2447 = vperm.xlu0 %2446, %v2409
        %v2448 = vpop.permute.xlu0 %2447
        %2451 = vset.pattern.permute.xlu0 0
        %2452 = vperm.xlu0 %2451, %v2410
        %v2453 = vpop.permute.xlu0 %2452
        %2456 = vset.pattern.permute.xlu0 0
        %2457 = vperm.xlu0 %2456, %v2411
        %v2458 = vpop.permute.xlu0 %2457
        %2461 = vset.pattern.permute.xlu0 0
        %2462 = vperm.xlu0 %2461, %v2412
        %v2463 = vpop.permute.xlu0 %2462
        %2466 = vset.pattern.permute.xlu0 0
        %2467 = vperm.xlu0 %2466, %v2413
        %v2468 = vpop.permute.xlu0 %2467
        %2471 = vset.pattern.permute.xlu0 0
        %2472 = vperm.xlu0 %2471, %v2414
        %v2473 = vpop.permute.xlu0 %2472
        %2476 = vset.pattern.permute.xlu0 0
        %2477 = vperm.xlu0 %2476, %v2415
        %v2478 = vpop.permute.xlu0 %2477
        %2481 = vset.pattern.permute.xlu0 0
        %2482 = vperm.xlu0 %2481, %v2416
        %v2483 = vpop.permute.xlu0 %2482
        %2486 = vset.pattern.permute.xlu0 0
        %2487 = vperm.xlu0 %2486, %v2417
        %v2488 = vpop.permute.xlu0 %2487
        %2491 = vset.pattern.permute.xlu0 0
        %2492 = vperm.xlu0 %2491, %v2418
        %v2493 = vpop.permute.xlu0 %2492
        %2496 = vset.pattern.permute.xlu0 0
        %2497 = vperm.xlu0 %2496, %v2419
        %v2498 = vpop.permute.xlu0 %2497
        %2501 = vset.pattern.permute.xlu0 0
        %2502 = vperm.xlu0 %2501, %v2420
        %v2503 = vpop.permute.xlu0 %2502
        %2506 = vset.pattern.permute.xlu0 0
        %2507 = vperm.xlu0 %2506, %v2421
        %v2508 = vpop.permute.xlu0 %2507
        %2511 = vset.pattern.permute.xlu0 0
        %2512 = vperm.xlu0 %2511, %v2422
        %v2513 = vpop.permute.xlu0 %2512
        %2516 = vset.pattern.permute.xlu0 0
        %2517 = vperm.xlu0 %2516, %v2423
        %v2518 = vpop.permute.xlu0 %2517
        %2521 = vset.pattern.permute.xlu0 0
        %2522 = vperm.xlu0 %2521, %v2424
        %v2523 = vpop.permute.xlu0 %2522
        %2526 = vset.pattern.permute.xlu0 0
        %2527 = vperm.xlu0 %2526, %v2425
        %v2528 = vpop.permute.xlu0 %2527
        %2531 = vset.pattern.permute.xlu0 0
        %2532 = vperm.xlu0 %2531, %v2426
        %v2533 = vpop.permute.xlu0 %2532
        %2536 = vset.pattern.permute.xlu0 0
        %2537 = vperm.xlu0 %2536, %v2427
        %v2538 = vpop.permute.xlu0 %2537
        %2541 = vset.pattern.permute.xlu0 0
        %2542 = vperm.xlu0 %2541, %v2428
        %v2543 = vpop.permute.xlu0 %2542
        %2546 = vset.pattern.permute.xlu0 0
        %2547 = vperm.xlu0 %2546, %v2429
        %v2548 = vpop.permute.xlu0 %2547
        %2551 = vset.pattern.permute.xlu0 0
        %2552 = vperm.xlu0 %2551, %v2430
        %v2553 = vpop.permute.xlu0 %2552
        %2556 = vset.pattern.permute.xlu0 0
        %2557 = vperm.xlu0 %2556, %v2431
        %v2558 = vpop.permute.xlu0 %2557
        %2561 = vset.pattern.permute.xlu0 0
        %2562 = vperm.xlu0 %2561, %v2432
        %v2563 = vpop.permute.xlu0 %2562
        %2566 = vset.pattern.permute.xlu0 0
        %2567 = vperm.xlu0 %2566, %v2433
        %v2568 = vpop.permute.xlu0 %2567
        %2571 = vset.pattern.permute.xlu0 0
        %2572 = vperm.xlu0 %2571, %v2434
        %v2573 = vpop.permute.xlu0 %2572
        %2576 = vset.pattern.permute.xlu0 0
        %2577 = vperm.xlu0 %2576, %v2435
        %v2578 = vpop.permute.xlu0 %2577
        %2581 = vset.pattern.permute.xlu0 0
        %2582 = vperm.xlu0 %2581, %v2436
        %v2583 = vpop.permute.xlu0 %2582
        %2586 = vset.pattern.permute.xlu0 0
        %2587 = vperm.xlu0 %2586, %v2437
        %v2588 = vpop.permute.xlu0 %2587
        %2591 = vset.pattern.permute.xlu0 0
        %2592 = vperm.xlu0 %2591, %v2438
        %v2593 = vpop.permute.xlu0 %2592
        %2596 = vset.pattern.permute.xlu0 0
        %2597 = vperm.xlu0 %2596, %v2439
        %v2598 = vpop.permute.xlu0 %2597
        %v2600 = vmul.f32 %v1321, %v2443
        %v2601 = vmul.f32 %v1320, %v2448
        %v2602 = vmul.f32 %v1319, %v2453
        %v2603 = vmul.f32 %v1318, %v2458
        %v2604 = vmul.f32 %v1317, %v2463
        %v2605 = vmul.f32 %v1316, %v2468
        %v2606 = vmul.f32 %v1315, %v2473
        %v2607 = vmul.f32 %v1314, %v2478
        %v2608 = vmul.f32 %v1313, %v2483
        %v2609 = vmul.f32 %v1312, %v2488
        %v2610 = vmul.f32 %v1311, %v2493
        %v2611 = vmul.f32 %v1310, %v2498
        %v2612 = vmul.f32 %v1309, %v2503
        %v2613 = vmul.f32 %v1308, %v2508
        %v2614 = vmul.f32 %v1307, %v2513
        %v2615 = vmul.f32 %v1306, %v2518
        %v2616 = vmul.f32 %v1305, %v2523
        %v2617 = vmul.f32 %v1304, %v2528
        %v2618 = vmul.f32 %v1303, %v2533
        %v2619 = vmul.f32 %v1302, %v2538
        %v2620 = vmul.f32 %v1301, %v2543
        %v2621 = vmul.f32 %v1300, %v2548
        %v2622 = vmul.f32 %v1299, %v2553
        %v2623 = vmul.f32 %v1298, %v2558
        %v2624 = vmul.f32 %v1297, %v2563
        %v2625 = vmul.f32 %v1296, %v2568
        %v2626 = vmul.f32 %v1295, %v2573
        %v2627 = vmul.f32 %v1294, %v2578
        %v2628 = vmul.f32 %v1293, %v2583
        %v2629 = vmul.f32 %v1292, %v2588
        %v2630 = vmul.f32 %v1291, %v2593
        %v2631 = vmul.f32 %v1322, %v2598
        %v2632 = vpack.c.bf16 %v2601, %v2600
        %v2633 = vpack.c.bf16 %v2603, %v2602
        %v2634 = vpack.c.bf16 %v2605, %v2604
        %v2635 = vpack.c.bf16 %v2607, %v2606
        %v2636 = vpack.c.bf16 %v2609, %v2608
        %v2637 = vpack.c.bf16 %v2611, %v2610
        %v2638 = vpack.c.bf16 %v2613, %v2612
        %v2639 = vpack.c.bf16 %v2615, %v2614
        %v2640 = vpack.c.bf16 %v2617, %v2616
        %v2641 = vpack.c.bf16 %v2619, %v2618
        %v2642 = vpack.c.bf16 %v2621, %v2620
        %v2643 = vpack.c.bf16 %v2623, %v2622
        %v2644 = vpack.c.bf16 %v2625, %v2624
        %v2645 = vpack.c.bf16 %v2627, %v2626
        %v2646 = vpack.c.bf16 %v2629, %v2628
        %v2647 = vpack.c.bf16 %v2631, %v2630
        %s2648 = scalar_lea.vmem %s2, 10
        %v2649 = vld [vmem:[%s2648] sm:$0x3]
        %v2651 = vsel %vm973, %v2632, 0
        %v2654 = vsel %vm973, %v2633, 0
        %v2657 = vsel %vm973, %v2634, 0
        %v2660 = vsel %vm973, %v2635, 0
        %v2663 = vsel %vm973, %v2636, 0
        %v2666 = vsel %vm973, %v2637, 0
        %v2669 = vsel %vm973, %v2638, 0
        %v2672 = vsel %vm973, %v2639, 0
        %v2675 = vsel %vm973, %v2640, 0
        %v2678 = vsel %vm973, %v2641, 0
        %v2681 = vsel %vm973, %v2642, 0
        %v2684 = vsel %vm973, %v2643, 0
        %v2687 = vsel %vm973, %v2644, 0
        %v2690 = vsel %vm973, %v2645, 0
        %v2693 = vsel %vm973, %v2646, 0
        %v2696 = vsel %vm973, %v2647, 0
        %v2699 = vand.u32 %v2649, %v1025
        %2701 = vmatpush.bf16.msra.mxu0 0
        %2702 = vmatpush.bf16.msra.mxu0 0
        %2703 = vmatpush.bf16.msra.mxu0 0
        %2704 = vmatpush.bf16.msra.mxu0 0
        %2705 = vmatpush.bf16.msra.mxu0 0
        %2706 = vmatpush.bf16.msra.mxu0 0
        %2707 = vmatpush.bf16.msra.mxu0 0
        %2708 = vmatpush.bf16.msra.mxu0 %v2699
        %2709 = vmatmul.bf16.gmra.mxu0 %v2651
        %v2710 = vpop.f32.mrf.mxu0
        %v2711 = vadd.f32 0.0, %v2710
        %v2712 = vpop.f32.mrf.mxu0
        %v2713 = vadd.f32 0.0, %v2712
        %2714 = vmatmul.bf16.gmra.mxu0 %v2654
        %v2715 = vpop.f32.mrf.mxu0
        %v2716 = vadd.f32 0.0, %v2715
        %v2717 = vpop.f32.mrf.mxu0
        %v2718 = vadd.f32 0.0, %v2717
        %2719 = vmatmul.bf16.gmra.mxu0 %v2657
        %v2720 = vpop.f32.mrf.mxu0
        %v2721 = vadd.f32 0.0, %v2720
        %v2722 = vpop.f32.mrf.mxu0
        %v2723 = vadd.f32 0.0, %v2722
        %2724 = vmatmul.bf16.gmra.mxu0 %v2660
        %v2725 = vpop.f32.mrf.mxu0
        %v2726 = vadd.f32 0.0, %v2725
        %v2727 = vpop.f32.mrf.mxu0
        %v2728 = vadd.f32 0.0, %v2727
        %2729 = vmatmul.bf16.gmra.mxu0 %v2663
        %v2730 = vpop.f32.mrf.mxu0
        %v2731 = vadd.f32 0.0, %v2730
        %v2732 = vpop.f32.mrf.mxu0
        %v2733 = vadd.f32 0.0, %v2732
        %2734 = vmatmul.bf16.gmra.mxu0 %v2666
        %v2735 = vpop.f32.mrf.mxu0
        %v2736 = vadd.f32 0.0, %v2735
        %v2737 = vpop.f32.mrf.mxu0
        %v2738 = vadd.f32 0.0, %v2737
        %2739 = vmatmul.bf16.gmra.mxu0 %v2669
        %v2740 = vpop.f32.mrf.mxu0
        %v2741 = vadd.f32 0.0, %v2740
        %v2742 = vpop.f32.mrf.mxu0
        %v2743 = vadd.f32 0.0, %v2742
        %2744 = vmatmul.bf16.gmra.mxu0 %v2672
        %v2745 = vpop.f32.mrf.mxu0
        %v2746 = vadd.f32 0.0, %v2745
        %v2747 = vpop.f32.mrf.mxu0
        %v2748 = vadd.f32 0.0, %v2747
        %2749 = vmatmul.bf16.gmra.mxu0 %v2675
        %v2750 = vpop.f32.mrf.mxu0
        %v2751 = vadd.f32 0.0, %v2750
        %v2752 = vpop.f32.mrf.mxu0
        %v2753 = vadd.f32 0.0, %v2752
        %2754 = vmatmul.bf16.gmra.mxu0 %v2678
        %v2755 = vpop.f32.mrf.mxu0
        %v2756 = vadd.f32 0.0, %v2755
        %v2757 = vpop.f32.mrf.mxu0
        %v2758 = vadd.f32 0.0, %v2757
        %2759 = vmatmul.bf16.gmra.mxu0 %v2681
        %v2760 = vpop.f32.mrf.mxu0
        %v2761 = vadd.f32 0.0, %v2760
        %v2762 = vpop.f32.mrf.mxu0
        %v2763 = vadd.f32 0.0, %v2762
        %2764 = vmatmul.bf16.gmra.mxu0 %v2684
        %v2765 = vpop.f32.mrf.mxu0
        %v2766 = vadd.f32 0.0, %v2765
        %v2767 = vpop.f32.mrf.mxu0
        %v2768 = vadd.f32 0.0, %v2767
        %2769 = vmatmul.bf16.gmra.mxu0 %v2687
        %v2770 = vpop.f32.mrf.mxu0
        %v2771 = vadd.f32 0.0, %v2770
        %v2772 = vpop.f32.mrf.mxu0
        %v2773 = vadd.f32 0.0, %v2772
        %2774 = vmatmul.bf16.gmra.mxu0 %v2690
        %v2775 = vpop.f32.mrf.mxu0
        %v2776 = vadd.f32 0.0, %v2775
        %v2777 = vpop.f32.mrf.mxu0
        %v2778 = vadd.f32 0.0, %v2777
        %2779 = vmatmul.bf16.gmra.mxu0 %v2693
        %v2780 = vpop.f32.mrf.mxu0
        %v2781 = vadd.f32 0.0, %v2780
        %v2782 = vpop.f32.mrf.mxu0
        %v2783 = vadd.f32 0.0, %v2782
        %2784 = vmatmul.bf16.gmra.mxu0 %v2696
        %v2785 = vpop.f32.mrf.mxu0
        %v2786 = vadd.f32 0.0, %v2785
        %v2787 = vpop.f32.mrf.mxu0
        %v2788 = vadd.f32 0.0, %v2787
        %2789 = vdwg.mxu0
        %v2790 = vadd.f32 %v2375, %v2711
        %v2791 = vadd.f32 %v2376, %v2713
        %v2792 = vadd.f32 %v2377, %v2716
        %v2793 = vadd.f32 %v2378, %v2718
        %v2794 = vadd.f32 %v2379, %v2721
        %v2795 = vadd.f32 %v2380, %v2723
        %v2796 = vadd.f32 %v2381, %v2726
        %v2797 = vadd.f32 %v2382, %v2728
        %v2798 = vadd.f32 %v2383, %v2731
        %v2799 = vadd.f32 %v2384, %v2733
        %v2800 = vadd.f32 %v2385, %v2736
        %v2801 = vadd.f32 %v2386, %v2738
        %v2802 = vadd.f32 %v2387, %v2741
        %v2803 = vadd.f32 %v2388, %v2743
        %v2804 = vadd.f32 %v2389, %v2746
        %v2805 = vadd.f32 %v2390, %v2748
        %v2806 = vadd.f32 %v2391, %v2751
        %v2807 = vadd.f32 %v2392, %v2753
        %v2808 = vadd.f32 %v2393, %v2756
        %v2809 = vadd.f32 %v2394, %v2758
        %v2810 = vadd.f32 %v2395, %v2761
        %v2811 = vadd.f32 %v2396, %v2763
        %v2812 = vadd.f32 %v2397, %v2766
        %v2813 = vadd.f32 %v2398, %v2768
        %v2814 = vadd.f32 %v2399, %v2771
        %v2815 = vadd.f32 %v2400, %v2773
        %v2816 = vadd.f32 %v2401, %v2776
        %v2817 = vadd.f32 %v2402, %v2778
        %v2818 = vadd.f32 %v2403, %v2781
        %v2819 = vadd.f32 %v2404, %v2783
        %v2820 = vadd.f32 %v2405, %v2786
        %v2821 = vadd.f32 %v2406, %v2788
        %s2822 = scalar_lea.vmem %s1, 1536
        %v2823 = vld [vmem:[%s2822] sm:$0xff]
        %v2824 = vld [vmem:[%s2822 + $0x8] sm:$0xff]
        %v2825 = vld [vmem:[%s2822 + $0x10] sm:$0xff]
        %v2826 = vld [vmem:[%s2822 + $0x18] sm:$0xff]
        %v2827 = vld [vmem:[%s2822 + $0x20] sm:$0xff]
        %v2828 = vld [vmem:[%s2822 + $0x28] sm:$0xff]
        %v2829 = vld [vmem:[%s2822 + $0x30] sm:$0xff]
        %v2830 = vld [vmem:[%s2822 + $0x38] sm:$0xff]
        %v2831 = vld [vmem:[%s2822 + $0x40] sm:$0xff]
        %v2832 = vld [vmem:[%s2822 + $0x48] sm:$0xff]
        %v2833 = vld [vmem:[%s2822 + $0x50] sm:$0xff]
        %v2834 = vld [vmem:[%s2822 + $0x58] sm:$0xff]
        %v2835 = vld [vmem:[%s2822 + $0x60] sm:$0xff]
        %v2836 = vld [vmem:[%s2822 + $0x68] sm:$0xff]
        %v2837 = vld [vmem:[%s2822 + $0x70] sm:$0xff]
        %v2838 = vld [vmem:[%s2822 + $0x78] sm:$0xff]
        %v2839 = vld [vmem:[%s2822 + $0x80] sm:$0xff]
        %v2840 = vld [vmem:[%s2822 + $0x88] sm:$0xff]
        %v2841 = vld [vmem:[%s2822 + $0x90] sm:$0xff]
        %v2842 = vld [vmem:[%s2822 + $0x98] sm:$0xff]
        %v2843 = vld [vmem:[%s2822 + $0xa0] sm:$0xff]
        %v2844 = vld [vmem:[%s2822 + $0xa8] sm:$0xff]
        %v2845 = vld [vmem:[%s2822 + $0xb0] sm:$0xff]
        %v2846 = vld [vmem:[%s2822 + $0xb8] sm:$0xff]
        %v2847 = vld [vmem:[%s2822 + $0xc0] sm:$0xff]
        %v2848 = vld [vmem:[%s2822 + $0xc8] sm:$0xff]
        %v2849 = vld [vmem:[%s2822 + $0xd0] sm:$0xff]
        %v2850 = vld [vmem:[%s2822 + $0xd8] sm:$0xff]
        %v2851 = vld [vmem:[%s2822 + $0xe0] sm:$0xff]
        %v2852 = vld [vmem:[%s2822 + $0xe8] sm:$0xff]
        %v2853 = vld [vmem:[%s2822 + $0xf0] sm:$0xff]
        %v2854 = vld [vmem:[%s2822 + $0xf8] sm:$0xff]
        %2856 = vset.pattern.permute.xlu0 0
        %2857 = vperm.xlu0 %2856, %v2823
        %v2858 = vpop.permute.xlu0 %2857
        %2861 = vset.pattern.permute.xlu0 0
        %2862 = vperm.xlu0 %2861, %v2824
        %v2863 = vpop.permute.xlu0 %2862
        %2866 = vset.pattern.permute.xlu0 0
        %2867 = vperm.xlu0 %2866, %v2825
        %v2868 = vpop.permute.xlu0 %2867
        %2871 = vset.pattern.permute.xlu0 0
        %2872 = vperm.xlu0 %2871, %v2826
        %v2873 = vpop.permute.xlu0 %2872
        %2876 = vset.pattern.permute.xlu0 0
        %2877 = vperm.xlu0 %2876, %v2827
        %v2878 = vpop.permute.xlu0 %2877
        %2881 = vset.pattern.permute.xlu0 0
        %2882 = vperm.xlu0 %2881, %v2828
        %v2883 = vpop.permute.xlu0 %2882
        %2886 = vset.pattern.permute.xlu0 0
        %2887 = vperm.xlu0 %2886, %v2829
        %v2888 = vpop.permute.xlu0 %2887
        %2891 = vset.pattern.permute.xlu0 0
        %2892 = vperm.xlu0 %2891, %v2830
        %v2893 = vpop.permute.xlu0 %2892
        %2896 = vset.pattern.permute.xlu0 0
        %2897 = vperm.xlu0 %2896, %v2831
        %v2898 = vpop.permute.xlu0 %2897
        %2901 = vset.pattern.permute.xlu0 0
        %2902 = vperm.xlu0 %2901, %v2832
        %v2903 = vpop.permute.xlu0 %2902
        %2906 = vset.pattern.permute.xlu0 0
        %2907 = vperm.xlu0 %2906, %v2833
        %v2908 = vpop.permute.xlu0 %2907
        %2911 = vset.pattern.permute.xlu0 0
        %2912 = vperm.xlu0 %2911, %v2834
        %v2913 = vpop.permute.xlu0 %2912
        %2916 = vset.pattern.permute.xlu0 0
        %2917 = vperm.xlu0 %2916, %v2835
        %v2918 = vpop.permute.xlu0 %2917
        %2921 = vset.pattern.permute.xlu0 0
        %2922 = vperm.xlu0 %2921, %v2836
        %v2923 = vpop.permute.xlu0 %2922
        %2926 = vset.pattern.permute.xlu0 0
        %2927 = vperm.xlu0 %2926, %v2837
        %v2928 = vpop.permute.xlu0 %2927
        %2931 = vset.pattern.permute.xlu0 0
        %2932 = vperm.xlu0 %2931, %v2838
        %v2933 = vpop.permute.xlu0 %2932
        %2936 = vset.pattern.permute.xlu0 0
        %2937 = vperm.xlu0 %2936, %v2839
        %v2938 = vpop.permute.xlu0 %2937
        %2941 = vset.pattern.permute.xlu0 0
        %2942 = vperm.xlu0 %2941, %v2840
        %v2943 = vpop.permute.xlu0 %2942
        %2946 = vset.pattern.permute.xlu0 0
        %2947 = vperm.xlu0 %2946, %v2841
        %v2948 = vpop.permute.xlu0 %2947
        %2951 = vset.pattern.permute.xlu0 0
        %2952 = vperm.xlu0 %2951, %v2842
        %v2953 = vpop.permute.xlu0 %2952
        %2956 = vset.pattern.permute.xlu0 0
        %2957 = vperm.xlu0 %2956, %v2843
        %v2958 = vpop.permute.xlu0 %2957
        %2961 = vset.pattern.permute.xlu0 0
        %2962 = vperm.xlu0 %2961, %v2844
        %v2963 = vpop.permute.xlu0 %2962
        %2966 = vset.pattern.permute.xlu0 0
        %2967 = vperm.xlu0 %2966, %v2845
        %v2968 = vpop.permute.xlu0 %2967
        %2971 = vset.pattern.permute.xlu0 0
        %2972 = vperm.xlu0 %2971, %v2846
        %v2973 = vpop.permute.xlu0 %2972
        %2976 = vset.pattern.permute.xlu0 0
        %2977 = vperm.xlu0 %2976, %v2847
        %v2978 = vpop.permute.xlu0 %2977
        %2981 = vset.pattern.permute.xlu0 0
        %2982 = vperm.xlu0 %2981, %v2848
        %v2983 = vpop.permute.xlu0 %2982
        %2986 = vset.pattern.permute.xlu0 0
        %2987 = vperm.xlu0 %2986, %v2849
        %v2988 = vpop.permute.xlu0 %2987
        %2991 = vset.pattern.permute.xlu0 0
        %2992 = vperm.xlu0 %2991, %v2850
        %v2993 = vpop.permute.xlu0 %2992
        %2996 = vset.pattern.permute.xlu0 0
        %2997 = vperm.xlu0 %2996, %v2851
        %v2998 = vpop.permute.xlu0 %2997
        %3001 = vset.pattern.permute.xlu0 0
        %3002 = vperm.xlu0 %3001, %v2852
        %v3003 = vpop.permute.xlu0 %3002
        %3006 = vset.pattern.permute.xlu0 0
        %3007 = vperm.xlu0 %3006, %v2853
        %v3008 = vpop.permute.xlu0 %3007
        %3011 = vset.pattern.permute.xlu0 0
        %3012 = vperm.xlu0 %3011, %v2854
        %v3013 = vpop.permute.xlu0 %3012
        %v3015 = vmul.f32 %v486, %v2858
        %v3016 = vmul.f32 %v485, %v2863
        %v3017 = vmul.f32 %v484, %v2868
        %v3018 = vmul.f32 %v483, %v2873
        %v3019 = vmul.f32 %v482, %v2878
        %v3020 = vmul.f32 %v481, %v2883
        %v3021 = vmul.f32 %v480, %v2888
        %v3022 = vmul.f32 %v479, %v2893
        %v3023 = vmul.f32 %v478, %v2898
        %v3024 = vmul.f32 %v477, %v2903
        %v3025 = vmul.f32 %v476, %v2908
        %v3026 = vmul.f32 %v475, %v2913
        %v3027 = vmul.f32 %v474, %v2918
        %v3028 = vmul.f32 %v473, %v2923
        %v3029 = vmul.f32 %v472, %v2928
        %v3030 = vmul.f32 %v471, %v2933
        %v3031 = vmul.f32 %v470, %v2938
        %v3032 = vmul.f32 %v469, %v2943
        %v3033 = vmul.f32 %v468, %v2948
        %v3034 = vmul.f32 %v467, %v2953
        %v3035 = vmul.f32 %v466, %v2958
        %v3036 = vmul.f32 %v465, %v2963
        %v3037 = vmul.f32 %v464, %v2968
        %v3038 = vmul.f32 %v463, %v2973
        %v3039 = vmul.f32 %v462, %v2978
        %v3040 = vmul.f32 %v461, %v2983
        %v3041 = vmul.f32 %v460, %v2988
        %v3042 = vmul.f32 %v459, %v2993
        %v3043 = vmul.f32 %v458, %v2998
        %v3044 = vmul.f32 %v457, %v3003
        %v3045 = vmul.f32 %v488, %v3008
        %v3046 = vmul.f32 %v487, %v3013
        %v3047 = vpack.c.bf16 %v3016, %v3015
        %v3048 = vpack.c.bf16 %v3018, %v3017
        %v3049 = vpack.c.bf16 %v3020, %v3019
        %v3050 = vpack.c.bf16 %v3022, %v3021
        %v3051 = vpack.c.bf16 %v3024, %v3023
        %v3052 = vpack.c.bf16 %v3026, %v3025
        %v3053 = vpack.c.bf16 %v3028, %v3027
        %v3054 = vpack.c.bf16 %v3030, %v3029
        %v3055 = vpack.c.bf16 %v3032, %v3031
        %v3056 = vpack.c.bf16 %v3034, %v3033
        %v3057 = vpack.c.bf16 %v3036, %v3035
        %v3058 = vpack.c.bf16 %v3038, %v3037
        %v3059 = vpack.c.bf16 %v3040, %v3039
        %v3060 = vpack.c.bf16 %v3042, %v3041
        %v3061 = vpack.c.bf16 %v3044, %v3043
        %v3062 = vpack.c.bf16 %v3046, %v3045
        %s3063 = scalar_lea.vmem %s2, 12
        %v3064 = vld [vmem:[%s3063] sm:$0x3]
        %v3066 = vsel %vm973, %v3047, 0
        %v3069 = vsel %vm973, %v3048, 0
        %v3072 = vsel %vm973, %v3049, 0
        %v3075 = vsel %vm973, %v3050, 0
        %v3078 = vsel %vm973, %v3051, 0
        %v3081 = vsel %vm973, %v3052, 0
        %v3084 = vsel %vm973, %v3053, 0
        %v3087 = vsel %vm973, %v3054, 0
        %v3090 = vsel %vm973, %v3055, 0
        %v3093 = vsel %vm973, %v3056, 0
        %v3096 = vsel %vm973, %v3057, 0
        %v3099 = vsel %vm973, %v3058, 0
        %v3102 = vsel %vm973, %v3059, 0
        %v3105 = vsel %vm973, %v3060, 0
        %v3108 = vsel %vm973, %v3061, 0
        %v3111 = vsel %vm973, %v3062, 0
        %v3114 = vand.u32 %v3064, %v1025
        %3116 = vmatpush.bf16.msra.mxu0 0
        %3117 = vmatpush.bf16.msra.mxu0 0
        %3118 = vmatpush.bf16.msra.mxu0 0
        %3119 = vmatpush.bf16.msra.mxu0 0
        %3120 = vmatpush.bf16.msra.mxu0 0
        %3121 = vmatpush.bf16.msra.mxu0 0
        %3122 = vmatpush.bf16.msra.mxu0 0
        %3123 = vmatpush.bf16.msra.mxu0 %v3114
        %3124 = vmatmul.bf16.gmra.mxu0 %v3066
        %v3125 = vpop.f32.mrf.mxu0
        %v3126 = vadd.f32 0.0, %v3125
        %v3127 = vpop.f32.mrf.mxu0
        %v3128 = vadd.f32 0.0, %v3127
        %3129 = vmatmul.bf16.gmra.mxu0 %v3069
        %v3130 = vpop.f32.mrf.mxu0
        %v3131 = vadd.f32 0.0, %v3130
        %v3132 = vpop.f32.mrf.mxu0
        %v3133 = vadd.f32 0.0, %v3132
        %3134 = vmatmul.bf16.gmra.mxu0 %v3072
        %v3135 = vpop.f32.mrf.mxu0
        %v3136 = vadd.f32 0.0, %v3135
        %v3137 = vpop.f32.mrf.mxu0
        %v3138 = vadd.f32 0.0, %v3137
        %3139 = vmatmul.bf16.gmra.mxu0 %v3075
        %v3140 = vpop.f32.mrf.mxu0
        %v3141 = vadd.f32 0.0, %v3140
        %v3142 = vpop.f32.mrf.mxu0
        %v3143 = vadd.f32 0.0, %v3142
        %3144 = vmatmul.bf16.gmra.mxu0 %v3078
        %v3145 = vpop.f32.mrf.mxu0
        %v3146 = vadd.f32 0.0, %v3145
        %v3147 = vpop.f32.mrf.mxu0
        %v3148 = vadd.f32 0.0, %v3147
        %3149 = vmatmul.bf16.gmra.mxu0 %v3081
        %v3150 = vpop.f32.mrf.mxu0
        %v3151 = vadd.f32 0.0, %v3150
        %v3152 = vpop.f32.mrf.mxu0
        %v3153 = vadd.f32 0.0, %v3152
        %3154 = vmatmul.bf16.gmra.mxu0 %v3084
        %v3155 = vpop.f32.mrf.mxu0
        %v3156 = vadd.f32 0.0, %v3155
        %v3157 = vpop.f32.mrf.mxu0
        %v3158 = vadd.f32 0.0, %v3157
        %3159 = vmatmul.bf16.gmra.mxu0 %v3087
        %v3160 = vpop.f32.mrf.mxu0
        %v3161 = vadd.f32 0.0, %v3160
        %v3162 = vpop.f32.mrf.mxu0
        %v3163 = vadd.f32 0.0, %v3162
        %3164 = vmatmul.bf16.gmra.mxu0 %v3090
        %v3165 = vpop.f32.mrf.mxu0
        %v3166 = vadd.f32 0.0, %v3165
        %v3167 = vpop.f32.mrf.mxu0
        %v3168 = vadd.f32 0.0, %v3167
        %3169 = vmatmul.bf16.gmra.mxu0 %v3093
        %v3170 = vpop.f32.mrf.mxu0
        %v3171 = vadd.f32 0.0, %v3170
        %v3172 = vpop.f32.mrf.mxu0
        %v3173 = vadd.f32 0.0, %v3172
        %3174 = vmatmul.bf16.gmra.mxu0 %v3096
        %v3175 = vpop.f32.mrf.mxu0
        %v3176 = vadd.f32 0.0, %v3175
        %v3177 = vpop.f32.mrf.mxu0
        %v3178 = vadd.f32 0.0, %v3177
        %3179 = vmatmul.bf16.gmra.mxu0 %v3099
        %v3180 = vpop.f32.mrf.mxu0
        %v3181 = vadd.f32 0.0, %v3180
        %v3182 = vpop.f32.mrf.mxu0
        %v3183 = vadd.f32 0.0, %v3182
        %3184 = vmatmul.bf16.gmra.mxu0 %v3102
        %v3185 = vpop.f32.mrf.mxu0
        %v3186 = vadd.f32 0.0, %v3185
        %v3187 = vpop.f32.mrf.mxu0
        %v3188 = vadd.f32 0.0, %v3187
        %3189 = vmatmul.bf16.gmra.mxu0 %v3105
        %v3190 = vpop.f32.mrf.mxu0
        %v3191 = vadd.f32 0.0, %v3190
        %v3192 = vpop.f32.mrf.mxu0
        %v3193 = vadd.f32 0.0, %v3192
        %3194 = vmatmul.bf16.gmra.mxu0 %v3108
        %v3195 = vpop.f32.mrf.mxu0
        %v3196 = vadd.f32 0.0, %v3195
        %v3197 = vpop.f32.mrf.mxu0
        %v3198 = vadd.f32 0.0, %v3197
        %3199 = vmatmul.bf16.gmra.mxu0 %v3111
        %v3200 = vpop.f32.mrf.mxu0
        %v3201 = vadd.f32 0.0, %v3200
        %v3202 = vpop.f32.mrf.mxu0
        %v3203 = vadd.f32 0.0, %v3202
        %3204 = vdwg.mxu0
        %v3205 = vadd.f32 %v2790, %v3126
        %v3206 = vadd.f32 %v2791, %v3128
        %v3207 = vadd.f32 %v2792, %v3131
        %v3208 = vadd.f32 %v2793, %v3133
        %v3209 = vadd.f32 %v2794, %v3136
        %v3210 = vadd.f32 %v2795, %v3138
        %v3211 = vadd.f32 %v2796, %v3141
        %v3212 = vadd.f32 %v2797, %v3143
        %v3213 = vadd.f32 %v2798, %v3146
        %v3214 = vadd.f32 %v2799, %v3148
        %v3215 = vadd.f32 %v2800, %v3151
        %v3216 = vadd.f32 %v2801, %v3153
        %v3217 = vadd.f32 %v2802, %v3156
        %v3218 = vadd.f32 %v2803, %v3158
        %v3219 = vadd.f32 %v2804, %v3161
        %v3220 = vadd.f32 %v2805, %v3163
        %v3221 = vadd.f32 %v2806, %v3166
        %v3222 = vadd.f32 %v2807, %v3168
        %v3223 = vadd.f32 %v2808, %v3171
        %v3224 = vadd.f32 %v2809, %v3173
        %v3225 = vadd.f32 %v2810, %v3176
        %v3226 = vadd.f32 %v2811, %v3178
        %v3227 = vadd.f32 %v2812, %v3181
        %v3228 = vadd.f32 %v2813, %v3183
        %v3229 = vadd.f32 %v2814, %v3186
        %v3230 = vadd.f32 %v2815, %v3188
        %v3231 = vadd.f32 %v2816, %v3191
        %v3232 = vadd.f32 %v2817, %v3193
        %v3233 = vadd.f32 %v2818, %v3196
        %v3234 = vadd.f32 %v2819, %v3198
        %v3235 = vadd.f32 %v2820, %v3201
        %v3236 = vadd.f32 %v2821, %v3203
        %s3237 = scalar_lea.vmem %s1, 1792
        %v3238 = vld [vmem:[%s3237] sm:$0xff]
        %v3239 = vld [vmem:[%s3237 + $0x8] sm:$0xff]
        %v3240 = vld [vmem:[%s3237 + $0x10] sm:$0xff]
        %v3241 = vld [vmem:[%s3237 + $0x18] sm:$0xff]
        %v3242 = vld [vmem:[%s3237 + $0x20] sm:$0xff]
        %v3243 = vld [vmem:[%s3237 + $0x28] sm:$0xff]
        %v3244 = vld [vmem:[%s3237 + $0x30] sm:$0xff]
        %v3245 = vld [vmem:[%s3237 + $0x38] sm:$0xff]
        %v3246 = vld [vmem:[%s3237 + $0x40] sm:$0xff]
        %v3247 = vld [vmem:[%s3237 + $0x48] sm:$0xff]
        %v3248 = vld [vmem:[%s3237 + $0x50] sm:$0xff]
        %v3249 = vld [vmem:[%s3237 + $0x58] sm:$0xff]
        %v3250 = vld [vmem:[%s3237 + $0x60] sm:$0xff]
        %v3251 = vld [vmem:[%s3237 + $0x68] sm:$0xff]
        %v3252 = vld [vmem:[%s3237 + $0x70] sm:$0xff]
        %v3253 = vld [vmem:[%s3237 + $0x78] sm:$0xff]
        %v3254 = vld [vmem:[%s3237 + $0x80] sm:$0xff]
        %v3255 = vld [vmem:[%s3237 + $0x88] sm:$0xff]
        %v3256 = vld [vmem:[%s3237 + $0x90] sm:$0xff]
        %v3257 = vld [vmem:[%s3237 + $0x98] sm:$0xff]
        %v3258 = vld [vmem:[%s3237 + $0xa0] sm:$0xff]
        %v3259 = vld [vmem:[%s3237 + $0xa8] sm:$0xff]
        %v3260 = vld [vmem:[%s3237 + $0xb0] sm:$0xff]
        %v3261 = vld [vmem:[%s3237 + $0xb8] sm:$0xff]
        %v3262 = vld [vmem:[%s3237 + $0xc0] sm:$0xff]
        %v3263 = vld [vmem:[%s3237 + $0xc8] sm:$0xff]
        %v3264 = vld [vmem:[%s3237 + $0xd0] sm:$0xff]
        %v3265 = vld [vmem:[%s3237 + $0xd8] sm:$0xff]
        %v3266 = vld [vmem:[%s3237 + $0xe0] sm:$0xff]
        %v3267 = vld [vmem:[%s3237 + $0xe8] sm:$0xff]
        %v3268 = vld [vmem:[%s3237 + $0xf0] sm:$0xff]
        %v3269 = vld [vmem:[%s3237 + $0xf8] sm:$0xff]
        %3271 = vset.pattern.permute.xlu0 0
        %3272 = vperm.xlu0 %3271, %v3238
        %v3273 = vpop.permute.xlu0 %3272
        %3276 = vset.pattern.permute.xlu0 0
        %3277 = vperm.xlu0 %3276, %v3239
        %v3278 = vpop.permute.xlu0 %3277
        %3281 = vset.pattern.permute.xlu0 0
        %3282 = vperm.xlu0 %3281, %v3240
        %v3283 = vpop.permute.xlu0 %3282
        %3286 = vset.pattern.permute.xlu0 0
        %3287 = vperm.xlu0 %3286, %v3241
        %v3288 = vpop.permute.xlu0 %3287
        %3291 = vset.pattern.permute.xlu0 0
        %3292 = vperm.xlu0 %3291, %v3242
        %v3293 = vpop.permute.xlu0 %3292
        %3296 = vset.pattern.permute.xlu0 0
        %3297 = vperm.xlu0 %3296, %v3243
        %v3298 = vpop.permute.xlu0 %3297
        %3301 = vset.pattern.permute.xlu0 0
        %3302 = vperm.xlu0 %3301, %v3244
        %v3303 = vpop.permute.xlu0 %3302
        %3306 = vset.pattern.permute.xlu0 0
        %3307 = vperm.xlu0 %3306, %v3245
        %v3308 = vpop.permute.xlu0 %3307
        %3311 = vset.pattern.permute.xlu0 0
        %3312 = vperm.xlu0 %3311, %v3246
        %v3313 = vpop.permute.xlu0 %3312
        %3316 = vset.pattern.permute.xlu0 0
        %3317 = vperm.xlu0 %3316, %v3247
        %v3318 = vpop.permute.xlu0 %3317
        %3321 = vset.pattern.permute.xlu0 0
        %3322 = vperm.xlu0 %3321, %v3248
        %v3323 = vpop.permute.xlu0 %3322
        %3326 = vset.pattern.permute.xlu0 0
        %3327 = vperm.xlu0 %3326, %v3249
        %v3328 = vpop.permute.xlu0 %3327
        %3331 = vset.pattern.permute.xlu0 0
        %3332 = vperm.xlu0 %3331, %v3250
        %v3333 = vpop.permute.xlu0 %3332
        %3336 = vset.pattern.permute.xlu0 0
        %3337 = vperm.xlu0 %3336, %v3251
        %v3338 = vpop.permute.xlu0 %3337
        %3341 = vset.pattern.permute.xlu0 0
        %3342 = vperm.xlu0 %3341, %v3252
        %v3343 = vpop.permute.xlu0 %3342
        %3346 = vset.pattern.permute.xlu0 0
        %3347 = vperm.xlu0 %3346, %v3253
        %v3348 = vpop.permute.xlu0 %3347
        %3351 = vset.pattern.permute.xlu0 0
        %3352 = vperm.xlu0 %3351, %v3254
        %v3353 = vpop.permute.xlu0 %3352
        %3356 = vset.pattern.permute.xlu0 0
        %3357 = vperm.xlu0 %3356, %v3255
        %v3358 = vpop.permute.xlu0 %3357
        %3361 = vset.pattern.permute.xlu0 0
        %3362 = vperm.xlu0 %3361, %v3256
        %v3363 = vpop.permute.xlu0 %3362
        %3366 = vset.pattern.permute.xlu0 0
        %3367 = vperm.xlu0 %3366, %v3257
        %v3368 = vpop.permute.xlu0 %3367
        %3371 = vset.pattern.permute.xlu0 0
        %3372 = vperm.xlu0 %3371, %v3258
        %v3373 = vpop.permute.xlu0 %3372
        %3376 = vset.pattern.permute.xlu0 0
        %3377 = vperm.xlu0 %3376, %v3259
        %v3378 = vpop.permute.xlu0 %3377
        %3381 = vset.pattern.permute.xlu0 0
        %3382 = vperm.xlu0 %3381, %v3260
        %v3383 = vpop.permute.xlu0 %3382
        %3386 = vset.pattern.permute.xlu0 0
        %3387 = vperm.xlu0 %3386, %v3261
        %v3388 = vpop.permute.xlu0 %3387
        %3391 = vset.pattern.permute.xlu0 0
        %3392 = vperm.xlu0 %3391, %v3262
        %v3393 = vpop.permute.xlu0 %3392
        %3396 = vset.pattern.permute.xlu0 0
        %3397 = vperm.xlu0 %3396, %v3263
        %v3398 = vpop.permute.xlu0 %3397
        %3401 = vset.pattern.permute.xlu0 0
        %3402 = vperm.xlu0 %3401, %v3264
        %v3403 = vpop.permute.xlu0 %3402
        %3406 = vset.pattern.permute.xlu0 0
        %3407 = vperm.xlu0 %3406, %v3265
        %v3408 = vpop.permute.xlu0 %3407
        %3411 = vset.pattern.permute.xlu0 0
        %3412 = vperm.xlu0 %3411, %v3266
        %v3413 = vpop.permute.xlu0 %3412
        %3416 = vset.pattern.permute.xlu0 0
        %3417 = vperm.xlu0 %3416, %v3267
        %v3418 = vpop.permute.xlu0 %3417
        %3421 = vset.pattern.permute.xlu0 0
        %3422 = vperm.xlu0 %3421, %v3268
        %v3423 = vpop.permute.xlu0 %3422
        %3426 = vset.pattern.permute.xlu0 0
        %3427 = vperm.xlu0 %3426, %v3269
        %v3428 = vpop.permute.xlu0 %3427
        %v3430 = vmul.f32 %v392, %v3273
        %v3431 = vmul.f32 %v393, %v3278
        %v3432 = vmul.f32 %v394, %v3283
        %v3433 = vmul.f32 %v395, %v3288
        %v3434 = vmul.f32 %v396, %v3293
        %v3435 = vmul.f32 %v397, %v3298
        %v3436 = vmul.f32 %v398, %v3303
        %v3437 = vmul.f32 %v399, %v3308
        %v3438 = vmul.f32 %v400, %v3313
        %v3439 = vmul.f32 %v401, %v3318
        %v3440 = vmul.f32 %v402, %v3323
        %v3441 = vmul.f32 %v403, %v3328
        %v3442 = vmul.f32 %v404, %v3333
        %v3443 = vmul.f32 %v405, %v3338
        %v3444 = vmul.f32 %v406, %v3343
        %v3445 = vmul.f32 %v407, %v3348
        %v3446 = vmul.f32 %v408, %v3353
        %v3447 = vmul.f32 %v409, %v3358
        %v3448 = vmul.f32 %v410, %v3363
        %v3449 = vmul.f32 %v411, %v3368
        %v3450 = vmul.f32 %v412, %v3373
        %v3451 = vmul.f32 %v413, %v3378
        %v3452 = vmul.f32 %v414, %v3383
        %v3453 = vmul.f32 %v415, %v3388
        %v3454 = vmul.f32 %v416, %v3393
        %v3455 = vmul.f32 %v417, %v3398
        %v3456 = vmul.f32 %v418, %v3403
        %v3457 = vmul.f32 %v419, %v3408
        %v3458 = vmul.f32 %v420, %v3413
        %v3459 = vmul.f32 %v421, %v3418
        %v3460 = vmul.f32 %v390, %v3423
        %v3461 = vmul.f32 %v391, %v3428
        %v3462 = vpack.c.bf16 %v3431, %v3430
        %v3463 = vpack.c.bf16 %v3433, %v3432
        %v3464 = vpack.c.bf16 %v3435, %v3434
        %v3465 = vpack.c.bf16 %v3437, %v3436
        %v3466 = vpack.c.bf16 %v3439, %v3438
        %v3467 = vpack.c.bf16 %v3441, %v3440
        %v3468 = vpack.c.bf16 %v3443, %v3442
        %v3469 = vpack.c.bf16 %v3445, %v3444
        %v3470 = vpack.c.bf16 %v3447, %v3446
        %v3471 = vpack.c.bf16 %v3449, %v3448
        %v3472 = vpack.c.bf16 %v3451, %v3450
        %v3473 = vpack.c.bf16 %v3453, %v3452
        %v3474 = vpack.c.bf16 %v3455, %v3454
        %v3475 = vpack.c.bf16 %v3457, %v3456
        %v3476 = vpack.c.bf16 %v3459, %v3458
        %v3477 = vpack.c.bf16 %v3461, %v3460
        %s3478 = scalar_lea.vmem %s2, 14
        %v3479 = vld [vmem:[%s3478] sm:$0x3]
        %v3481 = vsel %vm973, %v3462, 0
        %v3484 = vsel %vm973, %v3463, 0
        %v3487 = vsel %vm973, %v3464, 0
        %v3490 = vsel %vm973, %v3465, 0
        %v3493 = vsel %vm973, %v3466, 0
        %v3496 = vsel %vm973, %v3467, 0
        %v3499 = vsel %vm973, %v3468, 0
        %v3502 = vsel %vm973, %v3469, 0
        %v3505 = vsel %vm973, %v3470, 0
        %v3508 = vsel %vm973, %v3471, 0
        %v3511 = vsel %vm973, %v3472, 0
        %v3514 = vsel %vm973, %v3473, 0
        %v3517 = vsel %vm973, %v3474, 0
        %v3520 = vsel %vm973, %v3475, 0
        %v3523 = vsel %vm973, %v3476, 0
        %v3526 = vsel %vm973, %v3477, 0
        %v3529 = vand.u32 %v3479, %v1025
        %3531 = vmatpush.bf16.msra.mxu0 0
        %3532 = vmatpush.bf16.msra.mxu0 0
        %3533 = vmatpush.bf16.msra.mxu0 0
        %3534 = vmatpush.bf16.msra.mxu0 0
        %3535 = vmatpush.bf16.msra.mxu0 0
        %3536 = vmatpush.bf16.msra.mxu0 0
        %3537 = vmatpush.bf16.msra.mxu0 0
        %3538 = vmatpush.bf16.msra.mxu0 %v3529
        %3539 = vmatmul.bf16.gmra.mxu0 %v3481
        %v3540 = vpop.f32.mrf.mxu0
        %v3541 = vadd.f32 0.0, %v3540
        %v3542 = vpop.f32.mrf.mxu0
        %v3543 = vadd.f32 0.0, %v3542
        %3544 = vmatmul.bf16.gmra.mxu0 %v3484
        %v3545 = vpop.f32.mrf.mxu0
        %v3546 = vadd.f32 0.0, %v3545
        %v3547 = vpop.f32.mrf.mxu0
        %v3548 = vadd.f32 0.0, %v3547
        %3549 = vmatmul.bf16.gmra.mxu0 %v3487
        %v3550 = vpop.f32.mrf.mxu0
        %v3551 = vadd.f32 0.0, %v3550
        %v3552 = vpop.f32.mrf.mxu0
        %v3553 = vadd.f32 0.0, %v3552
        %3554 = vmatmul.bf16.gmra.mxu0 %v3490
        %v3555 = vpop.f32.mrf.mxu0
        %v3556 = vadd.f32 0.0, %v3555
        %v3557 = vpop.f32.mrf.mxu0
        %v3558 = vadd.f32 0.0, %v3557
        %3559 = vmatmul.bf16.gmra.mxu0 %v3493
        %v3560 = vpop.f32.mrf.mxu0
        %v3561 = vadd.f32 0.0, %v3560
        %v3562 = vpop.f32.mrf.mxu0
        %v3563 = vadd.f32 0.0, %v3562
        %3564 = vmatmul.bf16.gmra.mxu0 %v3496
        %v3565 = vpop.f32.mrf.mxu0
        %v3566 = vadd.f32 0.0, %v3565
        %v3567 = vpop.f32.mrf.mxu0
        %v3568 = vadd.f32 0.0, %v3567
        %3569 = vmatmul.bf16.gmra.mxu0 %v3499
        %v3570 = vpop.f32.mrf.mxu0
        %v3571 = vadd.f32 0.0, %v3570
        %v3572 = vpop.f32.mrf.mxu0
        %v3573 = vadd.f32 0.0, %v3572
        %3574 = vmatmul.bf16.gmra.mxu0 %v3502
        %v3575 = vpop.f32.mrf.mxu0
        %v3576 = vadd.f32 0.0, %v3575
        %v3577 = vpop.f32.mrf.mxu0
        %v3578 = vadd.f32 0.0, %v3577
        %3579 = vmatmul.bf16.gmra.mxu0 %v3505
        %v3580 = vpop.f32.mrf.mxu0
        %v3581 = vadd.f32 0.0, %v3580
        %v3582 = vpop.f32.mrf.mxu0
        %v3583 = vadd.f32 0.0, %v3582
        %3584 = vmatmul.bf16.gmra.mxu0 %v3508
        %v3585 = vpop.f32.mrf.mxu0
        %v3586 = vadd.f32 0.0, %v3585
        %v3587 = vpop.f32.mrf.mxu0
        %v3588 = vadd.f32 0.0, %v3587
        %3589 = vmatmul.bf16.gmra.mxu0 %v3511
        %v3590 = vpop.f32.mrf.mxu0
        %v3591 = vadd.f32 0.0, %v3590
        %v3592 = vpop.f32.mrf.mxu0
        %v3593 = vadd.f32 0.0, %v3592
        %3594 = vmatmul.bf16.gmra.mxu0 %v3514
        %v3595 = vpop.f32.mrf.mxu0
        %v3596 = vadd.f32 0.0, %v3595
        %v3597 = vpop.f32.mrf.mxu0
        %v3598 = vadd.f32 0.0, %v3597
        %3599 = vmatmul.bf16.gmra.mxu0 %v3517
        %v3600 = vpop.f32.mrf.mxu0
        %v3601 = vadd.f32 0.0, %v3600
        %v3602 = vpop.f32.mrf.mxu0
        %v3603 = vadd.f32 0.0, %v3602
        %3604 = vmatmul.bf16.gmra.mxu0 %v3520
        %v3605 = vpop.f32.mrf.mxu0
        %v3606 = vadd.f32 0.0, %v3605
        %v3607 = vpop.f32.mrf.mxu0
        %v3608 = vadd.f32 0.0, %v3607
        %3609 = vmatmul.bf16.gmra.mxu0 %v3523
        %v3610 = vpop.f32.mrf.mxu0
        %v3611 = vadd.f32 0.0, %v3610
        %v3612 = vpop.f32.mrf.mxu0
        %v3613 = vadd.f32 0.0, %v3612
        %3614 = vmatmul.bf16.gmra.mxu0 %v3526
        %v3615 = vpop.f32.mrf.mxu0
        %v3616 = vadd.f32 0.0, %v3615
        %v3617 = vpop.f32.mrf.mxu0
        %v3618 = vadd.f32 0.0, %v3617
        %3619 = vdwg.mxu0
        %v3620 = vadd.f32 %v3205, %v3541
        %v3621 = vadd.f32 %v3206, %v3543
        %v3622 = vadd.f32 %v3207, %v3546
        %v3623 = vadd.f32 %v3208, %v3548
        %v3624 = vadd.f32 %v3209, %v3551
        %v3625 = vadd.f32 %v3210, %v3553
        %v3626 = vadd.f32 %v3211, %v3556
        %v3627 = vadd.f32 %v3212, %v3558
        %v3628 = vadd.f32 %v3213, %v3561
        %v3629 = vadd.f32 %v3214, %v3563
        %v3630 = vadd.f32 %v3215, %v3566
        %v3631 = vadd.f32 %v3216, %v3568
        %v3632 = vadd.f32 %v3217, %v3571
        %v3633 = vadd.f32 %v3218, %v3573
        %v3634 = vadd.f32 %v3219, %v3576
        %v3635 = vadd.f32 %v3220, %v3578
        %v3636 = vadd.f32 %v3221, %v3581
        %v3637 = vadd.f32 %v3222, %v3583
        %v3638 = vadd.f32 %v3223, %v3586
        %v3639 = vadd.f32 %v3224, %v3588
        %v3640 = vadd.f32 %v3225, %v3591
        %v3641 = vadd.f32 %v3226, %v3593
        %v3642 = vadd.f32 %v3227, %v3596
        %v3643 = vadd.f32 %v3228, %v3598
        %v3644 = vadd.f32 %v3229, %v3601
        %v3645 = vadd.f32 %v3230, %v3603
        %v3646 = vadd.f32 %v3231, %v3606
        %v3647 = vadd.f32 %v3232, %v3608
        %v3648 = vadd.f32 %v3233, %v3611
        %v3649 = vadd.f32 %v3234, %v3613
        %v3650 = vadd.f32 %v3235, %v3616
        %v3651 = vadd.f32 %v3236, %v3618
        %s3652 = scalar_lea.vmem %s1, 2048
        %v3653 = vld [vmem:[%s3652] sm:$0xff]
        %v3654 = vld [vmem:[%s3652 + $0x8] sm:$0xff]
        %v3655 = vld [vmem:[%s3652 + $0x10] sm:$0xff]
        %v3656 = vld [vmem:[%s3652 + $0x18] sm:$0xff]
        %v3657 = vld [vmem:[%s3652 + $0x20] sm:$0xff]
        %v3658 = vld [vmem:[%s3652 + $0x28] sm:$0xff]
        %v3659 = vld [vmem:[%s3652 + $0x30] sm:$0xff]
        %v3660 = vld [vmem:[%s3652 + $0x38] sm:$0xff]
        %v3661 = vld [vmem:[%s3652 + $0x40] sm:$0xff]
        %v3662 = vld [vmem:[%s3652 + $0x48] sm:$0xff]
        %v3663 = vld [vmem:[%s3652 + $0x50] sm:$0xff]
        %v3664 = vld [vmem:[%s3652 + $0x58] sm:$0xff]
        %v3665 = vld [vmem:[%s3652 + $0x60] sm:$0xff]
        %v3666 = vld [vmem:[%s3652 + $0x68] sm:$0xff]
        %v3667 = vld [vmem:[%s3652 + $0x70] sm:$0xff]
        %v3668 = vld [vmem:[%s3652 + $0x78] sm:$0xff]
        %v3669 = vld [vmem:[%s3652 + $0x80] sm:$0xff]
        %v3670 = vld [vmem:[%s3652 + $0x88] sm:$0xff]
        %v3671 = vld [vmem:[%s3652 + $0x90] sm:$0xff]
        %v3672 = vld [vmem:[%s3652 + $0x98] sm:$0xff]
        %v3673 = vld [vmem:[%s3652 + $0xa0] sm:$0xff]
        %v3674 = vld [vmem:[%s3652 + $0xa8] sm:$0xff]
        %v3675 = vld [vmem:[%s3652 + $0xb0] sm:$0xff]
        %v3676 = vld [vmem:[%s3652 + $0xb8] sm:$0xff]
        %v3677 = vld [vmem:[%s3652 + $0xc0] sm:$0xff]
        %v3678 = vld [vmem:[%s3652 + $0xc8] sm:$0xff]
        %v3679 = vld [vmem:[%s3652 + $0xd0] sm:$0xff]
        %v3680 = vld [vmem:[%s3652 + $0xd8] sm:$0xff]
        %v3681 = vld [vmem:[%s3652 + $0xe0] sm:$0xff]
        %v3682 = vld [vmem:[%s3652 + $0xe8] sm:$0xff]
        %v3683 = vld [vmem:[%s3652 + $0xf0] sm:$0xff]
        %v3684 = vld [vmem:[%s3652 + $0xf8] sm:$0xff]
        %3686 = vset.pattern.permute.xlu0 0
        %3687 = vperm.xlu0 %3686, %v3653
        %v3688 = vpop.permute.xlu0 %3687
        %3691 = vset.pattern.permute.xlu0 0
        %3692 = vperm.xlu0 %3691, %v3654
        %v3693 = vpop.permute.xlu0 %3692
        %3696 = vset.pattern.permute.xlu0 0
        %3697 = vperm.xlu0 %3696, %v3655
        %v3698 = vpop.permute.xlu0 %3697
        %3701 = vset.pattern.permute.xlu0 0
        %3702 = vperm.xlu0 %3701, %v3656
        %v3703 = vpop.permute.xlu0 %3702
        %3706 = vset.pattern.permute.xlu0 0
        %3707 = vperm.xlu0 %3706, %v3657
        %v3708 = vpop.permute.xlu0 %3707
        %3711 = vset.pattern.permute.xlu0 0
        %3712 = vperm.xlu0 %3711, %v3658
        %v3713 = vpop.permute.xlu0 %3712
        %3716 = vset.pattern.permute.xlu0 0
        %3717 = vperm.xlu0 %3716, %v3659
        %v3718 = vpop.permute.xlu0 %3717
        %3721 = vset.pattern.permute.xlu0 0
        %3722 = vperm.xlu0 %3721, %v3660
        %v3723 = vpop.permute.xlu0 %3722
        %3726 = vset.pattern.permute.xlu0 0
        %3727 = vperm.xlu0 %3726, %v3661
        %v3728 = vpop.permute.xlu0 %3727
        %3731 = vset.pattern.permute.xlu0 0
        %3732 = vperm.xlu0 %3731, %v3662
        %v3733 = vpop.permute.xlu0 %3732
        %3736 = vset.pattern.permute.xlu0 0
        %3737 = vperm.xlu0 %3736, %v3663
        %v3738 = vpop.permute.xlu0 %3737
        %3741 = vset.pattern.permute.xlu0 0
        %3742 = vperm.xlu0 %3741, %v3664
        %v3743 = vpop.permute.xlu0 %3742
        %3746 = vset.pattern.permute.xlu0 0
        %3747 = vperm.xlu0 %3746, %v3665
        %v3748 = vpop.permute.xlu0 %3747
        %3751 = vset.pattern.permute.xlu0 0
        %3752 = vperm.xlu0 %3751, %v3666
        %v3753 = vpop.permute.xlu0 %3752
        %3756 = vset.pattern.permute.xlu0 0
        %3757 = vperm.xlu0 %3756, %v3667
        %v3758 = vpop.permute.xlu0 %3757
        %3761 = vset.pattern.permute.xlu0 0
        %3762 = vperm.xlu0 %3761, %v3668
        %v3763 = vpop.permute.xlu0 %3762
        %3766 = vset.pattern.permute.xlu0 0
        %3767 = vperm.xlu0 %3766, %v3669
        %v3768 = vpop.permute.xlu0 %3767
        %3771 = vset.pattern.permute.xlu0 0
        %3772 = vperm.xlu0 %3771, %v3670
        %v3773 = vpop.permute.xlu0 %3772
        %3776 = vset.pattern.permute.xlu0 0
        %3777 = vperm.xlu0 %3776, %v3671
        %v3778 = vpop.permute.xlu0 %3777
        %3781 = vset.pattern.permute.xlu0 0
        %3782 = vperm.xlu0 %3781, %v3672
        %v3783 = vpop.permute.xlu0 %3782
        %3786 = vset.pattern.permute.xlu0 0
        %3787 = vperm.xlu0 %3786, %v3673
        %v3788 = vpop.permute.xlu0 %3787
        %3791 = vset.pattern.permute.xlu0 0
        %3792 = vperm.xlu0 %3791, %v3674
        %v3793 = vpop.permute.xlu0 %3792
        %3796 = vset.pattern.permute.xlu0 0
        %3797 = vperm.xlu0 %3796, %v3675
        %v3798 = vpop.permute.xlu0 %3797
        %3801 = vset.pattern.permute.xlu0 0
        %3802 = vperm.xlu0 %3801, %v3676
        %v3803 = vpop.permute.xlu0 %3802
        %3806 = vset.pattern.permute.xlu0 0
        %3807 = vperm.xlu0 %3806, %v3677
        %v3808 = vpop.permute.xlu0 %3807
        %3811 = vset.pattern.permute.xlu0 0
        %3812 = vperm.xlu0 %3811, %v3678
        %v3813 = vpop.permute.xlu0 %3812
        %3816 = vset.pattern.permute.xlu0 0
        %3817 = vperm.xlu0 %3816, %v3679
        %v3818 = vpop.permute.xlu0 %3817
        %3821 = vset.pattern.permute.xlu0 0
        %3822 = vperm.xlu0 %3821, %v3680
        %v3823 = vpop.permute.xlu0 %3822
        %3826 = vset.pattern.permute.xlu0 0
        %3827 = vperm.xlu0 %3826, %v3681
        %v3828 = vpop.permute.xlu0 %3827
        %3831 = vset.pattern.permute.xlu0 0
        %3832 = vperm.xlu0 %3831, %v3682
        %v3833 = vpop.permute.xlu0 %3832
        %3836 = vset.pattern.permute.xlu0 0
        %3837 = vperm.xlu0 %3836, %v3683
        %v3838 = vpop.permute.xlu0 %3837
        %3841 = vset.pattern.permute.xlu0 0
        %3842 = vperm.xlu0 %3841, %v3684
        %v3843 = vpop.permute.xlu0 %3842
        %v3845 = vmul.f32 %v1319, %v3688
        %v3846 = vmul.f32 %v1318, %v3693
        %v3847 = vmul.f32 %v1317, %v3698
        %v3848 = vmul.f32 %v1316, %v3703
        %v3849 = vmul.f32 %v1315, %v3708
        %v3850 = vmul.f32 %v1314, %v3713
        %v3851 = vmul.f32 %v1313, %v3718
        %v3852 = vmul.f32 %v1312, %v3723
        %v3853 = vmul.f32 %v1311, %v3728
        %v3854 = vmul.f32 %v1310, %v3733
        %v3855 = vmul.f32 %v1309, %v3738
        %v3856 = vmul.f32 %v1308, %v3743
        %v3857 = vmul.f32 %v1307, %v3748
        %v3858 = vmul.f32 %v1306, %v3753
        %v3859 = vmul.f32 %v1305, %v3758
        %v3860 = vmul.f32 %v1304, %v3763
        %v3861 = vmul.f32 %v1303, %v3768
        %v3862 = vmul.f32 %v1302, %v3773
        %v3863 = vmul.f32 %v1301, %v3778
        %v3864 = vmul.f32 %v1300, %v3783
        %v3865 = vmul.f32 %v1299, %v3788
        %v3866 = vmul.f32 %v1298, %v3793
        %v3867 = vmul.f32 %v1297, %v3798
        %v3868 = vmul.f32 %v1296, %v3803
        %v3869 = vmul.f32 %v1295, %v3808
        %v3870 = vmul.f32 %v1294, %v3813
        %v3871 = vmul.f32 %v1293, %v3818
        %v3872 = vmul.f32 %v1292, %v3823
        %v3873 = vmul.f32 %v1291, %v3828
        %v3874 = vmul.f32 %v1322, %v3833
        %v3875 = vmul.f32 %v1321, %v3838
        %v3876 = vmul.f32 %v1320, %v3843
        %v3877 = vpack.c.bf16 %v3846, %v3845
        %v3878 = vpack.c.bf16 %v3848, %v3847
        %v3879 = vpack.c.bf16 %v3850, %v3849
        %v3880 = vpack.c.bf16 %v3852, %v3851
        %v3881 = vpack.c.bf16 %v3854, %v3853
        %v3882 = vpack.c.bf16 %v3856, %v3855
        %v3883 = vpack.c.bf16 %v3858, %v3857
        %v3884 = vpack.c.bf16 %v3860, %v3859
        %v3885 = vpack.c.bf16 %v3862, %v3861
        %v3886 = vpack.c.bf16 %v3864, %v3863
        %v3887 = vpack.c.bf16 %v3866, %v3865
        %v3888 = vpack.c.bf16 %v3868, %v3867
        %v3889 = vpack.c.bf16 %v3870, %v3869
        %v3890 = vpack.c.bf16 %v3872, %v3871
        %v3891 = vpack.c.bf16 %v3874, %v3873
        %v3892 = vpack.c.bf16 %v3876, %v3875
        %s3893 = scalar_lea.vmem %s2, 16
        %v3894 = vld [vmem:[%s3893] sm:$0x3]
        %v3896 = vsel %vm973, %v3877, 0
        %v3899 = vsel %vm973, %v3878, 0
        %v3902 = vsel %vm973, %v3879, 0
        %v3905 = vsel %vm973, %v3880, 0
        %v3908 = vsel %vm973, %v3881, 0
        %v3911 = vsel %vm973, %v3882, 0
        %v3914 = vsel %vm973, %v3883, 0
        %v3917 = vsel %vm973, %v3884, 0
        %v3920 = vsel %vm973, %v3885, 0
        %v3923 = vsel %vm973, %v3886, 0
        %v3926 = vsel %vm973, %v3887, 0
        %v3929 = vsel %vm973, %v3888, 0
        %v3932 = vsel %vm973, %v3889, 0
        %v3935 = vsel %vm973, %v3890, 0
        %v3938 = vsel %vm973, %v3891, 0
        %v3941 = vsel %vm973, %v3892, 0
        %v3944 = vand.u32 %v3894, %v1025
        %3946 = vmatpush.bf16.msra.mxu0 0
        %3947 = vmatpush.bf16.msra.mxu0 0
        %3948 = vmatpush.bf16.msra.mxu0 0
        %3949 = vmatpush.bf16.msra.mxu0 0
        %3950 = vmatpush.bf16.msra.mxu0 0
        %3951 = vmatpush.bf16.msra.mxu0 0
        %3952 = vmatpush.bf16.msra.mxu0 0
        %3953 = vmatpush.bf16.msra.mxu0 %v3944
        %3954 = vmatmul.bf16.gmra.mxu0 %v3896
        %v3955 = vpop.f32.mrf.mxu0
        %v3956 = vadd.f32 0.0, %v3955
        %v3957 = vpop.f32.mrf.mxu0
        %v3958 = vadd.f32 0.0, %v3957
        %3959 = vmatmul.bf16.gmra.mxu0 %v3899
        %v3960 = vpop.f32.mrf.mxu0
        %v3961 = vadd.f32 0.0, %v3960
        %v3962 = vpop.f32.mrf.mxu0
        %v3963 = vadd.f32 0.0, %v3962
        %3964 = vmatmul.bf16.gmra.mxu0 %v3902
        %v3965 = vpop.f32.mrf.mxu0
        %v3966 = vadd.f32 0.0, %v3965
        %v3967 = vpop.f32.mrf.mxu0
        %v3968 = vadd.f32 0.0, %v3967
        %3969 = vmatmul.bf16.gmra.mxu0 %v3905
        %v3970 = vpop.f32.mrf.mxu0
        %v3971 = vadd.f32 0.0, %v3970
        %v3972 = vpop.f32.mrf.mxu0
        %v3973 = vadd.f32 0.0, %v3972
        %3974 = vmatmul.bf16.gmra.mxu0 %v3908
        %v3975 = vpop.f32.mrf.mxu0
        %v3976 = vadd.f32 0.0, %v3975
        %v3977 = vpop.f32.mrf.mxu0
        %v3978 = vadd.f32 0.0, %v3977
        %3979 = vmatmul.bf16.gmra.mxu0 %v3911
        %v3980 = vpop.f32.mrf.mxu0
        %v3981 = vadd.f32 0.0, %v3980
        %v3982 = vpop.f32.mrf.mxu0
        %v3983 = vadd.f32 0.0, %v3982
        %3984 = vmatmul.bf16.gmra.mxu0 %v3914
        %v3985 = vpop.f32.mrf.mxu0
        %v3986 = vadd.f32 0.0, %v3985
        %v3987 = vpop.f32.mrf.mxu0
        %v3988 = vadd.f32 0.0, %v3987
        %3989 = vmatmul.bf16.gmra.mxu0 %v3917
        %v3990 = vpop.f32.mrf.mxu0
        %v3991 = vadd.f32 0.0, %v3990
        %v3992 = vpop.f32.mrf.mxu0
        %v3993 = vadd.f32 0.0, %v3992
        %3994 = vmatmul.bf16.gmra.mxu0 %v3920
        %v3995 = vpop.f32.mrf.mxu0
        %v3996 = vadd.f32 0.0, %v3995
        %v3997 = vpop.f32.mrf.mxu0
        %v3998 = vadd.f32 0.0, %v3997
        %3999 = vmatmul.bf16.gmra.mxu0 %v3923
        %v4000 = vpop.f32.mrf.mxu0
        %v4001 = vadd.f32 0.0, %v4000
        %v4002 = vpop.f32.mrf.mxu0
        %v4003 = vadd.f32 0.0, %v4002
        %4004 = vmatmul.bf16.gmra.mxu0 %v3926
        %v4005 = vpop.f32.mrf.mxu0
        %v4006 = vadd.f32 0.0, %v4005
        %v4007 = vpop.f32.mrf.mxu0
        %v4008 = vadd.f32 0.0, %v4007
        %4009 = vmatmul.bf16.gmra.mxu0 %v3929
        %v4010 = vpop.f32.mrf.mxu0
        %v4011 = vadd.f32 0.0, %v4010
        %v4012 = vpop.f32.mrf.mxu0
        %v4013 = vadd.f32 0.0, %v4012
        %4014 = vmatmul.bf16.gmra.mxu0 %v3932
        %v4015 = vpop.f32.mrf.mxu0
        %v4016 = vadd.f32 0.0, %v4015
        %v4017 = vpop.f32.mrf.mxu0
        %v4018 = vadd.f32 0.0, %v4017
        %4019 = vmatmul.bf16.gmra.mxu0 %v3935
        %v4020 = vpop.f32.mrf.mxu0
        %v4021 = vadd.f32 0.0, %v4020
        %v4022 = vpop.f32.mrf.mxu0
        %v4023 = vadd.f32 0.0, %v4022
        %4024 = vmatmul.bf16.gmra.mxu0 %v3938
        %v4025 = vpop.f32.mrf.mxu0
        %v4026 = vadd.f32 0.0, %v4025
        %v4027 = vpop.f32.mrf.mxu0
        %v4028 = vadd.f32 0.0, %v4027
        %4029 = vmatmul.bf16.gmra.mxu0 %v3941
        %v4030 = vpop.f32.mrf.mxu0
        %v4031 = vadd.f32 0.0, %v4030
        %v4032 = vpop.f32.mrf.mxu0
        %v4033 = vadd.f32 0.0, %v4032
        %4034 = vdwg.mxu0
        %v4035 = vadd.f32 %v3620, %v3956
        %v4036 = vadd.f32 %v3621, %v3958
        %v4037 = vadd.f32 %v3622, %v3961
        %v4038 = vadd.f32 %v3623, %v3963
        %v4039 = vadd.f32 %v3624, %v3966
        %v4040 = vadd.f32 %v3625, %v3968
        %v4041 = vadd.f32 %v3626, %v3971
        %v4042 = vadd.f32 %v3627, %v3973
        %v4043 = vadd.f32 %v3628, %v3976
        %v4044 = vadd.f32 %v3629, %v3978
        %v4045 = vadd.f32 %v3630, %v3981
        %v4046 = vadd.f32 %v3631, %v3983
        %v4047 = vadd.f32 %v3632, %v3986
        %v4048 = vadd.f32 %v3633, %v3988
        %v4049 = vadd.f32 %v3634, %v3991
        %v4050 = vadd.f32 %v3635, %v3993
        %v4051 = vadd.f32 %v3636, %v3996
        %v4052 = vadd.f32 %v3637, %v3998
        %v4053 = vadd.f32 %v3638, %v4001
        %v4054 = vadd.f32 %v3639, %v4003
        %v4055 = vadd.f32 %v3640, %v4006
        %v4056 = vadd.f32 %v3641, %v4008
        %v4057 = vadd.f32 %v3642, %v4011
        %v4058 = vadd.f32 %v3643, %v4013
        %v4059 = vadd.f32 %v3644, %v4016
        %v4060 = vadd.f32 %v3645, %v4018
        %v4061 = vadd.f32 %v3646, %v4021
        %v4062 = vadd.f32 %v3647, %v4023
        %v4063 = vadd.f32 %v3648, %v4026
        %v4064 = vadd.f32 %v3649, %v4028
        %v4065 = vadd.f32 %v3650, %v4031
        %v4066 = vadd.f32 %v3651, %v4033
        %v4067 = vld [vmem:[%s3] sm:$0x1]
        %v4069 = vperm.slane %v4067, 0
        %v4071 = vadd.f32 %v4035, %v4069
        %v4072 = vadd.f32 %v4036, %v4069
        %v4073 = vadd.f32 %v4037, %v4069
        %v4074 = vadd.f32 %v4038, %v4069
        %v4075 = vadd.f32 %v4039, %v4069
        %v4076 = vadd.f32 %v4040, %v4069
        %v4077 = vadd.f32 %v4041, %v4069
        %v4078 = vadd.f32 %v4042, %v4069
        %v4079 = vadd.f32 %v4043, %v4069
        %v4080 = vadd.f32 %v4044, %v4069
        %v4081 = vadd.f32 %v4045, %v4069
        %v4082 = vadd.f32 %v4046, %v4069
        %v4083 = vadd.f32 %v4047, %v4069
        %v4084 = vadd.f32 %v4048, %v4069
        %v4085 = vadd.f32 %v4049, %v4069
        %v4086 = vadd.f32 %v4050, %v4069
        %v4087 = vadd.f32 %v4051, %v4069
        %v4088 = vadd.f32 %v4052, %v4069
        %v4089 = vadd.f32 %v4053, %v4069
        %v4090 = vadd.f32 %v4054, %v4069
        %v4091 = vadd.f32 %v4055, %v4069
        %v4092 = vadd.f32 %v4056, %v4069
        %v4093 = vadd.f32 %v4057, %v4069
        %v4094 = vadd.f32 %v4058, %v4069
        %v4095 = vadd.f32 %v4059, %v4069
        %v4096 = vadd.f32 %v4060, %v4069
        %v4097 = vadd.f32 %v4061, %v4069
        %v4098 = vadd.f32 %v4062, %v4069
        %v4099 = vadd.f32 %v4063, %v4069
        %v4100 = vadd.f32 %v4064, %v4069
        %v4101 = vadd.f32 %v4065, %v4069
        %v4102 = vadd.f32 %v4066, %v4069
        %v4103 = vmax.f32 %v4071, 0.0
        %v4104 = vmax.f32 %v4072, 0.0
        %v4105 = vmax.f32 %v4073, 0.0
        %v4106 = vmax.f32 %v4074, 0.0
        %v4107 = vmax.f32 %v4075, 0.0
        %v4108 = vmax.f32 %v4076, 0.0
        %v4109 = vmax.f32 %v4077, 0.0
        %v4110 = vmax.f32 %v4078, 0.0
        %v4111 = vmax.f32 %v4079, 0.0
        %v4112 = vmax.f32 %v4080, 0.0
        %v4113 = vmax.f32 %v4081, 0.0
        %v4114 = vmax.f32 %v4082, 0.0
        %v4115 = vmax.f32 %v4083, 0.0
        %v4116 = vmax.f32 %v4084, 0.0
        %v4117 = vmax.f32 %v4085, 0.0
        %v4118 = vmax.f32 %v4086, 0.0
        %v4119 = vmax.f32 %v4087, 0.0
        %v4120 = vmax.f32 %v4088, 0.0
        %v4121 = vmax.f32 %v4089, 0.0
        %v4122 = vmax.f32 %v4090, 0.0
        %v4123 = vmax.f32 %v4091, 0.0
        %v4124 = vmax.f32 %v4092, 0.0
        %v4125 = vmax.f32 %v4093, 0.0
        %v4126 = vmax.f32 %v4094, 0.0
        %v4127 = vmax.f32 %v4095, 0.0
        %v4128 = vmax.f32 %v4096, 0.0
        %v4129 = vmax.f32 %v4097, 0.0
        %v4130 = vmax.f32 %v4098, 0.0
        %v4131 = vmax.f32 %v4099, 0.0
        %v4132 = vmax.f32 %v4100, 0.0
        %v4133 = vmax.f32 %v4101, 0.0
        %v4134 = vmax.f32 %v4102, 0.0
        %v4135 = vrot.slane %v4103, 7
        %v4136 = vrot.slane %v4104, 7
        %v4137 = vrot.slane %v4105, 7
        %v4138 = vrot.slane %v4106, 7
        %v4139 = vrot.slane %v4107, 7
        %v4140 = vrot.slane %v4108, 7
        %v4141 = vrot.slane %v4109, 7
        %v4142 = vrot.slane %v4110, 7
        %v4143 = vrot.slane %v4111, 7
        %v4144 = vrot.slane %v4112, 7
        %v4145 = vrot.slane %v4113, 7
        %v4146 = vrot.slane %v4114, 7
        %v4147 = vrot.slane %v4115, 7
        %v4148 = vrot.slane %v4116, 7
        %v4149 = vrot.slane %v4117, 7
        %v4150 = vrot.slane %v4118, 7
        %v4151 = vrot.slane %v4119, 7
        %v4152 = vrot.slane %v4120, 7
        %v4153 = vrot.slane %v4121, 7
        %v4154 = vrot.slane %v4122, 7
        %v4155 = vrot.slane %v4123, 7
        %v4156 = vrot.slane %v4124, 7
        %v4157 = vrot.slane %v4125, 7
        %v4158 = vrot.slane %v4126, 7
        %v4159 = vrot.slane %v4127, 7
        %v4160 = vrot.slane %v4128, 7
        %v4161 = vrot.slane %v4129, 7
        %v4162 = vrot.slane %v4130, 7
        %v4163 = vrot.slane %v4131, 7
        %v4164 = vrot.slane %v4132, 7
        %v4165 = vrot.slane %v4133, 7
        %v4166 = vrot.slane %v4134, 7
        %v4167 = vsel %vm456, %v4165, %v4166
        %v4168 = vsel %vm456, %v4164, %v4165
        %v4169 = vsel %vm456, %v4163, %v4164
        %v4170 = vsel %vm456, %v4162, %v4163
        %v4171 = vsel %vm456, %v4161, %v4162
        %v4172 = vsel %vm456, %v4160, %v4161
        %v4173 = vsel %vm456, %v4159, %v4160
        %v4174 = vsel %vm456, %v4158, %v4159
        %v4175 = vsel %vm456, %v4157, %v4158
        %v4176 = vsel %vm456, %v4156, %v4157
        %v4177 = vsel %vm456, %v4155, %v4156
        %v4178 = vsel %vm456, %v4154, %v4155
        %v4179 = vsel %vm456, %v4153, %v4154
        %v4180 = vsel %vm456, %v4152, %v4153
        %v4181 = vsel %vm456, %v4151, %v4152
        %v4182 = vsel %vm456, %v4150, %v4151
        %v4183 = vsel %vm456, %v4149, %v4150
        %v4184 = vsel %vm456, %v4148, %v4149
        %v4185 = vsel %vm456, %v4147, %v4148
        %v4186 = vsel %vm456, %v4146, %v4147
        %v4187 = vsel %vm456, %v4145, %v4146
        %v4188 = vsel %vm456, %v4144, %v4145
        %v4189 = vsel %vm456, %v4143, %v4144
        %v4190 = vsel %vm456, %v4142, %v4143
        %v4191 = vsel %vm456, %v4141, %v4142
        %v4192 = vsel %vm456, %v4140, %v4141
        %v4193 = vsel %vm456, %v4139, %v4140
        %v4194 = vsel %vm456, %v4138, %v4139
        %v4195 = vsel %vm456, %v4137, %v4138
        %v4196 = vsel %vm456, %v4136, %v4137
        %v4197 = vsel %vm456, %v4135, %v4136
        %v4198 = vsel %vm456, %v4166, %v4135
        %v4199 = vmul.f32 %v4168, %v524
        %v4200 = vmul.f32 %v4167, %v529
        %v4201 = vmul.f32 %v4198, %v534
        %v4202 = vmul.f32 %v4197, %v539
        %v4203 = vmul.f32 %v4196, %v544
        %v4204 = vmul.f32 %v4195, %v549
        %v4205 = vmul.f32 %v4194, %v554
        %v4206 = vmul.f32 %v4193, %v559
        %v4207 = vmul.f32 %v4192, %v564
        %v4208 = vmul.f32 %v4191, %v569
        %v4209 = vmul.f32 %v4190, %v574
        %v4210 = vmul.f32 %v4189, %v579
        %v4211 = vmul.f32 %v4188, %v584
        %v4212 = vmul.f32 %v4187, %v589
        %v4213 = vmul.f32 %v4186, %v594
        %v4214 = vmul.f32 %v4185, %v599
        %v4215 = vmul.f32 %v4184, %v604
        %v4216 = vmul.f32 %v4183, %v609
        %v4217 = vmul.f32 %v4182, %v614
        %v4218 = vmul.f32 %v4181, %v619
        %v4219 = vmul.f32 %v4180, %v624
        %v4220 = vmul.f32 %v4179, %v629
        %v4221 = vmul.f32 %v4178, %v634
        %v4222 = vmul.f32 %v4177, %v639
        %v4223 = vmul.f32 %v4176, %v644
        %v4224 = vmul.f32 %v4175, %v649
        %v4225 = vmul.f32 %v4174, %v654
        %v4226 = vmul.f32 %v4173, %v659
        %v4227 = vmul.f32 %v4172, %v664
        %v4228 = vmul.f32 %v4171, %v669
        %v4229 = vmul.f32 %v4170, %v674
        %v4230 = vmul.f32 %v4169, %v679
        %v4231 = vpack.c.bf16 %v4200, %v4199
        %v4232 = vpack.c.bf16 %v4202, %v4201
        %v4233 = vpack.c.bf16 %v4204, %v4203
        %v4234 = vpack.c.bf16 %v4206, %v4205
        %v4235 = vpack.c.bf16 %v4208, %v4207
        %v4236 = vpack.c.bf16 %v4210, %v4209
        %v4237 = vpack.c.bf16 %v4212, %v4211
        %v4238 = vpack.c.bf16 %v4214, %v4213
        %v4239 = vpack.c.bf16 %v4216, %v4215
        %v4240 = vpack.c.bf16 %v4218, %v4217
        %v4241 = vpack.c.bf16 %v4220, %v4219
        %v4242 = vpack.c.bf16 %v4222, %v4221
        %v4243 = vpack.c.bf16 %v4224, %v4223
        %v4244 = vpack.c.bf16 %v4226, %v4225
        %v4245 = vpack.c.bf16 %v4228, %v4227
        %v4246 = vpack.c.bf16 %v4230, %v4229
        %v4247 = vld [vmem:[%s4] sm:$0xf]
        %v4248 = vld [vmem:[%s4 + $0x4] sm:$0xf]
        %v4249 = vmul.f32 %v4133, %v766
        %v4250 = vmul.f32 %v4134, %v771
        %v4251 = vmul.f32 %v4103, %v776
        %v4252 = vmul.f32 %v4104, %v781
        %v4253 = vmul.f32 %v4105, %v786
        %v4254 = vmul.f32 %v4106, %v791
        %v4255 = vmul.f32 %v4107, %v796
        %v4256 = vmul.f32 %v4108, %v801
        %v4257 = vmul.f32 %v4109, %v806
        %v4258 = vmul.f32 %v4110, %v811
        %v4259 = vmul.f32 %v4111, %v816
        %v4260 = vmul.f32 %v4112, %v821
        %v4261 = vmul.f32 %v4113, %v826
        %v4262 = vmul.f32 %v4114, %v831
        %v4263 = vmul.f32 %v4115, %v836
        %v4264 = vmul.f32 %v4116, %v841
        %v4265 = vmul.f32 %v4117, %v846
        %v4266 = vmul.f32 %v4118, %v851
        %v4267 = vmul.f32 %v4119, %v856
        %v4268 = vmul.f32 %v4120, %v861
        %v4269 = vmul.f32 %v4121, %v866
        %v4270 = vmul.f32 %v4122, %v871
        %v4271 = vmul.f32 %v4123, %v876
        %v4272 = vmul.f32 %v4124, %v881
        %v4273 = vmul.f32 %v4125, %v886
        %v4274 = vmul.f32 %v4126, %v891
        %v4275 = vmul.f32 %v4127, %v896
        %v4276 = vmul.f32 %v4128, %v901
        %v4277 = vmul.f32 %v4129, %v906
        %v4278 = vmul.f32 %v4130, %v911
        %v4279 = vmul.f32 %v4131, %v916
        %v4280 = vmul.f32 %v4132, %v921
        %v4281 = vpack.c.bf16 %v4250, %v4249
        %v4282 = vpack.c.bf16 %v4252, %v4251
        %v4283 = vpack.c.bf16 %v4254, %v4253
        %v4284 = vpack.c.bf16 %v4256, %v4255
        %v4285 = vpack.c.bf16 %v4258, %v4257
        %v4286 = vpack.c.bf16 %v4260, %v4259
        %v4287 = vpack.c.bf16 %v4262, %v4261
        %v4288 = vpack.c.bf16 %v4264, %v4263
        %v4289 = vpack.c.bf16 %v4266, %v4265
        %v4290 = vpack.c.bf16 %v4268, %v4267
        %v4291 = vpack.c.bf16 %v4270, %v4269
        %v4292 = vpack.c.bf16 %v4272, %v4271
        %v4293 = vpack.c.bf16 %v4274, %v4273
        %v4294 = vpack.c.bf16 %v4276, %v4275
        %v4295 = vpack.c.bf16 %v4278, %v4277
        %v4296 = vpack.c.bf16 %v4280, %v4279
        %s4297 = scalar_lea.vmem %s4, 8
        %v4298 = vld [vmem:[%s4297] sm:$0xf]
        %v4299 = vld [vmem:[%s4297 + $0x4] sm:$0xf]
        %v4302 = vunpack.c.l.b16 %v4298
        %v4303 = vunpack.c.l.b16 %v4299
        %v4304 = vpack.c.b16 %v4303, %v4302
        %vm4306 = vcmask 130048
        %v4308 = vsel %vm4306, %v4281, 0
        %v4311 = vsel %vm4306, %v4282, 0
        %v4314 = vsel %vm4306, %v4283, 0
        %v4317 = vsel %vm4306, %v4284, 0
        %v4320 = vsel %vm4306, %v4285, 0
        %v4323 = vsel %vm4306, %v4286, 0
        %v4326 = vsel %vm4306, %v4287, 0
        %v4329 = vsel %vm4306, %v4288, 0
        %v4332 = vsel %vm4306, %v4289, 0
        %v4335 = vsel %vm4306, %v4290, 0
        %v4338 = vsel %vm4306, %v4291, 0
        %v4341 = vsel %vm4306, %v4292, 0
        %v4344 = vsel %vm4306, %v4293, 0
        %v4347 = vsel %vm4306, %v4294, 0
        %v4350 = vsel %vm4306, %v4295, 0
        %v4353 = vsel %vm4306, %v4296, 0
        %4355 = vmatpush.bf16.msra.mxu0 0
        %4356 = vmatpush.bf16.msra.mxu0 0
        %4357 = vmatpush.bf16.msra.mxu0 0
        %4358 = vmatpush.bf16.msra.mxu0 0
        %4359 = vmatpush.bf16.msra.mxu0 0
        %4360 = vmatpush.bf16.msra.mxu0 0
        %4361 = vmatpush.bf16.msra.mxu0 0
        %4362 = vmatpush.bf16.msra.mxu0 %v4304
        %4363 = vmatmul.bf16.gmra.mxu0 %v4308
        %v4364 = vpop.f32.mrf.mxu0
        %v4365 = vadd.f32 0.0, %v4364
        %v4366 = vpop.f32.mrf.mxu0
        %v4367 = vadd.f32 0.0, %v4366
        %4368 = vmatmul.bf16.gmra.mxu0 %v4311
        %v4369 = vpop.f32.mrf.mxu0
        %v4370 = vadd.f32 0.0, %v4369
        %v4371 = vpop.f32.mrf.mxu0
        %v4372 = vadd.f32 0.0, %v4371
        %4373 = vmatmul.bf16.gmra.mxu0 %v4314
        %v4374 = vpop.f32.mrf.mxu0
        %v4375 = vadd.f32 0.0, %v4374
        %v4376 = vpop.f32.mrf.mxu0
        %v4377 = vadd.f32 0.0, %v4376
        %4378 = vmatmul.bf16.gmra.mxu0 %v4317
        %v4379 = vpop.f32.mrf.mxu0
        %v4380 = vadd.f32 0.0, %v4379
        %v4381 = vpop.f32.mrf.mxu0
        %v4382 = vadd.f32 0.0, %v4381
        %4383 = vmatmul.bf16.gmra.mxu0 %v4320
        %v4384 = vpop.f32.mrf.mxu0
        %v4385 = vadd.f32 0.0, %v4384
        %v4386 = vpop.f32.mrf.mxu0
        %v4387 = vadd.f32 0.0, %v4386
        %4388 = vmatmul.bf16.gmra.mxu0 %v4323
        %v4389 = vpop.f32.mrf.mxu0
        %v4390 = vadd.f32 0.0, %v4389
        %v4391 = vpop.f32.mrf.mxu0
        %v4392 = vadd.f32 0.0, %v4391
        %4393 = vmatmul.bf16.gmra.mxu0 %v4326
        %v4394 = vpop.f32.mrf.mxu0
        %v4395 = vadd.f32 0.0, %v4394
        %v4396 = vpop.f32.mrf.mxu0
        %v4397 = vadd.f32 0.0, %v4396
        %4398 = vmatmul.bf16.gmra.mxu0 %v4329
        %v4399 = vpop.f32.mrf.mxu0
        %v4400 = vadd.f32 0.0, %v4399
        %v4401 = vpop.f32.mrf.mxu0
        %v4402 = vadd.f32 0.0, %v4401
        %4403 = vmatmul.bf16.gmra.mxu0 %v4332
        %v4404 = vpop.f32.mrf.mxu0
        %v4405 = vadd.f32 0.0, %v4404
        %v4406 = vpop.f32.mrf.mxu0
        %v4407 = vadd.f32 0.0, %v4406
        %4408 = vmatmul.bf16.gmra.mxu0 %v4335
        %v4409 = vpop.f32.mrf.mxu0
        %v4410 = vadd.f32 0.0, %v4409
        %v4411 = vpop.f32.mrf.mxu0
        %v4412 = vadd.f32 0.0, %v4411
        %4413 = vmatmul.bf16.gmra.mxu0 %v4338
        %v4414 = vpop.f32.mrf.mxu0
        %v4415 = vadd.f32 0.0, %v4414
        %v4416 = vpop.f32.mrf.mxu0
        %v4417 = vadd.f32 0.0, %v4416
        %4418 = vmatmul.bf16.gmra.mxu0 %v4341
        %v4419 = vpop.f32.mrf.mxu0
        %v4420 = vadd.f32 0.0, %v4419
        %v4421 = vpop.f32.mrf.mxu0
        %v4422 = vadd.f32 0.0, %v4421
        %4423 = vmatmul.bf16.gmra.mxu0 %v4344
        %v4424 = vpop.f32.mrf.mxu0
        %v4425 = vadd.f32 0.0, %v4424
        %v4426 = vpop.f32.mrf.mxu0
        %v4427 = vadd.f32 0.0, %v4426
        %4428 = vmatmul.bf16.gmra.mxu0 %v4347
        %v4429 = vpop.f32.mrf.mxu0
        %v4430 = vadd.f32 0.0, %v4429
        %v4431 = vpop.f32.mrf.mxu0
        %v4432 = vadd.f32 0.0, %v4431
        %4433 = vmatmul.bf16.gmra.mxu0 %v4350
        %v4434 = vpop.f32.mrf.mxu0
        %v4435 = vadd.f32 0.0, %v4434
        %v4436 = vpop.f32.mrf.mxu0
        %v4437 = vadd.f32 0.0, %v4436
        %4438 = vmatmul.bf16.gmra.mxu0 %v4353
        %v4439 = vpop.f32.mrf.mxu0
        %v4440 = vadd.f32 0.0, %v4439
        %v4441 = vpop.f32.mrf.mxu0
        %v4442 = vadd.f32 0.0, %v4441
        %4443 = vdwg.mxu0
        %v4446 = vunpack.c.l.b16 %v4247
        %v4447 = vunpack.c.l.b16 %v4248
        %v4448 = vpack.c.b16 %v4447, %v4446
        %v4451 = vsel %vm4306, %v4231, 0
        %v4454 = vsel %vm4306, %v4232, 0
        %v4457 = vsel %vm4306, %v4233, 0
        %v4460 = vsel %vm4306, %v4234, 0
        %v4463 = vsel %vm4306, %v4235, 0
        %v4466 = vsel %vm4306, %v4236, 0
        %v4469 = vsel %vm4306, %v4237, 0
        %v4472 = vsel %vm4306, %v4238, 0
        %v4475 = vsel %vm4306, %v4239, 0
        %v4478 = vsel %vm4306, %v4240, 0
        %v4481 = vsel %vm4306, %v4241, 0
        %v4484 = vsel %vm4306, %v4242, 0
        %v4487 = vsel %vm4306, %v4243, 0
        %v4490 = vsel %vm4306, %v4244, 0
        %v4493 = vsel %vm4306, %v4245, 0
        %v4496 = vsel %vm4306, %v4246, 0
        %4498 = vmatpush.bf16.msra.mxu0 0
        %4499 = vmatpush.bf16.msra.mxu0 0
        %4500 = vmatpush.bf16.msra.mxu0 0
        %4501 = vmatpush.bf16.msra.mxu0 0
        %4502 = vmatpush.bf16.msra.mxu0 0
        %4503 = vmatpush.bf16.msra.mxu0 0
        %4504 = vmatpush.bf16.msra.mxu0 0
        %4505 = vmatpush.bf16.msra.mxu0 %v4448
        %4506 = vmatmul.bf16.gmra.mxu0 %v4451
        %v4507 = vpop.f32.mrf.mxu0
        %v4508 = vadd.f32 %v4365, %v4507
        %v4509 = vpop.f32.mrf.mxu0
        %v4510 = vadd.f32 %v4367, %v4509
        %4511 = vmatmul.bf16.gmra.mxu0 %v4454
        %v4512 = vpop.f32.mrf.mxu0
        %v4513 = vadd.f32 %v4370, %v4512
        %v4514 = vpop.f32.mrf.mxu0
        %v4515 = vadd.f32 %v4372, %v4514
        %4516 = vmatmul.bf16.gmra.mxu0 %v4457
        %v4517 = vpop.f32.mrf.mxu0
        %v4518 = vadd.f32 %v4375, %v4517
        %v4519 = vpop.f32.mrf.mxu0
        %v4520 = vadd.f32 %v4377, %v4519
        %4521 = vmatmul.bf16.gmra.mxu0 %v4460
        %v4522 = vpop.f32.mrf.mxu0
        %v4523 = vadd.f32 %v4380, %v4522
        %v4524 = vpop.f32.mrf.mxu0
        %v4525 = vadd.f32 %v4382, %v4524
        %4526 = vmatmul.bf16.gmra.mxu0 %v4463
        %v4527 = vpop.f32.mrf.mxu0
        %v4528 = vadd.f32 %v4385, %v4527
        %v4529 = vpop.f32.mrf.mxu0
        %v4530 = vadd.f32 %v4387, %v4529
        %4531 = vmatmul.bf16.gmra.mxu0 %v4466
        %v4532 = vpop.f32.mrf.mxu0
        %v4533 = vadd.f32 %v4390, %v4532
        %v4534 = vpop.f32.mrf.mxu0
        %v4535 = vadd.f32 %v4392, %v4534
        %4536 = vmatmul.bf16.gmra.mxu0 %v4469
        %v4537 = vpop.f32.mrf.mxu0
        %v4538 = vadd.f32 %v4395, %v4537
        %v4539 = vpop.f32.mrf.mxu0
        %v4540 = vadd.f32 %v4397, %v4539
        %4541 = vmatmul.bf16.gmra.mxu0 %v4472
        %v4542 = vpop.f32.mrf.mxu0
        %v4543 = vadd.f32 %v4400, %v4542
        %v4544 = vpop.f32.mrf.mxu0
        %v4545 = vadd.f32 %v4402, %v4544
        %4546 = vmatmul.bf16.gmra.mxu0 %v4475
        %v4547 = vpop.f32.mrf.mxu0
        %v4548 = vadd.f32 %v4405, %v4547
        %v4549 = vpop.f32.mrf.mxu0
        %v4550 = vadd.f32 %v4407, %v4549
        %4551 = vmatmul.bf16.gmra.mxu0 %v4478
        %v4552 = vpop.f32.mrf.mxu0
        %v4553 = vadd.f32 %v4410, %v4552
        %v4554 = vpop.f32.mrf.mxu0
        %v4555 = vadd.f32 %v4412, %v4554
        %4556 = vmatmul.bf16.gmra.mxu0 %v4481
        %v4557 = vpop.f32.mrf.mxu0
        %v4558 = vadd.f32 %v4415, %v4557
        %v4559 = vpop.f32.mrf.mxu0
        %v4560 = vadd.f32 %v4417, %v4559
        %4561 = vmatmul.bf16.gmra.mxu0 %v4484
        %v4562 = vpop.f32.mrf.mxu0
        %v4563 = vadd.f32 %v4420, %v4562
        %v4564 = vpop.f32.mrf.mxu0
        %v4565 = vadd.f32 %v4422, %v4564
        %4566 = vmatmul.bf16.gmra.mxu0 %v4487
        %v4567 = vpop.f32.mrf.mxu0
        %v4568 = vadd.f32 %v4425, %v4567
        %v4569 = vpop.f32.mrf.mxu0
        %v4570 = vadd.f32 %v4427, %v4569
        %4571 = vmatmul.bf16.gmra.mxu0 %v4490
        %v4572 = vpop.f32.mrf.mxu0
        %v4573 = vadd.f32 %v4430, %v4572
        %v4574 = vpop.f32.mrf.mxu0
        %v4575 = vadd.f32 %v4432, %v4574
        %4576 = vmatmul.bf16.gmra.mxu0 %v4493
        %v4577 = vpop.f32.mrf.mxu0
        %v4578 = vadd.f32 %v4435, %v4577
        %v4579 = vpop.f32.mrf.mxu0
        %v4580 = vadd.f32 %v4437, %v4579
        %4581 = vmatmul.bf16.gmra.mxu0 %v4496
        %v4582 = vpop.f32.mrf.mxu0
        %v4583 = vadd.f32 %v4440, %v4582
        %v4584 = vpop.f32.mrf.mxu0
        %v4585 = vadd.f32 %v4442, %v4584
        %4586 = vdwg.mxu0
        %v4587 = vrot.slane %v4103, 1
        %v4588 = vrot.slane %v4104, 1
        %v4589 = vrot.slane %v4105, 1
        %v4590 = vrot.slane %v4106, 1
        %v4591 = vrot.slane %v4107, 1
        %v4592 = vrot.slane %v4108, 1
        %v4593 = vrot.slane %v4109, 1
        %v4594 = vrot.slane %v4110, 1
        %v4595 = vrot.slane %v4111, 1
        %v4596 = vrot.slane %v4112, 1
        %v4597 = vrot.slane %v4113, 1
        %v4598 = vrot.slane %v4114, 1
        %v4599 = vrot.slane %v4115, 1
        %v4600 = vrot.slane %v4116, 1
        %v4601 = vrot.slane %v4117, 1
        %v4602 = vrot.slane %v4118, 1
        %v4603 = vrot.slane %v4119, 1
        %v4604 = vrot.slane %v4120, 1
        %v4605 = vrot.slane %v4121, 1
        %v4606 = vrot.slane %v4122, 1
        %v4607 = vrot.slane %v4123, 1
        %v4608 = vrot.slane %v4124, 1
        %v4609 = vrot.slane %v4125, 1
        %v4610 = vrot.slane %v4126, 1
        %v4611 = vrot.slane %v4127, 1
        %v4612 = vrot.slane %v4128, 1
        %v4613 = vrot.slane %v4129, 1
        %v4614 = vrot.slane %v4130, 1
        %v4615 = vrot.slane %v4131, 1
        %v4616 = vrot.slane %v4132, 1
        %v4617 = vrot.slane %v4133, 1
        %v4618 = vrot.slane %v4134, 1
        %v4619 = vsel %vm1290, %v4617, %v4618
        %v4620 = vsel %vm1290, %v4616, %v4617
        %v4621 = vsel %vm1290, %v4615, %v4616
        %v4622 = vsel %vm1290, %v4614, %v4615
        %v4623 = vsel %vm1290, %v4613, %v4614
        %v4624 = vsel %vm1290, %v4612, %v4613
        %v4625 = vsel %vm1290, %v4611, %v4612
        %v4626 = vsel %vm1290, %v4610, %v4611
        %v4627 = vsel %vm1290, %v4609, %v4610
        %v4628 = vsel %vm1290, %v4608, %v4609
        %v4629 = vsel %vm1290, %v4607, %v4608
        %v4630 = vsel %vm1290, %v4606, %v4607
        %v4631 = vsel %vm1290, %v4605, %v4606
        %v4632 = vsel %vm1290, %v4604, %v4605
        %v4633 = vsel %vm1290, %v4603, %v4604
        %v4634 = vsel %vm1290, %v4602, %v4603
        %v4635 = vsel %vm1290, %v4601, %v4602
        %v4636 = vsel %vm1290, %v4600, %v4601
        %v4637 = vsel %vm1290, %v4599, %v4600
        %v4638 = vsel %vm1290, %v4598, %v4599
        %v4639 = vsel %vm1290, %v4597, %v4598
        %v4640 = vsel %vm1290, %v4596, %v4597
        %v4641 = vsel %vm1290, %v4595, %v4596
        %v4642 = vsel %vm1290, %v4594, %v4595
        %v4643 = vsel %vm1290, %v4593, %v4594
        %v4644 = vsel %vm1290, %v4592, %v4593
        %v4645 = vsel %vm1290, %v4591, %v4592
        %v4646 = vsel %vm1290, %v4590, %v4591
        %v4647 = vsel %vm1290, %v4589, %v4590
        %v4648 = vsel %vm1290, %v4588, %v4589
        %v4649 = vsel %vm1290, %v4587, %v4588
        %v4650 = vsel %vm1290, %v4618, %v4587
        %v4651 = vmul.f32 %v4619, %v1359
        %v4652 = vmul.f32 %v4650, %v1364
        %v4653 = vmul.f32 %v4649, %v1369
        %v4654 = vmul.f32 %v4648, %v1374
        %v4655 = vmul.f32 %v4647, %v1379
        %v4656 = vmul.f32 %v4646, %v1384
        %v4657 = vmul.f32 %v4645, %v1389
        %v4658 = vmul.f32 %v4644, %v1394
        %v4659 = vmul.f32 %v4643, %v1399
        %v4660 = vmul.f32 %v4642, %v1404
        %v4661 = vmul.f32 %v4641, %v1409
        %v4662 = vmul.f32 %v4640, %v1414
        %v4663 = vmul.f32 %v4639, %v1419
        %v4664 = vmul.f32 %v4638, %v1424
        %v4665 = vmul.f32 %v4637, %v1429
        %v4666 = vmul.f32 %v4636, %v1434
        %v4667 = vmul.f32 %v4635, %v1439
        %v4668 = vmul.f32 %v4634, %v1444
        %v4669 = vmul.f32 %v4633, %v1449
        %v4670 = vmul.f32 %v4632, %v1454
        %v4671 = vmul.f32 %v4631, %v1459
        %v4672 = vmul.f32 %v4630, %v1464
        %v4673 = vmul.f32 %v4629, %v1469
        %v4674 = vmul.f32 %v4628, %v1474
        %v4675 = vmul.f32 %v4627, %v1479
        %v4676 = vmul.f32 %v4626, %v1484
        %v4677 = vmul.f32 %v4625, %v1489
        %v4678 = vmul.f32 %v4624, %v1494
        %v4679 = vmul.f32 %v4623, %v1499
        %v4680 = vmul.f32 %v4622, %v1504
        %v4681 = vmul.f32 %v4621, %v1509
        %v4682 = vmul.f32 %v4620, %v1514
        %v4683 = vpack.c.bf16 %v4652, %v4651
        %v4684 = vpack.c.bf16 %v4654, %v4653
        %v4685 = vpack.c.bf16 %v4656, %v4655
        %v4686 = vpack.c.bf16 %v4658, %v4657
        %v4687 = vpack.c.bf16 %v4660, %v4659
        %v4688 = vpack.c.bf16 %v4662, %v4661
        %v4689 = vpack.c.bf16 %v4664, %v4663
        %v4690 = vpack.c.bf16 %v4666, %v4665
        %v4691 = vpack.c.bf16 %v4668, %v4667
        %v4692 = vpack.c.bf16 %v4670, %v4669
        %v4693 = vpack.c.bf16 %v4672, %v4671
        %v4694 = vpack.c.bf16 %v4674, %v4673
        %v4695 = vpack.c.bf16 %v4676, %v4675
        %v4696 = vpack.c.bf16 %v4678, %v4677
        %v4697 = vpack.c.bf16 %v4680, %v4679
        %v4698 = vpack.c.bf16 %v4682, %v4681
        %s4699 = scalar_lea.vmem %s4, 16
        %v4700 = vld [vmem:[%s4699] sm:$0xf]
        %v4701 = vld [vmem:[%s4699 + $0x4] sm:$0xf]
        %v4704 = vunpack.c.l.b16 %v4700
        %v4705 = vunpack.c.l.b16 %v4701
        %v4706 = vpack.c.b16 %v4705, %v4704
        %v4709 = vsel %vm4306, %v4683, 0
        %v4712 = vsel %vm4306, %v4684, 0
        %v4715 = vsel %vm4306, %v4685, 0
        %v4718 = vsel %vm4306, %v4686, 0
        %v4721 = vsel %vm4306, %v4687, 0
        %v4724 = vsel %vm4306, %v4688, 0
        %v4727 = vsel %vm4306, %v4689, 0
        %v4730 = vsel %vm4306, %v4690, 0
        %v4733 = vsel %vm4306, %v4691, 0
        %v4736 = vsel %vm4306, %v4692, 0
        %v4739 = vsel %vm4306, %v4693, 0
        %v4742 = vsel %vm4306, %v4694, 0
        %v4745 = vsel %vm4306, %v4695, 0
        %v4748 = vsel %vm4306, %v4696, 0
        %v4751 = vsel %vm4306, %v4697, 0
        %v4754 = vsel %vm4306, %v4698, 0
        %4756 = vmatpush.bf16.msra.mxu0 0
        %4757 = vmatpush.bf16.msra.mxu0 0
        %4758 = vmatpush.bf16.msra.mxu0 0
        %4759 = vmatpush.bf16.msra.mxu0 0
        %4760 = vmatpush.bf16.msra.mxu0 0
        %4761 = vmatpush.bf16.msra.mxu0 0
        %4762 = vmatpush.bf16.msra.mxu0 0
        %4763 = vmatpush.bf16.msra.mxu0 %v4706
        %4764 = vmatmul.bf16.gmra.mxu0 %v4709
        %v4765 = vpop.f32.mrf.mxu0
        %v4766 = vadd.f32 0.0, %v4765
        %v4767 = vpop.f32.mrf.mxu0
        %v4768 = vadd.f32 0.0, %v4767
        %4769 = vmatmul.bf16.gmra.mxu0 %v4712
        %v4770 = vpop.f32.mrf.mxu0
        %v4771 = vadd.f32 0.0, %v4770
        %v4772 = vpop.f32.mrf.mxu0
        %v4773 = vadd.f32 0.0, %v4772
        %4774 = vmatmul.bf16.gmra.mxu0 %v4715
        %v4775 = vpop.f32.mrf.mxu0
        %v4776 = vadd.f32 0.0, %v4775
        %v4777 = vpop.f32.mrf.mxu0
        %v4778 = vadd.f32 0.0, %v4777
        %4779 = vmatmul.bf16.gmra.mxu0 %v4718
        %v4780 = vpop.f32.mrf.mxu0
        %v4781 = vadd.f32 0.0, %v4780
        %v4782 = vpop.f32.mrf.mxu0
        %v4783 = vadd.f32 0.0, %v4782
        %4784 = vmatmul.bf16.gmra.mxu0 %v4721
        %v4785 = vpop.f32.mrf.mxu0
        %v4786 = vadd.f32 0.0, %v4785
        %v4787 = vpop.f32.mrf.mxu0
        %v4788 = vadd.f32 0.0, %v4787
        %4789 = vmatmul.bf16.gmra.mxu0 %v4724
        %v4790 = vpop.f32.mrf.mxu0
        %v4791 = vadd.f32 0.0, %v4790
        %v4792 = vpop.f32.mrf.mxu0
        %v4793 = vadd.f32 0.0, %v4792
        %4794 = vmatmul.bf16.gmra.mxu0 %v4727
        %v4795 = vpop.f32.mrf.mxu0
        %v4796 = vadd.f32 0.0, %v4795
        %v4797 = vpop.f32.mrf.mxu0
        %v4798 = vadd.f32 0.0, %v4797
        %4799 = vmatmul.bf16.gmra.mxu0 %v4730
        %v4800 = vpop.f32.mrf.mxu0
        %v4801 = vadd.f32 0.0, %v4800
        %v4802 = vpop.f32.mrf.mxu0
        %v4803 = vadd.f32 0.0, %v4802
        %4804 = vmatmul.bf16.gmra.mxu0 %v4733
        %v4805 = vpop.f32.mrf.mxu0
        %v4806 = vadd.f32 0.0, %v4805
        %v4807 = vpop.f32.mrf.mxu0
        %v4808 = vadd.f32 0.0, %v4807
        %4809 = vmatmul.bf16.gmra.mxu0 %v4736
        %v4810 = vpop.f32.mrf.mxu0
        %v4811 = vadd.f32 0.0, %v4810
        %v4812 = vpop.f32.mrf.mxu0
        %v4813 = vadd.f32 0.0, %v4812
        %4814 = vmatmul.bf16.gmra.mxu0 %v4739
        %v4815 = vpop.f32.mrf.mxu0
        %v4816 = vadd.f32 0.0, %v4815
        %v4817 = vpop.f32.mrf.mxu0
        %v4818 = vadd.f32 0.0, %v4817
        %4819 = vmatmul.bf16.gmra.mxu0 %v4742
        %v4820 = vpop.f32.mrf.mxu0
        %v4821 = vadd.f32 0.0, %v4820
        %v4822 = vpop.f32.mrf.mxu0
        %v4823 = vadd.f32 0.0, %v4822
        %4824 = vmatmul.bf16.gmra.mxu0 %v4745
        %v4825 = vpop.f32.mrf.mxu0
        %v4826 = vadd.f32 0.0, %v4825
        %v4827 = vpop.f32.mrf.mxu0
        %v4828 = vadd.f32 0.0, %v4827
        %4829 = vmatmul.bf16.gmra.mxu0 %v4748
        %v4830 = vpop.f32.mrf.mxu0
        %v4831 = vadd.f32 0.0, %v4830
        %v4832 = vpop.f32.mrf.mxu0
        %v4833 = vadd.f32 0.0, %v4832
        %4834 = vmatmul.bf16.gmra.mxu0 %v4751
        %v4835 = vpop.f32.mrf.mxu0
        %v4836 = vadd.f32 0.0, %v4835
        %v4837 = vpop.f32.mrf.mxu0
        %v4838 = vadd.f32 0.0, %v4837
        %4839 = vmatmul.bf16.gmra.mxu0 %v4754
        %v4840 = vpop.f32.mrf.mxu0
        %v4841 = vadd.f32 0.0, %v4840
        %v4842 = vpop.f32.mrf.mxu0
        %v4843 = vadd.f32 0.0, %v4842
        %4844 = vdwg.mxu0
        %v4845 = vadd.f32 %v4508, %v4766
        %v4846 = vadd.f32 %v4510, %v4768
        %v4847 = vadd.f32 %v4513, %v4771
        %v4848 = vadd.f32 %v4515, %v4773
        %v4849 = vadd.f32 %v4518, %v4776
        %v4850 = vadd.f32 %v4520, %v4778
        %v4851 = vadd.f32 %v4523, %v4781
        %v4852 = vadd.f32 %v4525, %v4783
        %v4853 = vadd.f32 %v4528, %v4786
        %v4854 = vadd.f32 %v4530, %v4788
        %v4855 = vadd.f32 %v4533, %v4791
        %v4856 = vadd.f32 %v4535, %v4793
        %v4857 = vadd.f32 %v4538, %v4796
        %v4858 = vadd.f32 %v4540, %v4798
        %v4859 = vadd.f32 %v4543, %v4801
        %v4860 = vadd.f32 %v4545, %v4803
        %v4861 = vadd.f32 %v4548, %v4806
        %v4862 = vadd.f32 %v4550, %v4808
        %v4863 = vadd.f32 %v4553, %v4811
        %v4864 = vadd.f32 %v4555, %v4813
        %v4865 = vadd.f32 %v4558, %v4816
        %v4866 = vadd.f32 %v4560, %v4818
        %v4867 = vadd.f32 %v4563, %v4821
        %v4868 = vadd.f32 %v4565, %v4823
        %v4869 = vadd.f32 %v4568, %v4826
        %v4870 = vadd.f32 %v4570, %v4828
        %v4871 = vadd.f32 %v4573, %v4831
        %v4872 = vadd.f32 %v4575, %v4833
        %v4873 = vadd.f32 %v4578, %v4836
        %v4874 = vadd.f32 %v4580, %v4838
        %v4875 = vadd.f32 %v4583, %v4841
        %v4876 = vadd.f32 %v4585, %v4843
        %v4877 = vmul.f32 %v4198, %v1774
        %v4878 = vmul.f32 %v4197, %v1779
        %v4879 = vmul.f32 %v4196, %v1784
        %v4880 = vmul.f32 %v4195, %v1789
        %v4881 = vmul.f32 %v4194, %v1794
        %v4882 = vmul.f32 %v4193, %v1799
        %v4883 = vmul.f32 %v4192, %v1804
        %v4884 = vmul.f32 %v4191, %v1809
        %v4885 = vmul.f32 %v4190, %v1814
        %v4886 = vmul.f32 %v4189, %v1819
        %v4887 = vmul.f32 %v4188, %v1824
        %v4888 = vmul.f32 %v4187, %v1829
        %v4889 = vmul.f32 %v4186, %v1834
        %v4890 = vmul.f32 %v4185, %v1839
        %v4891 = vmul.f32 %v4184, %v1844
        %v4892 = vmul.f32 %v4183, %v1849
        %v4893 = vmul.f32 %v4182, %v1854
        %v4894 = vmul.f32 %v4181, %v1859
        %v4895 = vmul.f32 %v4180, %v1864
        %v4896 = vmul.f32 %v4179, %v1869
        %v4897 = vmul.f32 %v4178, %v1874
        %v4898 = vmul.f32 %v4177, %v1879
        %v4899 = vmul.f32 %v4176, %v1884
        %v4900 = vmul.f32 %v4175, %v1889
        %v4901 = vmul.f32 %v4174, %v1894
        %v4902 = vmul.f32 %v4173, %v1899
        %v4903 = vmul.f32 %v4172, %v1904
        %v4904 = vmul.f32 %v4171, %v1909
        %v4905 = vmul.f32 %v4170, %v1914
        %v4906 = vmul.f32 %v4169, %v1919
        %v4907 = vmul.f32 %v4168, %v1924
        %v4908 = vmul.f32 %v4167, %v1929
        %v4909 = vpack.c.bf16 %v4878, %v4877
        %v4910 = vpack.c.bf16 %v4880, %v4879
        %v4911 = vpack.c.bf16 %v4882, %v4881
        %v4912 = vpack.c.bf16 %v4884, %v4883
        %v4913 = vpack.c.bf16 %v4886, %v4885
        %v4914 = vpack.c.bf16 %v4888, %v4887
        %v4915 = vpack.c.bf16 %v4890, %v4889
        %v4916 = vpack.c.bf16 %v4892, %v4891
        %v4917 = vpack.c.bf16 %v4894, %v4893
        %v4918 = vpack.c.bf16 %v4896, %v4895
        %v4919 = vpack.c.bf16 %v4898, %v4897
        %v4920 = vpack.c.bf16 %v4900, %v4899
        %v4921 = vpack.c.bf16 %v4902, %v4901
        %v4922 = vpack.c.bf16 %v4904, %v4903
        %v4923 = vpack.c.bf16 %v4906, %v4905
        %v4924 = vpack.c.bf16 %v4908, %v4907
        %s4925 = scalar_lea.vmem %s4, 24
        %v4926 = vld [vmem:[%s4925] sm:$0xf]
        %v4927 = vld [vmem:[%s4925 + $0x4] sm:$0xf]
        %v4930 = vunpack.c.l.b16 %v4926
        %v4931 = vunpack.c.l.b16 %v4927
        %v4932 = vpack.c.b16 %v4931, %v4930
        %v4935 = vsel %vm4306, %v4909, 0
        %v4938 = vsel %vm4306, %v4910, 0
        %v4941 = vsel %vm4306, %v4911, 0
        %v4944 = vsel %vm4306, %v4912, 0
        %v4947 = vsel %vm4306, %v4913, 0
        %v4950 = vsel %vm4306, %v4914, 0
        %v4953 = vsel %vm4306, %v4915, 0
        %v4956 = vsel %vm4306, %v4916, 0
        %v4959 = vsel %vm4306, %v4917, 0
        %v4962 = vsel %vm4306, %v4918, 0
        %v4965 = vsel %vm4306, %v4919, 0
        %v4968 = vsel %vm4306, %v4920, 0
        %v4971 = vsel %vm4306, %v4921, 0
        %v4974 = vsel %vm4306, %v4922, 0
        %v4977 = vsel %vm4306, %v4923, 0
        %v4980 = vsel %vm4306, %v4924, 0
        %4982 = vmatpush.bf16.msra.mxu0 0
        %4983 = vmatpush.bf16.msra.mxu0 0
        %4984 = vmatpush.bf16.msra.mxu0 0
        %4985 = vmatpush.bf16.msra.mxu0 0
        %4986 = vmatpush.bf16.msra.mxu0 0
        %4987 = vmatpush.bf16.msra.mxu0 0
        %4988 = vmatpush.bf16.msra.mxu0 0
        %4989 = vmatpush.bf16.msra.mxu0 %v4932
        %4990 = vmatmul.bf16.gmra.mxu0 %v4935
        %v4991 = vpop.f32.mrf.mxu0
        %v4992 = vadd.f32 0.0, %v4991
        %v4993 = vpop.f32.mrf.mxu0
        %v4994 = vadd.f32 0.0, %v4993
        %4995 = vmatmul.bf16.gmra.mxu0 %v4938
        %v4996 = vpop.f32.mrf.mxu0
        %v4997 = vadd.f32 0.0, %v4996
        %v4998 = vpop.f32.mrf.mxu0
        %v4999 = vadd.f32 0.0, %v4998
        %5000 = vmatmul.bf16.gmra.mxu0 %v4941
        %v5001 = vpop.f32.mrf.mxu0
        %v5002 = vadd.f32 0.0, %v5001
        %v5003 = vpop.f32.mrf.mxu0
        %v5004 = vadd.f32 0.0, %v5003
        %5005 = vmatmul.bf16.gmra.mxu0 %v4944
        %v5006 = vpop.f32.mrf.mxu0
        %v5007 = vadd.f32 0.0, %v5006
        %v5008 = vpop.f32.mrf.mxu0
        %v5009 = vadd.f32 0.0, %v5008
        %5010 = vmatmul.bf16.gmra.mxu0 %v4947
        %v5011 = vpop.f32.mrf.mxu0
        %v5012 = vadd.f32 0.0, %v5011
        %v5013 = vpop.f32.mrf.mxu0
        %v5014 = vadd.f32 0.0, %v5013
        %5015 = vmatmul.bf16.gmra.mxu0 %v4950
        %v5016 = vpop.f32.mrf.mxu0
        %v5017 = vadd.f32 0.0, %v5016
        %v5018 = vpop.f32.mrf.mxu0
        %v5019 = vadd.f32 0.0, %v5018
        %5020 = vmatmul.bf16.gmra.mxu0 %v4953
        %v5021 = vpop.f32.mrf.mxu0
        %v5022 = vadd.f32 0.0, %v5021
        %v5023 = vpop.f32.mrf.mxu0
        %v5024 = vadd.f32 0.0, %v5023
        %5025 = vmatmul.bf16.gmra.mxu0 %v4956
        %v5026 = vpop.f32.mrf.mxu0
        %v5027 = vadd.f32 0.0, %v5026
        %v5028 = vpop.f32.mrf.mxu0
        %v5029 = vadd.f32 0.0, %v5028
        %5030 = vmatmul.bf16.gmra.mxu0 %v4959
        %v5031 = vpop.f32.mrf.mxu0
        %v5032 = vadd.f32 0.0, %v5031
        %v5033 = vpop.f32.mrf.mxu0
        %v5034 = vadd.f32 0.0, %v5033
        %5035 = vmatmul.bf16.gmra.mxu0 %v4962
        %v5036 = vpop.f32.mrf.mxu0
        %v5037 = vadd.f32 0.0, %v5036
        %v5038 = vpop.f32.mrf.mxu0
        %v5039 = vadd.f32 0.0, %v5038
        %5040 = vmatmul.bf16.gmra.mxu0 %v4965
        %v5041 = vpop.f32.mrf.mxu0
        %v5042 = vadd.f32 0.0, %v5041
        %v5043 = vpop.f32.mrf.mxu0
        %v5044 = vadd.f32 0.0, %v5043
        %5045 = vmatmul.bf16.gmra.mxu0 %v4968
        %v5046 = vpop.f32.mrf.mxu0
        %v5047 = vadd.f32 0.0, %v5046
        %v5048 = vpop.f32.mrf.mxu0
        %v5049 = vadd.f32 0.0, %v5048
        %5050 = vmatmul.bf16.gmra.mxu0 %v4971
        %v5051 = vpop.f32.mrf.mxu0
        %v5052 = vadd.f32 0.0, %v5051
        %v5053 = vpop.f32.mrf.mxu0
        %v5054 = vadd.f32 0.0, %v5053
        %5055 = vmatmul.bf16.gmra.mxu0 %v4974
        %v5056 = vpop.f32.mrf.mxu0
        %v5057 = vadd.f32 0.0, %v5056
        %v5058 = vpop.f32.mrf.mxu0
        %v5059 = vadd.f32 0.0, %v5058
        %5060 = vmatmul.bf16.gmra.mxu0 %v4977
        %v5061 = vpop.f32.mrf.mxu0
        %v5062 = vadd.f32 0.0, %v5061
        %v5063 = vpop.f32.mrf.mxu0
        %v5064 = vadd.f32 0.0, %v5063
        %5065 = vmatmul.bf16.gmra.mxu0 %v4980
        %v5066 = vpop.f32.mrf.mxu0
        %v5067 = vadd.f32 0.0, %v5066
        %v5068 = vpop.f32.mrf.mxu0
        %v5069 = vadd.f32 0.0, %v5068
        %5070 = vdwg.mxu0
        %v5071 = vadd.f32 %v4845, %v4992
        %v5072 = vadd.f32 %v4846, %v4994
        %v5073 = vadd.f32 %v4847, %v4997
        %v5074 = vadd.f32 %v4848, %v4999
        %v5075 = vadd.f32 %v4849, %v5002
        %v5076 = vadd.f32 %v4850, %v5004
        %v5077 = vadd.f32 %v4851, %v5007
        %v5078 = vadd.f32 %v4852, %v5009
        %v5079 = vadd.f32 %v4853, %v5012
        %v5080 = vadd.f32 %v4854, %v5014
        %v5081 = vadd.f32 %v4855, %v5017
        %v5082 = vadd.f32 %v4856, %v5019
        %v5083 = vadd.f32 %v4857, %v5022
        %v5084 = vadd.f32 %v4858, %v5024
        %v5085 = vadd.f32 %v4859, %v5027
        %v5086 = vadd.f32 %v4860, %v5029
        %v5087 = vadd.f32 %v4861, %v5032
        %v5088 = vadd.f32 %v4862, %v5034
        %v5089 = vadd.f32 %v4863, %v5037
        %v5090 = vadd.f32 %v4864, %v5039
        %v5091 = vadd.f32 %v4865, %v5042
        %v5092 = vadd.f32 %v4866, %v5044
        %v5093 = vadd.f32 %v4867, %v5047
        %v5094 = vadd.f32 %v4868, %v5049
        %v5095 = vadd.f32 %v4869, %v5052
        %v5096 = vadd.f32 %v4870, %v5054
        %v5097 = vadd.f32 %v4871, %v5057
        %v5098 = vadd.f32 %v4872, %v5059
        %v5099 = vadd.f32 %v4873, %v5062
        %v5100 = vadd.f32 %v4874, %v5064
        %v5101 = vadd.f32 %v4875, %v5067
        %v5102 = vadd.f32 %v4876, %v5069
        %v5103 = vpack.c.bf16 %v4104, %v4103
        %v5104 = vpack.c.bf16 %v4106, %v4105
        %v5105 = vpack.c.bf16 %v4108, %v4107
        %v5106 = vpack.c.bf16 %v4110, %v4109
        %v5107 = vpack.c.bf16 %v4112, %v4111
        %v5108 = vpack.c.bf16 %v4114, %v4113
        %v5109 = vpack.c.bf16 %v4116, %v4115
        %v5110 = vpack.c.bf16 %v4118, %v4117
        %v5111 = vpack.c.bf16 %v4120, %v4119
        %v5112 = vpack.c.bf16 %v4122, %v4121
        %v5113 = vpack.c.bf16 %v4124, %v4123
        %v5114 = vpack.c.bf16 %v4126, %v4125
        %v5115 = vpack.c.bf16 %v4128, %v4127
        %v5116 = vpack.c.bf16 %v4130, %v4129
        %v5117 = vpack.c.bf16 %v4132, %v4131
        %v5118 = vpack.c.bf16 %v4134, %v4133
        %s5119 = scalar_lea.vmem %s4, 32
        %v5120 = vld [vmem:[%s5119] sm:$0xf]
        %v5121 = vld [vmem:[%s5119 + $0x4] sm:$0xf]
        %v5124 = vunpack.c.l.b16 %v5120
        %v5125 = vunpack.c.l.b16 %v5121
        %v5126 = vpack.c.b16 %v5125, %v5124
        %v5129 = vsel %vm4306, %v5103, 0
        %v5132 = vsel %vm4306, %v5104, 0
        %v5135 = vsel %vm4306, %v5105, 0
        %v5138 = vsel %vm4306, %v5106, 0
        %v5141 = vsel %vm4306, %v5107, 0
        %v5144 = vsel %vm4306, %v5108, 0
        %v5147 = vsel %vm4306, %v5109, 0
        %v5150 = vsel %vm4306, %v5110, 0
        %v5153 = vsel %vm4306, %v5111, 0
        %v5156 = vsel %vm4306, %v5112, 0
        %v5159 = vsel %vm4306, %v5113, 0
        %v5162 = vsel %vm4306, %v5114, 0
        %v5165 = vsel %vm4306, %v5115, 0
        %v5168 = vsel %vm4306, %v5116, 0
        %v5171 = vsel %vm4306, %v5117, 0
        %v5174 = vsel %vm4306, %v5118, 0
        %5176 = vmatpush.bf16.msra.mxu0 0
        %5177 = vmatpush.bf16.msra.mxu0 0
        %5178 = vmatpush.bf16.msra.mxu0 0
        %5179 = vmatpush.bf16.msra.mxu0 0
        %5180 = vmatpush.bf16.msra.mxu0 0
        %5181 = vmatpush.bf16.msra.mxu0 0
        %5182 = vmatpush.bf16.msra.mxu0 0
        %5183 = vmatpush.bf16.msra.mxu0 %v5126
        %5184 = vmatmul.bf16.gmra.mxu0 %v5129
        %v5185 = vpop.f32.mrf.mxu0
        %v5186 = vadd.f32 0.0, %v5185
        %v5187 = vpop.f32.mrf.mxu0
        %v5188 = vadd.f32 0.0, %v5187
        %5189 = vmatmul.bf16.gmra.mxu0 %v5132
        %v5190 = vpop.f32.mrf.mxu0
        %v5191 = vadd.f32 0.0, %v5190
        %v5192 = vpop.f32.mrf.mxu0
        %v5193 = vadd.f32 0.0, %v5192
        %5194 = vmatmul.bf16.gmra.mxu0 %v5135
        %v5195 = vpop.f32.mrf.mxu0
        %v5196 = vadd.f32 0.0, %v5195
        %v5197 = vpop.f32.mrf.mxu0
        %v5198 = vadd.f32 0.0, %v5197
        %5199 = vmatmul.bf16.gmra.mxu0 %v5138
        %v5200 = vpop.f32.mrf.mxu0
        %v5201 = vadd.f32 0.0, %v5200
        %v5202 = vpop.f32.mrf.mxu0
        %v5203 = vadd.f32 0.0, %v5202
        %5204 = vmatmul.bf16.gmra.mxu0 %v5141
        %v5205 = vpop.f32.mrf.mxu0
        %v5206 = vadd.f32 0.0, %v5205
        %v5207 = vpop.f32.mrf.mxu0
        %v5208 = vadd.f32 0.0, %v5207
        %5209 = vmatmul.bf16.gmra.mxu0 %v5144
        %v5210 = vpop.f32.mrf.mxu0
        %v5211 = vadd.f32 0.0, %v5210
        %v5212 = vpop.f32.mrf.mxu0
        %v5213 = vadd.f32 0.0, %v5212
        %5214 = vmatmul.bf16.gmra.mxu0 %v5147
        %v5215 = vpop.f32.mrf.mxu0
        %v5216 = vadd.f32 0.0, %v5215
        %v5217 = vpop.f32.mrf.mxu0
        %v5218 = vadd.f32 0.0, %v5217
        %5219 = vmatmul.bf16.gmra.mxu0 %v5150
        %v5220 = vpop.f32.mrf.mxu0
        %v5221 = vadd.f32 0.0, %v5220
        %v5222 = vpop.f32.mrf.mxu0
        %v5223 = vadd.f32 0.0, %v5222
        %5224 = vmatmul.bf16.gmra.mxu0 %v5153
        %v5225 = vpop.f32.mrf.mxu0
        %v5226 = vadd.f32 0.0, %v5225
        %v5227 = vpop.f32.mrf.mxu0
        %v5228 = vadd.f32 0.0, %v5227
        %5229 = vmatmul.bf16.gmra.mxu0 %v5156
        %v5230 = vpop.f32.mrf.mxu0
        %v5231 = vadd.f32 0.0, %v5230
        %v5232 = vpop.f32.mrf.mxu0
        %v5233 = vadd.f32 0.0, %v5232
        %5234 = vmatmul.bf16.gmra.mxu0 %v5159
        %v5235 = vpop.f32.mrf.mxu0
        %v5236 = vadd.f32 0.0, %v5235
        %v5237 = vpop.f32.mrf.mxu0
        %v5238 = vadd.f32 0.0, %v5237
        %5239 = vmatmul.bf16.gmra.mxu0 %v5162
        %v5240 = vpop.f32.mrf.mxu0
        %v5241 = vadd.f32 0.0, %v5240
        %v5242 = vpop.f32.mrf.mxu0
        %v5243 = vadd.f32 0.0, %v5242
        %5244 = vmatmul.bf16.gmra.mxu0 %v5165
        %v5245 = vpop.f32.mrf.mxu0
        %v5246 = vadd.f32 0.0, %v5245
        %v5247 = vpop.f32.mrf.mxu0
        %v5248 = vadd.f32 0.0, %v5247
        %5249 = vmatmul.bf16.gmra.mxu0 %v5168
        %v5250 = vpop.f32.mrf.mxu0
        %v5251 = vadd.f32 0.0, %v5250
        %v5252 = vpop.f32.mrf.mxu0
        %v5253 = vadd.f32 0.0, %v5252
        %5254 = vmatmul.bf16.gmra.mxu0 %v5171
        %v5255 = vpop.f32.mrf.mxu0
        %v5256 = vadd.f32 0.0, %v5255
        %v5257 = vpop.f32.mrf.mxu0
        %v5258 = vadd.f32 0.0, %v5257
        %5259 = vmatmul.bf16.gmra.mxu0 %v5174
        %v5260 = vpop.f32.mrf.mxu0
        %v5261 = vadd.f32 0.0, %v5260
        %v5262 = vpop.f32.mrf.mxu0
        %v5263 = vadd.f32 0.0, %v5262
        %5264 = vdwg.mxu0
        %v5265 = vadd.f32 %v5071, %v5186
        %v5266 = vadd.f32 %v5072, %v5188
        %v5267 = vadd.f32 %v5073, %v5191
        %v5268 = vadd.f32 %v5074, %v5193
        %v5269 = vadd.f32 %v5075, %v5196
        %v5270 = vadd.f32 %v5076, %v5198
        %v5271 = vadd.f32 %v5077, %v5201
        %v5272 = vadd.f32 %v5078, %v5203
        %v5273 = vadd.f32 %v5079, %v5206
        %v5274 = vadd.f32 %v5080, %v5208
        %v5275 = vadd.f32 %v5081, %v5211
        %v5276 = vadd.f32 %v5082, %v5213
        %v5277 = vadd.f32 %v5083, %v5216
        %v5278 = vadd.f32 %v5084, %v5218
        %v5279 = vadd.f32 %v5085, %v5221
        %v5280 = vadd.f32 %v5086, %v5223
        %v5281 = vadd.f32 %v5087, %v5226
        %v5282 = vadd.f32 %v5088, %v5228
        %v5283 = vadd.f32 %v5089, %v5231
        %v5284 = vadd.f32 %v5090, %v5233
        %v5285 = vadd.f32 %v5091, %v5236
        %v5286 = vadd.f32 %v5092, %v5238
        %v5287 = vadd.f32 %v5093, %v5241
        %v5288 = vadd.f32 %v5094, %v5243
        %v5289 = vadd.f32 %v5095, %v5246
        %v5290 = vadd.f32 %v5096, %v5248
        %v5291 = vadd.f32 %v5097, %v5251
        %v5292 = vadd.f32 %v5098, %v5253
        %v5293 = vadd.f32 %v5099, %v5256
        %v5294 = vadd.f32 %v5100, %v5258
        %v5295 = vadd.f32 %v5101, %v5261
        %v5296 = vadd.f32 %v5102, %v5263
        %v5297 = vmul.f32 %v4649, %v2443
        %v5298 = vmul.f32 %v4648, %v2448
        %v5299 = vmul.f32 %v4647, %v2453
        %v5300 = vmul.f32 %v4646, %v2458
        %v5301 = vmul.f32 %v4645, %v2463
        %v5302 = vmul.f32 %v4644, %v2468
        %v5303 = vmul.f32 %v4643, %v2473
        %v5304 = vmul.f32 %v4642, %v2478
        %v5305 = vmul.f32 %v4641, %v2483
        %v5306 = vmul.f32 %v4640, %v2488
        %v5307 = vmul.f32 %v4639, %v2493
        %v5308 = vmul.f32 %v4638, %v2498
        %v5309 = vmul.f32 %v4637, %v2503
        %v5310 = vmul.f32 %v4636, %v2508
        %v5311 = vmul.f32 %v4635, %v2513
        %v5312 = vmul.f32 %v4634, %v2518
        %v5313 = vmul.f32 %v4633, %v2523
        %v5314 = vmul.f32 %v4632, %v2528
        %v5315 = vmul.f32 %v4631, %v2533
        %v5316 = vmul.f32 %v4630, %v2538
        %v5317 = vmul.f32 %v4629, %v2543
        %v5318 = vmul.f32 %v4628, %v2548
        %v5319 = vmul.f32 %v4627, %v2553
        %v5320 = vmul.f32 %v4626, %v2558
        %v5321 = vmul.f32 %v4625, %v2563
        %v5322 = vmul.f32 %v4624, %v2568
        %v5323 = vmul.f32 %v4623, %v2573
        %v5324 = vmul.f32 %v4622, %v2578
        %v5325 = vmul.f32 %v4621, %v2583
        %v5326 = vmul.f32 %v4620, %v2588
        %v5327 = vmul.f32 %v4619, %v2593
        %v5328 = vmul.f32 %v4650, %v2598
        %v5329 = vpack.c.bf16 %v5298, %v5297
        %v5330 = vpack.c.bf16 %v5300, %v5299
        %v5331 = vpack.c.bf16 %v5302, %v5301
        %v5332 = vpack.c.bf16 %v5304, %v5303
        %v5333 = vpack.c.bf16 %v5306, %v5305
        %v5334 = vpack.c.bf16 %v5308, %v5307
        %v5335 = vpack.c.bf16 %v5310, %v5309
        %v5336 = vpack.c.bf16 %v5312, %v5311
        %v5337 = vpack.c.bf16 %v5314, %v5313
        %v5338 = vpack.c.bf16 %v5316, %v5315
        %v5339 = vpack.c.bf16 %v5318, %v5317
        %v5340 = vpack.c.bf16 %v5320, %v5319
        %v5341 = vpack.c.bf16 %v5322, %v5321
        %v5342 = vpack.c.bf16 %v5324, %v5323
        %v5343 = vpack.c.bf16 %v5326, %v5325
        %v5344 = vpack.c.bf16 %v5328, %v5327
        %s5345 = scalar_lea.vmem %s4, 40
        %v5346 = vld [vmem:[%s5345] sm:$0xf]
        %v5347 = vld [vmem:[%s5345 + $0x4] sm:$0xf]
        %v5350 = vunpack.c.l.b16 %v5346
        %v5351 = vunpack.c.l.b16 %v5347
        %v5352 = vpack.c.b16 %v5351, %v5350
        %v5355 = vsel %vm4306, %v5329, 0
        %v5358 = vsel %vm4306, %v5330, 0
        %v5361 = vsel %vm4306, %v5331, 0
        %v5364 = vsel %vm4306, %v5332, 0
        %v5367 = vsel %vm4306, %v5333, 0
        %v5370 = vsel %vm4306, %v5334, 0
        %v5373 = vsel %vm4306, %v5335, 0
        %v5376 = vsel %vm4306, %v5336, 0
        %v5379 = vsel %vm4306, %v5337, 0
        %v5382 = vsel %vm4306, %v5338, 0
        %v5385 = vsel %vm4306, %v5339, 0
        %v5388 = vsel %vm4306, %v5340, 0
        %v5391 = vsel %vm4306, %v5341, 0
        %v5394 = vsel %vm4306, %v5342, 0
        %v5397 = vsel %vm4306, %v5343, 0
        %v5400 = vsel %vm4306, %v5344, 0
        %5402 = vmatpush.bf16.msra.mxu0 0
        %5403 = vmatpush.bf16.msra.mxu0 0
        %5404 = vmatpush.bf16.msra.mxu0 0
        %5405 = vmatpush.bf16.msra.mxu0 0
        %5406 = vmatpush.bf16.msra.mxu0 0
        %5407 = vmatpush.bf16.msra.mxu0 0
        %5408 = vmatpush.bf16.msra.mxu0 0
        %5409 = vmatpush.bf16.msra.mxu0 %v5352
        %5410 = vmatmul.bf16.gmra.mxu0 %v5355
        %v5411 = vpop.f32.mrf.mxu0
        %v5412 = vadd.f32 0.0, %v5411
        %v5413 = vpop.f32.mrf.mxu0
        %v5414 = vadd.f32 0.0, %v5413
        %5415 = vmatmul.bf16.gmra.mxu0 %v5358
        %v5416 = vpop.f32.mrf.mxu0
        %v5417 = vadd.f32 0.0, %v5416
        %v5418 = vpop.f32.mrf.mxu0
        %v5419 = vadd.f32 0.0, %v5418
        %5420 = vmatmul.bf16.gmra.mxu0 %v5361
        %v5421 = vpop.f32.mrf.mxu0
        %v5422 = vadd.f32 0.0, %v5421
        %v5423 = vpop.f32.mrf.mxu0
        %v5424 = vadd.f32 0.0, %v5423
        %5425 = vmatmul.bf16.gmra.mxu0 %v5364
        %v5426 = vpop.f32.mrf.mxu0
        %v5427 = vadd.f32 0.0, %v5426
        %v5428 = vpop.f32.mrf.mxu0
        %v5429 = vadd.f32 0.0, %v5428
        %5430 = vmatmul.bf16.gmra.mxu0 %v5367
        %v5431 = vpop.f32.mrf.mxu0
        %v5432 = vadd.f32 0.0, %v5431
        %v5433 = vpop.f32.mrf.mxu0
        %v5434 = vadd.f32 0.0, %v5433
        %5435 = vmatmul.bf16.gmra.mxu0 %v5370
        %v5436 = vpop.f32.mrf.mxu0
        %v5437 = vadd.f32 0.0, %v5436
        %v5438 = vpop.f32.mrf.mxu0
        %v5439 = vadd.f32 0.0, %v5438
        %5440 = vmatmul.bf16.gmra.mxu0 %v5373
        %v5441 = vpop.f32.mrf.mxu0
        %v5442 = vadd.f32 0.0, %v5441
        %v5443 = vpop.f32.mrf.mxu0
        %v5444 = vadd.f32 0.0, %v5443
        %5445 = vmatmul.bf16.gmra.mxu0 %v5376
        %v5446 = vpop.f32.mrf.mxu0
        %v5447 = vadd.f32 0.0, %v5446
        %v5448 = vpop.f32.mrf.mxu0
        %v5449 = vadd.f32 0.0, %v5448
        %5450 = vmatmul.bf16.gmra.mxu0 %v5379
        %v5451 = vpop.f32.mrf.mxu0
        %v5452 = vadd.f32 0.0, %v5451
        %v5453 = vpop.f32.mrf.mxu0
        %v5454 = vadd.f32 0.0, %v5453
        %5455 = vmatmul.bf16.gmra.mxu0 %v5382
        %v5456 = vpop.f32.mrf.mxu0
        %v5457 = vadd.f32 0.0, %v5456
        %v5458 = vpop.f32.mrf.mxu0
        %v5459 = vadd.f32 0.0, %v5458
        %5460 = vmatmul.bf16.gmra.mxu0 %v5385
        %v5461 = vpop.f32.mrf.mxu0
        %v5462 = vadd.f32 0.0, %v5461
        %v5463 = vpop.f32.mrf.mxu0
        %v5464 = vadd.f32 0.0, %v5463
        %5465 = vmatmul.bf16.gmra.mxu0 %v5388
        %v5466 = vpop.f32.mrf.mxu0
        %v5467 = vadd.f32 0.0, %v5466
        %v5468 = vpop.f32.mrf.mxu0
        %v5469 = vadd.f32 0.0, %v5468
        %5470 = vmatmul.bf16.gmra.mxu0 %v5391
        %v5471 = vpop.f32.mrf.mxu0
        %v5472 = vadd.f32 0.0, %v5471
        %v5473 = vpop.f32.mrf.mxu0
        %v5474 = vadd.f32 0.0, %v5473
        %5475 = vmatmul.bf16.gmra.mxu0 %v5394
        %v5476 = vpop.f32.mrf.mxu0
        %v5477 = vadd.f32 0.0, %v5476
        %v5478 = vpop.f32.mrf.mxu0
        %v5479 = vadd.f32 0.0, %v5478
        %5480 = vmatmul.bf16.gmra.mxu0 %v5397
        %v5481 = vpop.f32.mrf.mxu0
        %v5482 = vadd.f32 0.0, %v5481
        %v5483 = vpop.f32.mrf.mxu0
        %v5484 = vadd.f32 0.0, %v5483
        %5485 = vmatmul.bf16.gmra.mxu0 %v5400
        %v5486 = vpop.f32.mrf.mxu0
        %v5487 = vadd.f32 0.0, %v5486
        %v5488 = vpop.f32.mrf.mxu0
        %v5489 = vadd.f32 0.0, %v5488
        %5490 = vdwg.mxu0
        %v5491 = vadd.f32 %v5265, %v5412
        %v5492 = vadd.f32 %v5266, %v5414
        %v5493 = vadd.f32 %v5267, %v5417
        %v5494 = vadd.f32 %v5268, %v5419
        %v5495 = vadd.f32 %v5269, %v5422
        %v5496 = vadd.f32 %v5270, %v5424
        %v5497 = vadd.f32 %v5271, %v5427
        %v5498 = vadd.f32 %v5272, %v5429
        %v5499 = vadd.f32 %v5273, %v5432
        %v5500 = vadd.f32 %v5274, %v5434
        %v5501 = vadd.f32 %v5275, %v5437
        %v5502 = vadd.f32 %v5276, %v5439
        %v5503 = vadd.f32 %v5277, %v5442
        %v5504 = vadd.f32 %v5278, %v5444
        %v5505 = vadd.f32 %v5279, %v5447
        %v5506 = vadd.f32 %v5280, %v5449
        %v5507 = vadd.f32 %v5281, %v5452
        %v5508 = vadd.f32 %v5282, %v5454
        %v5509 = vadd.f32 %v5283, %v5457
        %v5510 = vadd.f32 %v5284, %v5459
        %v5511 = vadd.f32 %v5285, %v5462
        %v5512 = vadd.f32 %v5286, %v5464
        %v5513 = vadd.f32 %v5287, %v5467
        %v5514 = vadd.f32 %v5288, %v5469
        %v5515 = vadd.f32 %v5289, %v5472
        %v5516 = vadd.f32 %v5290, %v5474
        %v5517 = vadd.f32 %v5291, %v5477
        %v5518 = vadd.f32 %v5292, %v5479
        %v5519 = vadd.f32 %v5293, %v5482
        %v5520 = vadd.f32 %v5294, %v5484
        %v5521 = vadd.f32 %v5295, %v5487
        %v5522 = vadd.f32 %v5296, %v5489
        %v5523 = vmul.f32 %v4196, %v2858
        %v5524 = vmul.f32 %v4195, %v2863
        %v5525 = vmul.f32 %v4194, %v2868
        %v5526 = vmul.f32 %v4193, %v2873
        %v5527 = vmul.f32 %v4192, %v2878
        %v5528 = vmul.f32 %v4191, %v2883
        %v5529 = vmul.f32 %v4190, %v2888
        %v5530 = vmul.f32 %v4189, %v2893
        %v5531 = vmul.f32 %v4188, %v2898
        %v5532 = vmul.f32 %v4187, %v2903
        %v5533 = vmul.f32 %v4186, %v2908
        %v5534 = vmul.f32 %v4185, %v2913
        %v5535 = vmul.f32 %v4184, %v2918
        %v5536 = vmul.f32 %v4183, %v2923
        %v5537 = vmul.f32 %v4182, %v2928
        %v5538 = vmul.f32 %v4181, %v2933
        %v5539 = vmul.f32 %v4180, %v2938
        %v5540 = vmul.f32 %v4179, %v2943
        %v5541 = vmul.f32 %v4178, %v2948
        %v5542 = vmul.f32 %v4177, %v2953
        %v5543 = vmul.f32 %v4176, %v2958
        %v5544 = vmul.f32 %v4175, %v2963
        %v5545 = vmul.f32 %v4174, %v2968
        %v5546 = vmul.f32 %v4173, %v2973
        %v5547 = vmul.f32 %v4172, %v2978
        %v5548 = vmul.f32 %v4171, %v2983
        %v5549 = vmul.f32 %v4170, %v2988
        %v5550 = vmul.f32 %v4169, %v2993
        %v5551 = vmul.f32 %v4168, %v2998
        %v5552 = vmul.f32 %v4167, %v3003
        %v5553 = vmul.f32 %v4198, %v3008
        %v5554 = vmul.f32 %v4197, %v3013
        %v5555 = vpack.c.bf16 %v5524, %v5523
        %v5556 = vpack.c.bf16 %v5526, %v5525
        %v5557 = vpack.c.bf16 %v5528, %v5527
        %v5558 = vpack.c.bf16 %v5530, %v5529
        %v5559 = vpack.c.bf16 %v5532, %v5531
        %v5560 = vpack.c.bf16 %v5534, %v5533
        %v5561 = vpack.c.bf16 %v5536, %v5535
        %v5562 = vpack.c.bf16 %v5538, %v5537
        %v5563 = vpack.c.bf16 %v5540, %v5539
        %v5564 = vpack.c.bf16 %v5542, %v5541
        %v5565 = vpack.c.bf16 %v5544, %v5543
        %v5566 = vpack.c.bf16 %v5546, %v5545
        %v5567 = vpack.c.bf16 %v5548, %v5547
        %v5568 = vpack.c.bf16 %v5550, %v5549
        %v5569 = vpack.c.bf16 %v5552, %v5551
        %v5570 = vpack.c.bf16 %v5554, %v5553
        %s5571 = scalar_lea.vmem %s4, 48
        %v5572 = vld [vmem:[%s5571] sm:$0xf]
        %v5573 = vld [vmem:[%s5571 + $0x4] sm:$0xf]
        %v5576 = vunpack.c.l.b16 %v5572
        %v5577 = vunpack.c.l.b16 %v5573
        %v5578 = vpack.c.b16 %v5577, %v5576
        %v5581 = vsel %vm4306, %v5555, 0
        %v5584 = vsel %vm4306, %v5556, 0
        %v5587 = vsel %vm4306, %v5557, 0
        %v5590 = vsel %vm4306, %v5558, 0
        %v5593 = vsel %vm4306, %v5559, 0
        %v5596 = vsel %vm4306, %v5560, 0
        %v5599 = vsel %vm4306, %v5561, 0
        %v5602 = vsel %vm4306, %v5562, 0
        %v5605 = vsel %vm4306, %v5563, 0
        %v5608 = vsel %vm4306, %v5564, 0
        %v5611 = vsel %vm4306, %v5565, 0
        %v5614 = vsel %vm4306, %v5566, 0
        %v5617 = vsel %vm4306, %v5567, 0
        %v5620 = vsel %vm4306, %v5568, 0
        %v5623 = vsel %vm4306, %v5569, 0
        %v5626 = vsel %vm4306, %v5570, 0
        %5628 = vmatpush.bf16.msra.mxu0 0
        %5629 = vmatpush.bf16.msra.mxu0 0
        %5630 = vmatpush.bf16.msra.mxu0 0
        %5631 = vmatpush.bf16.msra.mxu0 0
        %5632 = vmatpush.bf16.msra.mxu0 0
        %5633 = vmatpush.bf16.msra.mxu0 0
        %5634 = vmatpush.bf16.msra.mxu0 0
        %5635 = vmatpush.bf16.msra.mxu0 %v5578
        %5636 = vmatmul.bf16.gmra.mxu0 %v5581
        %v5637 = vpop.f32.mrf.mxu0
        %v5638 = vadd.f32 0.0, %v5637
        %v5639 = vpop.f32.mrf.mxu0
        %v5640 = vadd.f32 0.0, %v5639
        %5641 = vmatmul.bf16.gmra.mxu0 %v5584
        %v5642 = vpop.f32.mrf.mxu0
        %v5643 = vadd.f32 0.0, %v5642
        %v5644 = vpop.f32.mrf.mxu0
        %v5645 = vadd.f32 0.0, %v5644
        %5646 = vmatmul.bf16.gmra.mxu0 %v5587
        %v5647 = vpop.f32.mrf.mxu0
        %v5648 = vadd.f32 0.0, %v5647
        %v5649 = vpop.f32.mrf.mxu0
        %v5650 = vadd.f32 0.0, %v5649
        %5651 = vmatmul.bf16.gmra.mxu0 %v5590
        %v5652 = vpop.f32.mrf.mxu0
        %v5653 = vadd.f32 0.0, %v5652
        %v5654 = vpop.f32.mrf.mxu0
        %v5655 = vadd.f32 0.0, %v5654
        %5656 = vmatmul.bf16.gmra.mxu0 %v5593
        %v5657 = vpop.f32.mrf.mxu0
        %v5658 = vadd.f32 0.0, %v5657
        %v5659 = vpop.f32.mrf.mxu0
        %v5660 = vadd.f32 0.0, %v5659
        %5661 = vmatmul.bf16.gmra.mxu0 %v5596
        %v5662 = vpop.f32.mrf.mxu0
        %v5663 = vadd.f32 0.0, %v5662
        %v5664 = vpop.f32.mrf.mxu0
        %v5665 = vadd.f32 0.0, %v5664
        %5666 = vmatmul.bf16.gmra.mxu0 %v5599
        %v5667 = vpop.f32.mrf.mxu0
        %v5668 = vadd.f32 0.0, %v5667
        %v5669 = vpop.f32.mrf.mxu0
        %v5670 = vadd.f32 0.0, %v5669
        %5671 = vmatmul.bf16.gmra.mxu0 %v5602
        %v5672 = vpop.f32.mrf.mxu0
        %v5673 = vadd.f32 0.0, %v5672
        %v5674 = vpop.f32.mrf.mxu0
        %v5675 = vadd.f32 0.0, %v5674
        %5676 = vmatmul.bf16.gmra.mxu0 %v5605
        %v5677 = vpop.f32.mrf.mxu0
        %v5678 = vadd.f32 0.0, %v5677
        %v5679 = vpop.f32.mrf.mxu0
        %v5680 = vadd.f32 0.0, %v5679
        %5681 = vmatmul.bf16.gmra.mxu0 %v5608
        %v5682 = vpop.f32.mrf.mxu0
        %v5683 = vadd.f32 0.0, %v5682
        %v5684 = vpop.f32.mrf.mxu0
        %v5685 = vadd.f32 0.0, %v5684
        %5686 = vmatmul.bf16.gmra.mxu0 %v5611
        %v5687 = vpop.f32.mrf.mxu0
        %v5688 = vadd.f32 0.0, %v5687
        %v5689 = vpop.f32.mrf.mxu0
        %v5690 = vadd.f32 0.0, %v5689
        %5691 = vmatmul.bf16.gmra.mxu0 %v5614
        %v5692 = vpop.f32.mrf.mxu0
        %v5693 = vadd.f32 0.0, %v5692
        %v5694 = vpop.f32.mrf.mxu0
        %v5695 = vadd.f32 0.0, %v5694
        %5696 = vmatmul.bf16.gmra.mxu0 %v5617
        %v5697 = vpop.f32.mrf.mxu0
        %v5698 = vadd.f32 0.0, %v5697
        %v5699 = vpop.f32.mrf.mxu0
        %v5700 = vadd.f32 0.0, %v5699
        %5701 = vmatmul.bf16.gmra.mxu0 %v5620
        %v5702 = vpop.f32.mrf.mxu0
        %v5703 = vadd.f32 0.0, %v5702
        %v5704 = vpop.f32.mrf.mxu0
        %v5705 = vadd.f32 0.0, %v5704
        %5706 = vmatmul.bf16.gmra.mxu0 %v5623
        %v5707 = vpop.f32.mrf.mxu0
        %v5708 = vadd.f32 0.0, %v5707
        %v5709 = vpop.f32.mrf.mxu0
        %v5710 = vadd.f32 0.0, %v5709
        %5711 = vmatmul.bf16.gmra.mxu0 %v5626
        %v5712 = vpop.f32.mrf.mxu0
        %v5713 = vadd.f32 0.0, %v5712
        %v5714 = vpop.f32.mrf.mxu0
        %v5715 = vadd.f32 0.0, %v5714
        %5716 = vdwg.mxu0
        %v5717 = vadd.f32 %v5491, %v5638
        %v5718 = vadd.f32 %v5492, %v5640
        %v5719 = vadd.f32 %v5493, %v5643
        %v5720 = vadd.f32 %v5494, %v5645
        %v5721 = vadd.f32 %v5495, %v5648
        %v5722 = vadd.f32 %v5496, %v5650
        %v5723 = vadd.f32 %v5497, %v5653
        %v5724 = vadd.f32 %v5498, %v5655
        %v5725 = vadd.f32 %v5499, %v5658
        %v5726 = vadd.f32 %v5500, %v5660
        %v5727 = vadd.f32 %v5501, %v5663
        %v5728 = vadd.f32 %v5502, %v5665
        %v5729 = vadd.f32 %v5503, %v5668
        %v5730 = vadd.f32 %v5504, %v5670
        %v5731 = vadd.f32 %v5505, %v5673
        %v5732 = vadd.f32 %v5506, %v5675
        %v5733 = vadd.f32 %v5507, %v5678
        %v5734 = vadd.f32 %v5508, %v5680
        %v5735 = vadd.f32 %v5509, %v5683
        %v5736 = vadd.f32 %v5510, %v5685
        %v5737 = vadd.f32 %v5511, %v5688
        %v5738 = vadd.f32 %v5512, %v5690
        %v5739 = vadd.f32 %v5513, %v5693
        %v5740 = vadd.f32 %v5514, %v5695
        %v5741 = vadd.f32 %v5515, %v5698
        %v5742 = vadd.f32 %v5516, %v5700
        %v5743 = vadd.f32 %v5517, %v5703
        %v5744 = vadd.f32 %v5518, %v5705
        %v5745 = vadd.f32 %v5519, %v5708
        %v5746 = vadd.f32 %v5520, %v5710
        %v5747 = vadd.f32 %v5521, %v5713
        %v5748 = vadd.f32 %v5522, %v5715
        %v5749 = vmul.f32 %v4105, %v3273
        %v5750 = vmul.f32 %v4106, %v3278
        %v5751 = vmul.f32 %v4107, %v3283
        %v5752 = vmul.f32 %v4108, %v3288
        %v5753 = vmul.f32 %v4109, %v3293
        %v5754 = vmul.f32 %v4110, %v3298
        %v5755 = vmul.f32 %v4111, %v3303
        %v5756 = vmul.f32 %v4112, %v3308
        %v5757 = vmul.f32 %v4113, %v3313
        %v5758 = vmul.f32 %v4114, %v3318
        %v5759 = vmul.f32 %v4115, %v3323
        %v5760 = vmul.f32 %v4116, %v3328
        %v5761 = vmul.f32 %v4117, %v3333
        %v5762 = vmul.f32 %v4118, %v3338
        %v5763 = vmul.f32 %v4119, %v3343
        %v5764 = vmul.f32 %v4120, %v3348
        %v5765 = vmul.f32 %v4121, %v3353
        %v5766 = vmul.f32 %v4122, %v3358
        %v5767 = vmul.f32 %v4123, %v3363
        %v5768 = vmul.f32 %v4124, %v3368
        %v5769 = vmul.f32 %v4125, %v3373
        %v5770 = vmul.f32 %v4126, %v3378
        %v5771 = vmul.f32 %v4127, %v3383
        %v5772 = vmul.f32 %v4128, %v3388
        %v5773 = vmul.f32 %v4129, %v3393
        %v5774 = vmul.f32 %v4130, %v3398
        %v5775 = vmul.f32 %v4131, %v3403
        %v5776 = vmul.f32 %v4132, %v3408
        %v5777 = vmul.f32 %v4133, %v3413
        %v5778 = vmul.f32 %v4134, %v3418
        %v5779 = vmul.f32 %v4103, %v3423
        %v5780 = vmul.f32 %v4104, %v3428
        %v5781 = vpack.c.bf16 %v5750, %v5749
        %v5782 = vpack.c.bf16 %v5752, %v5751
        %v5783 = vpack.c.bf16 %v5754, %v5753
        %v5784 = vpack.c.bf16 %v5756, %v5755
        %v5785 = vpack.c.bf16 %v5758, %v5757
        %v5786 = vpack.c.bf16 %v5760, %v5759
        %v5787 = vpack.c.bf16 %v5762, %v5761
        %v5788 = vpack.c.bf16 %v5764, %v5763
        %v5789 = vpack.c.bf16 %v5766, %v5765
        %v5790 = vpack.c.bf16 %v5768, %v5767
        %v5791 = vpack.c.bf16 %v5770, %v5769
        %v5792 = vpack.c.bf16 %v5772, %v5771
        %v5793 = vpack.c.bf16 %v5774, %v5773
        %v5794 = vpack.c.bf16 %v5776, %v5775
        %v5795 = vpack.c.bf16 %v5778, %v5777
        %v5796 = vpack.c.bf16 %v5780, %v5779
        %s5797 = scalar_lea.vmem %s4, 56
        %v5798 = vld [vmem:[%s5797] sm:$0xf]
        %v5799 = vld [vmem:[%s5797 + $0x4] sm:$0xf]
        %v5802 = vunpack.c.l.b16 %v5798
        %v5803 = vunpack.c.l.b16 %v5799
        %v5804 = vpack.c.b16 %v5803, %v5802
        %v5807 = vsel %vm4306, %v5781, 0
        %v5810 = vsel %vm4306, %v5782, 0
        %v5813 = vsel %vm4306, %v5783, 0
        %v5816 = vsel %vm4306, %v5784, 0
        %v5819 = vsel %vm4306, %v5785, 0
        %v5822 = vsel %vm4306, %v5786, 0
        %v5825 = vsel %vm4306, %v5787, 0
        %v5828 = vsel %vm4306, %v5788, 0
        %v5831 = vsel %vm4306, %v5789, 0
        %v5834 = vsel %vm4306, %v5790, 0
        %v5837 = vsel %vm4306, %v5791, 0
        %v5840 = vsel %vm4306, %v5792, 0
        %v5843 = vsel %vm4306, %v5793, 0
        %v5846 = vsel %vm4306, %v5794, 0
        %v5849 = vsel %vm4306, %v5795, 0
        %v5852 = vsel %vm4306, %v5796, 0
        %5854 = vmatpush.bf16.msra.mxu0 0
        %5855 = vmatpush.bf16.msra.mxu0 0
        %5856 = vmatpush.bf16.msra.mxu0 0
        %5857 = vmatpush.bf16.msra.mxu0 0
        %5858 = vmatpush.bf16.msra.mxu0 0
        %5859 = vmatpush.bf16.msra.mxu0 0
        %5860 = vmatpush.bf16.msra.mxu0 0
        %5861 = vmatpush.bf16.msra.mxu0 %v5804
        %5862 = vmatmul.bf16.gmra.mxu0 %v5807
        %v5863 = vpop.f32.mrf.mxu0
        %v5864 = vadd.f32 0.0, %v5863
        %v5865 = vpop.f32.mrf.mxu0
        %v5866 = vadd.f32 0.0, %v5865
        %5867 = vmatmul.bf16.gmra.mxu0 %v5810
        %v5868 = vpop.f32.mrf.mxu0
        %v5869 = vadd.f32 0.0, %v5868
        %v5870 = vpop.f32.mrf.mxu0
        %v5871 = vadd.f32 0.0, %v5870
        %5872 = vmatmul.bf16.gmra.mxu0 %v5813
        %v5873 = vpop.f32.mrf.mxu0
        %v5874 = vadd.f32 0.0, %v5873
        %v5875 = vpop.f32.mrf.mxu0
        %v5876 = vadd.f32 0.0, %v5875
        %5877 = vmatmul.bf16.gmra.mxu0 %v5816
        %v5878 = vpop.f32.mrf.mxu0
        %v5879 = vadd.f32 0.0, %v5878
        %v5880 = vpop.f32.mrf.mxu0
        %v5881 = vadd.f32 0.0, %v5880
        %5882 = vmatmul.bf16.gmra.mxu0 %v5819
        %v5883 = vpop.f32.mrf.mxu0
        %v5884 = vadd.f32 0.0, %v5883
        %v5885 = vpop.f32.mrf.mxu0
        %v5886 = vadd.f32 0.0, %v5885
        %5887 = vmatmul.bf16.gmra.mxu0 %v5822
        %v5888 = vpop.f32.mrf.mxu0
        %v5889 = vadd.f32 0.0, %v5888
        %v5890 = vpop.f32.mrf.mxu0
        %v5891 = vadd.f32 0.0, %v5890
        %5892 = vmatmul.bf16.gmra.mxu0 %v5825
        %v5893 = vpop.f32.mrf.mxu0
        %v5894 = vadd.f32 0.0, %v5893
        %v5895 = vpop.f32.mrf.mxu0
        %v5896 = vadd.f32 0.0, %v5895
        %5897 = vmatmul.bf16.gmra.mxu0 %v5828
        %v5898 = vpop.f32.mrf.mxu0
        %v5899 = vadd.f32 0.0, %v5898
        %v5900 = vpop.f32.mrf.mxu0
        %v5901 = vadd.f32 0.0, %v5900
        %5902 = vmatmul.bf16.gmra.mxu0 %v5831
        %v5903 = vpop.f32.mrf.mxu0
        %v5904 = vadd.f32 0.0, %v5903
        %v5905 = vpop.f32.mrf.mxu0
        %v5906 = vadd.f32 0.0, %v5905
        %5907 = vmatmul.bf16.gmra.mxu0 %v5834
        %v5908 = vpop.f32.mrf.mxu0
        %v5909 = vadd.f32 0.0, %v5908
        %v5910 = vpop.f32.mrf.mxu0
        %v5911 = vadd.f32 0.0, %v5910
        %5912 = vmatmul.bf16.gmra.mxu0 %v5837
        %v5913 = vpop.f32.mrf.mxu0
        %v5914 = vadd.f32 0.0, %v5913
        %v5915 = vpop.f32.mrf.mxu0
        %v5916 = vadd.f32 0.0, %v5915
        %5917 = vmatmul.bf16.gmra.mxu0 %v5840
        %v5918 = vpop.f32.mrf.mxu0
        %v5919 = vadd.f32 0.0, %v5918
        %v5920 = vpop.f32.mrf.mxu0
        %v5921 = vadd.f32 0.0, %v5920
        %5922 = vmatmul.bf16.gmra.mxu0 %v5843
        %v5923 = vpop.f32.mrf.mxu0
        %v5924 = vadd.f32 0.0, %v5923
        %v5925 = vpop.f32.mrf.mxu0
        %v5926 = vadd.f32 0.0, %v5925
        %5927 = vmatmul.bf16.gmra.mxu0 %v5846
        %v5928 = vpop.f32.mrf.mxu0
        %v5929 = vadd.f32 0.0, %v5928
        %v5930 = vpop.f32.mrf.mxu0
        %v5931 = vadd.f32 0.0, %v5930
        %5932 = vmatmul.bf16.gmra.mxu0 %v5849
        %v5933 = vpop.f32.mrf.mxu0
        %v5934 = vadd.f32 0.0, %v5933
        %v5935 = vpop.f32.mrf.mxu0
        %v5936 = vadd.f32 0.0, %v5935
        %5937 = vmatmul.bf16.gmra.mxu0 %v5852
        %v5938 = vpop.f32.mrf.mxu0
        %v5939 = vadd.f32 0.0, %v5938
        %v5940 = vpop.f32.mrf.mxu0
        %v5941 = vadd.f32 0.0, %v5940
        %5942 = vdwg.mxu0
        %v5943 = vadd.f32 %v5717, %v5864
        %v5944 = vadd.f32 %v5718, %v5866
        %v5945 = vadd.f32 %v5719, %v5869
        %v5946 = vadd.f32 %v5720, %v5871
        %v5947 = vadd.f32 %v5721, %v5874
        %v5948 = vadd.f32 %v5722, %v5876
        %v5949 = vadd.f32 %v5723, %v5879
        %v5950 = vadd.f32 %v5724, %v5881
        %v5951 = vadd.f32 %v5725, %v5884
        %v5952 = vadd.f32 %v5726, %v5886
        %v5953 = vadd.f32 %v5727, %v5889
        %v5954 = vadd.f32 %v5728, %v5891
        %v5955 = vadd.f32 %v5729, %v5894
        %v5956 = vadd.f32 %v5730, %v5896
        %v5957 = vadd.f32 %v5731, %v5899
        %v5958 = vadd.f32 %v5732, %v5901
        %v5959 = vadd.f32 %v5733, %v5904
        %v5960 = vadd.f32 %v5734, %v5906
        %v5961 = vadd.f32 %v5735, %v5909
        %v5962 = vadd.f32 %v5736, %v5911
        %v5963 = vadd.f32 %v5737, %v5914
        %v5964 = vadd.f32 %v5738, %v5916
        %v5965 = vadd.f32 %v5739, %v5919
        %v5966 = vadd.f32 %v5740, %v5921
        %v5967 = vadd.f32 %v5741, %v5924
        %v5968 = vadd.f32 %v5742, %v5926
        %v5969 = vadd.f32 %v5743, %v5929
        %v5970 = vadd.f32 %v5744, %v5931
        %v5971 = vadd.f32 %v5745, %v5934
        %v5972 = vadd.f32 %v5746, %v5936
        %v5973 = vadd.f32 %v5747, %v5939
        %v5974 = vadd.f32 %v5748, %v5941
        %v5975 = vmul.f32 %v4647, %v3688
        %v5976 = vmul.f32 %v4646, %v3693
        %v5977 = vmul.f32 %v4645, %v3698
        %v5978 = vmul.f32 %v4644, %v3703
        %v5979 = vmul.f32 %v4643, %v3708
        %v5980 = vmul.f32 %v4642, %v3713
        %v5981 = vmul.f32 %v4641, %v3718
        %v5982 = vmul.f32 %v4640, %v3723
        %v5983 = vmul.f32 %v4639, %v3728
        %v5984 = vmul.f32 %v4638, %v3733
        %v5985 = vmul.f32 %v4637, %v3738
        %v5986 = vmul.f32 %v4636, %v3743
        %v5987 = vmul.f32 %v4635, %v3748
        %v5988 = vmul.f32 %v4634, %v3753
        %v5989 = vmul.f32 %v4633, %v3758
        %v5990 = vmul.f32 %v4632, %v3763
        %v5991 = vmul.f32 %v4631, %v3768
        %v5992 = vmul.f32 %v4630, %v3773
        %v5993 = vmul.f32 %v4629, %v3778
        %v5994 = vmul.f32 %v4628, %v3783
        %v5995 = vmul.f32 %v4627, %v3788
        %v5996 = vmul.f32 %v4626, %v3793
        %v5997 = vmul.f32 %v4625, %v3798
        %v5998 = vmul.f32 %v4624, %v3803
        %v5999 = vmul.f32 %v4623, %v3808
        %v6000 = vmul.f32 %v4622, %v3813
        %v6001 = vmul.f32 %v4621, %v3818
        %v6002 = vmul.f32 %v4620, %v3823
        %v6003 = vmul.f32 %v4619, %v3828
        %v6004 = vmul.f32 %v4650, %v3833
        %v6005 = vmul.f32 %v4649, %v3838
        %v6006 = vmul.f32 %v4648, %v3843
        %v6007 = vpack.c.bf16 %v5976, %v5975
        %v6008 = vpack.c.bf16 %v5978, %v5977
        %v6009 = vpack.c.bf16 %v5980, %v5979
        %v6010 = vpack.c.bf16 %v5982, %v5981
        %v6011 = vpack.c.bf16 %v5984, %v5983
        %v6012 = vpack.c.bf16 %v5986, %v5985
        %v6013 = vpack.c.bf16 %v5988, %v5987
        %v6014 = vpack.c.bf16 %v5990, %v5989
        %v6015 = vpack.c.bf16 %v5992, %v5991
        %v6016 = vpack.c.bf16 %v5994, %v5993
        %v6017 = vpack.c.bf16 %v5996, %v5995
        %v6018 = vpack.c.bf16 %v5998, %v5997
        %v6019 = vpack.c.bf16 %v6000, %v5999
        %v6020 = vpack.c.bf16 %v6002, %v6001
        %v6021 = vpack.c.bf16 %v6004, %v6003
        %v6022 = vpack.c.bf16 %v6006, %v6005
        %s6023 = scalar_lea.vmem %s4, 64
        %v6024 = vld [vmem:[%s6023] sm:$0xf]
        %v6025 = vld [vmem:[%s6023 + $0x4] sm:$0xf]
        %v6028 = vunpack.c.l.b16 %v6024
        %v6029 = vunpack.c.l.b16 %v6025
        %v6030 = vpack.c.b16 %v6029, %v6028
        %v6033 = vsel %vm4306, %v6007, 0
        %v6036 = vsel %vm4306, %v6008, 0
        %v6039 = vsel %vm4306, %v6009, 0
        %v6042 = vsel %vm4306, %v6010, 0
        %v6045 = vsel %vm4306, %v6011, 0
        %v6048 = vsel %vm4306, %v6012, 0
        %v6051 = vsel %vm4306, %v6013, 0
        %v6054 = vsel %vm4306, %v6014, 0
        %v6057 = vsel %vm4306, %v6015, 0
        %v6060 = vsel %vm4306, %v6016, 0
        %v6063 = vsel %vm4306, %v6017, 0
        %v6066 = vsel %vm4306, %v6018, 0
        %v6069 = vsel %vm4306, %v6019, 0
        %v6072 = vsel %vm4306, %v6020, 0
        %v6075 = vsel %vm4306, %v6021, 0
        %v6078 = vsel %vm4306, %v6022, 0
        %6080 = vmatpush.bf16.msra.mxu0 0
        %6081 = vmatpush.bf16.msra.mxu0 0
        %6082 = vmatpush.bf16.msra.mxu0 0
        %6083 = vmatpush.bf16.msra.mxu0 0
        %6084 = vmatpush.bf16.msra.mxu0 0
        %6085 = vmatpush.bf16.msra.mxu0 0
        %6086 = vmatpush.bf16.msra.mxu0 0
        %6087 = vmatpush.bf16.msra.mxu0 %v6030
        %6088 = vmatmul.bf16.gmra.mxu0 %v6033
        %v6089 = vpop.f32.mrf.mxu0
        %v6090 = vadd.f32 0.0, %v6089
        %v6091 = vpop.f32.mrf.mxu0
        %v6092 = vadd.f32 0.0, %v6091
        %6093 = vmatmul.bf16.gmra.mxu0 %v6036
        %v6094 = vpop.f32.mrf.mxu0
        %v6095 = vadd.f32 0.0, %v6094
        %v6096 = vpop.f32.mrf.mxu0
        %v6097 = vadd.f32 0.0, %v6096
        %6098 = vmatmul.bf16.gmra.mxu0 %v6039
        %v6099 = vpop.f32.mrf.mxu0
        %v6100 = vadd.f32 0.0, %v6099
        %v6101 = vpop.f32.mrf.mxu0
        %v6102 = vadd.f32 0.0, %v6101
        %6103 = vmatmul.bf16.gmra.mxu0 %v6042
        %v6104 = vpop.f32.mrf.mxu0
        %v6105 = vadd.f32 0.0, %v6104
        %v6106 = vpop.f32.mrf.mxu0
        %v6107 = vadd.f32 0.0, %v6106
        %6108 = vmatmul.bf16.gmra.mxu0 %v6045
        %v6109 = vpop.f32.mrf.mxu0
        %v6110 = vadd.f32 0.0, %v6109
        %v6111 = vpop.f32.mrf.mxu0
        %v6112 = vadd.f32 0.0, %v6111
        %6113 = vmatmul.bf16.gmra.mxu0 %v6048
        %v6114 = vpop.f32.mrf.mxu0
        %v6115 = vadd.f32 0.0, %v6114
        %v6116 = vpop.f32.mrf.mxu0
        %v6117 = vadd.f32 0.0, %v6116
        %6118 = vmatmul.bf16.gmra.mxu0 %v6051
        %v6119 = vpop.f32.mrf.mxu0
        %v6120 = vadd.f32 0.0, %v6119
        %v6121 = vpop.f32.mrf.mxu0
        %v6122 = vadd.f32 0.0, %v6121
        %6123 = vmatmul.bf16.gmra.mxu0 %v6054
        %v6124 = vpop.f32.mrf.mxu0
        %v6125 = vadd.f32 0.0, %v6124
        %v6126 = vpop.f32.mrf.mxu0
        %v6127 = vadd.f32 0.0, %v6126
        %6128 = vmatmul.bf16.gmra.mxu0 %v6057
        %v6129 = vpop.f32.mrf.mxu0
        %v6130 = vadd.f32 0.0, %v6129
        %v6131 = vpop.f32.mrf.mxu0
        %v6132 = vadd.f32 0.0, %v6131
        %6133 = vmatmul.bf16.gmra.mxu0 %v6060
        %v6134 = vpop.f32.mrf.mxu0
        %v6135 = vadd.f32 0.0, %v6134
        %v6136 = vpop.f32.mrf.mxu0
        %v6137 = vadd.f32 0.0, %v6136
        %6138 = vmatmul.bf16.gmra.mxu0 %v6063
        %v6139 = vpop.f32.mrf.mxu0
        %v6140 = vadd.f32 0.0, %v6139
        %v6141 = vpop.f32.mrf.mxu0
        %v6142 = vadd.f32 0.0, %v6141
        %6143 = vmatmul.bf16.gmra.mxu0 %v6066
        %v6144 = vpop.f32.mrf.mxu0
        %v6145 = vadd.f32 0.0, %v6144
        %v6146 = vpop.f32.mrf.mxu0
        %v6147 = vadd.f32 0.0, %v6146
        %6148 = vmatmul.bf16.gmra.mxu0 %v6069
        %v6149 = vpop.f32.mrf.mxu0
        %v6150 = vadd.f32 0.0, %v6149
        %v6151 = vpop.f32.mrf.mxu0
        %v6152 = vadd.f32 0.0, %v6151
        %6153 = vmatmul.bf16.gmra.mxu0 %v6072
        %v6154 = vpop.f32.mrf.mxu0
        %v6155 = vadd.f32 0.0, %v6154
        %v6156 = vpop.f32.mrf.mxu0
        %v6157 = vadd.f32 0.0, %v6156
        %6158 = vmatmul.bf16.gmra.mxu0 %v6075
        %v6159 = vpop.f32.mrf.mxu0
        %v6160 = vadd.f32 0.0, %v6159
        %v6161 = vpop.f32.mrf.mxu0
        %v6162 = vadd.f32 0.0, %v6161
        %6163 = vmatmul.bf16.gmra.mxu0 %v6078
        %v6164 = vpop.f32.mrf.mxu0
        %v6165 = vadd.f32 0.0, %v6164
        %v6166 = vpop.f32.mrf.mxu0
        %v6167 = vadd.f32 0.0, %v6166
        %6168 = vdwg.mxu0
        %v6169 = vadd.f32 %v5943, %v6090
        %v6170 = vadd.f32 %v5944, %v6092
        %v6171 = vadd.f32 %v5945, %v6095
        %v6172 = vadd.f32 %v5946, %v6097
        %v6173 = vadd.f32 %v5947, %v6100
        %v6174 = vadd.f32 %v5948, %v6102
        %v6175 = vadd.f32 %v5949, %v6105
        %v6176 = vadd.f32 %v5950, %v6107
        %v6177 = vadd.f32 %v5951, %v6110
        %v6178 = vadd.f32 %v5952, %v6112
        %v6179 = vadd.f32 %v5953, %v6115
        %v6180 = vadd.f32 %v5954, %v6117
        %v6181 = vadd.f32 %v5955, %v6120
        %v6182 = vadd.f32 %v5956, %v6122
        %v6183 = vadd.f32 %v5957, %v6125
        %v6184 = vadd.f32 %v5958, %v6127
        %v6185 = vadd.f32 %v5959, %v6130
        %v6186 = vadd.f32 %v5960, %v6132
        %v6187 = vadd.f32 %v5961, %v6135
        %v6188 = vadd.f32 %v5962, %v6137
        %v6189 = vadd.f32 %v5963, %v6140
        %v6190 = vadd.f32 %v5964, %v6142
        %v6191 = vadd.f32 %v5965, %v6145
        %v6192 = vadd.f32 %v5966, %v6147
        %v6193 = vadd.f32 %v5967, %v6150
        %v6194 = vadd.f32 %v5968, %v6152
        %v6195 = vadd.f32 %v5969, %v6155
        %v6196 = vadd.f32 %v5970, %v6157
        %v6197 = vadd.f32 %v5971, %v6160
        %v6198 = vadd.f32 %v5972, %v6162
        %v6199 = vadd.f32 %v5973, %v6165
        %v6200 = vadd.f32 %v5974, %v6167
        %v6201 = vld [vmem:[%s5] sm:$0x1]
        %v6203 = vperm.slane %v6201, 0
        %v6205 = vadd.f32 %v6169, %v6203
        %v6206 = vadd.f32 %v6170, %v6203
        %v6207 = vadd.f32 %v6171, %v6203
        %v6208 = vadd.f32 %v6172, %v6203
        %v6209 = vadd.f32 %v6173, %v6203
        %v6210 = vadd.f32 %v6174, %v6203
        %v6211 = vadd.f32 %v6175, %v6203
        %v6212 = vadd.f32 %v6176, %v6203
        %v6213 = vadd.f32 %v6177, %v6203
        %v6214 = vadd.f32 %v6178, %v6203
        %v6215 = vadd.f32 %v6179, %v6203
        %v6216 = vadd.f32 %v6180, %v6203
        %v6217 = vadd.f32 %v6181, %v6203
        %v6218 = vadd.f32 %v6182, %v6203
        %v6219 = vadd.f32 %v6183, %v6203
        %v6220 = vadd.f32 %v6184, %v6203
        %v6221 = vadd.f32 %v6185, %v6203
        %v6222 = vadd.f32 %v6186, %v6203
        %v6223 = vadd.f32 %v6187, %v6203
        %v6224 = vadd.f32 %v6188, %v6203
        %v6225 = vadd.f32 %v6189, %v6203
        %v6226 = vadd.f32 %v6190, %v6203
        %v6227 = vadd.f32 %v6191, %v6203
        %v6228 = vadd.f32 %v6192, %v6203
        %v6229 = vadd.f32 %v6193, %v6203
        %v6230 = vadd.f32 %v6194, %v6203
        %v6231 = vadd.f32 %v6195, %v6203
        %v6232 = vadd.f32 %v6196, %v6203
        %v6233 = vadd.f32 %v6197, %v6203
        %v6234 = vadd.f32 %v6198, %v6203
        %v6235 = vadd.f32 %v6199, %v6203
        %v6236 = vadd.f32 %v6200, %v6203
        %v6237 = vmax.f32 %v6205, 0.0
        %v6238 = vmax.f32 %v6206, 0.0
        %v6239 = vmax.f32 %v6207, 0.0
        %v6240 = vmax.f32 %v6208, 0.0
        %v6241 = vmax.f32 %v6209, 0.0
        %v6242 = vmax.f32 %v6210, 0.0
        %v6243 = vmax.f32 %v6211, 0.0
        %v6244 = vmax.f32 %v6212, 0.0
        %v6245 = vmax.f32 %v6213, 0.0
        %v6246 = vmax.f32 %v6214, 0.0
        %v6247 = vmax.f32 %v6215, 0.0
        %v6248 = vmax.f32 %v6216, 0.0
        %v6249 = vmax.f32 %v6217, 0.0
        %v6250 = vmax.f32 %v6218, 0.0
        %v6251 = vmax.f32 %v6219, 0.0
        %v6252 = vmax.f32 %v6220, 0.0
        %v6253 = vmax.f32 %v6221, 0.0
        %v6254 = vmax.f32 %v6222, 0.0
        %v6255 = vmax.f32 %v6223, 0.0
        %v6256 = vmax.f32 %v6224, 0.0
        %v6257 = vmax.f32 %v6225, 0.0
        %v6258 = vmax.f32 %v6226, 0.0
        %v6259 = vmax.f32 %v6227, 0.0
        %v6260 = vmax.f32 %v6228, 0.0
        %v6261 = vmax.f32 %v6229, 0.0
        %v6262 = vmax.f32 %v6230, 0.0
        %v6263 = vmax.f32 %v6231, 0.0
        %v6264 = vmax.f32 %v6232, 0.0
        %v6265 = vmax.f32 %v6233, 0.0
        %v6266 = vmax.f32 %v6234, 0.0
        %v6267 = vmax.f32 %v6235, 0.0
        %v6268 = vmax.f32 %v6236, 0.0
        %v6269 = vrot.slane %v6237, 7
        %v6270 = vrot.slane %v6238, 7
        %v6271 = vrot.slane %v6239, 7
        %v6272 = vrot.slane %v6240, 7
        %v6273 = vrot.slane %v6241, 7
        %v6274 = vrot.slane %v6242, 7
        %v6275 = vrot.slane %v6243, 7
        %v6276 = vrot.slane %v6244, 7
        %v6277 = vrot.slane %v6245, 7
        %v6278 = vrot.slane %v6246, 7
        %v6279 = vrot.slane %v6247, 7
        %v6280 = vrot.slane %v6248, 7
        %v6281 = vrot.slane %v6249, 7
        %v6282 = vrot.slane %v6250, 7
        %v6283 = vrot.slane %v6251, 7
        %v6284 = vrot.slane %v6252, 7
        %v6285 = vrot.slane %v6253, 7
        %v6286 = vrot.slane %v6254, 7
        %v6287 = vrot.slane %v6255, 7
        %v6288 = vrot.slane %v6256, 7
        %v6289 = vrot.slane %v6257, 7
        %v6290 = vrot.slane %v6258, 7
        %v6291 = vrot.slane %v6259, 7
        %v6292 = vrot.slane %v6260, 7
        %v6293 = vrot.slane %v6261, 7
        %v6294 = vrot.slane %v6262, 7
        %v6295 = vrot.slane %v6263, 7
        %v6296 = vrot.slane %v6264, 7
        %v6297 = vrot.slane %v6265, 7
        %v6298 = vrot.slane %v6266, 7
        %v6299 = vrot.slane %v6267, 7
        %v6300 = vrot.slane %v6268, 7
        %v6301 = vsel %vm456, %v6299, %v6300
        %v6302 = vsel %vm456, %v6298, %v6299
        %v6303 = vsel %vm456, %v6297, %v6298
        %v6304 = vsel %vm456, %v6296, %v6297
        %v6305 = vsel %vm456, %v6295, %v6296
        %v6306 = vsel %vm456, %v6294, %v6295
        %v6307 = vsel %vm456, %v6293, %v6294
        %v6308 = vsel %vm456, %v6292, %v6293
        %v6309 = vsel %vm456, %v6291, %v6292
        %v6310 = vsel %vm456, %v6290, %v6291
        %v6311 = vsel %vm456, %v6289, %v6290
        %v6312 = vsel %vm456, %v6288, %v6289
        %v6313 = vsel %vm456, %v6287, %v6288
        %v6314 = vsel %vm456, %v6286, %v6287
        %v6315 = vsel %vm456, %v6285, %v6286
        %v6316 = vsel %vm456, %v6284, %v6285
        %v6317 = vsel %vm456, %v6283, %v6284
        %v6318 = vsel %vm456, %v6282, %v6283
        %v6319 = vsel %vm456, %v6281, %v6282
        %v6320 = vsel %vm456, %v6280, %v6281
        %v6321 = vsel %vm456, %v6279, %v6280
        %v6322 = vsel %vm456, %v6278, %v6279
        %v6323 = vsel %vm456, %v6277, %v6278
        %v6324 = vsel %vm456, %v6276, %v6277
        %v6325 = vsel %vm456, %v6275, %v6276
        %v6326 = vsel %vm456, %v6274, %v6275
        %v6327 = vsel %vm456, %v6273, %v6274
        %v6328 = vsel %vm456, %v6272, %v6273
        %v6329 = vsel %vm456, %v6271, %v6272
        %v6330 = vsel %vm456, %v6270, %v6271
        %v6331 = vsel %vm456, %v6269, %v6270
        %v6332 = vsel %vm456, %v6300, %v6269
        %v6333 = vmul.f32 %v6302, %v524
        %v6334 = vmul.f32 %v6301, %v529
        %v6335 = vmul.f32 %v6332, %v534
        %v6336 = vmul.f32 %v6331, %v539
        %v6337 = vmul.f32 %v6330, %v544
        %v6338 = vmul.f32 %v6329, %v549
        %v6339 = vmul.f32 %v6328, %v554
        %v6340 = vmul.f32 %v6327, %v559
        %v6341 = vmul.f32 %v6326, %v564
        %v6342 = vmul.f32 %v6325, %v569
        %v6343 = vmul.f32 %v6324, %v574
        %v6344 = vmul.f32 %v6323, %v579
        %v6345 = vmul.f32 %v6322, %v584
        %v6346 = vmul.f32 %v6321, %v589
        %v6347 = vmul.f32 %v6320, %v594
        %v6348 = vmul.f32 %v6319, %v599
        %v6349 = vmul.f32 %v6318, %v604
        %v6350 = vmul.f32 %v6317, %v609
        %v6351 = vmul.f32 %v6316, %v614
        %v6352 = vmul.f32 %v6315, %v619
        %v6353 = vmul.f32 %v6314, %v624
        %v6354 = vmul.f32 %v6313, %v629
        %v6355 = vmul.f32 %v6312, %v634
        %v6356 = vmul.f32 %v6311, %v639
        %v6357 = vmul.f32 %v6310, %v644
        %v6358 = vmul.f32 %v6309, %v649
        %v6359 = vmul.f32 %v6308, %v654
        %v6360 = vmul.f32 %v6307, %v659
        %v6361 = vmul.f32 %v6306, %v664
        %v6362 = vmul.f32 %v6305, %v669
        %v6363 = vmul.f32 %v6304, %v674
        %v6364 = vmul.f32 %v6303, %v679
        %v6365 = vpack.c.bf16 %v6334, %v6333
        %v6366 = vpack.c.bf16 %v6336, %v6335
        %v6367 = vpack.c.bf16 %v6338, %v6337
        %v6368 = vpack.c.bf16 %v6340, %v6339
        %v6369 = vpack.c.bf16 %v6342, %v6341
        %v6370 = vpack.c.bf16 %v6344, %v6343
        %v6371 = vpack.c.bf16 %v6346, %v6345
        %v6372 = vpack.c.bf16 %v6348, %v6347
        %v6373 = vpack.c.bf16 %v6350, %v6349
        %v6374 = vpack.c.bf16 %v6352, %v6351
        %v6375 = vpack.c.bf16 %v6354, %v6353
        %v6376 = vpack.c.bf16 %v6356, %v6355
        %v6377 = vpack.c.bf16 %v6358, %v6357
        %v6378 = vpack.c.bf16 %v6360, %v6359
        %v6379 = vpack.c.bf16 %v6362, %v6361
        %v6380 = vpack.c.bf16 %v6364, %v6363
        %v6381 = vld [vmem:[%s6] sm:$0xf]
        %v6382 = vld [vmem:[%s6 + $0x4] sm:$0xf]
        %v6383 = vld [vmem:[%s6 + $0x8] sm:$0xf]
        %v6384 = vld [vmem:[%s6 + $0xc] sm:$0xf]
        %v6385 = vmul.f32 %v6267, %v766
        %v6386 = vmul.f32 %v6268, %v771
        %v6387 = vmul.f32 %v6237, %v776
        %v6388 = vmul.f32 %v6238, %v781
        %v6389 = vmul.f32 %v6239, %v786
        %v6390 = vmul.f32 %v6240, %v791
        %v6391 = vmul.f32 %v6241, %v796
        %v6392 = vmul.f32 %v6242, %v801
        %v6393 = vmul.f32 %v6243, %v806
        %v6394 = vmul.f32 %v6244, %v811
        %v6395 = vmul.f32 %v6245, %v816
        %v6396 = vmul.f32 %v6246, %v821
        %v6397 = vmul.f32 %v6247, %v826
        %v6398 = vmul.f32 %v6248, %v831
        %v6399 = vmul.f32 %v6249, %v836
        %v6400 = vmul.f32 %v6250, %v841
        %v6401 = vmul.f32 %v6251, %v846
        %v6402 = vmul.f32 %v6252, %v851
        %v6403 = vmul.f32 %v6253, %v856
        %v6404 = vmul.f32 %v6254, %v861
        %v6405 = vmul.f32 %v6255, %v866
        %v6406 = vmul.f32 %v6256, %v871
        %v6407 = vmul.f32 %v6257, %v876
        %v6408 = vmul.f32 %v6258, %v881
        %v6409 = vmul.f32 %v6259, %v886
        %v6410 = vmul.f32 %v6260, %v891
        %v6411 = vmul.f32 %v6261, %v896
        %v6412 = vmul.f32 %v6262, %v901
        %v6413 = vmul.f32 %v6263, %v906
        %v6414 = vmul.f32 %v6264, %v911
        %v6415 = vmul.f32 %v6265, %v916
        %v6416 = vmul.f32 %v6266, %v921
        %v6417 = vpack.c.bf16 %v6386, %v6385
        %v6418 = vpack.c.bf16 %v6388, %v6387
        %v6419 = vpack.c.bf16 %v6390, %v6389
        %v6420 = vpack.c.bf16 %v6392, %v6391
        %v6421 = vpack.c.bf16 %v6394, %v6393
        %v6422 = vpack.c.bf16 %v6396, %v6395
        %v6423 = vpack.c.bf16 %v6398, %v6397
        %v6424 = vpack.c.bf16 %v6400, %v6399
        %v6425 = vpack.c.bf16 %v6402, %v6401
        %v6426 = vpack.c.bf16 %v6404, %v6403
        %v6427 = vpack.c.bf16 %v6406, %v6405
        %v6428 = vpack.c.bf16 %v6408, %v6407
        %v6429 = vpack.c.bf16 %v6410, %v6409
        %v6430 = vpack.c.bf16 %v6412, %v6411
        %v6431 = vpack.c.bf16 %v6414, %v6413
        %v6432 = vpack.c.bf16 %v6416, %v6415
        %s6433 = scalar_lea.vmem %s6, 16
        %v6434 = vld [vmem:[%s6433] sm:$0xf]
        %v6435 = vld [vmem:[%s6433 + $0x4] sm:$0xf]
        %v6436 = vld [vmem:[%s6433 + $0x8] sm:$0xf]
        %v6437 = vld [vmem:[%s6433 + $0xc] sm:$0xf]
        %v6442 = vunpack.c.l.b16 %v6434
        %v6443 = vunpack.c.l.b16 %v6435
        %v6444 = vunpack.c.l.b16 %v6436
        %v6445 = vunpack.c.l.b16 %v6437
        %v6446 = vpack.c.b16 %v6443, %v6442
        %v6447 = vpack.c.b16 %v6445, %v6444
        %vm6450 = vcmask 261120
        %v6452 = vsel %vm6450, %v6417, 0
        %v6455 = vsel %vm6450, %v6418, 0
        %v6458 = vsel %vm6450, %v6419, 0
        %v6461 = vsel %vm6450, %v6420, 0
        %v6464 = vsel %vm6450, %v6421, 0
        %v6467 = vsel %vm6450, %v6422, 0
        %v6470 = vsel %vm6450, %v6423, 0
        %v6473 = vsel %vm6450, %v6424, 0
        %v6476 = vsel %vm6450, %v6425, 0
        %v6479 = vsel %vm6450, %v6426, 0
        %v6482 = vsel %vm6450, %v6427, 0
        %v6485 = vsel %vm6450, %v6428, 0
        %v6488 = vsel %vm6450, %v6429, 0
        %v6491 = vsel %vm6450, %v6430, 0
        %v6494 = vsel %vm6450, %v6431, 0
        %v6497 = vsel %vm6450, %v6432, 0
        %6499 = vmatpush.bf16.msra.mxu0 0
        %6500 = vmatpush.bf16.msra.mxu0 0
        %6501 = vmatpush.bf16.msra.mxu0 0
        %6502 = vmatpush.bf16.msra.mxu0 0
        %6503 = vmatpush.bf16.msra.mxu0 0
        %6504 = vmatpush.bf16.msra.mxu0 0
        %6505 = vmatpush.bf16.msra.mxu0 %v6447
        %6506 = vmatpush.bf16.msra.mxu0 %v6446
        %6507 = vmatmul.bf16.gmra.mxu0 %v6452
        %v6508 = vpop.f32.mrf.mxu0
        %v6509 = vadd.f32 0.0, %v6508
        %v6510 = vpop.f32.mrf.mxu0
        %v6511 = vadd.f32 0.0, %v6510
        %6512 = vmatmul.bf16.gmra.mxu0 %v6455
        %v6513 = vpop.f32.mrf.mxu0
        %v6514 = vadd.f32 0.0, %v6513
        %v6515 = vpop.f32.mrf.mxu0
        %v6516 = vadd.f32 0.0, %v6515
        %6517 = vmatmul.bf16.gmra.mxu0 %v6458
        %v6518 = vpop.f32.mrf.mxu0
        %v6519 = vadd.f32 0.0, %v6518
        %v6520 = vpop.f32.mrf.mxu0
        %v6521 = vadd.f32 0.0, %v6520
        %6522 = vmatmul.bf16.gmra.mxu0 %v6461
        %v6523 = vpop.f32.mrf.mxu0
        %v6524 = vadd.f32 0.0, %v6523
        %v6525 = vpop.f32.mrf.mxu0
        %v6526 = vadd.f32 0.0, %v6525
        %6527 = vmatmul.bf16.gmra.mxu0 %v6464
        %v6528 = vpop.f32.mrf.mxu0
        %v6529 = vadd.f32 0.0, %v6528
        %v6530 = vpop.f32.mrf.mxu0
        %v6531 = vadd.f32 0.0, %v6530
        %6532 = vmatmul.bf16.gmra.mxu0 %v6467
        %v6533 = vpop.f32.mrf.mxu0
        %v6534 = vadd.f32 0.0, %v6533
        %v6535 = vpop.f32.mrf.mxu0
        %v6536 = vadd.f32 0.0, %v6535
        %6537 = vmatmul.bf16.gmra.mxu0 %v6470
        %v6538 = vpop.f32.mrf.mxu0
        %v6539 = vadd.f32 0.0, %v6538
        %v6540 = vpop.f32.mrf.mxu0
        %v6541 = vadd.f32 0.0, %v6540
        %6542 = vmatmul.bf16.gmra.mxu0 %v6473
        %v6543 = vpop.f32.mrf.mxu0
        %v6544 = vadd.f32 0.0, %v6543
        %v6545 = vpop.f32.mrf.mxu0
        %v6546 = vadd.f32 0.0, %v6545
        %6547 = vmatmul.bf16.gmra.mxu0 %v6476
        %v6548 = vpop.f32.mrf.mxu0
        %v6549 = vadd.f32 0.0, %v6548
        %v6550 = vpop.f32.mrf.mxu0
        %v6551 = vadd.f32 0.0, %v6550
        %6552 = vmatmul.bf16.gmra.mxu0 %v6479
        %v6553 = vpop.f32.mrf.mxu0
        %v6554 = vadd.f32 0.0, %v6553
        %v6555 = vpop.f32.mrf.mxu0
        %v6556 = vadd.f32 0.0, %v6555
        %6557 = vmatmul.bf16.gmra.mxu0 %v6482
        %v6558 = vpop.f32.mrf.mxu0
        %v6559 = vadd.f32 0.0, %v6558
        %v6560 = vpop.f32.mrf.mxu0
        %v6561 = vadd.f32 0.0, %v6560
        %6562 = vmatmul.bf16.gmra.mxu0 %v6485
        %v6563 = vpop.f32.mrf.mxu0
        %v6564 = vadd.f32 0.0, %v6563
        %v6565 = vpop.f32.mrf.mxu0
        %v6566 = vadd.f32 0.0, %v6565
        %6567 = vmatmul.bf16.gmra.mxu0 %v6488
        %v6568 = vpop.f32.mrf.mxu0
        %v6569 = vadd.f32 0.0, %v6568
        %v6570 = vpop.f32.mrf.mxu0
        %v6571 = vadd.f32 0.0, %v6570
        %6572 = vmatmul.bf16.gmra.mxu0 %v6491
        %v6573 = vpop.f32.mrf.mxu0
        %v6574 = vadd.f32 0.0, %v6573
        %v6575 = vpop.f32.mrf.mxu0
        %v6576 = vadd.f32 0.0, %v6575
        %6577 = vmatmul.bf16.gmra.mxu0 %v6494
        %v6578 = vpop.f32.mrf.mxu0
        %v6579 = vadd.f32 0.0, %v6578
        %v6580 = vpop.f32.mrf.mxu0
        %v6581 = vadd.f32 0.0, %v6580
        %6582 = vmatmul.bf16.gmra.mxu0 %v6497
        %v6583 = vpop.f32.mrf.mxu0
        %v6584 = vadd.f32 0.0, %v6583
        %v6585 = vpop.f32.mrf.mxu0
        %v6586 = vadd.f32 0.0, %v6585
        %6587 = vdwg.mxu0
        %v6592 = vunpack.c.l.b16 %v6381
        %v6593 = vunpack.c.l.b16 %v6382
        %v6594 = vunpack.c.l.b16 %v6383
        %v6595 = vunpack.c.l.b16 %v6384
        %v6596 = vpack.c.b16 %v6593, %v6592
        %v6597 = vpack.c.b16 %v6595, %v6594
        %v6601 = vsel %vm6450, %v6365, 0
        %v6604 = vsel %vm6450, %v6366, 0
        %v6607 = vsel %vm6450, %v6367, 0
        %v6610 = vsel %vm6450, %v6368, 0
        %v6613 = vsel %vm6450, %v6369, 0
        %v6616 = vsel %vm6450, %v6370, 0
        %v6619 = vsel %vm6450, %v6371, 0
        %v6622 = vsel %vm6450, %v6372, 0
        %v6625 = vsel %vm6450, %v6373, 0
        %v6628 = vsel %vm6450, %v6374, 0
        %v6631 = vsel %vm6450, %v6375, 0
        %v6634 = vsel %vm6450, %v6376, 0
        %v6637 = vsel %vm6450, %v6377, 0
        %v6640 = vsel %vm6450, %v6378, 0
        %v6643 = vsel %vm6450, %v6379, 0
        %v6646 = vsel %vm6450, %v6380, 0
        %6648 = vmatpush.bf16.msra.mxu0 0
        %6649 = vmatpush.bf16.msra.mxu0 0
        %6650 = vmatpush.bf16.msra.mxu0 0
        %6651 = vmatpush.bf16.msra.mxu0 0
        %6652 = vmatpush.bf16.msra.mxu0 0
        %6653 = vmatpush.bf16.msra.mxu0 0
        %6654 = vmatpush.bf16.msra.mxu0 %v6597
        %6655 = vmatpush.bf16.msra.mxu0 %v6596
        %6656 = vmatmul.bf16.gmra.mxu0 %v6601
        %v6657 = vpop.f32.mrf.mxu0
        %v6658 = vadd.f32 %v6509, %v6657
        %v6659 = vpop.f32.mrf.mxu0
        %v6660 = vadd.f32 %v6511, %v6659
        %6661 = vmatmul.bf16.gmra.mxu0 %v6604
        %v6662 = vpop.f32.mrf.mxu0
        %v6663 = vadd.f32 %v6514, %v6662
        %v6664 = vpop.f32.mrf.mxu0
        %v6665 = vadd.f32 %v6516, %v6664
        %6666 = vmatmul.bf16.gmra.mxu0 %v6607
        %v6667 = vpop.f32.mrf.mxu0
        %v6668 = vadd.f32 %v6519, %v6667
        %v6669 = vpop.f32.mrf.mxu0
        %v6670 = vadd.f32 %v6521, %v6669
        %6671 = vmatmul.bf16.gmra.mxu0 %v6610
        %v6672 = vpop.f32.mrf.mxu0
        %v6673 = vadd.f32 %v6524, %v6672
        %v6674 = vpop.f32.mrf.mxu0
        %v6675 = vadd.f32 %v6526, %v6674
        %6676 = vmatmul.bf16.gmra.mxu0 %v6613
        %v6677 = vpop.f32.mrf.mxu0
        %v6678 = vadd.f32 %v6529, %v6677
        %v6679 = vpop.f32.mrf.mxu0
        %v6680 = vadd.f32 %v6531, %v6679
        %6681 = vmatmul.bf16.gmra.mxu0 %v6616
        %v6682 = vpop.f32.mrf.mxu0
        %v6683 = vadd.f32 %v6534, %v6682
        %v6684 = vpop.f32.mrf.mxu0
        %v6685 = vadd.f32 %v6536, %v6684
        %6686 = vmatmul.bf16.gmra.mxu0 %v6619
        %v6687 = vpop.f32.mrf.mxu0
        %v6688 = vadd.f32 %v6539, %v6687
        %v6689 = vpop.f32.mrf.mxu0
        %v6690 = vadd.f32 %v6541, %v6689
        %6691 = vmatmul.bf16.gmra.mxu0 %v6622
        %v6692 = vpop.f32.mrf.mxu0
        %v6693 = vadd.f32 %v6544, %v6692
        %v6694 = vpop.f32.mrf.mxu0
        %v6695 = vadd.f32 %v6546, %v6694
        %6696 = vmatmul.bf16.gmra.mxu0 %v6625
        %v6697 = vpop.f32.mrf.mxu0
        %v6698 = vadd.f32 %v6549, %v6697
        %v6699 = vpop.f32.mrf.mxu0
        %v6700 = vadd.f32 %v6551, %v6699
        %6701 = vmatmul.bf16.gmra.mxu0 %v6628
        %v6702 = vpop.f32.mrf.mxu0
        %v6703 = vadd.f32 %v6554, %v6702
        %v6704 = vpop.f32.mrf.mxu0
        %v6705 = vadd.f32 %v6556, %v6704
        %6706 = vmatmul.bf16.gmra.mxu0 %v6631
        %v6707 = vpop.f32.mrf.mxu0
        %v6708 = vadd.f32 %v6559, %v6707
        %v6709 = vpop.f32.mrf.mxu0
        %v6710 = vadd.f32 %v6561, %v6709
        %6711 = vmatmul.bf16.gmra.mxu0 %v6634
        %v6712 = vpop.f32.mrf.mxu0
        %v6713 = vadd.f32 %v6564, %v6712
        %v6714 = vpop.f32.mrf.mxu0
        %v6715 = vadd.f32 %v6566, %v6714
        %6716 = vmatmul.bf16.gmra.mxu0 %v6637
        %v6717 = vpop.f32.mrf.mxu0
        %v6718 = vadd.f32 %v6569, %v6717
        %v6719 = vpop.f32.mrf.mxu0
        %v6720 = vadd.f32 %v6571, %v6719
        %6721 = vmatmul.bf16.gmra.mxu0 %v6640
        %v6722 = vpop.f32.mrf.mxu0
        %v6723 = vadd.f32 %v6574, %v6722
        %v6724 = vpop.f32.mrf.mxu0
        %v6725 = vadd.f32 %v6576, %v6724
        %6726 = vmatmul.bf16.gmra.mxu0 %v6643
        %v6727 = vpop.f32.mrf.mxu0
        %v6728 = vadd.f32 %v6579, %v6727
        %v6729 = vpop.f32.mrf.mxu0
        %v6730 = vadd.f32 %v6581, %v6729
        %6731 = vmatmul.bf16.gmra.mxu0 %v6646
        %v6732 = vpop.f32.mrf.mxu0
        %v6733 = vadd.f32 %v6584, %v6732
        %v6734 = vpop.f32.mrf.mxu0
        %v6735 = vadd.f32 %v6586, %v6734
        %6736 = vdwg.mxu0
        %v6737 = vrot.slane %v6237, 1
        %v6738 = vrot.slane %v6238, 1
        %v6739 = vrot.slane %v6239, 1
        %v6740 = vrot.slane %v6240, 1
        %v6741 = vrot.slane %v6241, 1
        %v6742 = vrot.slane %v6242, 1
        %v6743 = vrot.slane %v6243, 1
        %v6744 = vrot.slane %v6244, 1
        %v6745 = vrot.slane %v6245, 1
        %v6746 = vrot.slane %v6246, 1
        %v6747 = vrot.slane %v6247, 1
        %v6748 = vrot.slane %v6248, 1
        %v6749 = vrot.slane %v6249, 1
        %v6750 = vrot.slane %v6250, 1
        %v6751 = vrot.slane %v6251, 1
        %v6752 = vrot.slane %v6252, 1
        %v6753 = vrot.slane %v6253, 1
        %v6754 = vrot.slane %v6254, 1
        %v6755 = vrot.slane %v6255, 1
        %v6756 = vrot.slane %v6256, 1
        %v6757 = vrot.slane %v6257, 1
        %v6758 = vrot.slane %v6258, 1
        %v6759 = vrot.slane %v6259, 1
        %v6760 = vrot.slane %v6260, 1
        %v6761 = vrot.slane %v6261, 1
        %v6762 = vrot.slane %v6262, 1
        %v6763 = vrot.slane %v6263, 1
        %v6764 = vrot.slane %v6264, 1
        %v6765 = vrot.slane %v6265, 1
        %v6766 = vrot.slane %v6266, 1
        %v6767 = vrot.slane %v6267, 1
        %v6768 = vrot.slane %v6268, 1
        %v6769 = vsel %vm1290, %v6767, %v6768
        %v6770 = vsel %vm1290, %v6766, %v6767
        %v6771 = vsel %vm1290, %v6765, %v6766
        %v6772 = vsel %vm1290, %v6764, %v6765
        %v6773 = vsel %vm1290, %v6763, %v6764
        %v6774 = vsel %vm1290, %v6762, %v6763
        %v6775 = vsel %vm1290, %v6761, %v6762
        %v6776 = vsel %vm1290, %v6760, %v6761
        %v6777 = vsel %vm1290, %v6759, %v6760
        %v6778 = vsel %vm1290, %v6758, %v6759
        %v6779 = vsel %vm1290, %v6757, %v6758
        %v6780 = vsel %vm1290, %v6756, %v6757
        %v6781 = vsel %vm1290, %v6755, %v6756
        %v6782 = vsel %vm1290, %v6754, %v6755
        %v6783 = vsel %vm1290, %v6753, %v6754
        %v6784 = vsel %vm1290, %v6752, %v6753
        %v6785 = vsel %vm1290, %v6751, %v6752
        %v6786 = vsel %vm1290, %v6750, %v6751
        %v6787 = vsel %vm1290, %v6749, %v6750
        %v6788 = vsel %vm1290, %v6748, %v6749
        %v6789 = vsel %vm1290, %v6747, %v6748
        %v6790 = vsel %vm1290, %v6746, %v6747
        %v6791 = vsel %vm1290, %v6745, %v6746
        %v6792 = vsel %vm1290, %v6744, %v6745
        %v6793 = vsel %vm1290, %v6743, %v6744
        %v6794 = vsel %vm1290, %v6742, %v6743
        %v6795 = vsel %vm1290, %v6741, %v6742
        %v6796 = vsel %vm1290, %v6740, %v6741
        %v6797 = vsel %vm1290, %v6739, %v6740
        %v6798 = vsel %vm1290, %v6738, %v6739
        %v6799 = vsel %vm1290, %v6737, %v6738
        %v6800 = vsel %vm1290, %v6768, %v6737
        %v6801 = vmul.f32 %v6769, %v1359
        %v6802 = vmul.f32 %v6800, %v1364
        %v6803 = vmul.f32 %v6799, %v1369
        %v6804 = vmul.f32 %v6798, %v1374
        %v6805 = vmul.f32 %v6797, %v1379
        %v6806 = vmul.f32 %v6796, %v1384
        %v6807 = vmul.f32 %v6795, %v1389
        %v6808 = vmul.f32 %v6794, %v1394
        %v6809 = vmul.f32 %v6793, %v1399
        %v6810 = vmul.f32 %v6792, %v1404
        %v6811 = vmul.f32 %v6791, %v1409
        %v6812 = vmul.f32 %v6790, %v1414
        %v6813 = vmul.f32 %v6789, %v1419
        %v6814 = vmul.f32 %v6788, %v1424
        %v6815 = vmul.f32 %v6787, %v1429
        %v6816 = vmul.f32 %v6786, %v1434
        %v6817 = vmul.f32 %v6785, %v1439
        %v6818 = vmul.f32 %v6784, %v1444
        %v6819 = vmul.f32 %v6783, %v1449
        %v6820 = vmul.f32 %v6782, %v1454
        %v6821 = vmul.f32 %v6781, %v1459
        %v6822 = vmul.f32 %v6780, %v1464
        %v6823 = vmul.f32 %v6779, %v1469
        %v6824 = vmul.f32 %v6778, %v1474
        %v6825 = vmul.f32 %v6777, %v1479
        %v6826 = vmul.f32 %v6776, %v1484
        %v6827 = vmul.f32 %v6775, %v1489
        %v6828 = vmul.f32 %v6774, %v1494
        %v6829 = vmul.f32 %v6773, %v1499
        %v6830 = vmul.f32 %v6772, %v1504
        %v6831 = vmul.f32 %v6771, %v1509
        %v6832 = vmul.f32 %v6770, %v1514
        %v6833 = vpack.c.bf16 %v6802, %v6801
        %v6834 = vpack.c.bf16 %v6804, %v6803
        %v6835 = vpack.c.bf16 %v6806, %v6805
        %v6836 = vpack.c.bf16 %v6808, %v6807
        %v6837 = vpack.c.bf16 %v6810, %v6809
        %v6838 = vpack.c.bf16 %v6812, %v6811
        %v6839 = vpack.c.bf16 %v6814, %v6813
        %v6840 = vpack.c.bf16 %v6816, %v6815
        %v6841 = vpack.c.bf16 %v6818, %v6817
        %v6842 = vpack.c.bf16 %v6820, %v6819
        %v6843 = vpack.c.bf16 %v6822, %v6821
        %v6844 = vpack.c.bf16 %v6824, %v6823
        %v6845 = vpack.c.bf16 %v6826, %v6825
        %v6846 = vpack.c.bf16 %v6828, %v6827
        %v6847 = vpack.c.bf16 %v6830, %v6829
        %v6848 = vpack.c.bf16 %v6832, %v6831
        %s6849 = scalar_lea.vmem %s6, 32
        %v6850 = vld [vmem:[%s6849] sm:$0xf]
        %v6851 = vld [vmem:[%s6849 + $0x4] sm:$0xf]
        %v6852 = vld [vmem:[%s6849 + $0x8] sm:$0xf]
        %v6853 = vld [vmem:[%s6849 + $0xc] sm:$0xf]
        %v6858 = vunpack.c.l.b16 %v6850
        %v6859 = vunpack.c.l.b16 %v6851
        %v6860 = vunpack.c.l.b16 %v6852
        %v6861 = vunpack.c.l.b16 %v6853
        %v6862 = vpack.c.b16 %v6859, %v6858
        %v6863 = vpack.c.b16 %v6861, %v6860
        %v6867 = vsel %vm6450, %v6833, 0
        %v6870 = vsel %vm6450, %v6834, 0
        %v6873 = vsel %vm6450, %v6835, 0
        %v6876 = vsel %vm6450, %v6836, 0
        %v6879 = vsel %vm6450, %v6837, 0
        %v6882 = vsel %vm6450, %v6838, 0
        %v6885 = vsel %vm6450, %v6839, 0
        %v6888 = vsel %vm6450, %v6840, 0
        %v6891 = vsel %vm6450, %v6841, 0
        %v6894 = vsel %vm6450, %v6842, 0
        %v6897 = vsel %vm6450, %v6843, 0
        %v6900 = vsel %vm6450, %v6844, 0
        %v6903 = vsel %vm6450, %v6845, 0
        %v6906 = vsel %vm6450, %v6846, 0
        %v6909 = vsel %vm6450, %v6847, 0
        %v6912 = vsel %vm6450, %v6848, 0
        %6914 = vmatpush.bf16.msra.mxu0 0
        %6915 = vmatpush.bf16.msra.mxu0 0
        %6916 = vmatpush.bf16.msra.mxu0 0
        %6917 = vmatpush.bf16.msra.mxu0 0
        %6918 = vmatpush.bf16.msra.mxu0 0
        %6919 = vmatpush.bf16.msra.mxu0 0
        %6920 = vmatpush.bf16.msra.mxu0 %v6863
        %6921 = vmatpush.bf16.msra.mxu0 %v6862
        %6922 = vmatmul.bf16.gmra.mxu0 %v6867
        %v6923 = vpop.f32.mrf.mxu0
        %v6924 = vadd.f32 0.0, %v6923
        %v6925 = vpop.f32.mrf.mxu0
        %v6926 = vadd.f32 0.0, %v6925
        %6927 = vmatmul.bf16.gmra.mxu0 %v6870
        %v6928 = vpop.f32.mrf.mxu0
        %v6929 = vadd.f32 0.0, %v6928
        %v6930 = vpop.f32.mrf.mxu0
        %v6931 = vadd.f32 0.0, %v6930
        %6932 = vmatmul.bf16.gmra.mxu0 %v6873
        %v6933 = vpop.f32.mrf.mxu0
        %v6934 = vadd.f32 0.0, %v6933
        %v6935 = vpop.f32.mrf.mxu0
        %v6936 = vadd.f32 0.0, %v6935
        %6937 = vmatmul.bf16.gmra.mxu0 %v6876
        %v6938 = vpop.f32.mrf.mxu0
        %v6939 = vadd.f32 0.0, %v6938
        %v6940 = vpop.f32.mrf.mxu0
        %v6941 = vadd.f32 0.0, %v6940
        %6942 = vmatmul.bf16.gmra.mxu0 %v6879
        %v6943 = vpop.f32.mrf.mxu0
        %v6944 = vadd.f32 0.0, %v6943
        %v6945 = vpop.f32.mrf.mxu0
        %v6946 = vadd.f32 0.0, %v6945
        %6947 = vmatmul.bf16.gmra.mxu0 %v6882
        %v6948 = vpop.f32.mrf.mxu0
        %v6949 = vadd.f32 0.0, %v6948
        %v6950 = vpop.f32.mrf.mxu0
        %v6951 = vadd.f32 0.0, %v6950
        %6952 = vmatmul.bf16.gmra.mxu0 %v6885
        %v6953 = vpop.f32.mrf.mxu0
        %v6954 = vadd.f32 0.0, %v6953
        %v6955 = vpop.f32.mrf.mxu0
        %v6956 = vadd.f32 0.0, %v6955
        %6957 = vmatmul.bf16.gmra.mxu0 %v6888
        %v6958 = vpop.f32.mrf.mxu0
        %v6959 = vadd.f32 0.0, %v6958
        %v6960 = vpop.f32.mrf.mxu0
        %v6961 = vadd.f32 0.0, %v6960
        %6962 = vmatmul.bf16.gmra.mxu0 %v6891
        %v6963 = vpop.f32.mrf.mxu0
        %v6964 = vadd.f32 0.0, %v6963
        %v6965 = vpop.f32.mrf.mxu0
        %v6966 = vadd.f32 0.0, %v6965
        %6967 = vmatmul.bf16.gmra.mxu0 %v6894
        %v6968 = vpop.f32.mrf.mxu0
        %v6969 = vadd.f32 0.0, %v6968
        %v6970 = vpop.f32.mrf.mxu0
        %v6971 = vadd.f32 0.0, %v6970
        %6972 = vmatmul.bf16.gmra.mxu0 %v6897
        %v6973 = vpop.f32.mrf.mxu0
        %v6974 = vadd.f32 0.0, %v6973
        %v6975 = vpop.f32.mrf.mxu0
        %v6976 = vadd.f32 0.0, %v6975
        %6977 = vmatmul.bf16.gmra.mxu0 %v6900
        %v6978 = vpop.f32.mrf.mxu0
        %v6979 = vadd.f32 0.0, %v6978
        %v6980 = vpop.f32.mrf.mxu0
        %v6981 = vadd.f32 0.0, %v6980
        %6982 = vmatmul.bf16.gmra.mxu0 %v6903
        %v6983 = vpop.f32.mrf.mxu0
        %v6984 = vadd.f32 0.0, %v6983
        %v6985 = vpop.f32.mrf.mxu0
        %v6986 = vadd.f32 0.0, %v6985
        %6987 = vmatmul.bf16.gmra.mxu0 %v6906
        %v6988 = vpop.f32.mrf.mxu0
        %v6989 = vadd.f32 0.0, %v6988
        %v6990 = vpop.f32.mrf.mxu0
        %v6991 = vadd.f32 0.0, %v6990
        %6992 = vmatmul.bf16.gmra.mxu0 %v6909
        %v6993 = vpop.f32.mrf.mxu0
        %v6994 = vadd.f32 0.0, %v6993
        %v6995 = vpop.f32.mrf.mxu0
        %v6996 = vadd.f32 0.0, %v6995
        %6997 = vmatmul.bf16.gmra.mxu0 %v6912
        %v6998 = vpop.f32.mrf.mxu0
        %v6999 = vadd.f32 0.0, %v6998
        %v7000 = vpop.f32.mrf.mxu0
        %v7001 = vadd.f32 0.0, %v7000
        %7002 = vdwg.mxu0
        %v7003 = vadd.f32 %v6658, %v6924
        %v7004 = vadd.f32 %v6660, %v6926
        %v7005 = vadd.f32 %v6663, %v6929
        %v7006 = vadd.f32 %v6665, %v6931
        %v7007 = vadd.f32 %v6668, %v6934
        %v7008 = vadd.f32 %v6670, %v6936
        %v7009 = vadd.f32 %v6673, %v6939
        %v7010 = vadd.f32 %v6675, %v6941
        %v7011 = vadd.f32 %v6678, %v6944
        %v7012 = vadd.f32 %v6680, %v6946
        %v7013 = vadd.f32 %v6683, %v6949
        %v7014 = vadd.f32 %v6685, %v6951
        %v7015 = vadd.f32 %v6688, %v6954
        %v7016 = vadd.f32 %v6690, %v6956
        %v7017 = vadd.f32 %v6693, %v6959
        %v7018 = vadd.f32 %v6695, %v6961
        %v7019 = vadd.f32 %v6698, %v6964
        %v7020 = vadd.f32 %v6700, %v6966
        %v7021 = vadd.f32 %v6703, %v6969
        %v7022 = vadd.f32 %v6705, %v6971
        %v7023 = vadd.f32 %v6708, %v6974
        %v7024 = vadd.f32 %v6710, %v6976
        %v7025 = vadd.f32 %v6713, %v6979
        %v7026 = vadd.f32 %v6715, %v6981
        %v7027 = vadd.f32 %v6718, %v6984
        %v7028 = vadd.f32 %v6720, %v6986
        %v7029 = vadd.f32 %v6723, %v6989
        %v7030 = vadd.f32 %v6725, %v6991
        %v7031 = vadd.f32 %v6728, %v6994
        %v7032 = vadd.f32 %v6730, %v6996
        %v7033 = vadd.f32 %v6733, %v6999
        %v7034 = vadd.f32 %v6735, %v7001
        %v7035 = vmul.f32 %v6332, %v1774
        %v7036 = vmul.f32 %v6331, %v1779
        %v7037 = vmul.f32 %v6330, %v1784
        %v7038 = vmul.f32 %v6329, %v1789
        %v7039 = vmul.f32 %v6328, %v1794
        %v7040 = vmul.f32 %v6327, %v1799
        %v7041 = vmul.f32 %v6326, %v1804
        %v7042 = vmul.f32 %v6325, %v1809
        %v7043 = vmul.f32 %v6324, %v1814
        %v7044 = vmul.f32 %v6323, %v1819
        %v7045 = vmul.f32 %v6322, %v1824
        %v7046 = vmul.f32 %v6321, %v1829
        %v7047 = vmul.f32 %v6320, %v1834
        %v7048 = vmul.f32 %v6319, %v1839
        %v7049 = vmul.f32 %v6318, %v1844
        %v7050 = vmul.f32 %v6317, %v1849
        %v7051 = vmul.f32 %v6316, %v1854
        %v7052 = vmul.f32 %v6315, %v1859
        %v7053 = vmul.f32 %v6314, %v1864
        %v7054 = vmul.f32 %v6313, %v1869
        %v7055 = vmul.f32 %v6312, %v1874
        %v7056 = vmul.f32 %v6311, %v1879
        %v7057 = vmul.f32 %v6310, %v1884
        %v7058 = vmul.f32 %v6309, %v1889
        %v7059 = vmul.f32 %v6308, %v1894
        %v7060 = vmul.f32 %v6307, %v1899
        %v7061 = vmul.f32 %v6306, %v1904
        %v7062 = vmul.f32 %v6305, %v1909
        %v7063 = vmul.f32 %v6304, %v1914
        %v7064 = vmul.f32 %v6303, %v1919
        %v7065 = vmul.f32 %v6302, %v1924
        %v7066 = vmul.f32 %v6301, %v1929
        %v7067 = vpack.c.bf16 %v7036, %v7035
        %v7068 = vpack.c.bf16 %v7038, %v7037
        %v7069 = vpack.c.bf16 %v7040, %v7039
        %v7070 = vpack.c.bf16 %v7042, %v7041
        %v7071 = vpack.c.bf16 %v7044, %v7043
        %v7072 = vpack.c.bf16 %v7046, %v7045
        %v7073 = vpack.c.bf16 %v7048, %v7047
        %v7074 = vpack.c.bf16 %v7050, %v7049
        %v7075 = vpack.c.bf16 %v7052, %v7051
        %v7076 = vpack.c.bf16 %v7054, %v7053
        %v7077 = vpack.c.bf16 %v7056, %v7055
        %v7078 = vpack.c.bf16 %v7058, %v7057
        %v7079 = vpack.c.bf16 %v7060, %v7059
        %v7080 = vpack.c.bf16 %v7062, %v7061
        %v7081 = vpack.c.bf16 %v7064, %v7063
        %v7082 = vpack.c.bf16 %v7066, %v7065
        %s7083 = scalar_lea.vmem %s6, 48
        %v7084 = vld [vmem:[%s7083] sm:$0xf]
        %v7085 = vld [vmem:[%s7083 + $0x4] sm:$0xf]
        %v7086 = vld [vmem:[%s7083 + $0x8] sm:$0xf]
        %v7087 = vld [vmem:[%s7083 + $0xc] sm:$0xf]
        %v7092 = vunpack.c.l.b16 %v7084
        %v7093 = vunpack.c.l.b16 %v7085
        %v7094 = vunpack.c.l.b16 %v7086
        %v7095 = vunpack.c.l.b16 %v7087
        %v7096 = vpack.c.b16 %v7093, %v7092
        %v7097 = vpack.c.b16 %v7095, %v7094
        %v7101 = vsel %vm6450, %v7067, 0
        %v7104 = vsel %vm6450, %v7068, 0
        %v7107 = vsel %vm6450, %v7069, 0
        %v7110 = vsel %vm6450, %v7070, 0
        %v7113 = vsel %vm6450, %v7071, 0
        %v7116 = vsel %vm6450, %v7072, 0
        %v7119 = vsel %vm6450, %v7073, 0
        %v7122 = vsel %vm6450, %v7074, 0
        %v7125 = vsel %vm6450, %v7075, 0
        %v7128 = vsel %vm6450, %v7076, 0
        %v7131 = vsel %vm6450, %v7077, 0
        %v7134 = vsel %vm6450, %v7078, 0
        %v7137 = vsel %vm6450, %v7079, 0
        %v7140 = vsel %vm6450, %v7080, 0
        %v7143 = vsel %vm6450, %v7081, 0
        %v7146 = vsel %vm6450, %v7082, 0
        %7148 = vmatpush.bf16.msra.mxu0 0
        %7149 = vmatpush.bf16.msra.mxu0 0
        %7150 = vmatpush.bf16.msra.mxu0 0
        %7151 = vmatpush.bf16.msra.mxu0 0
        %7152 = vmatpush.bf16.msra.mxu0 0
        %7153 = vmatpush.bf16.msra.mxu0 0
        %7154 = vmatpush.bf16.msra.mxu0 %v7097
        %7155 = vmatpush.bf16.msra.mxu0 %v7096
        %7156 = vmatmul.bf16.gmra.mxu0 %v7101
        %v7157 = vpop.f32.mrf.mxu0
        %v7158 = vadd.f32 0.0, %v7157
        %v7159 = vpop.f32.mrf.mxu0
        %v7160 = vadd.f32 0.0, %v7159
        %7161 = vmatmul.bf16.gmra.mxu0 %v7104
        %v7162 = vpop.f32.mrf.mxu0
        %v7163 = vadd.f32 0.0, %v7162
        %v7164 = vpop.f32.mrf.mxu0
        %v7165 = vadd.f32 0.0, %v7164
        %7166 = vmatmul.bf16.gmra.mxu0 %v7107
        %v7167 = vpop.f32.mrf.mxu0
        %v7168 = vadd.f32 0.0, %v7167
        %v7169 = vpop.f32.mrf.mxu0
        %v7170 = vadd.f32 0.0, %v7169
        %7171 = vmatmul.bf16.gmra.mxu0 %v7110
        %v7172 = vpop.f32.mrf.mxu0
        %v7173 = vadd.f32 0.0, %v7172
        %v7174 = vpop.f32.mrf.mxu0
        %v7175 = vadd.f32 0.0, %v7174
        %7176 = vmatmul.bf16.gmra.mxu0 %v7113
        %v7177 = vpop.f32.mrf.mxu0
        %v7178 = vadd.f32 0.0, %v7177
        %v7179 = vpop.f32.mrf.mxu0
        %v7180 = vadd.f32 0.0, %v7179
        %7181 = vmatmul.bf16.gmra.mxu0 %v7116
        %v7182 = vpop.f32.mrf.mxu0
        %v7183 = vadd.f32 0.0, %v7182
        %v7184 = vpop.f32.mrf.mxu0
        %v7185 = vadd.f32 0.0, %v7184
        %7186 = vmatmul.bf16.gmra.mxu0 %v7119
        %v7187 = vpop.f32.mrf.mxu0
        %v7188 = vadd.f32 0.0, %v7187
        %v7189 = vpop.f32.mrf.mxu0
        %v7190 = vadd.f32 0.0, %v7189
        %7191 = vmatmul.bf16.gmra.mxu0 %v7122
        %v7192 = vpop.f32.mrf.mxu0
        %v7193 = vadd.f32 0.0, %v7192
        %v7194 = vpop.f32.mrf.mxu0
        %v7195 = vadd.f32 0.0, %v7194
        %7196 = vmatmul.bf16.gmra.mxu0 %v7125
        %v7197 = vpop.f32.mrf.mxu0
        %v7198 = vadd.f32 0.0, %v7197
        %v7199 = vpop.f32.mrf.mxu0
        %v7200 = vadd.f32 0.0, %v7199
        %7201 = vmatmul.bf16.gmra.mxu0 %v7128
        %v7202 = vpop.f32.mrf.mxu0
        %v7203 = vadd.f32 0.0, %v7202
        %v7204 = vpop.f32.mrf.mxu0
        %v7205 = vadd.f32 0.0, %v7204
        %7206 = vmatmul.bf16.gmra.mxu0 %v7131
        %v7207 = vpop.f32.mrf.mxu0
        %v7208 = vadd.f32 0.0, %v7207
        %v7209 = vpop.f32.mrf.mxu0
        %v7210 = vadd.f32 0.0, %v7209
        %7211 = vmatmul.bf16.gmra.mxu0 %v7134
        %v7212 = vpop.f32.mrf.mxu0
        %v7213 = vadd.f32 0.0, %v7212
        %v7214 = vpop.f32.mrf.mxu0
        %v7215 = vadd.f32 0.0, %v7214
        %7216 = vmatmul.bf16.gmra.mxu0 %v7137
        %v7217 = vpop.f32.mrf.mxu0
        %v7218 = vadd.f32 0.0, %v7217
        %v7219 = vpop.f32.mrf.mxu0
        %v7220 = vadd.f32 0.0, %v7219
        %7221 = vmatmul.bf16.gmra.mxu0 %v7140
        %v7222 = vpop.f32.mrf.mxu0
        %v7223 = vadd.f32 0.0, %v7222
        %v7224 = vpop.f32.mrf.mxu0
        %v7225 = vadd.f32 0.0, %v7224
        %7226 = vmatmul.bf16.gmra.mxu0 %v7143
        %v7227 = vpop.f32.mrf.mxu0
        %v7228 = vadd.f32 0.0, %v7227
        %v7229 = vpop.f32.mrf.mxu0
        %v7230 = vadd.f32 0.0, %v7229
        %7231 = vmatmul.bf16.gmra.mxu0 %v7146
        %v7232 = vpop.f32.mrf.mxu0
        %v7233 = vadd.f32 0.0, %v7232
        %v7234 = vpop.f32.mrf.mxu0
        %v7235 = vadd.f32 0.0, %v7234
        %7236 = vdwg.mxu0
        %v7237 = vadd.f32 %v7003, %v7158
        %v7238 = vadd.f32 %v7004, %v7160
        %v7239 = vadd.f32 %v7005, %v7163
        %v7240 = vadd.f32 %v7006, %v7165
        %v7241 = vadd.f32 %v7007, %v7168
        %v7242 = vadd.f32 %v7008, %v7170
        %v7243 = vadd.f32 %v7009, %v7173
        %v7244 = vadd.f32 %v7010, %v7175
        %v7245 = vadd.f32 %v7011, %v7178
        %v7246 = vadd.f32 %v7012, %v7180
        %v7247 = vadd.f32 %v7013, %v7183
        %v7248 = vadd.f32 %v7014, %v7185
        %v7249 = vadd.f32 %v7015, %v7188
        %v7250 = vadd.f32 %v7016, %v7190
        %v7251 = vadd.f32 %v7017, %v7193
        %v7252 = vadd.f32 %v7018, %v7195
        %v7253 = vadd.f32 %v7019, %v7198
        %v7254 = vadd.f32 %v7020, %v7200
        %v7255 = vadd.f32 %v7021, %v7203
        %v7256 = vadd.f32 %v7022, %v7205
        %v7257 = vadd.f32 %v7023, %v7208
        %v7258 = vadd.f32 %v7024, %v7210
        %v7259 = vadd.f32 %v7025, %v7213
        %v7260 = vadd.f32 %v7026, %v7215
        %v7261 = vadd.f32 %v7027, %v7218
        %v7262 = vadd.f32 %v7028, %v7220
        %v7263 = vadd.f32 %v7029, %v7223
        %v7264 = vadd.f32 %v7030, %v7225
        %v7265 = vadd.f32 %v7031, %v7228
        %v7266 = vadd.f32 %v7032, %v7230
        %v7267 = vadd.f32 %v7033, %v7233
        %v7268 = vadd.f32 %v7034, %v7235
        %v7269 = vpack.c.bf16 %v6238, %v6237
        %v7270 = vpack.c.bf16 %v6240, %v6239
        %v7271 = vpack.c.bf16 %v6242, %v6241
        %v7272 = vpack.c.bf16 %v6244, %v6243
        %v7273 = vpack.c.bf16 %v6246, %v6245
        %v7274 = vpack.c.bf16 %v6248, %v6247
        %v7275 = vpack.c.bf16 %v6250, %v6249
        %v7276 = vpack.c.bf16 %v6252, %v6251
        %v7277 = vpack.c.bf16 %v6254, %v6253
        %v7278 = vpack.c.bf16 %v6256, %v6255
        %v7279 = vpack.c.bf16 %v6258, %v6257
        %v7280 = vpack.c.bf16 %v6260, %v6259
        %v7281 = vpack.c.bf16 %v6262, %v6261
        %v7282 = vpack.c.bf16 %v6264, %v6263
        %v7283 = vpack.c.bf16 %v6266, %v6265
        %v7284 = vpack.c.bf16 %v6268, %v6267
        %s7285 = scalar_lea.vmem %s6, 64
        %v7286 = vld [vmem:[%s7285] sm:$0xf]
        %v7287 = vld [vmem:[%s7285 + $0x4] sm:$0xf]
        %v7288 = vld [vmem:[%s7285 + $0x8] sm:$0xf]
        %v7289 = vld [vmem:[%s7285 + $0xc] sm:$0xf]
        %v7294 = vunpack.c.l.b16 %v7286
        %v7295 = vunpack.c.l.b16 %v7287
        %v7296 = vunpack.c.l.b16 %v7288
        %v7297 = vunpack.c.l.b16 %v7289
        %v7298 = vpack.c.b16 %v7295, %v7294
        %v7299 = vpack.c.b16 %v7297, %v7296
        %v7303 = vsel %vm6450, %v7269, 0
        %v7306 = vsel %vm6450, %v7270, 0
        %v7309 = vsel %vm6450, %v7271, 0
        %v7312 = vsel %vm6450, %v7272, 0
        %v7315 = vsel %vm6450, %v7273, 0
        %v7318 = vsel %vm6450, %v7274, 0
        %v7321 = vsel %vm6450, %v7275, 0
        %v7324 = vsel %vm6450, %v7276, 0
        %v7327 = vsel %vm6450, %v7277, 0
        %v7330 = vsel %vm6450, %v7278, 0
        %v7333 = vsel %vm6450, %v7279, 0
        %v7336 = vsel %vm6450, %v7280, 0
        %v7339 = vsel %vm6450, %v7281, 0
        %v7342 = vsel %vm6450, %v7282, 0
        %v7345 = vsel %vm6450, %v7283, 0
        %v7348 = vsel %vm6450, %v7284, 0
        %7350 = vmatpush.bf16.msra.mxu0 0
        %7351 = vmatpush.bf16.msra.mxu0 0
        %7352 = vmatpush.bf16.msra.mxu0 0
        %7353 = vmatpush.bf16.msra.mxu0 0
        %7354 = vmatpush.bf16.msra.mxu0 0
        %7355 = vmatpush.bf16.msra.mxu0 0
        %7356 = vmatpush.bf16.msra.mxu0 %v7299
        %7357 = vmatpush.bf16.msra.mxu0 %v7298
        %7358 = vmatmul.bf16.gmra.mxu0 %v7303
        %v7359 = vpop.f32.mrf.mxu0
        %v7360 = vadd.f32 0.0, %v7359
        %v7361 = vpop.f32.mrf.mxu0
        %v7362 = vadd.f32 0.0, %v7361
        %7363 = vmatmul.bf16.gmra.mxu0 %v7306
        %v7364 = vpop.f32.mrf.mxu0
        %v7365 = vadd.f32 0.0, %v7364
        %v7366 = vpop.f32.mrf.mxu0
        %v7367 = vadd.f32 0.0, %v7366
        %7368 = vmatmul.bf16.gmra.mxu0 %v7309
        %v7369 = vpop.f32.mrf.mxu0
        %v7370 = vadd.f32 0.0, %v7369
        %v7371 = vpop.f32.mrf.mxu0
        %v7372 = vadd.f32 0.0, %v7371
        %7373 = vmatmul.bf16.gmra.mxu0 %v7312
        %v7374 = vpop.f32.mrf.mxu0
        %v7375 = vadd.f32 0.0, %v7374
        %v7376 = vpop.f32.mrf.mxu0
        %v7377 = vadd.f32 0.0, %v7376
        %7378 = vmatmul.bf16.gmra.mxu0 %v7315
        %v7379 = vpop.f32.mrf.mxu0
        %v7380 = vadd.f32 0.0, %v7379
        %v7381 = vpop.f32.mrf.mxu0
        %v7382 = vadd.f32 0.0, %v7381
        %7383 = vmatmul.bf16.gmra.mxu0 %v7318
        %v7384 = vpop.f32.mrf.mxu0
        %v7385 = vadd.f32 0.0, %v7384
        %v7386 = vpop.f32.mrf.mxu0
        %v7387 = vadd.f32 0.0, %v7386
        %7388 = vmatmul.bf16.gmra.mxu0 %v7321
        %v7389 = vpop.f32.mrf.mxu0
        %v7390 = vadd.f32 0.0, %v7389
        %v7391 = vpop.f32.mrf.mxu0
        %v7392 = vadd.f32 0.0, %v7391
        %7393 = vmatmul.bf16.gmra.mxu0 %v7324
        %v7394 = vpop.f32.mrf.mxu0
        %v7395 = vadd.f32 0.0, %v7394
        %v7396 = vpop.f32.mrf.mxu0
        %v7397 = vadd.f32 0.0, %v7396
        %7398 = vmatmul.bf16.gmra.mxu0 %v7327
        %v7399 = vpop.f32.mrf.mxu0
        %v7400 = vadd.f32 0.0, %v7399
        %v7401 = vpop.f32.mrf.mxu0
        %v7402 = vadd.f32 0.0, %v7401
        %7403 = vmatmul.bf16.gmra.mxu0 %v7330
        %v7404 = vpop.f32.mrf.mxu0
        %v7405 = vadd.f32 0.0, %v7404
        %v7406 = vpop.f32.mrf.mxu0
        %v7407 = vadd.f32 0.0, %v7406
        %7408 = vmatmul.bf16.gmra.mxu0 %v7333
        %v7409 = vpop.f32.mrf.mxu0
        %v7410 = vadd.f32 0.0, %v7409
        %v7411 = vpop.f32.mrf.mxu0
        %v7412 = vadd.f32 0.0, %v7411
        %7413 = vmatmul.bf16.gmra.mxu0 %v7336
        %v7414 = vpop.f32.mrf.mxu0
        %v7415 = vadd.f32 0.0, %v7414
        %v7416 = vpop.f32.mrf.mxu0
        %v7417 = vadd.f32 0.0, %v7416
        %7418 = vmatmul.bf16.gmra.mxu0 %v7339
        %v7419 = vpop.f32.mrf.mxu0
        %v7420 = vadd.f32 0.0, %v7419
        %v7421 = vpop.f32.mrf.mxu0
        %v7422 = vadd.f32 0.0, %v7421
        %7423 = vmatmul.bf16.gmra.mxu0 %v7342
        %v7424 = vpop.f32.mrf.mxu0
        %v7425 = vadd.f32 0.0, %v7424
        %v7426 = vpop.f32.mrf.mxu0
        %v7427 = vadd.f32 0.0, %v7426
        %7428 = vmatmul.bf16.gmra.mxu0 %v7345
        %v7429 = vpop.f32.mrf.mxu0
        %v7430 = vadd.f32 0.0, %v7429
        %v7431 = vpop.f32.mrf.mxu0
        %v7432 = vadd.f32 0.0, %v7431
        %7433 = vmatmul.bf16.gmra.mxu0 %v7348
        %v7434 = vpop.f32.mrf.mxu0
        %v7435 = vadd.f32 0.0, %v7434
        %v7436 = vpop.f32.mrf.mxu0
        %v7437 = vadd.f32 0.0, %v7436
        %7438 = vdwg.mxu0
        %v7439 = vadd.f32 %v7237, %v7360
        %v7440 = vadd.f32 %v7238, %v7362
        %v7441 = vadd.f32 %v7239, %v7365
        %v7442 = vadd.f32 %v7240, %v7367
        %v7443 = vadd.f32 %v7241, %v7370
        %v7444 = vadd.f32 %v7242, %v7372
        %v7445 = vadd.f32 %v7243, %v7375
        %v7446 = vadd.f32 %v7244, %v7377
        %v7447 = vadd.f32 %v7245, %v7380
        %v7448 = vadd.f32 %v7246, %v7382
        %v7449 = vadd.f32 %v7247, %v7385
        %v7450 = vadd.f32 %v7248, %v7387
        %v7451 = vadd.f32 %v7249, %v7390
        %v7452 = vadd.f32 %v7250, %v7392
        %v7453 = vadd.f32 %v7251, %v7395
        %v7454 = vadd.f32 %v7252, %v7397
        %v7455 = vadd.f32 %v7253, %v7400
        %v7456 = vadd.f32 %v7254, %v7402
        %v7457 = vadd.f32 %v7255, %v7405
        %v7458 = vadd.f32 %v7256, %v7407
        %v7459 = vadd.f32 %v7257, %v7410
        %v7460 = vadd.f32 %v7258, %v7412
        %v7461 = vadd.f32 %v7259, %v7415
        %v7462 = vadd.f32 %v7260, %v7417
        %v7463 = vadd.f32 %v7261, %v7420
        %v7464 = vadd.f32 %v7262, %v7422
        %v7465 = vadd.f32 %v7263, %v7425
        %v7466 = vadd.f32 %v7264, %v7427
        %v7467 = vadd.f32 %v7265, %v7430
        %v7468 = vadd.f32 %v7266, %v7432
        %v7469 = vadd.f32 %v7267, %v7435
        %v7470 = vadd.f32 %v7268, %v7437
        %v7471 = vmul.f32 %v6799, %v2443
        %v7472 = vmul.f32 %v6798, %v2448
        %v7473 = vmul.f32 %v6797, %v2453
        %v7474 = vmul.f32 %v6796, %v2458
        %v7475 = vmul.f32 %v6795, %v2463
        %v7476 = vmul.f32 %v6794, %v2468
        %v7477 = vmul.f32 %v6793, %v2473
        %v7478 = vmul.f32 %v6792, %v2478
        %v7479 = vmul.f32 %v6791, %v2483
        %v7480 = vmul.f32 %v6790, %v2488
        %v7481 = vmul.f32 %v6789, %v2493
        %v7482 = vmul.f32 %v6788, %v2498
        %v7483 = vmul.f32 %v6787, %v2503
        %v7484 = vmul.f32 %v6786, %v2508
        %v7485 = vmul.f32 %v6785, %v2513
        %v7486 = vmul.f32 %v6784, %v2518
        %v7487 = vmul.f32 %v6783, %v2523
        %v7488 = vmul.f32 %v6782, %v2528
        %v7489 = vmul.f32 %v6781, %v2533
        %v7490 = vmul.f32 %v6780, %v2538
        %v7491 = vmul.f32 %v6779, %v2543
        %v7492 = vmul.f32 %v6778, %v2548
        %v7493 = vmul.f32 %v6777, %v2553
        %v7494 = vmul.f32 %v6776, %v2558
        %v7495 = vmul.f32 %v6775, %v2563
        %v7496 = vmul.f32 %v6774, %v2568
        %v7497 = vmul.f32 %v6773, %v2573
        %v7498 = vmul.f32 %v6772, %v2578
        %v7499 = vmul.f32 %v6771, %v2583
        %v7500 = vmul.f32 %v6770, %v2588
        %v7501 = vmul.f32 %v6769, %v2593
        %v7502 = vmul.f32 %v6800, %v2598
        %v7503 = vpack.c.bf16 %v7472, %v7471
        %v7504 = vpack.c.bf16 %v7474, %v7473
        %v7505 = vpack.c.bf16 %v7476, %v7475
        %v7506 = vpack.c.bf16 %v7478, %v7477
        %v7507 = vpack.c.bf16 %v7480, %v7479
        %v7508 = vpack.c.bf16 %v7482, %v7481
        %v7509 = vpack.c.bf16 %v7484, %v7483
        %v7510 = vpack.c.bf16 %v7486, %v7485
        %v7511 = vpack.c.bf16 %v7488, %v7487
        %v7512 = vpack.c.bf16 %v7490, %v7489
        %v7513 = vpack.c.bf16 %v7492, %v7491
        %v7514 = vpack.c.bf16 %v7494, %v7493
        %v7515 = vpack.c.bf16 %v7496, %v7495
        %v7516 = vpack.c.bf16 %v7498, %v7497
        %v7517 = vpack.c.bf16 %v7500, %v7499
        %v7518 = vpack.c.bf16 %v7502, %v7501
        %s7519 = scalar_lea.vmem %s6, 80
        %v7520 = vld [vmem:[%s7519] sm:$0xf]
        %v7521 = vld [vmem:[%s7519 + $0x4] sm:$0xf]
        %v7522 = vld [vmem:[%s7519 + $0x8] sm:$0xf]
        %v7523 = vld [vmem:[%s7519 + $0xc] sm:$0xf]
        %v7528 = vunpack.c.l.b16 %v7520
        %v7529 = vunpack.c.l.b16 %v7521
        %v7530 = vunpack.c.l.b16 %v7522
        %v7531 = vunpack.c.l.b16 %v7523
        %v7532 = vpack.c.b16 %v7529, %v7528
        %v7533 = vpack.c.b16 %v7531, %v7530
        %v7537 = vsel %vm6450, %v7503, 0
        %v7540 = vsel %vm6450, %v7504, 0
        %v7543 = vsel %vm6450, %v7505, 0
        %v7546 = vsel %vm6450, %v7506, 0
        %v7549 = vsel %vm6450, %v7507, 0
        %v7552 = vsel %vm6450, %v7508, 0
        %v7555 = vsel %vm6450, %v7509, 0
        %v7558 = vsel %vm6450, %v7510, 0
        %v7561 = vsel %vm6450, %v7511, 0
        %v7564 = vsel %vm6450, %v7512, 0
        %v7567 = vsel %vm6450, %v7513, 0
        %v7570 = vsel %vm6450, %v7514, 0
        %v7573 = vsel %vm6450, %v7515, 0
        %v7576 = vsel %vm6450, %v7516, 0
        %v7579 = vsel %vm6450, %v7517, 0
        %v7582 = vsel %vm6450, %v7518, 0
        %7584 = vmatpush.bf16.msra.mxu0 0
        %7585 = vmatpush.bf16.msra.mxu0 0
        %7586 = vmatpush.bf16.msra.mxu0 0
        %7587 = vmatpush.bf16.msra.mxu0 0
        %7588 = vmatpush.bf16.msra.mxu0 0
        %7589 = vmatpush.bf16.msra.mxu0 0
        %7590 = vmatpush.bf16.msra.mxu0 %v7533
        %7591 = vmatpush.bf16.msra.mxu0 %v7532
        %7592 = vmatmul.bf16.gmra.mxu0 %v7537
        %v7593 = vpop.f32.mrf.mxu0
        %v7594 = vadd.f32 0.0, %v7593
        %v7595 = vpop.f32.mrf.mxu0
        %v7596 = vadd.f32 0.0, %v7595
        %7597 = vmatmul.bf16.gmra.mxu0 %v7540
        %v7598 = vpop.f32.mrf.mxu0
        %v7599 = vadd.f32 0.0, %v7598
        %v7600 = vpop.f32.mrf.mxu0
        %v7601 = vadd.f32 0.0, %v7600
        %7602 = vmatmul.bf16.gmra.mxu0 %v7543
        %v7603 = vpop.f32.mrf.mxu0
        %v7604 = vadd.f32 0.0, %v7603
        %v7605 = vpop.f32.mrf.mxu0
        %v7606 = vadd.f32 0.0, %v7605
        %7607 = vmatmul.bf16.gmra.mxu0 %v7546
        %v7608 = vpop.f32.mrf.mxu0
        %v7609 = vadd.f32 0.0, %v7608
        %v7610 = vpop.f32.mrf.mxu0
        %v7611 = vadd.f32 0.0, %v7610
        %7612 = vmatmul.bf16.gmra.mxu0 %v7549
        %v7613 = vpop.f32.mrf.mxu0
        %v7614 = vadd.f32 0.0, %v7613
        %v7615 = vpop.f32.mrf.mxu0
        %v7616 = vadd.f32 0.0, %v7615
        %7617 = vmatmul.bf16.gmra.mxu0 %v7552
        %v7618 = vpop.f32.mrf.mxu0
        %v7619 = vadd.f32 0.0, %v7618
        %v7620 = vpop.f32.mrf.mxu0
        %v7621 = vadd.f32 0.0, %v7620
        %7622 = vmatmul.bf16.gmra.mxu0 %v7555
        %v7623 = vpop.f32.mrf.mxu0
        %v7624 = vadd.f32 0.0, %v7623
        %v7625 = vpop.f32.mrf.mxu0
        %v7626 = vadd.f32 0.0, %v7625
        %7627 = vmatmul.bf16.gmra.mxu0 %v7558
        %v7628 = vpop.f32.mrf.mxu0
        %v7629 = vadd.f32 0.0, %v7628
        %v7630 = vpop.f32.mrf.mxu0
        %v7631 = vadd.f32 0.0, %v7630
        %7632 = vmatmul.bf16.gmra.mxu0 %v7561
        %v7633 = vpop.f32.mrf.mxu0
        %v7634 = vadd.f32 0.0, %v7633
        %v7635 = vpop.f32.mrf.mxu0
        %v7636 = vadd.f32 0.0, %v7635
        %7637 = vmatmul.bf16.gmra.mxu0 %v7564
        %v7638 = vpop.f32.mrf.mxu0
        %v7639 = vadd.f32 0.0, %v7638
        %v7640 = vpop.f32.mrf.mxu0
        %v7641 = vadd.f32 0.0, %v7640
        %7642 = vmatmul.bf16.gmra.mxu0 %v7567
        %v7643 = vpop.f32.mrf.mxu0
        %v7644 = vadd.f32 0.0, %v7643
        %v7645 = vpop.f32.mrf.mxu0
        %v7646 = vadd.f32 0.0, %v7645
        %7647 = vmatmul.bf16.gmra.mxu0 %v7570
        %v7648 = vpop.f32.mrf.mxu0
        %v7649 = vadd.f32 0.0, %v7648
        %v7650 = vpop.f32.mrf.mxu0
        %v7651 = vadd.f32 0.0, %v7650
        %7652 = vmatmul.bf16.gmra.mxu0 %v7573
        %v7653 = vpop.f32.mrf.mxu0
        %v7654 = vadd.f32 0.0, %v7653
        %v7655 = vpop.f32.mrf.mxu0
        %v7656 = vadd.f32 0.0, %v7655
        %7657 = vmatmul.bf16.gmra.mxu0 %v7576
        %v7658 = vpop.f32.mrf.mxu0
        %v7659 = vadd.f32 0.0, %v7658
        %v7660 = vpop.f32.mrf.mxu0
        %v7661 = vadd.f32 0.0, %v7660
        %7662 = vmatmul.bf16.gmra.mxu0 %v7579
        %v7663 = vpop.f32.mrf.mxu0
        %v7664 = vadd.f32 0.0, %v7663
        %v7665 = vpop.f32.mrf.mxu0
        %v7666 = vadd.f32 0.0, %v7665
        %7667 = vmatmul.bf16.gmra.mxu0 %v7582
        %v7668 = vpop.f32.mrf.mxu0
        %v7669 = vadd.f32 0.0, %v7668
        %v7670 = vpop.f32.mrf.mxu0
        %v7671 = vadd.f32 0.0, %v7670
        %7672 = vdwg.mxu0
        %v7673 = vadd.f32 %v7439, %v7594
        %v7674 = vadd.f32 %v7440, %v7596
        %v7675 = vadd.f32 %v7441, %v7599
        %v7676 = vadd.f32 %v7442, %v7601
        %v7677 = vadd.f32 %v7443, %v7604
        %v7678 = vadd.f32 %v7444, %v7606
        %v7679 = vadd.f32 %v7445, %v7609
        %v7680 = vadd.f32 %v7446, %v7611
        %v7681 = vadd.f32 %v7447, %v7614
        %v7682 = vadd.f32 %v7448, %v7616
        %v7683 = vadd.f32 %v7449, %v7619
        %v7684 = vadd.f32 %v7450, %v7621
        %v7685 = vadd.f32 %v7451, %v7624
        %v7686 = vadd.f32 %v7452, %v7626
        %v7687 = vadd.f32 %v7453, %v7629
        %v7688 = vadd.f32 %v7454, %v7631
        %v7689 = vadd.f32 %v7455, %v7634
        %v7690 = vadd.f32 %v7456, %v7636
        %v7691 = vadd.f32 %v7457, %v7639
        %v7692 = vadd.f32 %v7458, %v7641
        %v7693 = vadd.f32 %v7459, %v7644
        %v7694 = vadd.f32 %v7460, %v7646
        %v7695 = vadd.f32 %v7461, %v7649
        %v7696 = vadd.f32 %v7462, %v7651
        %v7697 = vadd.f32 %v7463, %v7654
        %v7698 = vadd.f32 %v7464, %v7656
        %v7699 = vadd.f32 %v7465, %v7659
        %v7700 = vadd.f32 %v7466, %v7661
        %v7701 = vadd.f32 %v7467, %v7664
        %v7702 = vadd.f32 %v7468, %v7666
        %v7703 = vadd.f32 %v7469, %v7669
        %v7704 = vadd.f32 %v7470, %v7671
        %v7705 = vmul.f32 %v6330, %v2858
        %v7706 = vmul.f32 %v6329, %v2863
        %v7707 = vmul.f32 %v6328, %v2868
        %v7708 = vmul.f32 %v6327, %v2873
        %v7709 = vmul.f32 %v6326, %v2878
        %v7710 = vmul.f32 %v6325, %v2883
        %v7711 = vmul.f32 %v6324, %v2888
        %v7712 = vmul.f32 %v6323, %v2893
        %v7713 = vmul.f32 %v6322, %v2898
        %v7714 = vmul.f32 %v6321, %v2903
        %v7715 = vmul.f32 %v6320, %v2908
        %v7716 = vmul.f32 %v6319, %v2913
        %v7717 = vmul.f32 %v6318, %v2918
        %v7718 = vmul.f32 %v6317, %v2923
        %v7719 = vmul.f32 %v6316, %v2928
        %v7720 = vmul.f32 %v6315, %v2933
        %v7721 = vmul.f32 %v6314, %v2938
        %v7722 = vmul.f32 %v6313, %v2943
        %v7723 = vmul.f32 %v6312, %v2948
        %v7724 = vmul.f32 %v6311, %v2953
        %v7725 = vmul.f32 %v6310, %v2958
        %v7726 = vmul.f32 %v6309, %v2963
        %v7727 = vmul.f32 %v6308, %v2968
        %v7728 = vmul.f32 %v6307, %v2973
        %v7729 = vmul.f32 %v6306, %v2978
        %v7730 = vmul.f32 %v6305, %v2983
        %v7731 = vmul.f32 %v6304, %v2988
        %v7732 = vmul.f32 %v6303, %v2993
        %v7733 = vmul.f32 %v6302, %v2998
        %v7734 = vmul.f32 %v6301, %v3003
        %v7735 = vmul.f32 %v6332, %v3008
        %v7736 = vmul.f32 %v6331, %v3013
        %v7737 = vpack.c.bf16 %v7706, %v7705
        %v7738 = vpack.c.bf16 %v7708, %v7707
        %v7739 = vpack.c.bf16 %v7710, %v7709
        %v7740 = vpack.c.bf16 %v7712, %v7711
        %v7741 = vpack.c.bf16 %v7714, %v7713
        %v7742 = vpack.c.bf16 %v7716, %v7715
        %v7743 = vpack.c.bf16 %v7718, %v7717
        %v7744 = vpack.c.bf16 %v7720, %v7719
        %v7745 = vpack.c.bf16 %v7722, %v7721
        %v7746 = vpack.c.bf16 %v7724, %v7723
        %v7747 = vpack.c.bf16 %v7726, %v7725
        %v7748 = vpack.c.bf16 %v7728, %v7727
        %v7749 = vpack.c.bf16 %v7730, %v7729
        %v7750 = vpack.c.bf16 %v7732, %v7731
        %v7751 = vpack.c.bf16 %v7734, %v7733
        %v7752 = vpack.c.bf16 %v7736, %v7735
        %s7753 = scalar_lea.vmem %s6, 96
        %v7754 = vld [vmem:[%s7753] sm:$0xf]
        %v7755 = vld [vmem:[%s7753 + $0x4] sm:$0xf]
        %v7756 = vld [vmem:[%s7753 + $0x8] sm:$0xf]
        %v7757 = vld [vmem:[%s7753 + $0xc] sm:$0xf]
        %v7762 = vunpack.c.l.b16 %v7754
        %v7763 = vunpack.c.l.b16 %v7755
        %v7764 = vunpack.c.l.b16 %v7756
        %v7765 = vunpack.c.l.b16 %v7757
        %v7766 = vpack.c.b16 %v7763, %v7762
        %v7767 = vpack.c.b16 %v7765, %v7764
        %v7771 = vsel %vm6450, %v7737, 0
        %v7774 = vsel %vm6450, %v7738, 0
        %v7777 = vsel %vm6450, %v7739, 0
        %v7780 = vsel %vm6450, %v7740, 0
        %v7783 = vsel %vm6450, %v7741, 0
        %v7786 = vsel %vm6450, %v7742, 0
        %v7789 = vsel %vm6450, %v7743, 0
        %v7792 = vsel %vm6450, %v7744, 0
        %v7795 = vsel %vm6450, %v7745, 0
        %v7798 = vsel %vm6450, %v7746, 0
        %v7801 = vsel %vm6450, %v7747, 0
        %v7804 = vsel %vm6450, %v7748, 0
        %v7807 = vsel %vm6450, %v7749, 0
        %v7810 = vsel %vm6450, %v7750, 0
        %v7813 = vsel %vm6450, %v7751, 0
        %v7816 = vsel %vm6450, %v7752, 0
        %7818 = vmatpush.bf16.msra.mxu0 0
        %7819 = vmatpush.bf16.msra.mxu0 0
        %7820 = vmatpush.bf16.msra.mxu0 0
        %7821 = vmatpush.bf16.msra.mxu0 0
        %7822 = vmatpush.bf16.msra.mxu0 0
        %7823 = vmatpush.bf16.msra.mxu0 0
        %7824 = vmatpush.bf16.msra.mxu0 %v7767
        %7825 = vmatpush.bf16.msra.mxu0 %v7766
        %7826 = vmatmul.bf16.gmra.mxu0 %v7771
        %v7827 = vpop.f32.mrf.mxu0
        %v7828 = vadd.f32 0.0, %v7827
        %v7829 = vpop.f32.mrf.mxu0
        %v7830 = vadd.f32 0.0, %v7829
        %7831 = vmatmul.bf16.gmra.mxu0 %v7774
        %v7832 = vpop.f32.mrf.mxu0
        %v7833 = vadd.f32 0.0, %v7832
        %v7834 = vpop.f32.mrf.mxu0
        %v7835 = vadd.f32 0.0, %v7834
        %7836 = vmatmul.bf16.gmra.mxu0 %v7777
        %v7837 = vpop.f32.mrf.mxu0
        %v7838 = vadd.f32 0.0, %v7837
        %v7839 = vpop.f32.mrf.mxu0
        %v7840 = vadd.f32 0.0, %v7839
        %7841 = vmatmul.bf16.gmra.mxu0 %v7780
        %v7842 = vpop.f32.mrf.mxu0
        %v7843 = vadd.f32 0.0, %v7842
        %v7844 = vpop.f32.mrf.mxu0
        %v7845 = vadd.f32 0.0, %v7844
        %7846 = vmatmul.bf16.gmra.mxu0 %v7783
        %v7847 = vpop.f32.mrf.mxu0
        %v7848 = vadd.f32 0.0, %v7847
        %v7849 = vpop.f32.mrf.mxu0
        %v7850 = vadd.f32 0.0, %v7849
        %7851 = vmatmul.bf16.gmra.mxu0 %v7786
        %v7852 = vpop.f32.mrf.mxu0
        %v7853 = vadd.f32 0.0, %v7852
        %v7854 = vpop.f32.mrf.mxu0
        %v7855 = vadd.f32 0.0, %v7854
        %7856 = vmatmul.bf16.gmra.mxu0 %v7789
        %v7857 = vpop.f32.mrf.mxu0
        %v7858 = vadd.f32 0.0, %v7857
        %v7859 = vpop.f32.mrf.mxu0
        %v7860 = vadd.f32 0.0, %v7859
        %7861 = vmatmul.bf16.gmra.mxu0 %v7792
        %v7862 = vpop.f32.mrf.mxu0
        %v7863 = vadd.f32 0.0, %v7862
        %v7864 = vpop.f32.mrf.mxu0
        %v7865 = vadd.f32 0.0, %v7864
        %7866 = vmatmul.bf16.gmra.mxu0 %v7795
        %v7867 = vpop.f32.mrf.mxu0
        %v7868 = vadd.f32 0.0, %v7867
        %v7869 = vpop.f32.mrf.mxu0
        %v7870 = vadd.f32 0.0, %v7869
        %7871 = vmatmul.bf16.gmra.mxu0 %v7798
        %v7872 = vpop.f32.mrf.mxu0
        %v7873 = vadd.f32 0.0, %v7872
        %v7874 = vpop.f32.mrf.mxu0
        %v7875 = vadd.f32 0.0, %v7874
        %7876 = vmatmul.bf16.gmra.mxu0 %v7801
        %v7877 = vpop.f32.mrf.mxu0
        %v7878 = vadd.f32 0.0, %v7877
        %v7879 = vpop.f32.mrf.mxu0
        %v7880 = vadd.f32 0.0, %v7879
        %7881 = vmatmul.bf16.gmra.mxu0 %v7804
        %v7882 = vpop.f32.mrf.mxu0
        %v7883 = vadd.f32 0.0, %v7882
        %v7884 = vpop.f32.mrf.mxu0
        %v7885 = vadd.f32 0.0, %v7884
        %7886 = vmatmul.bf16.gmra.mxu0 %v7807
        %v7887 = vpop.f32.mrf.mxu0
        %v7888 = vadd.f32 0.0, %v7887
        %v7889 = vpop.f32.mrf.mxu0
        %v7890 = vadd.f32 0.0, %v7889
        %7891 = vmatmul.bf16.gmra.mxu0 %v7810
        %v7892 = vpop.f32.mrf.mxu0
        %v7893 = vadd.f32 0.0, %v7892
        %v7894 = vpop.f32.mrf.mxu0
        %v7895 = vadd.f32 0.0, %v7894
        %7896 = vmatmul.bf16.gmra.mxu0 %v7813
        %v7897 = vpop.f32.mrf.mxu0
        %v7898 = vadd.f32 0.0, %v7897
        %v7899 = vpop.f32.mrf.mxu0
        %v7900 = vadd.f32 0.0, %v7899
        %7901 = vmatmul.bf16.gmra.mxu0 %v7816
        %v7902 = vpop.f32.mrf.mxu0
        %v7903 = vadd.f32 0.0, %v7902
        %v7904 = vpop.f32.mrf.mxu0
        %v7905 = vadd.f32 0.0, %v7904
        %7906 = vdwg.mxu0
        %v7907 = vadd.f32 %v7673, %v7828
        %v7908 = vadd.f32 %v7674, %v7830
        %v7909 = vadd.f32 %v7675, %v7833
        %v7910 = vadd.f32 %v7676, %v7835
        %v7911 = vadd.f32 %v7677, %v7838
        %v7912 = vadd.f32 %v7678, %v7840
        %v7913 = vadd.f32 %v7679, %v7843
        %v7914 = vadd.f32 %v7680, %v7845
        %v7915 = vadd.f32 %v7681, %v7848
        %v7916 = vadd.f32 %v7682, %v7850
        %v7917 = vadd.f32 %v7683, %v7853
        %v7918 = vadd.f32 %v7684, %v7855
        %v7919 = vadd.f32 %v7685, %v7858
        %v7920 = vadd.f32 %v7686, %v7860
        %v7921 = vadd.f32 %v7687, %v7863
        %v7922 = vadd.f32 %v7688, %v7865
        %v7923 = vadd.f32 %v7689, %v7868
        %v7924 = vadd.f32 %v7690, %v7870
        %v7925 = vadd.f32 %v7691, %v7873
        %v7926 = vadd.f32 %v7692, %v7875
        %v7927 = vadd.f32 %v7693, %v7878
        %v7928 = vadd.f32 %v7694, %v7880
        %v7929 = vadd.f32 %v7695, %v7883
        %v7930 = vadd.f32 %v7696, %v7885
        %v7931 = vadd.f32 %v7697, %v7888
        %v7932 = vadd.f32 %v7698, %v7890
        %v7933 = vadd.f32 %v7699, %v7893
        %v7934 = vadd.f32 %v7700, %v7895
        %v7935 = vadd.f32 %v7701, %v7898
        %v7936 = vadd.f32 %v7702, %v7900
        %v7937 = vadd.f32 %v7703, %v7903
        %v7938 = vadd.f32 %v7704, %v7905
        %v7939 = vmul.f32 %v6239, %v3273
        %v7940 = vmul.f32 %v6240, %v3278
        %v7941 = vmul.f32 %v6241, %v3283
        %v7942 = vmul.f32 %v6242, %v3288
        %v7943 = vmul.f32 %v6243, %v3293
        %v7944 = vmul.f32 %v6244, %v3298
        %v7945 = vmul.f32 %v6245, %v3303
        %v7946 = vmul.f32 %v6246, %v3308
        %v7947 = vmul.f32 %v6247, %v3313
        %v7948 = vmul.f32 %v6248, %v3318
        %v7949 = vmul.f32 %v6249, %v3323
        %v7950 = vmul.f32 %v6250, %v3328
        %v7951 = vmul.f32 %v6251, %v3333
        %v7952 = vmul.f32 %v6252, %v3338
        %v7953 = vmul.f32 %v6253, %v3343
        %v7954 = vmul.f32 %v6254, %v3348
        %v7955 = vmul.f32 %v6255, %v3353
        %v7956 = vmul.f32 %v6256, %v3358
        %v7957 = vmul.f32 %v6257, %v3363
        %v7958 = vmul.f32 %v6258, %v3368
        %v7959 = vmul.f32 %v6259, %v3373
        %v7960 = vmul.f32 %v6260, %v3378
        %v7961 = vmul.f32 %v6261, %v3383
        %v7962 = vmul.f32 %v6262, %v3388
        %v7963 = vmul.f32 %v6263, %v3393
        %v7964 = vmul.f32 %v6264, %v3398
        %v7965 = vmul.f32 %v6265, %v3403
        %v7966 = vmul.f32 %v6266, %v3408
        %v7967 = vmul.f32 %v6267, %v3413
        %v7968 = vmul.f32 %v6268, %v3418
        %v7969 = vmul.f32 %v6237, %v3423
        %v7970 = vmul.f32 %v6238, %v3428
        %v7971 = vpack.c.bf16 %v7940, %v7939
        %v7972 = vpack.c.bf16 %v7942, %v7941
        %v7973 = vpack.c.bf16 %v7944, %v7943
        %v7974 = vpack.c.bf16 %v7946, %v7945
        %v7975 = vpack.c.bf16 %v7948, %v7947
        %v7976 = vpack.c.bf16 %v7950, %v7949
        %v7977 = vpack.c.bf16 %v7952, %v7951
        %v7978 = vpack.c.bf16 %v7954, %v7953
        %v7979 = vpack.c.bf16 %v7956, %v7955
        %v7980 = vpack.c.bf16 %v7958, %v7957
        %v7981 = vpack.c.bf16 %v7960, %v7959
        %v7982 = vpack.c.bf16 %v7962, %v7961
        %v7983 = vpack.c.bf16 %v7964, %v7963
        %v7984 = vpack.c.bf16 %v7966, %v7965
        %v7985 = vpack.c.bf16 %v7968, %v7967
        %v7986 = vpack.c.bf16 %v7970, %v7969
        %s7987 = scalar_lea.vmem %s6, 112
        %v7988 = vld [vmem:[%s7987] sm:$0xf]
        %v7989 = vld [vmem:[%s7987 + $0x4] sm:$0xf]
        %v7990 = vld [vmem:[%s7987 + $0x8] sm:$0xf]
        %v7991 = vld [vmem:[%s7987 + $0xc] sm:$0xf]
        %v7996 = vunpack.c.l.b16 %v7988
        %v7997 = vunpack.c.l.b16 %v7989
        %v7998 = vunpack.c.l.b16 %v7990
        %v7999 = vunpack.c.l.b16 %v7991
        %v8000 = vpack.c.b16 %v7997, %v7996
        %v8001 = vpack.c.b16 %v7999, %v7998
        %v8005 = vsel %vm6450, %v7971, 0
        %v8008 = vsel %vm6450, %v7972, 0
        %v8011 = vsel %vm6450, %v7973, 0
        %v8014 = vsel %vm6450, %v7974, 0
        %v8017 = vsel %vm6450, %v7975, 0
        %v8020 = vsel %vm6450, %v7976, 0
        %v8023 = vsel %vm6450, %v7977, 0
        %v8026 = vsel %vm6450, %v7978, 0
        %v8029 = vsel %vm6450, %v7979, 0
        %v8032 = vsel %vm6450, %v7980, 0
        %v8035 = vsel %vm6450, %v7981, 0
        %v8038 = vsel %vm6450, %v7982, 0
        %v8041 = vsel %vm6450, %v7983, 0
        %v8044 = vsel %vm6450, %v7984, 0
        %v8047 = vsel %vm6450, %v7985, 0
        %v8050 = vsel %vm6450, %v7986, 0
        %8052 = vmatpush.bf16.msra.mxu0 0
        %8053 = vmatpush.bf16.msra.mxu0 0
        %8054 = vmatpush.bf16.msra.mxu0 0
        %8055 = vmatpush.bf16.msra.mxu0 0
        %8056 = vmatpush.bf16.msra.mxu0 0
        %8057 = vmatpush.bf16.msra.mxu0 0
        %8058 = vmatpush.bf16.msra.mxu0 %v8001
        %8059 = vmatpush.bf16.msra.mxu0 %v8000
        %8060 = vmatmul.bf16.gmra.mxu0 %v8005
        %v8061 = vpop.f32.mrf.mxu0
        %v8062 = vadd.f32 0.0, %v8061
        %v8063 = vpop.f32.mrf.mxu0
        %v8064 = vadd.f32 0.0, %v8063
        %8065 = vmatmul.bf16.gmra.mxu0 %v8008
        %v8066 = vpop.f32.mrf.mxu0
        %v8067 = vadd.f32 0.0, %v8066
        %v8068 = vpop.f32.mrf.mxu0
        %v8069 = vadd.f32 0.0, %v8068
        %8070 = vmatmul.bf16.gmra.mxu0 %v8011
        %v8071 = vpop.f32.mrf.mxu0
        %v8072 = vadd.f32 0.0, %v8071
        %v8073 = vpop.f32.mrf.mxu0
        %v8074 = vadd.f32 0.0, %v8073
        %8075 = vmatmul.bf16.gmra.mxu0 %v8014
        %v8076 = vpop.f32.mrf.mxu0
        %v8077 = vadd.f32 0.0, %v8076
        %v8078 = vpop.f32.mrf.mxu0
        %v8079 = vadd.f32 0.0, %v8078
        %8080 = vmatmul.bf16.gmra.mxu0 %v8017
        %v8081 = vpop.f32.mrf.mxu0
        %v8082 = vadd.f32 0.0, %v8081
        %v8083 = vpop.f32.mrf.mxu0
        %v8084 = vadd.f32 0.0, %v8083
        %8085 = vmatmul.bf16.gmra.mxu0 %v8020
        %v8086 = vpop.f32.mrf.mxu0
        %v8087 = vadd.f32 0.0, %v8086
        %v8088 = vpop.f32.mrf.mxu0
        %v8089 = vadd.f32 0.0, %v8088
        %8090 = vmatmul.bf16.gmra.mxu0 %v8023
        %v8091 = vpop.f32.mrf.mxu0
        %v8092 = vadd.f32 0.0, %v8091
        %v8093 = vpop.f32.mrf.mxu0
        %v8094 = vadd.f32 0.0, %v8093
        %8095 = vmatmul.bf16.gmra.mxu0 %v8026
        %v8096 = vpop.f32.mrf.mxu0
        %v8097 = vadd.f32 0.0, %v8096
        %v8098 = vpop.f32.mrf.mxu0
        %v8099 = vadd.f32 0.0, %v8098
        %8100 = vmatmul.bf16.gmra.mxu0 %v8029
        %v8101 = vpop.f32.mrf.mxu0
        %v8102 = vadd.f32 0.0, %v8101
        %v8103 = vpop.f32.mrf.mxu0
        %v8104 = vadd.f32 0.0, %v8103
        %8105 = vmatmul.bf16.gmra.mxu0 %v8032
        %v8106 = vpop.f32.mrf.mxu0
        %v8107 = vadd.f32 0.0, %v8106
        %v8108 = vpop.f32.mrf.mxu0
        %v8109 = vadd.f32 0.0, %v8108
        %8110 = vmatmul.bf16.gmra.mxu0 %v8035
        %v8111 = vpop.f32.mrf.mxu0
        %v8112 = vadd.f32 0.0, %v8111
        %v8113 = vpop.f32.mrf.mxu0
        %v8114 = vadd.f32 0.0, %v8113
        %8115 = vmatmul.bf16.gmra.mxu0 %v8038
        %v8116 = vpop.f32.mrf.mxu0
        %v8117 = vadd.f32 0.0, %v8116
        %v8118 = vpop.f32.mrf.mxu0
        %v8119 = vadd.f32 0.0, %v8118
        %8120 = vmatmul.bf16.gmra.mxu0 %v8041
        %v8121 = vpop.f32.mrf.mxu0
        %v8122 = vadd.f32 0.0, %v8121
        %v8123 = vpop.f32.mrf.mxu0
        %v8124 = vadd.f32 0.0, %v8123
        %8125 = vmatmul.bf16.gmra.mxu0 %v8044
        %v8126 = vpop.f32.mrf.mxu0
        %v8127 = vadd.f32 0.0, %v8126
        %v8128 = vpop.f32.mrf.mxu0
        %v8129 = vadd.f32 0.0, %v8128
        %8130 = vmatmul.bf16.gmra.mxu0 %v8047
        %v8131 = vpop.f32.mrf.mxu0
        %v8132 = vadd.f32 0.0, %v8131
        %v8133 = vpop.f32.mrf.mxu0
        %v8134 = vadd.f32 0.0, %v8133
        %8135 = vmatmul.bf16.gmra.mxu0 %v8050
        %v8136 = vpop.f32.mrf.mxu0
        %v8137 = vadd.f32 0.0, %v8136
        %v8138 = vpop.f32.mrf.mxu0
        %v8139 = vadd.f32 0.0, %v8138
        %8140 = vdwg.mxu0
        %v8141 = vadd.f32 %v7907, %v8062
        %v8142 = vadd.f32 %v7908, %v8064
        %v8143 = vadd.f32 %v7909, %v8067
        %v8144 = vadd.f32 %v7910, %v8069
        %v8145 = vadd.f32 %v7911, %v8072
        %v8146 = vadd.f32 %v7912, %v8074
        %v8147 = vadd.f32 %v7913, %v8077
        %v8148 = vadd.f32 %v7914, %v8079
        %v8149 = vadd.f32 %v7915, %v8082
        %v8150 = vadd.f32 %v7916, %v8084
        %v8151 = vadd.f32 %v7917, %v8087
        %v8152 = vadd.f32 %v7918, %v8089
        %v8153 = vadd.f32 %v7919, %v8092
        %v8154 = vadd.f32 %v7920, %v8094
        %v8155 = vadd.f32 %v7921, %v8097
        %v8156 = vadd.f32 %v7922, %v8099
        %v8157 = vadd.f32 %v7923, %v8102
        %v8158 = vadd.f32 %v7924, %v8104
        %v8159 = vadd.f32 %v7925, %v8107
        %v8160 = vadd.f32 %v7926, %v8109
        %v8161 = vadd.f32 %v7927, %v8112
        %v8162 = vadd.f32 %v7928, %v8114
        %v8163 = vadd.f32 %v7929, %v8117
        %v8164 = vadd.f32 %v7930, %v8119
        %v8165 = vadd.f32 %v7931, %v8122
        %v8166 = vadd.f32 %v7932, %v8124
        %v8167 = vadd.f32 %v7933, %v8127
        %v8168 = vadd.f32 %v7934, %v8129
        %v8169 = vadd.f32 %v7935, %v8132
        %v8170 = vadd.f32 %v7936, %v8134
        %v8171 = vadd.f32 %v7937, %v8137
        %v8172 = vadd.f32 %v7938, %v8139
        %v8173 = vmul.f32 %v6797, %v3688
        %v8174 = vmul.f32 %v6796, %v3693
        %v8175 = vmul.f32 %v6795, %v3698
        %v8176 = vmul.f32 %v6794, %v3703
        %v8177 = vmul.f32 %v6793, %v3708
        %v8178 = vmul.f32 %v6792, %v3713
        %v8179 = vmul.f32 %v6791, %v3718
        %v8180 = vmul.f32 %v6790, %v3723
        %v8181 = vmul.f32 %v6789, %v3728
        %v8182 = vmul.f32 %v6788, %v3733
        %v8183 = vmul.f32 %v6787, %v3738
        %v8184 = vmul.f32 %v6786, %v3743
        %v8185 = vmul.f32 %v6785, %v3748
        %v8186 = vmul.f32 %v6784, %v3753
        %v8187 = vmul.f32 %v6783, %v3758
        %v8188 = vmul.f32 %v6782, %v3763
        %v8189 = vmul.f32 %v6781, %v3768
        %v8190 = vmul.f32 %v6780, %v3773
        %v8191 = vmul.f32 %v6779, %v3778
        %v8192 = vmul.f32 %v6778, %v3783
        %v8193 = vmul.f32 %v6777, %v3788
        %v8194 = vmul.f32 %v6776, %v3793
        %v8195 = vmul.f32 %v6775, %v3798
        %v8196 = vmul.f32 %v6774, %v3803
        %v8197 = vmul.f32 %v6773, %v3808
        %v8198 = vmul.f32 %v6772, %v3813
        %v8199 = vmul.f32 %v6771, %v3818
        %v8200 = vmul.f32 %v6770, %v3823
        %v8201 = vmul.f32 %v6769, %v3828
        %v8202 = vmul.f32 %v6800, %v3833
        %v8203 = vmul.f32 %v6799, %v3838
        %v8204 = vmul.f32 %v6798, %v3843
        %v8205 = vpack.c.bf16 %v8174, %v8173
        %v8206 = vpack.c.bf16 %v8176, %v8175
        %v8207 = vpack.c.bf16 %v8178, %v8177
        %v8208 = vpack.c.bf16 %v8180, %v8179
        %v8209 = vpack.c.bf16 %v8182, %v8181
        %v8210 = vpack.c.bf16 %v8184, %v8183
        %v8211 = vpack.c.bf16 %v8186, %v8185
        %v8212 = vpack.c.bf16 %v8188, %v8187
        %v8213 = vpack.c.bf16 %v8190, %v8189
        %v8214 = vpack.c.bf16 %v8192, %v8191
        %v8215 = vpack.c.bf16 %v8194, %v8193
        %v8216 = vpack.c.bf16 %v8196, %v8195
        %v8217 = vpack.c.bf16 %v8198, %v8197
        %v8218 = vpack.c.bf16 %v8200, %v8199
        %v8219 = vpack.c.bf16 %v8202, %v8201
        %v8220 = vpack.c.bf16 %v8204, %v8203
        %s8221 = scalar_lea.vmem %s6, 128
        %v8222 = vld [vmem:[%s8221] sm:$0xf]
        %v8223 = vld [vmem:[%s8221 + $0x4] sm:$0xf]
        %v8224 = vld [vmem:[%s8221 + $0x8] sm:$0xf]
        %v8225 = vld [vmem:[%s8221 + $0xc] sm:$0xf]
        %v8230 = vunpack.c.l.b16 %v8222
        %v8231 = vunpack.c.l.b16 %v8223
        %v8232 = vunpack.c.l.b16 %v8224
        %v8233 = vunpack.c.l.b16 %v8225
        %v8234 = vpack.c.b16 %v8231, %v8230
        %v8235 = vpack.c.b16 %v8233, %v8232
        %v8239 = vsel %vm6450, %v8205, 0
        %v8242 = vsel %vm6450, %v8206, 0
        %v8245 = vsel %vm6450, %v8207, 0
        %v8248 = vsel %vm6450, %v8208, 0
        %v8251 = vsel %vm6450, %v8209, 0
        %v8254 = vsel %vm6450, %v8210, 0
        %v8257 = vsel %vm6450, %v8211, 0
        %v8260 = vsel %vm6450, %v8212, 0
        %v8263 = vsel %vm6450, %v8213, 0
        %v8266 = vsel %vm6450, %v8214, 0
        %v8269 = vsel %vm6450, %v8215, 0
        %v8272 = vsel %vm6450, %v8216, 0
        %v8275 = vsel %vm6450, %v8217, 0
        %v8278 = vsel %vm6450, %v8218, 0
        %v8281 = vsel %vm6450, %v8219, 0
        %v8284 = vsel %vm6450, %v8220, 0
        %8286 = vmatpush.bf16.msra.mxu0 0
        %8287 = vmatpush.bf16.msra.mxu0 0
        %8288 = vmatpush.bf16.msra.mxu0 0
        %8289 = vmatpush.bf16.msra.mxu0 0
        %8290 = vmatpush.bf16.msra.mxu0 0
        %8291 = vmatpush.bf16.msra.mxu0 0
        %8292 = vmatpush.bf16.msra.mxu0 %v8235
        %8293 = vmatpush.bf16.msra.mxu0 %v8234
        %8294 = vmatmul.bf16.gmra.mxu0 %v8239
        %v8295 = vpop.f32.mrf.mxu0
        %v8296 = vadd.f32 0.0, %v8295
        %v8297 = vpop.f32.mrf.mxu0
        %v8298 = vadd.f32 0.0, %v8297
        %8299 = vmatmul.bf16.gmra.mxu0 %v8242
        %v8300 = vpop.f32.mrf.mxu0
        %v8301 = vadd.f32 0.0, %v8300
        %v8302 = vpop.f32.mrf.mxu0
        %v8303 = vadd.f32 0.0, %v8302
        %8304 = vmatmul.bf16.gmra.mxu0 %v8245
        %v8305 = vpop.f32.mrf.mxu0
        %v8306 = vadd.f32 0.0, %v8305
        %v8307 = vpop.f32.mrf.mxu0
        %v8308 = vadd.f32 0.0, %v8307
        %8309 = vmatmul.bf16.gmra.mxu0 %v8248
        %v8310 = vpop.f32.mrf.mxu0
        %v8311 = vadd.f32 0.0, %v8310
        %v8312 = vpop.f32.mrf.mxu0
        %v8313 = vadd.f32 0.0, %v8312
        %8314 = vmatmul.bf16.gmra.mxu0 %v8251
        %v8315 = vpop.f32.mrf.mxu0
        %v8316 = vadd.f32 0.0, %v8315
        %v8317 = vpop.f32.mrf.mxu0
        %v8318 = vadd.f32 0.0, %v8317
        %8319 = vmatmul.bf16.gmra.mxu0 %v8254
        %v8320 = vpop.f32.mrf.mxu0
        %v8321 = vadd.f32 0.0, %v8320
        %v8322 = vpop.f32.mrf.mxu0
        %v8323 = vadd.f32 0.0, %v8322
        %8324 = vmatmul.bf16.gmra.mxu0 %v8257
        %v8325 = vpop.f32.mrf.mxu0
        %v8326 = vadd.f32 0.0, %v8325
        %v8327 = vpop.f32.mrf.mxu0
        %v8328 = vadd.f32 0.0, %v8327
        %8329 = vmatmul.bf16.gmra.mxu0 %v8260
        %v8330 = vpop.f32.mrf.mxu0
        %v8331 = vadd.f32 0.0, %v8330
        %v8332 = vpop.f32.mrf.mxu0
        %v8333 = vadd.f32 0.0, %v8332
        %8334 = vmatmul.bf16.gmra.mxu0 %v8263
        %v8335 = vpop.f32.mrf.mxu0
        %v8336 = vadd.f32 0.0, %v8335
        %v8337 = vpop.f32.mrf.mxu0
        %v8338 = vadd.f32 0.0, %v8337
        %8339 = vmatmul.bf16.gmra.mxu0 %v8266
        %v8340 = vpop.f32.mrf.mxu0
        %v8341 = vadd.f32 0.0, %v8340
        %v8342 = vpop.f32.mrf.mxu0
        %v8343 = vadd.f32 0.0, %v8342
        %8344 = vmatmul.bf16.gmra.mxu0 %v8269
        %v8345 = vpop.f32.mrf.mxu0
        %v8346 = vadd.f32 0.0, %v8345
        %v8347 = vpop.f32.mrf.mxu0
        %v8348 = vadd.f32 0.0, %v8347
        %8349 = vmatmul.bf16.gmra.mxu0 %v8272
        %v8350 = vpop.f32.mrf.mxu0
        %v8351 = vadd.f32 0.0, %v8350
        %v8352 = vpop.f32.mrf.mxu0
        %v8353 = vadd.f32 0.0, %v8352
        %8354 = vmatmul.bf16.gmra.mxu0 %v8275
        %v8355 = vpop.f32.mrf.mxu0
        %v8356 = vadd.f32 0.0, %v8355
        %v8357 = vpop.f32.mrf.mxu0
        %v8358 = vadd.f32 0.0, %v8357
        %8359 = vmatmul.bf16.gmra.mxu0 %v8278
        %v8360 = vpop.f32.mrf.mxu0
        %v8361 = vadd.f32 0.0, %v8360
        %v8362 = vpop.f32.mrf.mxu0
        %v8363 = vadd.f32 0.0, %v8362
        %8364 = vmatmul.bf16.gmra.mxu0 %v8281
        %v8365 = vpop.f32.mrf.mxu0
        %v8366 = vadd.f32 0.0, %v8365
        %v8367 = vpop.f32.mrf.mxu0
        %v8368 = vadd.f32 0.0, %v8367
        %8369 = vmatmul.bf16.gmra.mxu0 %v8284
        %v8370 = vpop.f32.mrf.mxu0
        %v8371 = vadd.f32 0.0, %v8370
        %v8372 = vpop.f32.mrf.mxu0
        %v8373 = vadd.f32 0.0, %v8372
        %8374 = vdwg.mxu0
        %v8375 = vadd.f32 %v8141, %v8296
        %v8376 = vadd.f32 %v8142, %v8298
        %v8377 = vadd.f32 %v8143, %v8301
        %v8378 = vadd.f32 %v8144, %v8303
        %v8379 = vadd.f32 %v8145, %v8306
        %v8380 = vadd.f32 %v8146, %v8308
        %v8381 = vadd.f32 %v8147, %v8311
        %v8382 = vadd.f32 %v8148, %v8313
        %v8383 = vadd.f32 %v8149, %v8316
        %v8384 = vadd.f32 %v8150, %v8318
        %v8385 = vadd.f32 %v8151, %v8321
        %v8386 = vadd.f32 %v8152, %v8323
        %v8387 = vadd.f32 %v8153, %v8326
        %v8388 = vadd.f32 %v8154, %v8328
        %v8389 = vadd.f32 %v8155, %v8331
        %v8390 = vadd.f32 %v8156, %v8333
        %v8391 = vadd.f32 %v8157, %v8336
        %v8392 = vadd.f32 %v8158, %v8338
        %v8393 = vadd.f32 %v8159, %v8341
        %v8394 = vadd.f32 %v8160, %v8343
        %v8395 = vadd.f32 %v8161, %v8346
        %v8396 = vadd.f32 %v8162, %v8348
        %v8397 = vadd.f32 %v8163, %v8351
        %v8398 = vadd.f32 %v8164, %v8353
        %v8399 = vadd.f32 %v8165, %v8356
        %v8400 = vadd.f32 %v8166, %v8358
        %v8401 = vadd.f32 %v8167, %v8361
        %v8402 = vadd.f32 %v8168, %v8363
        %v8403 = vadd.f32 %v8169, %v8366
        %v8404 = vadd.f32 %v8170, %v8368
        %v8405 = vadd.f32 %v8171, %v8371
        %v8406 = vadd.f32 %v8172, %v8373
        %v8407 = vld [vmem:[%s7] sm:$0x1]
        %v8409 = vperm.slane %v8407, 0
        %v8411 = vadd.f32 %v8375, %v8409
        %v8412 = vadd.f32 %v8376, %v8409
        %v8413 = vadd.f32 %v8377, %v8409
        %v8414 = vadd.f32 %v8378, %v8409
        %v8415 = vadd.f32 %v8379, %v8409
        %v8416 = vadd.f32 %v8380, %v8409
        %v8417 = vadd.f32 %v8381, %v8409
        %v8418 = vadd.f32 %v8382, %v8409
        %v8419 = vadd.f32 %v8383, %v8409
        %v8420 = vadd.f32 %v8384, %v8409
        %v8421 = vadd.f32 %v8385, %v8409
        %v8422 = vadd.f32 %v8386, %v8409
        %v8423 = vadd.f32 %v8387, %v8409
        %v8424 = vadd.f32 %v8388, %v8409
        %v8425 = vadd.f32 %v8389, %v8409
        %v8426 = vadd.f32 %v8390, %v8409
        %v8427 = vadd.f32 %v8391, %v8409
        %v8428 = vadd.f32 %v8392, %v8409
        %v8429 = vadd.f32 %v8393, %v8409
        %v8430 = vadd.f32 %v8394, %v8409
        %v8431 = vadd.f32 %v8395, %v8409
        %v8432 = vadd.f32 %v8396, %v8409
        %v8433 = vadd.f32 %v8397, %v8409
        %v8434 = vadd.f32 %v8398, %v8409
        %v8435 = vadd.f32 %v8399, %v8409
        %v8436 = vadd.f32 %v8400, %v8409
        %v8437 = vadd.f32 %v8401, %v8409
        %v8438 = vadd.f32 %v8402, %v8409
        %v8439 = vadd.f32 %v8403, %v8409
        %v8440 = vadd.f32 %v8404, %v8409
        %v8441 = vadd.f32 %v8405, %v8409
        %v8442 = vadd.f32 %v8406, %v8409
        %v8443 = vmax.f32 %v8411, 0.0
        %v8444 = vmax.f32 %v8412, 0.0
        %v8445 = vmax.f32 %v8413, 0.0
        %v8446 = vmax.f32 %v8414, 0.0
        %v8447 = vmax.f32 %v8415, 0.0
        %v8448 = vmax.f32 %v8416, 0.0
        %v8449 = vmax.f32 %v8417, 0.0
        %v8450 = vmax.f32 %v8418, 0.0
        %v8451 = vmax.f32 %v8419, 0.0
        %v8452 = vmax.f32 %v8420, 0.0
        %v8453 = vmax.f32 %v8421, 0.0
        %v8454 = vmax.f32 %v8422, 0.0
        %v8455 = vmax.f32 %v8423, 0.0
        %v8456 = vmax.f32 %v8424, 0.0
        %v8457 = vmax.f32 %v8425, 0.0
        %v8458 = vmax.f32 %v8426, 0.0
        %v8459 = vmax.f32 %v8427, 0.0
        %v8460 = vmax.f32 %v8428, 0.0
        %v8461 = vmax.f32 %v8429, 0.0
        %v8462 = vmax.f32 %v8430, 0.0
        %v8463 = vmax.f32 %v8431, 0.0
        %v8464 = vmax.f32 %v8432, 0.0
        %v8465 = vmax.f32 %v8433, 0.0
        %v8466 = vmax.f32 %v8434, 0.0
        %v8467 = vmax.f32 %v8435, 0.0
        %v8468 = vmax.f32 %v8436, 0.0
        %v8469 = vmax.f32 %v8437, 0.0
        %v8470 = vmax.f32 %v8438, 0.0
        %v8471 = vmax.f32 %v8439, 0.0
        %v8472 = vmax.f32 %v8440, 0.0
        %v8473 = vmax.f32 %v8441, 0.0
        %v8474 = vmax.f32 %v8442, 0.0
        %v8475 = vsel %vm6450, %v8443, 0.0
        %v8476 = vsel %vm6450, %v8444, 0.0
        %v8477 = vadd.f32 %v8475, %v8476
        %v8478 = vsel %vm6450, %v8445, 0.0
        %v8479 = vadd.f32 %v8477, %v8478
        %v8480 = vsel %vm6450, %v8446, 0.0
        %v8481 = vadd.f32 %v8479, %v8480
        %v8482 = vsel %vm6450, %v8447, 0.0
        %v8483 = vadd.f32 %v8481, %v8482
        %v8484 = vsel %vm6450, %v8448, 0.0
        %v8485 = vadd.f32 %v8483, %v8484
        %v8486 = vsel %vm6450, %v8449, 0.0
        %v8487 = vadd.f32 %v8485, %v8486
        %v8488 = vsel %vm6450, %v8450, 0.0
        %v8489 = vadd.f32 %v8487, %v8488
        %v8490 = vsel %vm6450, %v8451, 0.0
        %v8491 = vadd.f32 %v8489, %v8490
        %v8492 = vsel %vm6450, %v8452, 0.0
        %v8493 = vadd.f32 %v8491, %v8492
        %v8494 = vsel %vm6450, %v8453, 0.0
        %v8495 = vadd.f32 %v8493, %v8494
        %v8496 = vsel %vm6450, %v8454, 0.0
        %v8497 = vadd.f32 %v8495, %v8496
        %v8498 = vsel %vm6450, %v8455, 0.0
        %v8499 = vadd.f32 %v8497, %v8498
        %v8500 = vsel %vm6450, %v8456, 0.0
        %v8501 = vadd.f32 %v8499, %v8500
        %v8502 = vsel %vm6450, %v8457, 0.0
        %v8503 = vadd.f32 %v8501, %v8502
        %v8504 = vsel %vm6450, %v8458, 0.0
        %v8505 = vadd.f32 %v8503, %v8504
        %v8506 = vsel %vm6450, %v8459, 0.0
        %v8507 = vadd.f32 %v8505, %v8506
        %v8508 = vsel %vm6450, %v8460, 0.0
        %v8509 = vadd.f32 %v8507, %v8508
        %v8510 = vsel %vm6450, %v8461, 0.0
        %v8511 = vadd.f32 %v8509, %v8510
        %v8512 = vsel %vm6450, %v8462, 0.0
        %v8513 = vadd.f32 %v8511, %v8512
        %v8514 = vsel %vm6450, %v8463, 0.0
        %v8515 = vadd.f32 %v8513, %v8514
        %v8516 = vsel %vm6450, %v8464, 0.0
        %v8517 = vadd.f32 %v8515, %v8516
        %v8518 = vsel %vm6450, %v8465, 0.0
        %v8519 = vadd.f32 %v8517, %v8518
        %v8520 = vsel %vm6450, %v8466, 0.0
        %v8521 = vadd.f32 %v8519, %v8520
        %v8522 = vsel %vm6450, %v8467, 0.0
        %v8523 = vadd.f32 %v8521, %v8522
        %v8524 = vsel %vm6450, %v8468, 0.0
        %v8525 = vadd.f32 %v8523, %v8524
        %v8526 = vsel %vm6450, %v8469, 0.0
        %v8527 = vadd.f32 %v8525, %v8526
        %v8528 = vsel %vm6450, %v8470, 0.0
        %v8529 = vadd.f32 %v8527, %v8528
        %v8530 = vsel %vm6450, %v8471, 0.0
        %v8531 = vadd.f32 %v8529, %v8530
        %v8532 = vsel %vm6450, %v8472, 0.0
        %v8533 = vadd.f32 %v8531, %v8532
        %v8534 = vsel %vm6450, %v8473, 0.0
        %v8535 = vadd.f32 %v8533, %v8534
        %v8536 = vsel %vm6450, %v8474, 0.0
        %v8537 = vadd.f32 %v8535, %v8536
        %v8538 = vrot.slane %v8537, 4
        %v8539 = vadd.f32 %v8537, %v8538
        %v8540 = vrot.slane %v8539, 2
        %v8541 = vadd.f32 %v8539, %v8540
        %v8542 = vrot.slane %v8541, 1
        %v8543 = vadd.f32 %v8541, %v8542
        %v8544 = vmul.f32 %v8543, 0.00390625
        %v8545 = vld [vmem:[%s8] sm:$0xff]
        %v8546 = vld [vmem:[%s8 + $0x8] sm:$0xff]
        %v8547 = vld [vmem:[%s8 + $0x10] sm:$0xff]
        %v8548 = vld [vmem:[%s8 + $0x18] sm:$0xff]
        %v8549 = vld [vmem:[%s9] sm:$0x1]
        %v8551 = vsel %vm6450, %v8544, 0
        %8553 = vmatpush.msra.mxu0 0.0
        %8554 = vmatpush.msra.mxu0 0.0
        %8555 = vmatpush.msra.mxu0 0.0
        %8556 = vmatpush.msra.mxu0 0.0
        %8557 = vmatpush.msra.mxu0 0.0
        %8558 = vmatpush.msra.mxu0 0.0
        %8559 = vmatpush.msra.mxu0 0.0
        %8560 = vmatpush.msra.mxu0 0.0
        %8561 = vmatpush.msra.mxu0 0.0
        %8562 = vmatpush.msra.mxu0 0.0
        %8563 = vmatpush.msra.mxu0 0.0
        %8564 = vmatpush.msra.mxu0 0.0
        %8565 = vmatpush.msra.mxu0 %v8548
        %8566 = vmatpush.msra.mxu0 %v8547
        %8567 = vmatpush.msra.mxu0 %v8546
        %8568 = vmatpush.msra.mxu0 %v8545
        %8569 = vmatmul.f32.gmra.mxu0 %v8551
        %v8570 = vpop.f32.mrf.mxu0
        %v8571 = vadd.f32 %v8549, %v8570
        %8572 = vdwg.mxu0
        %8573 = vst [vmem:[%s351] sm:$0x1] %v8571
        %s8574 = sand.u32 %s247, 1
        %s8575 = scalar_lea.sflag [#allocation3], %s8574
        %s8576 = sand.u32 %s247, 1
        %s8577 = scalar_lea.vmem [#allocation2], %s8576
        // Predicated region
        $region61: #{mtl_nogate_forward_val.1} parent=59 // pred_check
          %p8578 = pneg %p257
        $region62: #{mtl_nogate_forward_val.1} parent=59 // pred_check_branch
          %8580 = sbr.rel (%p8578) target = $region64
        $region63: #{mtl_nogate_forward_val.1} parent=59 // pred_region
          %8582 = vsyncadd %s8575, 0
          %s8583 = scalar_lea.hbm %s10, %s24
          %s8585 = sshll.u32 %s8577, 4
          %s8586 = int_to_ptr.vmem [resolvable:$true] %s8585
          %s8587 = sshll.u32 %s8583, 4
          %s8588 = int_to_ptr.hbm [resolvable:$true] %s8587
          %8590 = dma.vmem_to_hbm [thread:$0]  %s8586, 16, %s8588, %s8575
        $region64: #{mtl_nogate_forward_val.1} parent=59 // pred_fallthru
          _
      $region60: #{mtl_nogate_forward_val.1} parent=5 // pred_fallthru
        _
      %p8591 = scmp.le.s32.totalorder 2, %s19
      // Predicated region
      $region65: #{mtl_nogate_forward_val.1} parent=5 // pred_check
        %p8592 = pneg %p8591
      $region66: #{mtl_nogate_forward_val.1} parent=5 // pred_check_branch
        %8594 = sbr.rel (%p8592) target = $region68
      $region67: #{mtl_nogate_forward_val.1} parent=5 // pred_region
        %s8595 = ssub.s32 %s19, 2
        // Predicated region
        $region69: #{mtl_nogate_forward_val.1} parent=67 // pred_check
          %p8596 = pneg %p263
        $region70: #{mtl_nogate_forward_val.1} parent=67 // pred_check_branch
          %8598 = sbr.rel (%p8596) target = $region72
        $region71: #{mtl_nogate_forward_val.1} parent=67 // pred_region
          %s8599 = sand.u32 %s248, 1
          %s8600 = scalar_lea.sflag [#allocation3], %s8599
          %s8601 = sand.u32 %s248, 1
          %s8602 = scalar_lea.vmem [#allocation2], %s8601
          %8604 = dma.done %s8600, 16
        $region72: #{mtl_nogate_forward_val.1} parent=67 // pred_fallthru
          _
      $region68: #{mtl_nogate_forward_val.1} parent=5 // pred_fallthru
        _
    $region6: #{mtl_nogate_forward_val.1} parent=1 // loop_footer
      %s23 = sadd.s32 1, %s19
    $region7: #{mtl_nogate_forward_val.1} parent=1 // loop_footer_branch
      %18 = sbr.rel target = $region3
    $region8: #{mtl_nogate_forward_val.1} parent=1 // loop_exit
      _
    %8605 = vsyncpa [#allocation3], 1
    %s8606 = scalar_lea.sflag [#allocation3], 1
    %8607 = vsyncpa %s8606, 1

</llo_original>
